<compile_context>
chip_gen: v5e
topology: v5e:2x2
jax: 0.10.0
libtpu: 0.0.40
codegen_flags: <defaults>
</compile_context>

<pallas_src>
import jax
import jax.numpy as jnp
import numpy as np
from jax.experimental import pallas as pl
from jax.experimental.pallas import tpu as pltpu

D = 32       # emb_dim
NI = 8       # padded #users per item
NU = 8       # padded #items per user
EPS = 1e-10

# row indices into the packed (11, D) f32 bias / head-row slab
(_BGU2, _BGV2, _BATI, _BATU, _B1AGI, _BAGI, _BAGU,
 _BC2, _BC3, _HWI, _HWU) = range(11)


# ------------------------------ weight packing ------------------------------

def _pack_params(weights):
    """Fold w1 / BatchNorm into consumers and lane-stack into wide bf16 slabs."""
    (w1_w, w1_b, gu1_w, gu1_b, gu2_w, gu2_b, gv1_w, gv1_b, gv2_w, gv2_b,
     ai1_w, ai1_b, ai2_w, ai2_b, agi_w, agi_b,
     au1_w, au1_b, au2_w, au2_b, agu_w, agu_b,
     c1_w, c1_b, bn1_s, bn1_t, c2_w, c2_b, bn2_s, bn2_t, c3_w, c3_b) = weights
    d = w1_w.shape[0]
    f32 = jnp.float32

    # shared w1 composed into every consumer (w1 never runs on its own)
    ai1_a, ai1_bk = ai1_w[:d], ai1_w[d:]
    au1_a, au1_bk = au1_w[:d], au1_w[d:]
    w1_ai1a = w1_w @ ai1_a
    w1_ai1b = w1_w @ ai1_bk
    w1_au1a = w1_w @ au1_a
    w1_au1b = w1_w @ au1_bk
    w1_agi = w1_w @ agi_w
    b1_agi = w1_b @ agi_w
    gv2_w1_au1a = gv2_w @ w1_au1a

    # constant bias pieces of the attention pre-activations
    att_b_i = ai1_b + w1_b @ ai1_a + w1_b @ ai1_bk
    att_b_u = au1_b + w1_b @ au1_a + w1_b @ au1_bk + gv2_b @ w1_au1a

    # eval-mode BatchNorm folded into the adjacent Linear
    c1_wf = c1_w * bn1_s
    c1_bf = c1_b * bn1_s + bn1_t
    c2_wf = c2_w * bn2_s
    c2_bf = c2_b * bn2_s + bn2_t

    # ---- lane-stacked weight slabs (N = 96 on the two dominant matmuls) ----
    # layer-1 slab: operand is [p_t | er_i | q_a | er_u]  (K = 4d = 128)
    wb1 = jnp.zeros((4 * d, 3 * d), f32)
    wb1 = wb1.at[0:2 * d, 0:d].set(gu1_w)            # [p_t|er_i] -> gu1 pre-act
    wb1 = wb1.at[2 * d:4 * d, d:2 * d].set(gv1_w)    # [q_a|er_u] -> gv1 pre-act
    wb1 = wb1.at[0:d, 2 * d:3 * d].set(w1_ai1a)      # p_t -> item-att left
    # layer-2 slab: operand is [h_gu | h_gv]  (K = 2d = 64)
    wb2 = jnp.zeros((2 * d, 3 * d), f32)
    wb2 = wb2.at[0:d, 0:d].set(gu2_w)                # h_gu -> f_jt pre-bias
    wb2 = wb2.at[d:2 * d, d:2 * d].set(gv2_w)        # h_gv -> x_ia pre-bias
    wb2 = wb2.at[d:2 * d, 2 * d:3 * d].set(gv2_w1_au1a)  # h_gv -> user-att left
    w96 = jnp.concatenate([wb1, wb2], axis=0).astype(jnp.bfloat16)   # (6d, 3d)

    # attention centers: operand is [q_i | p_u]
    wqp = jnp.zeros((2 * d, 2 * d), f32)
    wqp = wqp.at[0:d, 0:d].set(w1_ai1b)              # q_i -> item-att center
    wqp = wqp.at[d:2 * d, d:2 * d].set(w1_au1b)      # p_u -> user-att center
    w64 = jnp.concatenate([wqp, c1_wf], axis=0).astype(jnp.bfloat16)  # (5d, 2d)

    w32 = jnp.concatenate([w1_agi, agu_w, c2_wf, c3_w],
                          axis=0).astype(jnp.bfloat16)                # (5d, d)

    bias64 = jnp.concatenate([
        jnp.concatenate([gu1_b, gv1_b], axis=1),     # row 0: [b_gu1 | b_gv1]
        c1_bf,                                        # row 1: folded c1 bias
    ], axis=0).astype(f32)                            # (2, 2d)

    bias32 = jnp.concatenate([
        gu2_b, gv2_b, att_b_i, att_b_u, b1_agi, agi_b, agu_b, c2_bf, c3_b,
        ai2_w.T, au2_w.T,                             # D->1 heads stored as rows
    ], axis=0).astype(f32)                            # (11, d)

    head_b = jnp.concatenate(
        [ai2_b.reshape(-1), au2_b.reshape(-1)]).astype(f32)           # (2,)

    return w96, w64, w32, bias64, bias32, head_b


# --------------------------------- kernel ----------------------------------

def item_model_kernel(xin_ref, qp_ref, mask_ref,
                      w96_ref, w64_ref, w32_ref, b64_ref, b32_ref, hb_ref,
                      out_ref):
    tb, n, four_d = xin_ref.shape
    d = four_d // 4

    def mm(a, b):                        # MXU: bf16 x bf16 -> f32 accumulation
        return jnp.dot(a.astype(jnp.bfloat16), b,
                       preferred_element_type=jnp.float32)

    def leaky(x):
        return jnp.maximum(x, 0.2 * x)

    def brow(i):                         # (1, d) f32 bias / head row
        return b32_ref[i:i + 1, :]

    xin = xin_ref[...].reshape(tb * n, four_d)        # [p_t | er_i | q_a | er_u]
    mask = mask_ref[...]
    mask_i = mask[:, :n]
    mask_u = mask[:, n:]

    # layer 1 (wide): g_u.0, g_v.0 and the item-attention "left" term
    r1 = mm(xin, w96_ref[0:4 * d, :])                         # (tb*n, 3d)
    h12 = leaky(r1[:, 0:2 * d] + b64_ref[0:1, :])             # [h_gu | h_gv]
    att_left_i = r1[:, 2 * d:3 * d]                           # p_t @ (W1@AI1A)

    # layer 2 (wide): g_u.2, g_v.2 and the user-attention "left" term
    r2 = mm(h12, w96_ref[4 * d:6 * d, :])                     # (tb*n, 3d)
    f_jt = r2[:, 0:d] + brow(_BGU2)
    x_ia = r2[:, d:2 * d] + brow(_BGV2)
    att_left_u = r2[:, 2 * d:3 * d]                           # h_gv @ (GV2@W1@AU1A)

    # attention centers: [q_i @ (W1@AI1B) | p_u @ (W1@AU1B)]
    r_qp = mm(qp_ref[...], w64_ref[0:2 * d, :])               # (tb, 2d)

    def att_weights(left, center, mask_n, bias_row, head_row, head_b):
        # masked-center linearity: w1(mask*c)@B == mask*(c@(W1@B)) + const
        # (all constants, incl. w1_b@B, are pre-folded into bias_row).
        h = (left.reshape(tb, n, d)
             + mask_n[:, :, None] * center[:, None, :] + bias_row)
        h = leaky(h)
        logit = jnp.sum(h * head_row, axis=-1) + head_b       # (tb, n)
        a = jnp.exp(logit) * mask_n
        inv = pl.reciprocal(jnp.sum(a, axis=1, keepdims=True) + EPS, approx=True)
        return a * inv                                        # normalized weights

    miu = att_weights(att_left_i, r_qp[:, 0:d], mask_i,
                      brow(_BATI), brow(_HWI), hb_ref[0])
    alpha = att_weights(att_left_u, r_qp[:, d:2 * d], mask_u,
                        brow(_BATU), brow(_HWU), hb_ref[1])

    # aggregations; item branch uses
    #   sum_j miu_j * w1(f_jt_j) == (sum_j miu_j f_jt_j)@W1 + (sum_j miu_j)*b1
    # with W1@AGI and b1@AGI pre-composed.
    agg_i = jnp.sum(miu[:, :, None] * f_jt.reshape(tb, n, d), axis=1)   # (tb, d)
    s_miu = jnp.sum(miu, axis=1, keepdims=True)                         # ~1 or 0
    z_j = jnp.maximum(
        mm(agg_i, w32_ref[0:d, :]) + s_miu * brow(_B1AGI) + brow(_BAGI), 0.0)
    agg_u = jnp.sum(alpha[:, :, None] * x_ia.reshape(tb, n, d), axis=1)
    h_iI = jnp.maximum(mm(agg_u, w32_ref[d:2 * d, :]) + brow(_BAGU), 0.0)

    # combine_mlp (BN folded; the 3d concat is a split-accumulate over K)
    z_dot = z_j * h_iI
    h = (mm(z_dot, w64_ref[2 * d:3 * d, :])
         + mm(z_j, w64_ref[3 * d:4 * d, :])
         + mm(h_iI, w64_ref[4 * d:5 * d, :]) + b64_ref[1:2, :])
    h = jnp.maximum(h, 0.0)
    h = jnp.maximum(mm(h, w32_ref[2 * d:4 * d, :]) + brow(_BC2), 0.0)
    out_ref[...] = mm(h, w32_ref[4 * d:5 * d, :]) + brow(_BC3)


# --------------------------------- wrapper ----------------------------------

def item_model_forward(p_t, er_i, mask_i, q_i, q_a, er_u, mask_u, p_u, weights,
                       *, block_b=None):
    batch, ni, d = p_t.shape
    nu = q_a.shape[1]
    n = max(ni, nu)

    # pad the two neighbour axes to a common length; the extra rows are fully
    # masked, so they cannot change the result.
    if ni < n:
        p_t = jnp.pad(p_t, ((0, 0), (0, n - ni), (0, 0)))
        er_i = jnp.pad(er_i, ((0, 0), (0, n - ni), (0, 0)))
        mask_i = jnp.pad(mask_i, ((0, 0), (0, n - ni)))
    if nu < n:
        q_a = jnp.pad(q_a, ((0, 0), (0, n - nu), (0, 0)))
        er_u = jnp.pad(er_u, ((0, 0), (0, n - nu), (0, 0)))
        mask_u = jnp.pad(mask_u, ((0, 0), (0, n - nu)))

    if block_b is None:
        # grid >= 2 keeps both v7x TensorCores busy; the tile is still large
        # enough to amortise per-grid-step overhead on single-TC v5e/v6e.
        block_b = max(8, (min(128, pl.cdiv(batch, 2)) // 8) * 8)

    w96, w64, w32, bias64, bias32, head_b = _pack_params(weights)

    # wrapper-side lane-dense concatenation + bf16 cast (halves input DMA and
    # removes every in-kernel lane concatenate)
    big_in = jnp.concatenate([p_t, er_i, q_a, er_u], axis=-1).astype(jnp.bfloat16)
    qp = jnp.concatenate([q_i, p_u], axis=-1).astype(jnp.bfloat16)
    masks = jnp.concatenate([mask_i, mask_u], axis=-1).astype(jnp.float32)

    pad_b = (-batch) % block_b
    if pad_b:
        big_in = jnp.pad(big_in, ((0, pad_b), (0, 0), (0, 0)))
        qp = jnp.pad(qp, ((0, pad_b), (0, 0)))
        masks = jnp.pad(masks, ((0, pad_b), (0, 0)))
    padded = batch + pad_b

    data_specs = [
        pl.BlockSpec((block_b, n, 4 * d), lambda b: (b, 0, 0)),  # [p_t|er_i|q_a|er_u]
        pl.BlockSpec((block_b, 2 * d), lambda b: (b, 0)),        # [q_i|p_u]
        pl.BlockSpec((block_b, 2 * n), lambda b: (b, 0)),        # [mask_i|mask_u]
    ]
    weight_specs = [
        pl.BlockSpec(w96.shape, lambda b: (0, 0)),
        pl.BlockSpec(w64.shape, lambda b: (0, 0)),
        pl.BlockSpec(w32.shape, lambda b: (0, 0)),
        pl.BlockSpec(bias64.shape, lambda b: (0, 0)),
        pl.BlockSpec(bias32.shape, lambda b: (0, 0)),
        pl.BlockSpec(memory_space=pltpu.MemorySpace.SMEM),       # 2 head-bias scalars
    ]
    out = pl.pallas_call(
        item_model_kernel,
        out_shape=jax.ShapeDtypeStruct((padded, d), jnp.float32),
        grid_spec=pltpu.PrefetchScalarGridSpec(
            num_scalar_prefetch=0,
            grid=(padded // block_b,),
            in_specs=data_specs + weight_specs,
            out_specs=pl.BlockSpec((block_b, d), lambda b: (b, 0)),
        ),
        compiler_params=pltpu.CompilerParams(
            dimension_semantics=("parallel",)),
    )(big_in, qp, masks, w96, w64, w32, bias64, bias32, head_b)
    return out[:batch]


# ------------------------- pure-JAX reference check -------------------------

def ref_forward(p_t, er_i, mask_i, q_i, q_a, er_u, mask_u, p_u, weights):
    (w1_w, w1_b, gu1_w, gu1_b, gu2_w, gu2_b, gv1_w, gv1_b, gv2_w, gv2_b,
     ai1_w, ai1_b, ai2_w, ai2_b, agi_w, agi_b,
     au1_w, au1_b, au2_w, au2_b, agu_w, agu_b,
     c1_w, c1_b, bn1_s, bn1_t, c2_w, c2_b, bn2_s, bn2_t, c3_w, c3_b) = weights

    def lin(x, w, b): return x @ w + b
    def mlp2(x, w1, b1, w2, b2):
        h = lin(x, w1, b1)
        h = jnp.where(h > 0, h, 0.2 * h)
        return lin(h, w2, b2)

    bsz, ni, d = p_t.shape
    f_jt = mlp2(jnp.concatenate([p_t, er_i], -1).reshape(-1, 2 * d),
                gu1_w, gu1_b, gu2_w, gu2_b).reshape(bsz, ni, d)
    q_j = mask_i[:, :, None] * q_i[:, None, :]
    miu = mlp2(jnp.concatenate([lin(p_t, w1_w, w1_b), lin(q_j, w1_w, w1_b)],
                               -1).reshape(-1, 2 * d),
               ai1_w, ai1_b, ai2_w, ai2_b).reshape(bsz, ni)
    miu = jnp.exp(miu) * mask_i
    miu = miu / (jnp.sum(miu, 1, keepdims=True) + EPS)
    z_j = jax.nn.relu(lin(jnp.sum(miu[:, :, None] * lin(f_jt, w1_w, w1_b), 1),
                          agi_w, agi_b))

    nu = q_a.shape[1]
    x_ia = mlp2(jnp.concatenate([q_a, er_u], -1).reshape(-1, 2 * d),
                gv1_w, gv1_b, gv2_w, gv2_b).reshape(bsz, nu, d)
    p_i = mask_u[:, :, None] * p_u[:, None, :]
    alpha = mlp2(jnp.concatenate([lin(x_ia, w1_w, w1_b), lin(p_i, w1_w, w1_b)],
                                 -1).reshape(-1, 2 * d),
                 au1_w, au1_b, au2_w, au2_b).reshape(bsz, nu)
    alpha = jnp.exp(alpha) * mask_u
    alpha = alpha / (jnp.sum(alpha, 1, keepdims=True) + EPS)
    h_iI = jax.nn.relu(lin(jnp.sum(alpha[:, :, None] * x_ia, 1), agu_w, agu_b))

    comb = jnp.concatenate([z_j * h_iI, z_j, h_iI], -1)
    h = jax.nn.relu(lin(comb, c1_w, c1_b) * bn1_s + bn1_t)
    h = jax.nn.relu(lin(h, c2_w, c2_b) * bn2_s + bn2_t)
    return lin(h, c3_w, c3_b)


# ------------------------------- param init --------------------------------

def _init_linear(key, fan_in, fan_out):
    kw, kb = jax.random.split(key)
    bound = 1.0 / np.sqrt(fan_in)
    w = jax.random.uniform(kw, (fan_in, fan_out), jnp.float32, -bound, bound)
    b = jax.random.uniform(kb, (1, fan_out), jnp.float32, -bound, bound)
    return w, b


def _init_bn(key, dim):
    k1, k2, k3, k4 = jax.random.split(key, 4)
    gamma = 1.0 + 0.1 * jax.random.normal(k1, (1, dim), jnp.float32)
    beta = 0.1 * jax.random.normal(k2, (1, dim), jnp.float32)
    mean = 0.05 * jax.random.normal(k3, (1, dim), jnp.float32)
    var = 1.0 + 0.1 * jnp.abs(jax.random.normal(k4, (1, dim), jnp.float32))
    scale = gamma / jnp.sqrt(var + 1e-5)
    shift = beta - mean * scale
    return scale, shift


if __name__ == "__main__":
    root = jax.random.PRNGKey(0)
    keys = jax.random.split(root, 16)

    B = 128                                   # batch (tiled into 2 blocks of 64)
    n_users, n_items, n_rates = 40, 40, 6
    user_emb = 0.1 * jax.random.normal(keys[0], (n_users, D), jnp.float32)
    item_emb = 0.1 * jax.random.normal(keys[1], (n_items, D), jnp.float32)
    rate_emb = 0.1 * jax.random.normal(keys[2], (n_rates, D), jnp.float32)

    # forward() inputs (ids; id 0 == padding)
    iids = jax.random.randint(keys[3], (B,), 1, n_items)
    uids = jax.random.randint(keys[4], (B,), 1, n_users)
    iu_ids = jax.random.randint(keys[5], (B, NI), 1, n_users)
    iu_ids = iu_ids * (jax.random.uniform(keys[6], (B, NI)) < 0.7).astype(jnp.int32)
    iu_rate = jax.random.randint(keys[7], (B, NI), 0, n_rates)
    i_user_pad = jnp.stack([iu_ids, iu_rate], axis=-1)            # (B, NI, 2)
    ui_ids = jax.random.randint(keys[8], (B, NU), 1, n_items)
    ui_ids = ui_ids * (jax.random.uniform(keys[9], (B, NU)) < 0.7).astype(jnp.int32)
    ui_rate = jax.random.randint(keys[10], (B, NU), 0, n_rates)
    u_item_pad = jnp.stack([ui_ids, ui_rate], axis=-1)            # (B, NU, 2)

    # glue: embedding gathers + masks (plain JAX)
    p_t = user_emb[i_user_pad[:, :, 0]]
    er_i = rate_emb[i_user_pad[:, :, 1]]
    mask_i = (i_user_pad[:, :, 0] > 0).astype(jnp.float32)
    q_i = item_emb[iids]
    q_a = item_emb[u_item_pad[:, :, 0]]
    er_u = rate_emb[u_item_pad[:, :, 1]]
    mask_u = (u_item_pad[:, :, 0] > 0).astype(jnp.float32)
    p_u = user_emb[uids]

    # parameters (deterministic; same list layout as the reference expects)
    wkeys = jax.random.split(keys[11], 16)
    w1 = _init_linear(wkeys[0], D, D)
    gu1 = _init_linear(wkeys[1], 2 * D, D); gu2 = _init_linear(wkeys[2], D, D)
    gv1 = _init_linear(wkeys[3], 2 * D, D); gv2 = _init_linear(wkeys[4], D, D)
    ai1 = _init_linear(wkeys[5], 2 * D, D); ai2 = _init_linear(wkeys[6], D, 1)
    agi = _init_linear(wkeys[7], D, D)
    au1 = _init_linear(wkeys[8], 2 * D, D); au2 = _init_linear(wkeys[9], D, 1)
    agu = _init_linear(wkeys[10], D, D)
    c1 = _init_linear(wkeys[11], 3 * D, 2 * D); bn1 = _init_bn(wkeys[12], 2 * D)
    c2 = _init_linear(wkeys[13], 2 * D, D);     bn2 = _init_bn(wkeys[14], D)
    c3 = _init_linear(wkeys[15], D, D)

    weights = [*w1, *gu1, *gu2, *gv1, *gv2, *ai1, *ai2, *agi,
               *au1, *au2, *agu, *c1, *bn1, *c2, *bn2, *c3]

    out = item_model_forward(p_t, er_i, mask_i, q_i, q_a, er_u, mask_u, p_u, weights)
    out = jax.block_until_ready(out)

    ref = ref_forward(p_t, er_i, mask_i, q_i, q_a, er_u, mask_u, p_u, weights)
    # tolerance covers bf16 matmul operands, the approx-reciprocal softmax and
    # the (mathematically exact) weight folding / restructuring
    np.testing.assert_allclose(np.asarray(out), np.asarray(ref), rtol=3e-2, atol=5e-3)

    print("KERNEL_OK")
</pallas_src>

<mosaic_0001>
module attributes {stable_mosaic.version = 11 : i64} {
  func.func @item_model_kernel(%arg0: i32, %arg1: memref<64x8x128xbf16, #tpu.memory_space<vmem>>, %arg2: memref<64x64xbf16, #tpu.memory_space<vmem>>, %arg3: memref<64x16xf32, #tpu.memory_space<vmem>>, %arg4: memref<192x96xbf16, #tpu.memory_space<vmem>>, %arg5: memref<160x64xbf16, #tpu.memory_space<vmem>>, %arg6: memref<160x32xbf16, #tpu.memory_space<vmem>>, %arg7: memref<2x64xf32, #tpu.memory_space<vmem>>, %arg8: memref<11x32xf32, #tpu.memory_space<vmem>>, %arg9: memref<2xf32, #tpu.memory_space<smem>>, %arg10: memref<64x32xf32, #tpu.memory_space<vmem>>) attributes {dimension_semantics = [#tpu.dimension_semantics<parallel>], iteration_bounds = array<i64: 2>, scalar_prefetch = 0 : i64, scratch_operands = 0 : i64, tpu.core_type = #tpu.core_type<tc>, window_params = [{transform_indices = @transform_0, window_bounds = array<i64: 64, 8, 128>}, {transform_indices = @transform_1, window_bounds = array<i64: 64, 64>}, {transform_indices = @transform_2, window_bounds = array<i64: 64, 16>}, {pipeline_mode = #tpu.pipeline_mode<synchronous>, transform_indices = @transform_3, window_bounds = array<i64: 192, 96>}, {pipeline_mode = #tpu.pipeline_mode<synchronous>, transform_indices = @transform_4, window_bounds = array<i64: 160, 64>}, {pipeline_mode = #tpu.pipeline_mode<synchronous>, transform_indices = @transform_5, window_bounds = array<i64: 160, 32>}, {pipeline_mode = #tpu.pipeline_mode<synchronous>, transform_indices = @transform_6, window_bounds = array<i64: 2, 64>}, {pipeline_mode = #tpu.pipeline_mode<synchronous>, transform_indices = @transform_7, window_bounds = array<i64: 11, 32>}, {transform_indices = @transform_8, window_bounds = array<i64: 2>}, {transform_indices = @transform_9, window_bounds = array<i64: 64, 32>}]} {
    %c0 = arith.constant 0 : index
    %c0_0 = arith.constant 0 : index
    %c0_1 = arith.constant 0 : index
    %0 = vector.load %arg1[%c0, %c0_0, %c0_1] : memref<64x8x128xbf16, #tpu.memory_space<vmem>>, vector<64x8x128xbf16>
    %1 = vector.shape_cast %0 : vector<64x8x128xbf16> to vector<512x128xbf16>
    %c0_2 = arith.constant 0 : index
    %c0_3 = arith.constant 0 : index
    %2 = vector.load %arg3[%c0_2, %c0_3] : memref<64x16xf32, #tpu.memory_space<vmem>>, vector<64x16xf32>
    %3 = vector.extract_strided_slice %2 {offsets = [0, 0], sizes = [64, 8], strides = [1, 1]} : vector<64x16xf32> to vector<64x8xf32>
    %4 = vector.extract_strided_slice %2 {offsets = [0, 8], sizes = [64, 8], strides = [1, 1]} : vector<64x16xf32> to vector<64x8xf32>
    %c0_4 = arith.constant 0 : index
    %c0_5 = arith.constant 0 : index
    %5 = vector.load %arg4[%c0_4, %c0_5] : memref<192x96xbf16, #tpu.memory_space<vmem>>, vector<128x96xbf16>
    %cst = arith.constant dense<0.000000e+00> : vector<512x96xf32>
    %6 = tpu.matmul %1, %5, %cst {dimension_numbers = #tpu.dot_dimension_numbers<[1], [0], [0], [1], [0, 0, 1, 1], [], []>} : vector<512x128xbf16>, vector<128x96xbf16>, vector<512x96xf32> -> vector<512x96xf32>
    %7 = vector.extract_strided_slice %6 {offsets = [0, 0], sizes = [512, 64], strides = [1, 1]} : vector<512x96xf32> to vector<512x64xf32>
    %c0_6 = arith.constant 0 : index
    %c0_7 = arith.constant 0 : index
    %8 = vector.load %arg7[%c0_6, %c0_7] : memref<2x64xf32, #tpu.memory_space<vmem>>, vector<1x64xf32>
    %9 = vector.broadcast %8 : vector<1x64xf32> to vector<512x64xf32>
    %10 = arith.addf %7, %9 : vector<512x64xf32>
    %cst_8 = arith.constant 2.000000e-01 : f32
    %11 = vector.broadcast %cst_8 : f32 to vector<512x64xf32>
    %12 = arith.mulf %11, %10 : vector<512x64xf32>
    %13 = arith.maximumf %10, %12 : vector<512x64xf32>
    %14 = vector.extract_strided_slice %6 {offsets = [0, 64], sizes = [512, 32], strides = [1, 1]} : vector<512x96xf32> to vector<512x32xf32>
    %c128 = arith.constant 128 : index
    %c0_9 = arith.constant 0 : index
    %15 = vector.load %arg4[%c128, %c0_9] : memref<192x96xbf16, #tpu.memory_space<vmem>>, vector<64x96xbf16>
    %16 = arith.truncf %13 : vector<512x64xf32> to vector<512x64xbf16>
    %cst_10 = arith.constant dense<0.000000e+00> : vector<512x96xf32>
    %17 = tpu.matmul %16, %15, %cst_10 {dimension_numbers = #tpu.dot_dimension_numbers<[1], [0], [0], [1], [0, 0, 1, 1], [], []>} : vector<512x64xbf16>, vector<64x96xbf16>, vector<512x96xf32> -> vector<512x96xf32>
    %18 = vector.extract_strided_slice %17 {offsets = [0, 0], sizes = [512, 32], strides = [1, 1]} : vector<512x96xf32> to vector<512x32xf32>
    %c0_11 = arith.constant 0 : index
    %c0_12 = arith.constant 0 : index
    %19 = vector.load %arg8[%c0_11, %c0_12] : memref<11x32xf32, #tpu.memory_space<vmem>>, vector<1x32xf32>
    %20 = vector.broadcast %19 : vector<1x32xf32> to vector<512x32xf32>
    %21 = arith.addf %18, %20 : vector<512x32xf32>
    %22 = vector.extract_strided_slice %17 {offsets = [0, 32], sizes = [512, 32], strides = [1, 1]} : vector<512x96xf32> to vector<512x32xf32>
    %c1 = arith.constant 1 : index
    %c0_13 = arith.constant 0 : index
    %23 = vector.load %arg8[%c1, %c0_13] : memref<11x32xf32, #tpu.memory_space<vmem>>, vector<1x32xf32>
    %24 = vector.broadcast %23 : vector<1x32xf32> to vector<512x32xf32>
    %25 = arith.addf %22, %24 : vector<512x32xf32>
    %26 = vector.extract_strided_slice %17 {offsets = [0, 64], sizes = [512, 32], strides = [1, 1]} : vector<512x96xf32> to vector<512x32xf32>
    %c0_14 = arith.constant 0 : index
    %c0_15 = arith.constant 0 : index
    %27 = vector.load %arg2[%c0_14, %c0_15] : memref<64x64xbf16, #tpu.memory_space<vmem>>, vector<64x64xbf16>
    %c0_16 = arith.constant 0 : index
    %c0_17 = arith.constant 0 : index
    %28 = vector.load %arg5[%c0_16, %c0_17] : memref<160x64xbf16, #tpu.memory_space<vmem>>, vector<64x64xbf16>
    %cst_18 = arith.constant dense<0.000000e+00> : vector<64x64xf32>
    %29 = tpu.matmul %27, %28, %cst_18 {dimension_numbers = #tpu.dot_dimension_numbers<[1], [0], [0], [1], [0, 0, 1, 1], [], []>} : vector<64x64xbf16>, vector<64x64xbf16>, vector<64x64xf32> -> vector<64x64xf32>
    %30 = vector.extract_strided_slice %29 {offsets = [0, 0], sizes = [64, 32], strides = [1, 1]} : vector<64x64xf32> to vector<64x32xf32>
    %c2 = arith.constant 2 : index
    %c0_19 = arith.constant 0 : index
    %31 = vector.load %arg8[%c2, %c0_19] : memref<11x32xf32, #tpu.memory_space<vmem>>, vector<1x32xf32>
    %c9 = arith.constant 9 : index
    %c0_20 = arith.constant 0 : index
    %32 = vector.load %arg8[%c9, %c0_20] : memref<11x32xf32, #tpu.memory_space<vmem>>, vector<1x32xf32>
    %c0_21 = arith.constant 0 : index
    %33 = memref.load %arg9[%c0_21] : memref<2xf32, #tpu.memory_space<smem>>
    %34 = vector.shape_cast %14 : vector<512x32xf32> to vector<64x8x32xf32>
    %35 = vector.shape_cast %3 : vector<64x8xf32> to vector<64x8x1xf32>
    %36 = vector.shape_cast %30 : vector<64x32xf32> to vector<64x1x32xf32>
    %37 = vector.broadcast %35 : vector<64x8x1xf32> to vector<64x8x32xf32>
    %38 = vector.broadcast %36 : vector<64x1x32xf32> to vector<64x8x32xf32>
    %39 = arith.mulf %37, %38 : vector<64x8x32xf32>
    %40 = arith.addf %34, %39 : vector<64x8x32xf32>
    %41 = vector.shape_cast %31 : vector<1x32xf32> to vector<1x1x32xf32>
    %42 = vector.broadcast %41 : vector<1x1x32xf32> to vector<64x8x32xf32>
    %43 = arith.addf %40, %42 : vector<64x8x32xf32>
    %cst_22 = arith.constant 2.000000e-01 : f32
    %44 = vector.broadcast %cst_22 : f32 to vector<64x8x32xf32>
    %45 = arith.mulf %44, %43 : vector<64x8x32xf32>
    %46 = arith.maximumf %43, %45 : vector<64x8x32xf32>
    %47 = vector.shape_cast %32 : vector<1x32xf32> to vector<1x1x32xf32>
    %48 = vector.broadcast %47 : vector<1x1x32xf32> to vector<64x8x32xf32>
    %49 = arith.mulf %46, %48 : vector<64x8x32xf32>
    %cst_23 = arith.constant dense<0.000000e+00> : vector<64x8xf32>
    %50 = vector.multi_reduction <add>, %49, %cst_23 [2] : vector<64x8x32xf32> to vector<64x8xf32>
    %51 = vector.broadcast %33 : f32 to vector<64x8xf32>
    %52 = arith.addf %50, %51 : vector<64x8xf32>
    %53 = math.exp %52 : vector<64x8xf32>
    %54 = arith.mulf %53, %3 : vector<64x8xf32>
    %cst_24 = arith.constant dense<0.000000e+00> : vector<64xf32>
    %55 = vector.multi_reduction <add>, %54, %cst_24 [1] : vector<64x8xf32> to vector<64xf32>
    %56 = vector.shape_cast %55 : vector<64xf32> to vector<64x1xf32>
    %cst_25 = arith.constant 1.000000e-10 : f32
    %57 = vector.broadcast %cst_25 : f32 to vector<64x1xf32>
    %58 = arith.addf %56, %57 : vector<64x1xf32>
    %59 = tpu.reciprocal %58 {approx = true} : vector<64x1xf32> -> vector<64x1xf32>
    %60 = vector.broadcast %59 : vector<64x1xf32> to vector<64x8xf32>
    %61 = arith.mulf %54, %60 : vector<64x8xf32>
    %62 = vector.extract_strided_slice %29 {offsets = [0, 32], sizes = [64, 32], strides = [1, 1]} : vector<64x64xf32> to vector<64x32xf32>
    %c3 = arith.constant 3 : index
    %c0_26 = arith.constant 0 : index
    %63 = vector.load %arg8[%c3, %c0_26] : memref<11x32xf32, #tpu.memory_space<vmem>>, vector<1x32xf32>
    %c10 = arith.constant 10 : index
    %c0_27 = arith.constant 0 : index
    %64 = vector.load %arg8[%c10, %c0_27] : memref<11x32xf32, #tpu.memory_space<vmem>>, vector<1x32xf32>
    %c1_28 = arith.constant 1 : index
    %65 = memref.load %arg9[%c1_28] : memref<2xf32, #tpu.memory_space<smem>>
    %66 = vector.shape_cast %26 : vector<512x32xf32> to vector<64x8x32xf32>
    %67 = vector.shape_cast %4 : vector<64x8xf32> to vector<64x8x1xf32>
    %68 = vector.shape_cast %62 : vector<64x32xf32> to vector<64x1x32xf32>
    %69 = vector.broadcast %67 : vector<64x8x1xf32> to vector<64x8x32xf32>
    %70 = vector.broadcast %68 : vector<64x1x32xf32> to vector<64x8x32xf32>
    %71 = arith.mulf %69, %70 : vector<64x8x32xf32>
    %72 = arith.addf %66, %71 : vector<64x8x32xf32>
    %73 = vector.shape_cast %63 : vector<1x32xf32> to vector<1x1x32xf32>
    %74 = vector.broadcast %73 : vector<1x1x32xf32> to vector<64x8x32xf32>
    %75 = arith.addf %72, %74 : vector<64x8x32xf32>
    %cst_29 = arith.constant 2.000000e-01 : f32
    %76 = vector.broadcast %cst_29 : f32 to vector<64x8x32xf32>
    %77 = arith.mulf %76, %75 : vector<64x8x32xf32>
    %78 = arith.maximumf %75, %77 : vector<64x8x32xf32>
    %79 = vector.shape_cast %64 : vector<1x32xf32> to vector<1x1x32xf32>
    %80 = vector.broadcast %79 : vector<1x1x32xf32> to vector<64x8x32xf32>
    %81 = arith.mulf %78, %80 : vector<64x8x32xf32>
    %cst_30 = arith.constant dense<0.000000e+00> : vector<64x8xf32>
    %82 = vector.multi_reduction <add>, %81, %cst_30 [2] : vector<64x8x32xf32> to vector<64x8xf32>
    %83 = vector.broadcast %65 : f32 to vector<64x8xf32>
    %84 = arith.addf %82, %83 : vector<64x8xf32>
    %85 = math.exp %84 : vector<64x8xf32>
    %86 = arith.mulf %85, %4 : vector<64x8xf32>
    %cst_31 = arith.constant dense<0.000000e+00> : vector<64xf32>
    %87 = vector.multi_reduction <add>, %86, %cst_31 [1] : vector<64x8xf32> to vector<64xf32>
    %88 = vector.shape_cast %87 : vector<64xf32> to vector<64x1xf32>
    %cst_32 = arith.constant 1.000000e-10 : f32
    %89 = vector.broadcast %cst_32 : f32 to vector<64x1xf32>
    %90 = arith.addf %88, %89 : vector<64x1xf32>
    %91 = tpu.reciprocal %90 {approx = true} : vector<64x1xf32> -> vector<64x1xf32>
    %92 = vector.broadcast %91 : vector<64x1xf32> to vector<64x8xf32>
    %93 = arith.mulf %86, %92 : vector<64x8xf32>
    %94 = vector.shape_cast %61 : vector<64x8xf32> to vector<64x8x1xf32>
    %95 = vector.shape_cast %21 : vector<512x32xf32> to vector<64x8x32xf32>
    %96 = vector.broadcast %94 : vector<64x8x1xf32> to vector<64x8x32xf32>
    %97 = arith.mulf %96, %95 : vector<64x8x32xf32>
    %cst_33 = arith.constant dense<0.000000e+00> : vector<64x32xf32>
    %98 = vector.multi_reduction <add>, %97, %cst_33 [1] : vector<64x8x32xf32> to vector<64x32xf32>
    %cst_34 = arith.constant dense<0.000000e+00> : vector<64xf32>
    %99 = vector.multi_reduction <add>, %61, %cst_34 [1] : vector<64x8xf32> to vector<64xf32>
    %100 = vector.shape_cast %99 : vector<64xf32> to vector<64x1xf32>
    %c0_35 = arith.constant 0 : index
    %c0_36 = arith.constant 0 : index
    %101 = vector.load %arg6[%c0_35, %c0_36] : memref<160x32xbf16, #tpu.memory_space<vmem>>, vector<32x32xbf16>
    %102 = arith.truncf %98 : vector<64x32xf32> to vector<64x32xbf16>
    %cst_37 = arith.constant dense<0.000000e+00> : vector<64x32xf32>
    %103 = tpu.matmul %102, %101, %cst_37 {dimension_numbers = #tpu.dot_dimension_numbers<[1], [0], [0], [1], [0, 0, 1, 1], [], []>} : vector<64x32xbf16>, vector<32x32xbf16>, vector<64x32xf32> -> vector<64x32xf32>
    %c4 = arith.constant 4 : index
    %c0_38 = arith.constant 0 : index
    %104 = vector.load %arg8[%c4, %c0_38] : memref<11x32xf32, #tpu.memory_space<vmem>>, vector<1x32xf32>
    %105 = vector.broadcast %100 : vector<64x1xf32> to vector<64x32xf32>
    %106 = vector.broadcast %104 : vector<1x32xf32> to vector<64x32xf32>
    %107 = arith.mulf %105, %106 : vector<64x32xf32>
    %108 = arith.addf %103, %107 : vector<64x32xf32>
    %c5 = arith.constant 5 : index
    %c0_39 = arith.constant 0 : index
    %109 = vector.load %arg8[%c5, %c0_39] : memref<11x32xf32, #tpu.memory_space<vmem>>, vector<1x32xf32>
    %110 = vector.broadcast %109 : vector<1x32xf32> to vector<64x32xf32>
    %111 = arith.addf %108, %110 : vector<64x32xf32>
    %cst_40 = arith.constant 0.000000e+00 : f32
    %112 = vector.broadcast %cst_40 : f32 to vector<64x32xf32>
    %113 = arith.maximumf %111, %112 : vector<64x32xf32>
    %114 = vector.shape_cast %93 : vector<64x8xf32> to vector<64x8x1xf32>
    %115 = vector.shape_cast %25 : vector<512x32xf32> to vector<64x8x32xf32>
    %116 = vector.broadcast %114 : vector<64x8x1xf32> to vector<64x8x32xf32>
    %117 = arith.mulf %116, %115 : vector<64x8x32xf32>
    %cst_41 = arith.constant dense<0.000000e+00> : vector<64x32xf32>
    %118 = vector.multi_reduction <add>, %117, %cst_41 [1] : vector<64x8x32xf32> to vector<64x32xf32>
    %c32 = arith.constant 32 : index
    %c0_42 = arith.constant 0 : index
    %119 = vector.load %arg6[%c32, %c0_42] : memref<160x32xbf16, #tpu.memory_space<vmem>>, vector<32x32xbf16>
    %120 = arith.truncf %118 : vector<64x32xf32> to vector<64x32xbf16>
    %cst_43 = arith.constant dense<0.000000e+00> : vector<64x32xf32>
    %121 = tpu.matmul %120, %119, %cst_43 {dimension_numbers = #tpu.dot_dimension_numbers<[1], [0], [0], [1], [0, 0, 1, 1], [], []>} : vector<64x32xbf16>, vector<32x32xbf16>, vector<64x32xf32> -> vector<64x32xf32>
    %c6 = arith.constant 6 : index
    %c0_44 = arith.constant 0 : index
    %122 = vector.load %arg8[%c6, %c0_44] : memref<11x32xf32, #tpu.memory_space<vmem>>, vector<1x32xf32>
    %123 = vector.broadcast %122 : vector<1x32xf32> to vector<64x32xf32>
    %124 = arith.addf %121, %123 : vector<64x32xf32>
    %cst_45 = arith.constant 0.000000e+00 : f32
    %125 = vector.broadcast %cst_45 : f32 to vector<64x32xf32>
    %126 = arith.maximumf %124, %125 : vector<64x32xf32>
    %127 = arith.mulf %113, %126 : vector<64x32xf32>
    %c64 = arith.constant 64 : index
    %c0_46 = arith.constant 0 : index
    %128 = vector.load %arg5[%c64, %c0_46] : memref<160x64xbf16, #tpu.memory_space<vmem>>, vector<32x64xbf16>
    %129 = arith.truncf %127 : vector<64x32xf32> to vector<64x32xbf16>
    %cst_47 = arith.constant dense<0.000000e+00> : vector<64x64xf32>
    %130 = tpu.matmul %129, %128, %cst_47 {dimension_numbers = #tpu.dot_dimension_numbers<[1], [0], [0], [1], [0, 0, 1, 1], [], []>} : vector<64x32xbf16>, vector<32x64xbf16>, vector<64x64xf32> -> vector<64x64xf32>
    %c96 = arith.constant 96 : index
    %c0_48 = arith.constant 0 : index
    %131 = vector.load %arg5[%c96, %c0_48] : memref<160x64xbf16, #tpu.memory_space<vmem>>, vector<32x64xbf16>
    %132 = arith.truncf %113 : vector<64x32xf32> to vector<64x32xbf16>
    %cst_49 = arith.constant dense<0.000000e+00> : vector<64x64xf32>
    %133 = tpu.matmul %132, %131, %cst_49 {dimension_numbers = #tpu.dot_dimension_numbers<[1], [0], [0], [1], [0, 0, 1, 1], [], []>} : vector<64x32xbf16>, vector<32x64xbf16>, vector<64x64xf32> -> vector<64x64xf32>
    %134 = arith.addf %130, %133 : vector<64x64xf32>
    %c128_50 = arith.constant 128 : index
    %c0_51 = arith.constant 0 : index
    %135 = vector.load %arg5[%c128_50, %c0_51] : memref<160x64xbf16, #tpu.memory_space<vmem>>, vector<32x64xbf16>
    %136 = arith.truncf %126 : vector<64x32xf32> to vector<64x32xbf16>
    %cst_52 = arith.constant dense<0.000000e+00> : vector<64x64xf32>
    %137 = tpu.matmul %136, %135, %cst_52 {dimension_numbers = #tpu.dot_dimension_numbers<[1], [0], [0], [1], [0, 0, 1, 1], [], []>} : vector<64x32xbf16>, vector<32x64xbf16>, vector<64x64xf32> -> vector<64x64xf32>
    %138 = arith.addf %134, %137 : vector<64x64xf32>
    %c1_53 = arith.constant 1 : index
    %c0_54 = arith.constant 0 : index
    %139 = vector.load %arg7[%c1_53, %c0_54] : memref<2x64xf32, #tpu.memory_space<vmem>>, vector<1x64xf32>
    %140 = vector.broadcast %139 : vector<1x64xf32> to vector<64x64xf32>
    %141 = arith.addf %138, %140 : vector<64x64xf32>
    %cst_55 = arith.constant 0.000000e+00 : f32
    %142 = vector.broadcast %cst_55 : f32 to vector<64x64xf32>
    %143 = arith.maximumf %141, %142 : vector<64x64xf32>
    %c64_56 = arith.constant 64 : index
    %c0_57 = arith.constant 0 : index
    %144 = vector.load %arg6[%c64_56, %c0_57] : memref<160x32xbf16, #tpu.memory_space<vmem>>, vector<64x32xbf16>
    %145 = arith.truncf %143 : vector<64x64xf32> to vector<64x64xbf16>
    %cst_58 = arith.constant dense<0.000000e+00> : vector<64x32xf32>
    %146 = tpu.matmul %145, %144, %cst_58 {dimension_numbers = #tpu.dot_dimension_numbers<[1], [0], [0], [1], [0, 0, 1, 1], [], []>} : vector<64x64xbf16>, vector<64x32xbf16>, vector<64x32xf32> -> vector<64x32xf32>
    %c7 = arith.constant 7 : index
    %c0_59 = arith.constant 0 : index
    %147 = vector.load %arg8[%c7, %c0_59] : memref<11x32xf32, #tpu.memory_space<vmem>>, vector<1x32xf32>
    %148 = vector.broadcast %147 : vector<1x32xf32> to vector<64x32xf32>
    %149 = arith.addf %146, %148 : vector<64x32xf32>
    %cst_60 = arith.constant 0.000000e+00 : f32
    %150 = vector.broadcast %cst_60 : f32 to vector<64x32xf32>
    %151 = arith.maximumf %149, %150 : vector<64x32xf32>
    %c128_61 = arith.constant 128 : index
    %c0_62 = arith.constant 0 : index
    %152 = vector.load %arg6[%c128_61, %c0_62] : memref<160x32xbf16, #tpu.memory_space<vmem>>, vector<32x32xbf16>
    %153 = arith.truncf %151 : vector<64x32xf32> to vector<64x32xbf16>
    %cst_63 = arith.constant dense<0.000000e+00> : vector<64x32xf32>
    %154 = tpu.matmul %153, %152, %cst_63 {dimension_numbers = #tpu.dot_dimension_numbers<[1], [0], [0], [1], [0, 0, 1, 1], [], []>} : vector<64x32xbf16>, vector<32x32xbf16>, vector<64x32xf32> -> vector<64x32xf32>
    %c8 = arith.constant 8 : index
    %c0_64 = arith.constant 0 : index
    %155 = vector.load %arg8[%c8, %c0_64] : memref<11x32xf32, #tpu.memory_space<vmem>>, vector<1x32xf32>
    %156 = vector.broadcast %155 : vector<1x32xf32> to vector<64x32xf32>
    %157 = arith.addf %154, %156 : vector<64x32xf32>
    %c0_65 = arith.constant 0 : index
    %c0_66 = arith.constant 0 : index
    %158 = vector.load %arg10[%c0_65, %c0_66] : memref<64x32xf32, #tpu.memory_space<vmem>>, vector<64x32xf32>
    tpu.vector_store %arg10[%c0_65, %c0_66], %157 {strides = array<i32>} : memref<64x32xf32, #tpu.memory_space<vmem>>, vector<64x32xf32>,
    return
  }
  func.func @transform_0(%arg0: i32) -> (i32, i32, i32) {
    %c0_i32 = arith.constant 0 : i32
    %c0_i32_0 = arith.constant 0 : i32
    %c0_i32_1 = arith.constant 0 : i32
    return %arg0, %c0_i32, %c0_i32_0 : i32, i32, i32
  }
  func.func @transform_1(%arg0: i32) -> (i32, i32) {
    %c0_i32 = arith.constant 0 : i32
    %c0_i32_0 = arith.constant 0 : i32
    return %arg0, %c0_i32 : i32, i32
  }
  func.func @transform_2(%arg0: i32) -> (i32, i32) {
    %c0_i32 = arith.constant 0 : i32
    %c0_i32_0 = arith.constant 0 : i32
    return %arg0, %c0_i32 : i32, i32
  }
  func.func @transform_3(%arg0: i32) -> (i32, i32) {
    %c0_i32 = arith.constant 0 : i32
    %c0_i32_0 = arith.constant 0 : i32
    %c0_i32_1 = arith.constant 0 : i32
    return %c0_i32, %c0_i32_0 : i32, i32
  }
  func.func @transform_4(%arg0: i32) -> (i32, i32) {
    %c0_i32 = arith.constant 0 : i32
    %c0_i32_0 = arith.constant 0 : i32
    %c0_i32_1 = arith.constant 0 : i32
    return %c0_i32, %c0_i32_0 : i32, i32
  }
  func.func @transform_5(%arg0: i32) -> (i32, i32) {
    %c0_i32 = arith.constant 0 : i32
    %c0_i32_0 = arith.constant 0 : i32
    %c0_i32_1 = arith.constant 0 : i32
    return %c0_i32, %c0_i32_0 : i32, i32
  }
  func.func @transform_6(%arg0: i32) -> (i32, i32) {
    %c0_i32 = arith.constant 0 : i32
    %c0_i32_0 = arith.constant 0 : i32
    %c0_i32_1 = arith.constant 0 : i32
    return %c0_i32, %c0_i32_0 : i32, i32
  }
  func.func @transform_7(%arg0: i32) -> (i32, i32) {
    %c0_i32 = arith.constant 0 : i32
    %c0_i32_0 = arith.constant 0 : i32
    %c0_i32_1 = arith.constant 0 : i32
    return %c0_i32, %c0_i32_0 : i32, i32
  }
  func.func @transform_8(%arg0: i32) -> i32 {
    %c0_i32 = arith.constant 0 : i32
    %c0_i32_0 = arith.constant 0 : i32
    return %c0_i32 : i32
  }
  func.func @transform_9(%arg0: i32) -> (i32, i32) {
    %c0_i32 = arith.constant 0 : i32
    %c0_i32_0 = arith.constant 0 : i32
    return %arg0, %c0_i32 : i32, i32
  }
}

</mosaic_0001>

<llo_original>
// kernel: tpu_custom_call.1
$region0: #{tpu_custom_call.1}
  #allocation0 [shape = 'u32[]', space=smem, size = 0x4, offset = 0x4, fixed_abs, tag = 'smem constant byte address 0x4 - core index']
  #allocation1 [shape = 'u32[72,128]{1,0:T(1,128)}', space=vmem, size = 0x9000, scoped, tag = 'internal scratch']
  %s0 = inlined_call_operand.hbm [shape: bf16[128,8,128], index: 0, kind: input, shape index: {}]
  %s1 = inlined_call_operand.vmem [shape: bf16[128,64], index: 1, kind: input, shape index: {}]
  %s2 = inlined_call_operand.vmem [shape: f32[128,16], index: 2, kind: input, shape index: {}]
  %s3 = inlined_call_operand.vmem [shape: bf16[192,96], index: 3, kind: input, shape index: {}]
  %s4 = inlined_call_operand.vmem [shape: bf16[160,64], index: 4, kind: input, shape index: {}]
  %s5 = inlined_call_operand.vmem [shape: bf16[160,32], index: 5, kind: input, shape index: {}]
  %s6 = inlined_call_operand.vmem [shape: f32[2,64], index: 6, kind: input, shape index: {}]
  %s7 = inlined_call_operand.vmem [shape: f32[11,32], index: 7, kind: input, shape index: {}]
  %s8 = inlined_call_operand.vmem [shape: f32[2], index: 8, kind: input, shape index: {}]
  %s9 = inlined_call_operand.vmem [shape: f32[128,32], index: 9, kind: output, shape index: {}]
  %s10 = sld [smem:[#allocation0]]
  $region77: #{tpu_custom_call.1} parent=0
    _
  %s12 = ssub.s32 1, %s10
  %s13 = scalar_select 0, %s12, %s10
  $region1: #{tpu_custom_call.1} parent=0
    #allocation2 [shape = 'u8[262144]{0}', space=vmem, size = 0x40000, scoped, tag = 'input window, operand 0']
    #allocation3 [shape = 's32[2]{0}', space=sflag, size = 0x8, scoped, tag = 'scoped memory for tpu_custom_call.1']
    #allocation4 [shape = 's32[2]{0}', space=sflag, size = 0x8, scoped, tag = 'scoped memory for tpu_custom_call.1']
    #allocation5 [shape = 'u8[512]{0}', space=smem, size = 0x200, scoped, tag = 'input window, operand 8, single buffered']
    %14 = vsyncpa [#allocation3], 0
    %s15 = scalar_lea.sflag [#allocation3], 1
    %16 = vsyncpa %s15, 0
    %17 = vsyncpa [#allocation4], 0
    loop: start=0, step=1, limit=4
    $region2: #{tpu_custom_call.1} parent=1 // loop_pre_header
      _
    $region3: #{tpu_custom_call.1} parent=1 // loop_header
      %s19 = sphi 0, %s23
      %p20 = scmp.ge.s32.totalorder %s19, 4
      %s29 = sphi 0, %s31
      %s32 = sphi 0, %s29
      %s33 = sphi 0, %s32
      %s49 = sphi 0, %s33
      %s55 = sphi 0, %s57
      %s58 = sphi 0, %s55
      %s59 = sphi 0, %s58
      %s75 = sphi 0, %s59
      %s81 = sphi 0, %s83
      %s84 = sphi 0, %s81
      %s85 = sphi 0, %s84
      %s101 = sphi 0, %s85
      %s105 = sphi 0, %s105
      %s107 = sphi 0, %s105
      %s108 = sphi 0, %s107
      %s122 = sphi 0, %s108
      %s126 = sphi 0, %s126
      %s128 = sphi 0, %s126
      %s129 = sphi 0, %s128
      %s143 = sphi 0, %s129
      %s147 = sphi 0, %s147
      %s149 = sphi 0, %s147
      %s150 = sphi 0, %s149
      %s164 = sphi 0, %s150
      %s168 = sphi 0, %s168
      %s170 = sphi 0, %s168
      %s171 = sphi 0, %s170
      %s185 = sphi 0, %s171
      %s189 = sphi 0, %s189
      %s191 = sphi 0, %s189
      %s192 = sphi 0, %s191
      %s206 = sphi 0, %s192
      %s210 = sphi 0, %s210
      %s212 = sphi 0, %s210
      %s213 = sphi 0, %s212
      %s227 = sphi 0, %s213
      %s233 = sphi 0, %s235
      %s236 = sphi 0, %s233
      %s237 = sphi 0, %s236
      %s253 = sphi 0, %s237
    $region4: #{tpu_custom_call.1} parent=1 // loop_header_branch
      %22 = sbr.rel (%p20) target = $region8
    $region5: #{tpu_custom_call.1} parent=1 // loop_body
      %s24 = ssub.s32 %s19, 1
      %s25 = ssub.s32 %s19, 2
      %s26 = sadd.s32 %s19, 1
      %s27 = ssub.s32 %s19, %s26
      %p28 = scmp.eq.s32.totalorder %s27, 0
      %s30 = sadd.s32 %s29, 1
      %s31 = scalar_select %p28, %s29, %s30
      %p34 = pneg %p28
      %p35 = scmp.eq.s32.totalorder %s19, 1
      %p36 = por %p34, %p35
      %p37 = scmp.ne.s32.totalorder %s29, %s32
      %p38 = scmp.eq.s32.totalorder %s19, 0
      %p39 = por %p37, %p38
      %p40 = scmp.ne.s32.totalorder %s29, %s32
      %p41 = scmp.eq.s32.totalorder %s24, 1
      %p42 = por %p40, %p41
      %p43 = scmp.ne.s32.totalorder %s32, %s33
      %p44 = scmp.eq.s32.totalorder %s24, 0
      %p45 = por %p43, %p44
      %p46 = scmp.ne.s32.totalorder %s32, %s33
      %p47 = scmp.eq.s32.totalorder %s25, 1
      %p48 = por %p46, %p47
      %p50 = scmp.ne.s32.totalorder %s33, %s49
      %p51 = scmp.eq.s32.totalorder %s25, 0
      %p52 = por %p50, %p51
      %s53 = ssub.s32 %s19, %s26
      %p54 = scmp.eq.s32.totalorder %s53, 0
      %s56 = sadd.s32 %s55, 1
      %s57 = scalar_select %p54, %s55, %s56
      %p60 = pneg %p54
      %p61 = scmp.eq.s32.totalorder %s19, 1
      %p62 = por %p60, %p61
      %p63 = scmp.ne.s32.totalorder %s55, %s58
      %p64 = scmp.eq.s32.totalorder %s19, 0
      %p65 = por %p63, %p64
      %p66 = scmp.ne.s32.totalorder %s55, %s58
      %p67 = scmp.eq.s32.totalorder %s24, 1
      %p68 = por %p66, %p67
      %p69 = scmp.ne.s32.totalorder %s58, %s59
      %p70 = scmp.eq.s32.totalorder %s24, 0
      %p71 = por %p69, %p70
      %p72 = scmp.ne.s32.totalorder %s58, %s59
      %p73 = scmp.eq.s32.totalorder %s25, 1
      %p74 = por %p72, %p73
      %p76 = scmp.ne.s32.totalorder %s59, %s75
      %p77 = scmp.eq.s32.totalorder %s25, 0
      %p78 = por %p76, %p77
      %s79 = ssub.s32 %s19, %s26
      %p80 = scmp.eq.s32.totalorder %s79, 0
      %s82 = sadd.s32 %s81, 1
      %s83 = scalar_select %p80, %s81, %s82
      %p86 = pneg %p80
      %p87 = scmp.eq.s32.totalorder %s19, 1
      %p88 = por %p86, %p87
      %p89 = scmp.ne.s32.totalorder %s81, %s84
      %p90 = scmp.eq.s32.totalorder %s19, 0
      %p91 = por %p89, %p90
      %p92 = scmp.ne.s32.totalorder %s81, %s84
      %p93 = scmp.eq.s32.totalorder %s24, 1
      %p94 = por %p92, %p93
      %p95 = scmp.ne.s32.totalorder %s84, %s85
      %p96 = scmp.eq.s32.totalorder %s24, 0
      %p97 = por %p95, %p96
      %p98 = scmp.ne.s32.totalorder %s84, %s85
      %p99 = scmp.eq.s32.totalorder %s25, 1
      %p100 = por %p98, %p99
      %p102 = scmp.ne.s32.totalorder %s85, %s101
      %p103 = scmp.eq.s32.totalorder %s25, 0
      %p104 = por %p102, %p103
      %s106 = sadd.s32 %s105, 1
      %p109 = scmp.eq.s32.totalorder %s19, 1
      %p110 = scmp.ne.s32.totalorder %s105, %s107
      %p111 = scmp.eq.s32.totalorder %s19, 0
      %p112 = por %p110, %p111
      %p113 = scmp.ne.s32.totalorder %s105, %s107
      %p114 = scmp.eq.s32.totalorder %s24, 1
      %p115 = por %p113, %p114
      %p116 = scmp.ne.s32.totalorder %s107, %s108
      %p117 = scmp.eq.s32.totalorder %s24, 0
      %p118 = por %p116, %p117
      %p119 = scmp.ne.s32.totalorder %s107, %s108
      %p120 = scmp.eq.s32.totalorder %s25, 1
      %p121 = por %p119, %p120
      %p123 = scmp.ne.s32.totalorder %s108, %s122
      %p124 = scmp.eq.s32.totalorder %s25, 0
      %p125 = por %p123, %p124
      %s127 = sadd.s32 %s126, 1
      %p130 = scmp.eq.s32.totalorder %s19, 1
      %p131 = scmp.ne.s32.totalorder %s126, %s128
      %p132 = scmp.eq.s32.totalorder %s19, 0
      %p133 = por %p131, %p132
      %p134 = scmp.ne.s32.totalorder %s126, %s128
      %p135 = scmp.eq.s32.totalorder %s24, 1
      %p136 = por %p134, %p135
      %p137 = scmp.ne.s32.totalorder %s128, %s129
      %p138 = scmp.eq.s32.totalorder %s24, 0
      %p139 = por %p137, %p138
      %p140 = scmp.ne.s32.totalorder %s128, %s129
      %p141 = scmp.eq.s32.totalorder %s25, 1
      %p142 = por %p140, %p141
      %p144 = scmp.ne.s32.totalorder %s129, %s143
      %p145 = scmp.eq.s32.totalorder %s25, 0
      %p146 = por %p144, %p145
      %s148 = sadd.s32 %s147, 1
      %p151 = scmp.eq.s32.totalorder %s19, 1
      %p152 = scmp.ne.s32.totalorder %s147, %s149
      %p153 = scmp.eq.s32.totalorder %s19, 0
      %p154 = por %p152, %p153
      %p155 = scmp.ne.s32.totalorder %s147, %s149
      %p156 = scmp.eq.s32.totalorder %s24, 1
      %p157 = por %p155, %p156
      %p158 = scmp.ne.s32.totalorder %s149, %s150
      %p159 = scmp.eq.s32.totalorder %s24, 0
      %p160 = por %p158, %p159
      %p161 = scmp.ne.s32.totalorder %s149, %s150
      %p162 = scmp.eq.s32.totalorder %s25, 1
      %p163 = por %p161, %p162
      %p165 = scmp.ne.s32.totalorder %s150, %s164
      %p166 = scmp.eq.s32.totalorder %s25, 0
      %p167 = por %p165, %p166
      %s169 = sadd.s32 %s168, 1
      %p172 = scmp.eq.s32.totalorder %s19, 1
      %p173 = scmp.ne.s32.totalorder %s168, %s170
      %p174 = scmp.eq.s32.totalorder %s19, 0
      %p175 = por %p173, %p174
      %p176 = scmp.ne.s32.totalorder %s168, %s170
      %p177 = scmp.eq.s32.totalorder %s24, 1
      %p178 = por %p176, %p177
      %p179 = scmp.ne.s32.totalorder %s170, %s171
      %p180 = scmp.eq.s32.totalorder %s24, 0
      %p181 = por %p179, %p180
      %p182 = scmp.ne.s32.totalorder %s170, %s171
      %p183 = scmp.eq.s32.totalorder %s25, 1
      %p184 = por %p182, %p183
      %p186 = scmp.ne.s32.totalorder %s171, %s185
      %p187 = scmp.eq.s32.totalorder %s25, 0
      %p188 = por %p186, %p187
      %s190 = sadd.s32 %s189, 1
      %p193 = scmp.eq.s32.totalorder %s19, 1
      %p194 = scmp.ne.s32.totalorder %s189, %s191
      %p195 = scmp.eq.s32.totalorder %s19, 0
      %p196 = por %p194, %p195
      %p197 = scmp.ne.s32.totalorder %s189, %s191
      %p198 = scmp.eq.s32.totalorder %s24, 1
      %p199 = por %p197, %p198
      %p200 = scmp.ne.s32.totalorder %s191, %s192
      %p201 = scmp.eq.s32.totalorder %s24, 0
      %p202 = por %p200, %p201
      %p203 = scmp.ne.s32.totalorder %s191, %s192
      %p204 = scmp.eq.s32.totalorder %s25, 1
      %p205 = por %p203, %p204
      %p207 = scmp.ne.s32.totalorder %s192, %s206
      %p208 = scmp.eq.s32.totalorder %s25, 0
      %p209 = por %p207, %p208
      %s211 = sadd.s32 %s210, 1
      %p214 = scmp.eq.s32.totalorder %s19, 1
      %p215 = scmp.ne.s32.totalorder %s210, %s212
      %p216 = scmp.eq.s32.totalorder %s19, 0
      %p217 = por %p215, %p216
      %p218 = scmp.ne.s32.totalorder %s210, %s212
      %p219 = scmp.eq.s32.totalorder %s24, 1
      %p220 = por %p218, %p219
      %p221 = scmp.ne.s32.totalorder %s212, %s213
      %p222 = scmp.eq.s32.totalorder %s24, 0
      %p223 = por %p221, %p222
      %p224 = scmp.ne.s32.totalorder %s212, %s213
      %p225 = scmp.eq.s32.totalorder %s25, 1
      %p226 = por %p224, %p225
      %p228 = scmp.ne.s32.totalorder %s213, %s227
      %p229 = scmp.eq.s32.totalorder %s25, 0
      %p230 = por %p228, %p229
      %s231 = ssub.s32 %s19, %s26
      %p232 = scmp.eq.s32.totalorder %s231, 0
      %s234 = sadd.s32 %s233, 1
      %s235 = scalar_select %p232, %s233, %s234
      %p238 = pneg %p232
      %p239 = scmp.eq.s32.totalorder %s19, 1
      %p240 = por %p238, %p239
      %p241 = scmp.ne.s32.totalorder %s233, %s236
      %p242 = scmp.eq.s32.totalorder %s19, 0
      %p243 = por %p241, %p242
      %p244 = scmp.ne.s32.totalorder %s233, %s236
      %p245 = scmp.eq.s32.totalorder %s24, 1
      %p246 = por %p244, %p245
      %p247 = scmp.ne.s32.totalorder %s236, %s237
      %p248 = scmp.eq.s32.totalorder %s24, 0
      %p249 = por %p247, %p248
      %p250 = scmp.ne.s32.totalorder %s236, %s237
      %p251 = scmp.eq.s32.totalorder %s25, 1
      %p252 = por %p250, %p251
      %p254 = scmp.ne.s32.totalorder %s237, %s253
      %p255 = scmp.eq.s32.totalorder %s25, 0
      %p256 = por %p254, %p255
      %p257 = scmp.le.s32.totalorder 1, %s19
      %p258 = scmp.lt.s32.totalorder %s19, 3
      %p259 = pnand %p257, %p258
      %p260 = pneg %p259
      // Predicated region
      $region9: #{tpu_custom_call.1} parent=5 // pred_check
        _
      $region10: #{tpu_custom_call.1} parent=5 // pred_check_branch
        %262 = sbr.rel (%p259) target = $region12
      $region11: #{tpu_custom_call.1} parent=5 // pred_region
        %s263 = ssub.s32 %s19, 1
        // Predicated region
        $region13: #{tpu_custom_call.1} parent=11 // pred_check
          %p264 = pneg %p118
        $region14: #{tpu_custom_call.1} parent=11 // pred_check_branch
          %266 = sbr.rel (%p264) target = $region16
        $region15: #{tpu_custom_call.1} parent=11 // pred_region
          _
        $region16: #{tpu_custom_call.1} parent=11 // pred_fallthru
          _
        // Predicated region
        $region17: #{tpu_custom_call.1} parent=11 // pred_check
          %p267 = pneg %p139
        $region18: #{tpu_custom_call.1} parent=11 // pred_check_branch
          %269 = sbr.rel (%p267) target = $region20
        $region19: #{tpu_custom_call.1} parent=11 // pred_region
          _
        $region20: #{tpu_custom_call.1} parent=11 // pred_fallthru
          _
        // Predicated region
        $region21: #{tpu_custom_call.1} parent=11 // pred_check
          %p270 = pneg %p160
        $region22: #{tpu_custom_call.1} parent=11 // pred_check_branch
          %272 = sbr.rel (%p270) target = $region24
        $region23: #{tpu_custom_call.1} parent=11 // pred_region
          _
        $region24: #{tpu_custom_call.1} parent=11 // pred_fallthru
          _
        // Predicated region
        $region25: #{tpu_custom_call.1} parent=11 // pred_check
          %p273 = pneg %p181
        $region26: #{tpu_custom_call.1} parent=11 // pred_check_branch
          %275 = sbr.rel (%p273) target = $region28
        $region27: #{tpu_custom_call.1} parent=11 // pred_region
          _
        $region28: #{tpu_custom_call.1} parent=11 // pred_fallthru
          _
        // Predicated region
        $region29: #{tpu_custom_call.1} parent=11 // pred_check
          %p276 = pneg %p202
        $region30: #{tpu_custom_call.1} parent=11 // pred_check_branch
          %278 = sbr.rel (%p276) target = $region32
        $region31: #{tpu_custom_call.1} parent=11 // pred_region
          _
        $region32: #{tpu_custom_call.1} parent=11 // pred_fallthru
          _
        // Predicated region
        $region33: #{tpu_custom_call.1} parent=11 // pred_check
          %p279 = pneg %p223
        $region34: #{tpu_custom_call.1} parent=11 // pred_check_branch
          %281 = sbr.rel (%p279) target = $region36
        $region35: #{tpu_custom_call.1} parent=11 // pred_region
          %283 = vsyncadd [#allocation4], 0
          %s285 = sshll.u32 %s8, 4
          %s286 = int_to_ptr.vmem [resolvable:$true] %s285
          %288 = dma.vmem_to_smem %s286, 16, [#allocation5], [#allocation4]
        $region36: #{tpu_custom_call.1} parent=11 // pred_fallthru
          _
      $region12: #{tpu_custom_call.1} parent=5 // pred_fallthru
        _
      %p289 = scmp.lt.s32.totalorder %s19, 2
      // Predicated region
      $region37: #{tpu_custom_call.1} parent=5 // pred_check
        %p290 = pneg %p289
      $region38: #{tpu_custom_call.1} parent=5 // pred_check_branch
        %292 = sbr.rel (%p290) target = $region40
      $region39: #{tpu_custom_call.1} parent=5 // pred_region
        // Predicated region
        $region41: #{tpu_custom_call.1} parent=39 // pred_check
          %p293 = pneg %p39
        $region42: #{tpu_custom_call.1} parent=39 // pred_check_branch
          %295 = sbr.rel (%p293) target = $region44
        $region43: #{tpu_custom_call.1} parent=39 // pred_region
          %s296 = sand.u32 %s29, 1
          %s297 = scalar_lea.sflag [#allocation3], %s296
          %s298 = sand.u32 %s29, 1
          %s299 = smul.addr %s298, 256
          %s300 = scalar_lea.vmem [#allocation2], %s299
          %s301 = smul.u32 64, %s19
          %303 = vsyncadd %s297, 0
          %s304 = smul.addr %s301, 4
          %s305 = scalar_lea.hbm %s0, %s304
          %s306 = sshll.u32 %s305, 4
          %s307 = int_to_ptr.hbm [resolvable:$true] %s306
          %s308 = sshll.u32 %s300, 4
          %s309 = int_to_ptr.vmem [resolvable:$true] %s308
          %314 = dma.hbm_to_vmem [thread:$0]  %s307, 4096, %s309, %s297, 64, 64, 4
        $region44: #{tpu_custom_call.1} parent=39 // pred_fallthru
          _
        // Predicated region
        $region45: #{tpu_custom_call.1} parent=39 // pred_check
          %p315 = pneg %p65
        $region46: #{tpu_custom_call.1} parent=39 // pred_check_branch
          %317 = sbr.rel (%p315) target = $region48
        $region47: #{tpu_custom_call.1} parent=39 // pred_region
          %s318 = smul.u32 8, %s19
          %p319 = scmp.lt.s32.totalorder %s318, 15
          %s320 = scalar_select %p319, %s318, 15
          %s321 = smul.addr %s320, 4
          %s322 = scalar_lea.vmem %s1, %s321
          %s323 = smul.u32 8, %s19
        $region48: #{tpu_custom_call.1} parent=39 // pred_fallthru
          _
        // Predicated region
        $region49: #{tpu_custom_call.1} parent=39 // pred_check
          %p324 = pneg %p91
        $region50: #{tpu_custom_call.1} parent=39 // pred_check_branch
          %326 = sbr.rel (%p324) target = $region52
        $region51: #{tpu_custom_call.1} parent=39 // pred_region
          %s327 = smul.u32 8, %s19
          %p328 = scmp.lt.s32.totalorder %s327, 15
          %s329 = scalar_select %p328, %s327, 15
          %s330 = smul.addr %s329, 8
          %s331 = scalar_lea.vmem %s2, %s330
          %s332 = smul.u32 8, %s19
        $region52: #{tpu_custom_call.1} parent=39 // pred_fallthru
          _
      $region40: #{tpu_custom_call.1} parent=5 // pred_fallthru
        _
      %p333 = scmp.le.s32.totalorder 1, %s19
      %p334 = scmp.lt.s32.totalorder %s19, 3
      %p335 = pnand %p333, %p334
      %p336 = pneg %p335
      // Predicated region
      $region53: #{tpu_custom_call.1} parent=5 // pred_check
        _
      $region54: #{tpu_custom_call.1} parent=5 // pred_check_branch
        %338 = sbr.rel (%p335) target = $region56
      $region55: #{tpu_custom_call.1} parent=5 // pred_region
        %s339 = ssub.s32 %s19, 1
        %s340 = sand.u32 %s32, 1
        %s341 = scalar_lea.sflag [#allocation3], %s340
        %s342 = sand.u32 %s32, 1
        %s343 = smul.addr %s342, 256
        %s344 = scalar_lea.vmem [#allocation2], %s343
        // Predicated region
        $region57: #{tpu_custom_call.1} parent=55 // pred_check
          %p345 = pneg %p45
        $region58: #{tpu_custom_call.1} parent=55 // pred_check_branch
          %347 = sbr.rel (%p345) target = $region60
        $region59: #{tpu_custom_call.1} parent=55 // pred_region
          %349 = dma.done %s341, 4096
        $region60: #{tpu_custom_call.1} parent=55 // pred_fallthru
          _
        // Predicated region
        $region61: #{tpu_custom_call.1} parent=55 // pred_check
          %p350 = pneg %p223
        $region62: #{tpu_custom_call.1} parent=55 // pred_check_branch
          %352 = sbr.rel (%p350) target = $region64
        $region63: #{tpu_custom_call.1} parent=55 // pred_region
          %354 = dma.done [#allocation4], 16
        $region64: #{tpu_custom_call.1} parent=55 // pred_fallthru
          _
        %355 = sfence
        %s356 = sand.u32 %s32, 1
        %s357 = scalar_lea.sflag [#allocation3], %s356
        %s358 = sand.u32 %s32, 1
        %s359 = smul.addr %s358, 256
        %s360 = scalar_lea.vmem [#allocation2], %s359
        %p361 = pneg %p45
        %p362 = pneg %p42
        %s363 = smul.u32 8, %s24
        %p364 = scmp.lt.s32.totalorder %s363, 15
        %s365 = scalar_select %p364, %s363, 15
        %s366 = smul.addr %s365, 4
        %s367 = scalar_lea.vmem %s1, %s366
        %p368 = pneg %p71
        %p369 = pneg %p68
        %s370 = smul.u32 8, %s24
        %p371 = scmp.lt.s32.totalorder %s370, 15
        %s372 = scalar_select %p371, %s370, 15
        %s373 = smul.addr %s372, 8
        %s374 = scalar_lea.vmem %s2, %s373
        %p375 = pneg %p97
        %p376 = pneg %p94
        %p377 = pneg %p118
        %p378 = pneg %p115
        %p379 = pneg %p139
        %p380 = pneg %p136
        %p381 = pneg %p160
        %p382 = pneg %p157
        %p383 = pneg %p181
        %p384 = pneg %p178
        %p385 = pneg %p202
        %p386 = pneg %p199
        %p387 = pneg %p223
        %p388 = pneg %p220
        %p389 = pneg %p249
        %p390 = pneg %p246
        %s391 = smul.u32 8, %s24
        %p392 = scmp.lt.s32.totalorder %s391, 15
        %s393 = scalar_select %p392, %s391, 15
        %s394 = smul.addr %s393, 8
        %s395 = scalar_lea.vmem %s9, %s394
        %s396 = smul.u32 64, %s24
        %s397 = smul.u32 8, %s24
        %p398 = scmp.lt.s32.totalorder %s397, 15
        %s399 = scalar_select %p398, %s397, 15
        %s400 = smul.addr %s399, 4
        %s401 = scalar_lea.vmem %s1, %s400
        %s402 = smul.u32 8, %s24
        %s403 = smul.u32 8, %s24
        %p404 = scmp.lt.s32.totalorder %s403, 15
        %s405 = scalar_select %p404, %s403, 15
        %s406 = smul.addr %s405, 8
        %s407 = scalar_lea.vmem %s2, %s406
        %s408 = smul.u32 8, %s24
        %s409 = smul.u32 8, %s24
        %p410 = scmp.lt.s32.totalorder %s409, 15
        %s411 = scalar_select %p410, %s409, 15
        %s412 = smul.addr %s411, 8
        %s413 = scalar_lea.vmem %s9, %s412
        %s414 = smul.u32 8, %s24
        %v416 = vld [vmem:[%s344] sm:$0xf]
        %v417 = vld [vmem:[%s344 + $0x4] sm:$0xf]
        %v418 = vld [vmem:[%s344 + $0x8] sm:$0xf]
        %v419 = vld [vmem:[%s344 + $0xc] sm:$0xf]
        %v420 = vld [vmem:[%s344 + $0x10] sm:$0xf]
        %v421 = vld [vmem:[%s344 + $0x14] sm:$0xf]
        %v422 = vld [vmem:[%s344 + $0x18] sm:$0xf]
        %v423 = vld [vmem:[%s344 + $0x1c] sm:$0xf]
        %v424 = vld [vmem:[%s344 + $0x20] sm:$0xf]
        %v425 = vld [vmem:[%s344 + $0x24] sm:$0xf]
        %v426 = vld [vmem:[%s344 + $0x28] sm:$0xf]
        %v427 = vld [vmem:[%s344 + $0x2c] sm:$0xf]
        %v428 = vld [vmem:[%s344 + $0x30] sm:$0xf]
        %v429 = vld [vmem:[%s344 + $0x34] sm:$0xf]
        %v430 = vld [vmem:[%s344 + $0x38] sm:$0xf]
        %v431 = vld [vmem:[%s344 + $0x3c] sm:$0xf]
        %v432 = vld [vmem:[%s344 + $0x40] sm:$0xf]
        %v433 = vld [vmem:[%s344 + $0x44] sm:$0xf]
        %v434 = vld [vmem:[%s344 + $0x48] sm:$0xf]
        %v435 = vld [vmem:[%s344 + $0x4c] sm:$0xf]
        %v436 = vld [vmem:[%s344 + $0x50] sm:$0xf]
        %v437 = vld [vmem:[%s344 + $0x54] sm:$0xf]
        %v438 = vld [vmem:[%s344 + $0x58] sm:$0xf]
        %v439 = vld [vmem:[%s344 + $0x5c] sm:$0xf]
        %v440 = vld [vmem:[%s344 + $0x60] sm:$0xf]
        %v441 = vld [vmem:[%s344 + $0x64] sm:$0xf]
        %v442 = vld [vmem:[%s344 + $0x68] sm:$0xf]
        %v443 = vld [vmem:[%s344 + $0x6c] sm:$0xf]
        %v444 = vld [vmem:[%s344 + $0x70] sm:$0xf]
        %v445 = vld [vmem:[%s344 + $0x74] sm:$0xf]
        %v446 = vld [vmem:[%s344 + $0x78] sm:$0xf]
        %v447 = vld [vmem:[%s344 + $0x7c] sm:$0xf]
        %v448 = vld [vmem:[%s344 + $0x80] sm:$0xf]
        %v449 = vld [vmem:[%s344 + $0x84] sm:$0xf]
        %v450 = vld [vmem:[%s344 + $0x88] sm:$0xf]
        %v451 = vld [vmem:[%s344 + $0x8c] sm:$0xf]
        %v452 = vld [vmem:[%s344 + $0x90] sm:$0xf]
        %v453 = vld [vmem:[%s344 + $0x94] sm:$0xf]
        %v454 = vld [vmem:[%s344 + $0x98] sm:$0xf]
        %v455 = vld [vmem:[%s344 + $0x9c] sm:$0xf]
        %v456 = vld [vmem:[%s344 + $0xa0] sm:$0xf]
        %v457 = vld [vmem:[%s344 + $0xa4] sm:$0xf]
        %v458 = vld [vmem:[%s344 + $0xa8] sm:$0xf]
        %v459 = vld [vmem:[%s344 + $0xac] sm:$0xf]
        %v460 = vld [vmem:[%s344 + $0xb0] sm:$0xf]
        %v461 = vld [vmem:[%s344 + $0xb4] sm:$0xf]
        %v462 = vld [vmem:[%s344 + $0xb8] sm:$0xf]
        %v463 = vld [vmem:[%s344 + $0xbc] sm:$0xf]
        %v464 = vld [vmem:[%s344 + $0xc0] sm:$0xf]
        %v465 = vld [vmem:[%s344 + $0xc4] sm:$0xf]
        %v466 = vld [vmem:[%s344 + $0xc8] sm:$0xf]
        %v467 = vld [vmem:[%s344 + $0xcc] sm:$0xf]
        %v468 = vld [vmem:[%s344 + $0xd0] sm:$0xf]
        %v469 = vld [vmem:[%s344 + $0xd4] sm:$0xf]
        %v470 = vld [vmem:[%s344 + $0xd8] sm:$0xf]
        %v471 = vld [vmem:[%s344 + $0xdc] sm:$0xf]
        %v472 = vld [vmem:[%s344 + $0xe0] sm:$0xf]
        %v473 = vld [vmem:[%s344 + $0xe4] sm:$0xf]
        %v474 = vld [vmem:[%s344 + $0xe8] sm:$0xf]
        %v475 = vld [vmem:[%s344 + $0xec] sm:$0xf]
        %v476 = vld [vmem:[%s344 + $0xf0] sm:$0xf]
        %v477 = vld [vmem:[%s344 + $0xf4] sm:$0xf]
        %v478 = vld [vmem:[%s344 + $0xf8] sm:$0xf]
        %v479 = vld [vmem:[%s344 + $0xfc] sm:$0xf]
        %v480 = vld [vmem:[%s407] sm:$0xff]
        %v481 = vld [vmem:[%s407 + $0x8] sm:$0xff]
        %v482 = vld [vmem:[%s407 + $0x10] sm:$0xff]
        %v483 = vld [vmem:[%s407 + $0x18] sm:$0xff]
        %v484 = vld [vmem:[%s407 + $0x20] sm:$0xff]
        %v485 = vld [vmem:[%s407 + $0x28] sm:$0xff]
        %v486 = vld [vmem:[%s407 + $0x30] sm:$0xff]
        %v487 = vld [vmem:[%s407 + $0x38] sm:$0xff]
        %v488 = vld [vmem:[%s3] sm:$0xf]
        %v489 = vld [vmem:[%s3 + $0x4] sm:$0xf]
        %v490 = vld [vmem:[%s3 + $0x8] sm:$0xf]
        %v491 = vld [vmem:[%s3 + $0xc] sm:$0xf]
        %v492 = vld [vmem:[%s3 + $0x10] sm:$0xf]
        %v493 = vld [vmem:[%s3 + $0x14] sm:$0xf]
        %v494 = vld [vmem:[%s3 + $0x18] sm:$0xf]
        %v495 = vld [vmem:[%s3 + $0x1c] sm:$0xf]
        %v496 = vld [vmem:[%s3 + $0x20] sm:$0xf]
        %v497 = vld [vmem:[%s3 + $0x24] sm:$0xf]
        %v498 = vld [vmem:[%s3 + $0x28] sm:$0xf]
        %v499 = vld [vmem:[%s3 + $0x2c] sm:$0xf]
        %v500 = vld [vmem:[%s3 + $0x30] sm:$0xf]
        %v501 = vld [vmem:[%s3 + $0x34] sm:$0xf]
        %v502 = vld [vmem:[%s3 + $0x38] sm:$0xf]
        %v503 = vld [vmem:[%s3 + $0x3c] sm:$0xf]
        %v568 = vunpack.c.l.b16 %v416
        %v569 = vunpack.c.l.b16 %v417
        %v570 = vunpack.c.l.b16 %v418
        %v571 = vunpack.c.l.b16 %v419
        %v572 = vunpack.c.l.b16 %v420
        %v573 = vunpack.c.l.b16 %v421
        %v574 = vunpack.c.l.b16 %v422
        %v575 = vunpack.c.l.b16 %v423
        %v576 = vunpack.c.l.b16 %v424
        %v577 = vunpack.c.l.b16 %v425
        %v578 = vunpack.c.l.b16 %v426
        %v579 = vunpack.c.l.b16 %v427
        %v580 = vunpack.c.l.b16 %v428
        %v581 = vunpack.c.l.b16 %v429
        %v582 = vunpack.c.l.b16 %v430
        %v583 = vunpack.c.l.b16 %v431
        %v584 = vunpack.c.l.b16 %v432
        %v585 = vunpack.c.l.b16 %v433
        %v586 = vunpack.c.l.b16 %v434
        %v587 = vunpack.c.l.b16 %v435
        %v588 = vunpack.c.l.b16 %v436
        %v589 = vunpack.c.l.b16 %v437
        %v590 = vunpack.c.l.b16 %v438
        %v591 = vunpack.c.l.b16 %v439
        %v592 = vunpack.c.l.b16 %v440
        %v593 = vunpack.c.l.b16 %v441
        %v594 = vunpack.c.l.b16 %v442
        %v595 = vunpack.c.l.b16 %v443
        %v596 = vunpack.c.l.b16 %v444
        %v597 = vunpack.c.l.b16 %v445
        %v598 = vunpack.c.l.b16 %v446
        %v599 = vunpack.c.l.b16 %v447
        %v600 = vunpack.c.l.b16 %v448
        %v601 = vunpack.c.l.b16 %v449
        %v602 = vunpack.c.l.b16 %v450
        %v603 = vunpack.c.l.b16 %v451
        %v604 = vunpack.c.l.b16 %v452
        %v605 = vunpack.c.l.b16 %v453
        %v606 = vunpack.c.l.b16 %v454
        %v607 = vunpack.c.l.b16 %v455
        %v608 = vunpack.c.l.b16 %v456
        %v609 = vunpack.c.l.b16 %v457
        %v610 = vunpack.c.l.b16 %v458
        %v611 = vunpack.c.l.b16 %v459
        %v612 = vunpack.c.l.b16 %v460
        %v613 = vunpack.c.l.b16 %v461
        %v614 = vunpack.c.l.b16 %v462
        %v615 = vunpack.c.l.b16 %v463
        %v616 = vunpack.c.l.b16 %v464
        %v617 = vunpack.c.l.b16 %v465
        %v618 = vunpack.c.l.b16 %v466
        %v619 = vunpack.c.l.b16 %v467
        %v620 = vunpack.c.l.b16 %v468
        %v621 = vunpack.c.l.b16 %v469
        %v622 = vunpack.c.l.b16 %v470
        %v623 = vunpack.c.l.b16 %v471
        %v624 = vunpack.c.l.b16 %v472
        %v625 = vunpack.c.l.b16 %v473
        %v626 = vunpack.c.l.b16 %v474
        %v627 = vunpack.c.l.b16 %v475
        %v628 = vunpack.c.l.b16 %v476
        %v629 = vunpack.c.l.b16 %v477
        %v630 = vunpack.c.l.b16 %v478
        %v631 = vunpack.c.l.b16 %v479
        %v632 = vpack.c.b16 %v569, %v568
        %v633 = vpack.c.b16 %v571, %v570
        %v634 = vpack.c.b16 %v573, %v572
        %v635 = vpack.c.b16 %v575, %v574
        %v636 = vpack.c.b16 %v577, %v576
        %v637 = vpack.c.b16 %v579, %v578
        %v638 = vpack.c.b16 %v581, %v580
        %v639 = vpack.c.b16 %v583, %v582
        %v640 = vpack.c.b16 %v585, %v584
        %v641 = vpack.c.b16 %v587, %v586
        %v642 = vpack.c.b16 %v589, %v588
        %v643 = vpack.c.b16 %v591, %v590
        %v644 = vpack.c.b16 %v593, %v592
        %v645 = vpack.c.b16 %v595, %v594
        %v646 = vpack.c.b16 %v597, %v596
        %v647 = vpack.c.b16 %v599, %v598
        %v648 = vpack.c.b16 %v601, %v600
        %v649 = vpack.c.b16 %v603, %v602
        %v650 = vpack.c.b16 %v605, %v604
        %v651 = vpack.c.b16 %v607, %v606
        %v652 = vpack.c.b16 %v609, %v608
        %v653 = vpack.c.b16 %v611, %v610
        %v654 = vpack.c.b16 %v613, %v612
        %v655 = vpack.c.b16 %v615, %v614
        %v656 = vpack.c.b16 %v617, %v616
        %v657 = vpack.c.b16 %v619, %v618
        %v658 = vpack.c.b16 %v621, %v620
        %v659 = vpack.c.b16 %v623, %v622
        %v660 = vpack.c.b16 %v625, %v624
        %v661 = vpack.c.b16 %v627, %v626
        %v662 = vpack.c.b16 %v629, %v628
        %v663 = vpack.c.b16 %v631, %v630
        %v712 = vunpack.c.l.b16 %v488
        %v713 = vunpack.c.l.b16 %v489
        %v714 = vunpack.c.l.b16 %v490
        %v715 = vunpack.c.l.b16 %v491
        %v716 = vunpack.c.l.b16 %v492
        %v717 = vunpack.c.l.b16 %v493
        %v718 = vunpack.c.l.b16 %v494
        %v719 = vunpack.c.l.b16 %v495
        %v720 = vunpack.c.l.b16 %v496
        %v721 = vunpack.c.l.b16 %v497
        %v722 = vunpack.c.l.b16 %v498
        %v723 = vunpack.c.l.b16 %v499
        %v724 = vunpack.c.l.b16 %v500
        %v725 = vunpack.c.l.b16 %v501
        %v726 = vunpack.c.l.b16 %v502
        %v727 = vunpack.c.l.b16 %v503
        %v728 = vpack.c.b16 %v713, %v712
        %v729 = vpack.c.b16 %v715, %v714
        %v730 = vpack.c.b16 %v717, %v716
        %v731 = vpack.c.b16 %v719, %v718
        %v732 = vpack.c.b16 %v721, %v720
        %v733 = vpack.c.b16 %v723, %v722
        %v734 = vpack.c.b16 %v725, %v724
        %v735 = vpack.c.b16 %v727, %v726
        %744 = vmatpush.bf16.msra.mxu0 %v735
        %745 = vmatpush.bf16.msra.mxu0 %v734
        %746 = vmatpush.bf16.msra.mxu0 %v733
        %747 = vmatpush.bf16.msra.mxu0 %v732
        %748 = vmatpush.bf16.msra.mxu0 %v731
        %749 = vmatpush.bf16.msra.mxu0 %v730
        %750 = vmatpush.bf16.msra.mxu0 %v729
        %751 = vmatpush.bf16.msra.mxu0 %v728
        %752 = vmatmul.bf16.gmra.mxu0 %v632
        %v753 = vpop.f32.mrf.mxu0
        %v754 = vadd.f32 0.0, %v753
        %v755 = vpop.f32.mrf.mxu0
        %v756 = vadd.f32 0.0, %v755
        %757 = vmatmul.bf16.gmra.mxu0 %v633
        %v758 = vpop.f32.mrf.mxu0
        %v759 = vadd.f32 0.0, %v758
        %v760 = vpop.f32.mrf.mxu0
        %v761 = vadd.f32 0.0, %v760
        %762 = vmatmul.bf16.gmra.mxu0 %v634
        %v763 = vpop.f32.mrf.mxu0
        %v764 = vadd.f32 0.0, %v763
        %v765 = vpop.f32.mrf.mxu0
        %v766 = vadd.f32 0.0, %v765
        %767 = vmatmul.bf16.gmra.mxu0 %v635
        %v768 = vpop.f32.mrf.mxu0
        %v769 = vadd.f32 0.0, %v768
        %v770 = vpop.f32.mrf.mxu0
        %v771 = vadd.f32 0.0, %v770
        %772 = vmatmul.bf16.gmra.mxu0 %v636
        %v773 = vpop.f32.mrf.mxu0
        %v774 = vadd.f32 0.0, %v773
        %v775 = vpop.f32.mrf.mxu0
        %v776 = vadd.f32 0.0, %v775
        %777 = vmatmul.bf16.gmra.mxu0 %v637
        %v778 = vpop.f32.mrf.mxu0
        %v779 = vadd.f32 0.0, %v778
        %v780 = vpop.f32.mrf.mxu0
        %v781 = vadd.f32 0.0, %v780
        %782 = vmatmul.bf16.gmra.mxu0 %v638
        %v783 = vpop.f32.mrf.mxu0
        %v784 = vadd.f32 0.0, %v783
        %v785 = vpop.f32.mrf.mxu0
        %v786 = vadd.f32 0.0, %v785
        %787 = vmatmul.bf16.gmra.mxu0 %v639
        %v788 = vpop.f32.mrf.mxu0
        %v789 = vadd.f32 0.0, %v788
        %v790 = vpop.f32.mrf.mxu0
        %v791 = vadd.f32 0.0, %v790
        %792 = vmatmul.bf16.gmra.mxu0 %v640
        %v793 = vpop.f32.mrf.mxu0
        %v794 = vadd.f32 0.0, %v793
        %v795 = vpop.f32.mrf.mxu0
        %v796 = vadd.f32 0.0, %v795
        %797 = vmatmul.bf16.gmra.mxu0 %v641
        %v798 = vpop.f32.mrf.mxu0
        %v799 = vadd.f32 0.0, %v798
        %v800 = vpop.f32.mrf.mxu0
        %v801 = vadd.f32 0.0, %v800
        %802 = vmatmul.bf16.gmra.mxu0 %v642
        %v803 = vpop.f32.mrf.mxu0
        %v804 = vadd.f32 0.0, %v803
        %v805 = vpop.f32.mrf.mxu0
        %v806 = vadd.f32 0.0, %v805
        %807 = vmatmul.bf16.gmra.mxu0 %v643
        %v808 = vpop.f32.mrf.mxu0
        %v809 = vadd.f32 0.0, %v808
        %v810 = vpop.f32.mrf.mxu0
        %v811 = vadd.f32 0.0, %v810
        %812 = vmatmul.bf16.gmra.mxu0 %v644
        %v813 = vpop.f32.mrf.mxu0
        %v814 = vadd.f32 0.0, %v813
        %v815 = vpop.f32.mrf.mxu0
        %v816 = vadd.f32 0.0, %v815
        %817 = vmatmul.bf16.gmra.mxu0 %v645
        %v818 = vpop.f32.mrf.mxu0
        %v819 = vadd.f32 0.0, %v818
        %v820 = vpop.f32.mrf.mxu0
        %v821 = vadd.f32 0.0, %v820
        %822 = vmatmul.bf16.gmra.mxu0 %v646
        %v823 = vpop.f32.mrf.mxu0
        %v824 = vadd.f32 0.0, %v823
        %v825 = vpop.f32.mrf.mxu0
        %v826 = vadd.f32 0.0, %v825
        %827 = vmatmul.bf16.gmra.mxu0 %v647
        %v828 = vpop.f32.mrf.mxu0
        %v829 = vadd.f32 0.0, %v828
        %v830 = vpop.f32.mrf.mxu0
        %v831 = vadd.f32 0.0, %v830
        %832 = vmatmul.bf16.gmra.mxu0 %v648
        %v833 = vpop.f32.mrf.mxu0
        %v834 = vadd.f32 0.0, %v833
        %v835 = vpop.f32.mrf.mxu0
        %v836 = vadd.f32 0.0, %v835
        %837 = vmatmul.bf16.gmra.mxu0 %v649
        %v838 = vpop.f32.mrf.mxu0
        %v839 = vadd.f32 0.0, %v838
        %v840 = vpop.f32.mrf.mxu0
        %v841 = vadd.f32 0.0, %v840
        %842 = vmatmul.bf16.gmra.mxu0 %v650
        %v843 = vpop.f32.mrf.mxu0
        %v844 = vadd.f32 0.0, %v843
        %v845 = vpop.f32.mrf.mxu0
        %v846 = vadd.f32 0.0, %v845
        %847 = vmatmul.bf16.gmra.mxu0 %v651
        %v848 = vpop.f32.mrf.mxu0
        %v849 = vadd.f32 0.0, %v848
        %v850 = vpop.f32.mrf.mxu0
        %v851 = vadd.f32 0.0, %v850
        %852 = vmatmul.bf16.gmra.mxu0 %v652
        %v853 = vpop.f32.mrf.mxu0
        %v854 = vadd.f32 0.0, %v853
        %v855 = vpop.f32.mrf.mxu0
        %v856 = vadd.f32 0.0, %v855
        %857 = vmatmul.bf16.gmra.mxu0 %v653
        %v858 = vpop.f32.mrf.mxu0
        %v859 = vadd.f32 0.0, %v858
        %v860 = vpop.f32.mrf.mxu0
        %v861 = vadd.f32 0.0, %v860
        %862 = vmatmul.bf16.gmra.mxu0 %v654
        %v863 = vpop.f32.mrf.mxu0
        %v864 = vadd.f32 0.0, %v863
        %v865 = vpop.f32.mrf.mxu0
        %v866 = vadd.f32 0.0, %v865
        %867 = vmatmul.bf16.gmra.mxu0 %v655
        %v868 = vpop.f32.mrf.mxu0
        %v869 = vadd.f32 0.0, %v868
        %v870 = vpop.f32.mrf.mxu0
        %v871 = vadd.f32 0.0, %v870
        %872 = vmatmul.bf16.gmra.mxu0 %v656
        %v873 = vpop.f32.mrf.mxu0
        %v874 = vadd.f32 0.0, %v873
        %v875 = vpop.f32.mrf.mxu0
        %v876 = vadd.f32 0.0, %v875
        %877 = vmatmul.bf16.gmra.mxu0 %v657
        %v878 = vpop.f32.mrf.mxu0
        %v879 = vadd.f32 0.0, %v878
        %v880 = vpop.f32.mrf.mxu0
        %v881 = vadd.f32 0.0, %v880
        %882 = vmatmul.bf16.gmra.mxu0 %v658
        %v883 = vpop.f32.mrf.mxu0
        %v884 = vadd.f32 0.0, %v883
        %v885 = vpop.f32.mrf.mxu0
        %v886 = vadd.f32 0.0, %v885
        %887 = vmatmul.bf16.gmra.mxu0 %v659
        %v888 = vpop.f32.mrf.mxu0
        %v889 = vadd.f32 0.0, %v888
        %v890 = vpop.f32.mrf.mxu0
        %v891 = vadd.f32 0.0, %v890
        %892 = vmatmul.bf16.gmra.mxu0 %v660
        %v893 = vpop.f32.mrf.mxu0
        %v894 = vadd.f32 0.0, %v893
        %v895 = vpop.f32.mrf.mxu0
        %v896 = vadd.f32 0.0, %v895
        %897 = vmatmul.bf16.gmra.mxu0 %v661
        %v898 = vpop.f32.mrf.mxu0
        %v899 = vadd.f32 0.0, %v898
        %v900 = vpop.f32.mrf.mxu0
        %v901 = vadd.f32 0.0, %v900
        %902 = vmatmul.bf16.gmra.mxu0 %v662
        %v903 = vpop.f32.mrf.mxu0
        %v904 = vadd.f32 0.0, %v903
        %v905 = vpop.f32.mrf.mxu0
        %v906 = vadd.f32 0.0, %v905
        %907 = vmatmul.bf16.gmra.mxu0 %v663
        %v908 = vpop.f32.mrf.mxu0
        %v909 = vadd.f32 0.0, %v908
        %v910 = vpop.f32.mrf.mxu0
        %v911 = vadd.f32 0.0, %v910
        %912 = vdwg.mxu0
        %v913 = vld [vmem:[%s6] sm:$0x1]
        %v914 = vperm.slane %v913, 0
        %v915 = vadd.f32 %v754, %v914
        %v916 = vadd.f32 %v756, %v914
        %v917 = vadd.f32 %v759, %v914
        %v918 = vadd.f32 %v761, %v914
        %v919 = vadd.f32 %v764, %v914
        %v920 = vadd.f32 %v766, %v914
        %v921 = vadd.f32 %v769, %v914
        %v922 = vadd.f32 %v771, %v914
        %v923 = vadd.f32 %v774, %v914
        %v924 = vadd.f32 %v776, %v914
        %v925 = vadd.f32 %v779, %v914
        %v926 = vadd.f32 %v781, %v914
        %v927 = vadd.f32 %v784, %v914
        %v928 = vadd.f32 %v786, %v914
        %v929 = vadd.f32 %v789, %v914
        %v930 = vadd.f32 %v791, %v914
        %v931 = vadd.f32 %v794, %v914
        %v932 = vadd.f32 %v796, %v914
        %v933 = vadd.f32 %v799, %v914
        %v934 = vadd.f32 %v801, %v914
        %v935 = vadd.f32 %v804, %v914
        %v936 = vadd.f32 %v806, %v914
        %v937 = vadd.f32 %v809, %v914
        %v938 = vadd.f32 %v811, %v914
        %v939 = vadd.f32 %v814, %v914
        %v940 = vadd.f32 %v816, %v914
        %v941 = vadd.f32 %v819, %v914
        %v942 = vadd.f32 %v821, %v914
        %v943 = vadd.f32 %v824, %v914
        %v944 = vadd.f32 %v826, %v914
        %v945 = vadd.f32 %v829, %v914
        %v946 = vadd.f32 %v831, %v914
        %v947 = vadd.f32 %v834, %v914
        %v948 = vadd.f32 %v836, %v914
        %v949 = vadd.f32 %v839, %v914
        %v950 = vadd.f32 %v841, %v914
        %v951 = vadd.f32 %v844, %v914
        %v952 = vadd.f32 %v846, %v914
        %v953 = vadd.f32 %v849, %v914
        %v954 = vadd.f32 %v851, %v914
        %v955 = vadd.f32 %v854, %v914
        %v956 = vadd.f32 %v856, %v914
        %v957 = vadd.f32 %v859, %v914
        %v958 = vadd.f32 %v861, %v914
        %v959 = vadd.f32 %v864, %v914
        %v960 = vadd.f32 %v866, %v914
        %v961 = vadd.f32 %v869, %v914
        %v962 = vadd.f32 %v871, %v914
        %v963 = vadd.f32 %v874, %v914
        %v964 = vadd.f32 %v876, %v914
        %v965 = vadd.f32 %v879, %v914
        %v966 = vadd.f32 %v881, %v914
        %v967 = vadd.f32 %v884, %v914
        %v968 = vadd.f32 %v886, %v914
        %v969 = vadd.f32 %v889, %v914
        %v970 = vadd.f32 %v891, %v914
        %v971 = vadd.f32 %v894, %v914
        %v972 = vadd.f32 %v896, %v914
        %v973 = vadd.f32 %v899, %v914
        %v974 = vadd.f32 %v901, %v914
        %v975 = vadd.f32 %v904, %v914
        %v976 = vadd.f32 %v906, %v914
        %v977 = vadd.f32 %v909, %v914
        %v978 = vadd.f32 %v911, %v914
        %v979 = vmul.f32 %v915, 0.2
        %v980 = vmul.f32 %v916, 0.2
        %v981 = vmul.f32 %v917, 0.2
        %v982 = vmul.f32 %v918, 0.2
        %v983 = vmul.f32 %v919, 0.2
        %v984 = vmul.f32 %v920, 0.2
        %v985 = vmul.f32 %v921, 0.2
        %v986 = vmul.f32 %v922, 0.2
        %v987 = vmul.f32 %v923, 0.2
        %v988 = vmul.f32 %v924, 0.2
        %v989 = vmul.f32 %v925, 0.2
        %v990 = vmul.f32 %v926, 0.2
        %v991 = vmul.f32 %v927, 0.2
        %v992 = vmul.f32 %v928, 0.2
        %v993 = vmul.f32 %v929, 0.2
        %v994 = vmul.f32 %v930, 0.2
        %v995 = vmul.f32 %v931, 0.2
        %v996 = vmul.f32 %v932, 0.2
        %v997 = vmul.f32 %v933, 0.2
        %v998 = vmul.f32 %v934, 0.2
        %v999 = vmul.f32 %v935, 0.2
        %v1000 = vmul.f32 %v936, 0.2
        %v1001 = vmul.f32 %v937, 0.2
        %v1002 = vmul.f32 %v938, 0.2
        %v1003 = vmul.f32 %v939, 0.2
        %v1004 = vmul.f32 %v940, 0.2
        %v1005 = vmul.f32 %v941, 0.2
        %v1006 = vmul.f32 %v942, 0.2
        %v1007 = vmul.f32 %v943, 0.2
        %v1008 = vmul.f32 %v944, 0.2
        %v1009 = vmul.f32 %v945, 0.2
        %v1010 = vmul.f32 %v946, 0.2
        %v1011 = vmul.f32 %v947, 0.2
        %v1012 = vmul.f32 %v948, 0.2
        %v1013 = vmul.f32 %v949, 0.2
        %v1014 = vmul.f32 %v950, 0.2
        %v1015 = vmul.f32 %v951, 0.2
        %v1016 = vmul.f32 %v952, 0.2
        %v1017 = vmul.f32 %v953, 0.2
        %v1018 = vmul.f32 %v954, 0.2
        %v1019 = vmul.f32 %v955, 0.2
        %v1020 = vmul.f32 %v956, 0.2
        %v1021 = vmul.f32 %v957, 0.2
        %v1022 = vmul.f32 %v958, 0.2
        %v1023 = vmul.f32 %v959, 0.2
        %v1024 = vmul.f32 %v960, 0.2
        %v1025 = vmul.f32 %v961, 0.2
        %v1026 = vmul.f32 %v962, 0.2
        %v1027 = vmul.f32 %v963, 0.2
        %v1028 = vmul.f32 %v964, 0.2
        %v1029 = vmul.f32 %v965, 0.2
        %v1030 = vmul.f32 %v966, 0.2
        %v1031 = vmul.f32 %v967, 0.2
        %v1032 = vmul.f32 %v968, 0.2
        %v1033 = vmul.f32 %v969, 0.2
        %v1034 = vmul.f32 %v970, 0.2
        %v1035 = vmul.f32 %v971, 0.2
        %v1036 = vmul.f32 %v972, 0.2
        %v1037 = vmul.f32 %v973, 0.2
        %v1038 = vmul.f32 %v974, 0.2
        %v1039 = vmul.f32 %v975, 0.2
        %v1040 = vmul.f32 %v976, 0.2
        %v1041 = vmul.f32 %v977, 0.2
        %v1042 = vmul.f32 %v978, 0.2
        %v1043 = vmax.f32 %v915, %v979
        %v1044 = vmax.f32 %v916, %v980
        %v1045 = vmax.f32 %v917, %v981
        %v1046 = vmax.f32 %v918, %v982
        %v1047 = vmax.f32 %v919, %v983
        %v1048 = vmax.f32 %v920, %v984
        %v1049 = vmax.f32 %v921, %v985
        %v1050 = vmax.f32 %v922, %v986
        %v1051 = vmax.f32 %v923, %v987
        %v1052 = vmax.f32 %v924, %v988
        %v1053 = vmax.f32 %v925, %v989
        %v1054 = vmax.f32 %v926, %v990
        %v1055 = vmax.f32 %v927, %v991
        %v1056 = vmax.f32 %v928, %v992
        %v1057 = vmax.f32 %v929, %v993
        %v1058 = vmax.f32 %v930, %v994
        %v1059 = vmax.f32 %v931, %v995
        %v1060 = vmax.f32 %v932, %v996
        %v1061 = vmax.f32 %v933, %v997
        %v1062 = vmax.f32 %v934, %v998
        %v1063 = vmax.f32 %v935, %v999
        %v1064 = vmax.f32 %v936, %v1000
        %v1065 = vmax.f32 %v937, %v1001
        %v1066 = vmax.f32 %v938, %v1002
        %v1067 = vmax.f32 %v939, %v1003
        %v1068 = vmax.f32 %v940, %v1004
        %v1069 = vmax.f32 %v941, %v1005
        %v1070 = vmax.f32 %v942, %v1006
        %v1071 = vmax.f32 %v943, %v1007
        %v1072 = vmax.f32 %v944, %v1008
        %v1073 = vmax.f32 %v945, %v1009
        %v1074 = vmax.f32 %v946, %v1010
        %v1075 = vmax.f32 %v947, %v1011
        %v1076 = vmax.f32 %v948, %v1012
        %v1077 = vmax.f32 %v949, %v1013
        %v1078 = vmax.f32 %v950, %v1014
        %v1079 = vmax.f32 %v951, %v1015
        %v1080 = vmax.f32 %v952, %v1016
        %v1081 = vmax.f32 %v953, %v1017
        %v1082 = vmax.f32 %v954, %v1018
        %v1083 = vmax.f32 %v955, %v1019
        %v1084 = vmax.f32 %v956, %v1020
        %v1085 = vmax.f32 %v957, %v1021
        %v1086 = vmax.f32 %v958, %v1022
        %v1087 = vmax.f32 %v959, %v1023
        %v1088 = vmax.f32 %v960, %v1024
        %v1089 = vmax.f32 %v961, %v1025
        %v1090 = vmax.f32 %v962, %v1026
        %v1091 = vmax.f32 %v963, %v1027
        %v1092 = vmax.f32 %v964, %v1028
        %v1093 = vmax.f32 %v965, %v1029
        %v1094 = vmax.f32 %v966, %v1030
        %v1095 = vmax.f32 %v967, %v1031
        %v1096 = vmax.f32 %v968, %v1032
        %v1097 = vmax.f32 %v969, %v1033
        %v1098 = vmax.f32 %v970, %v1034
        %v1099 = vmax.f32 %v971, %v1035
        %v1100 = vmax.f32 %v972, %v1036
        %v1101 = vmax.f32 %v973, %v1037
        %v1102 = vmax.f32 %v974, %v1038
        %v1103 = vmax.f32 %v975, %v1039
        %v1104 = vmax.f32 %v976, %v1040
        %v1105 = vmax.f32 %v977, %v1041
        %v1106 = vmax.f32 %v978, %v1042
        %v1107 = vld [vmem:[%s3 + $0x40] sm:$0xf]
        %v1108 = vld [vmem:[%s3 + $0x44] sm:$0xf]
        %v1109 = vld [vmem:[%s3 + $0x48] sm:$0xf]
        %v1110 = vld [vmem:[%s3 + $0x4c] sm:$0xf]
        %v1111 = vld [vmem:[%s3 + $0x50] sm:$0xf]
        %v1112 = vld [vmem:[%s3 + $0x54] sm:$0xf]
        %v1113 = vld [vmem:[%s3 + $0x58] sm:$0xf]
        %v1114 = vld [vmem:[%s3 + $0x5c] sm:$0xf]
        %v1115 = vpack.c.bf16 %v1044, %v1043
        %v1116 = vpack.c.bf16 %v1046, %v1045
        %v1117 = vpack.c.bf16 %v1048, %v1047
        %v1118 = vpack.c.bf16 %v1050, %v1049
        %v1119 = vpack.c.bf16 %v1052, %v1051
        %v1120 = vpack.c.bf16 %v1054, %v1053
        %v1121 = vpack.c.bf16 %v1056, %v1055
        %v1122 = vpack.c.bf16 %v1058, %v1057
        %v1123 = vpack.c.bf16 %v1060, %v1059
        %v1124 = vpack.c.bf16 %v1062, %v1061
        %v1125 = vpack.c.bf16 %v1064, %v1063
        %v1126 = vpack.c.bf16 %v1066, %v1065
        %v1127 = vpack.c.bf16 %v1068, %v1067
        %v1128 = vpack.c.bf16 %v1070, %v1069
        %v1129 = vpack.c.bf16 %v1072, %v1071
        %v1130 = vpack.c.bf16 %v1074, %v1073
        %v1131 = vpack.c.bf16 %v1076, %v1075
        %v1132 = vpack.c.bf16 %v1078, %v1077
        %v1133 = vpack.c.bf16 %v1080, %v1079
        %v1134 = vpack.c.bf16 %v1082, %v1081
        %v1135 = vpack.c.bf16 %v1084, %v1083
        %v1136 = vpack.c.bf16 %v1086, %v1085
        %v1137 = vpack.c.bf16 %v1088, %v1087
        %v1138 = vpack.c.bf16 %v1090, %v1089
        %v1139 = vpack.c.bf16 %v1092, %v1091
        %v1140 = vpack.c.bf16 %v1094, %v1093
        %v1141 = vpack.c.bf16 %v1096, %v1095
        %v1142 = vpack.c.bf16 %v1098, %v1097
        %v1143 = vpack.c.bf16 %v1100, %v1099
        %v1144 = vpack.c.bf16 %v1102, %v1101
        %v1145 = vpack.c.bf16 %v1104, %v1103
        %v1146 = vpack.c.bf16 %v1106, %v1105
        %v1155 = vunpack.c.l.b16 %v1107
        %v1156 = vunpack.c.l.b16 %v1108
        %v1157 = vunpack.c.l.b16 %v1109
        %v1158 = vunpack.c.l.b16 %v1110
        %v1159 = vunpack.c.l.b16 %v1111
        %v1160 = vunpack.c.l.b16 %v1112
        %v1161 = vunpack.c.l.b16 %v1113
        %v1162 = vunpack.c.l.b16 %v1114
        %v1163 = vpack.c.b16 %v1156, %v1155
        %v1164 = vpack.c.b16 %v1158, %v1157
        %v1165 = vpack.c.b16 %v1160, %v1159
        %v1166 = vpack.c.b16 %v1162, %v1161
        %vm1171 = vcmask 523264
        %v1173 = vsel %vm1171, %v1115, 0
        %v1176 = vsel %vm1171, %v1116, 0
        %v1179 = vsel %vm1171, %v1117, 0
        %v1182 = vsel %vm1171, %v1118, 0
        %v1185 = vsel %vm1171, %v1119, 0
        %v1188 = vsel %vm1171, %v1120, 0
        %v1191 = vsel %vm1171, %v1121, 0
        %v1194 = vsel %vm1171, %v1122, 0
        %v1197 = vsel %vm1171, %v1123, 0
        %v1200 = vsel %vm1171, %v1124, 0
        %v1203 = vsel %vm1171, %v1125, 0
        %v1206 = vsel %vm1171, %v1126, 0
        %v1209 = vsel %vm1171, %v1127, 0
        %v1212 = vsel %vm1171, %v1128, 0
        %v1215 = vsel %vm1171, %v1129, 0
        %v1218 = vsel %vm1171, %v1130, 0
        %v1221 = vsel %vm1171, %v1131, 0
        %v1224 = vsel %vm1171, %v1132, 0
        %v1227 = vsel %vm1171, %v1133, 0
        %v1230 = vsel %vm1171, %v1134, 0
        %v1233 = vsel %vm1171, %v1135, 0
        %v1236 = vsel %vm1171, %v1136, 0
        %v1239 = vsel %vm1171, %v1137, 0
        %v1242 = vsel %vm1171, %v1138, 0
        %v1245 = vsel %vm1171, %v1139, 0
        %v1248 = vsel %vm1171, %v1140, 0
        %v1251 = vsel %vm1171, %v1141, 0
        %v1254 = vsel %vm1171, %v1142, 0
        %v1257 = vsel %vm1171, %v1143, 0
        %v1260 = vsel %vm1171, %v1144, 0
        %v1263 = vsel %vm1171, %v1145, 0
        %v1266 = vsel %vm1171, %v1146, 0
        %1268 = vmatpush.bf16.msra.mxu0 0
        %1269 = vmatpush.bf16.msra.mxu0 0
        %1270 = vmatpush.bf16.msra.mxu0 0
        %1271 = vmatpush.bf16.msra.mxu0 0
        %1272 = vmatpush.bf16.msra.mxu0 %v1166
        %1273 = vmatpush.bf16.msra.mxu0 %v1165
        %1274 = vmatpush.bf16.msra.mxu0 %v1164
        %1275 = vmatpush.bf16.msra.mxu0 %v1163
        %1276 = vmatmul.bf16.gmra.mxu0 %v1173
        %v1277 = vpop.f32.mrf.mxu0
        %v1278 = vadd.f32 0.0, %v1277
        %v1279 = vpop.f32.mrf.mxu0
        %v1280 = vadd.f32 0.0, %v1279
        %1281 = vmatmul.bf16.gmra.mxu0 %v1176
        %v1282 = vpop.f32.mrf.mxu0
        %v1283 = vadd.f32 0.0, %v1282
        %v1284 = vpop.f32.mrf.mxu0
        %v1285 = vadd.f32 0.0, %v1284
        %1286 = vmatmul.bf16.gmra.mxu0 %v1179
        %v1287 = vpop.f32.mrf.mxu0
        %v1288 = vadd.f32 0.0, %v1287
        %v1289 = vpop.f32.mrf.mxu0
        %v1290 = vadd.f32 0.0, %v1289
        %1291 = vmatmul.bf16.gmra.mxu0 %v1182
        %v1292 = vpop.f32.mrf.mxu0
        %v1293 = vadd.f32 0.0, %v1292
        %v1294 = vpop.f32.mrf.mxu0
        %v1295 = vadd.f32 0.0, %v1294
        %1296 = vmatmul.bf16.gmra.mxu0 %v1185
        %v1297 = vpop.f32.mrf.mxu0
        %v1298 = vadd.f32 0.0, %v1297
        %v1299 = vpop.f32.mrf.mxu0
        %v1300 = vadd.f32 0.0, %v1299
        %1301 = vmatmul.bf16.gmra.mxu0 %v1188
        %v1302 = vpop.f32.mrf.mxu0
        %v1303 = vadd.f32 0.0, %v1302
        %v1304 = vpop.f32.mrf.mxu0
        %v1305 = vadd.f32 0.0, %v1304
        %1306 = vmatmul.bf16.gmra.mxu0 %v1191
        %v1307 = vpop.f32.mrf.mxu0
        %v1308 = vadd.f32 0.0, %v1307
        %v1309 = vpop.f32.mrf.mxu0
        %v1310 = vadd.f32 0.0, %v1309
        %1311 = vmatmul.bf16.gmra.mxu0 %v1194
        %v1312 = vpop.f32.mrf.mxu0
        %v1313 = vadd.f32 0.0, %v1312
        %v1314 = vpop.f32.mrf.mxu0
        %v1315 = vadd.f32 0.0, %v1314
        %1316 = vmatmul.bf16.gmra.mxu0 %v1197
        %v1317 = vpop.f32.mrf.mxu0
        %v1318 = vadd.f32 0.0, %v1317
        %v1319 = vpop.f32.mrf.mxu0
        %v1320 = vadd.f32 0.0, %v1319
        %1321 = vmatmul.bf16.gmra.mxu0 %v1200
        %v1322 = vpop.f32.mrf.mxu0
        %v1323 = vadd.f32 0.0, %v1322
        %v1324 = vpop.f32.mrf.mxu0
        %v1325 = vadd.f32 0.0, %v1324
        %1326 = vmatmul.bf16.gmra.mxu0 %v1203
        %v1327 = vpop.f32.mrf.mxu0
        %v1328 = vadd.f32 0.0, %v1327
        %v1329 = vpop.f32.mrf.mxu0
        %v1330 = vadd.f32 0.0, %v1329
        %1331 = vmatmul.bf16.gmra.mxu0 %v1206
        %v1332 = vpop.f32.mrf.mxu0
        %v1333 = vadd.f32 0.0, %v1332
        %v1334 = vpop.f32.mrf.mxu0
        %v1335 = vadd.f32 0.0, %v1334
        %1336 = vmatmul.bf16.gmra.mxu0 %v1209
        %v1337 = vpop.f32.mrf.mxu0
        %v1338 = vadd.f32 0.0, %v1337
        %v1339 = vpop.f32.mrf.mxu0
        %v1340 = vadd.f32 0.0, %v1339
        %1341 = vmatmul.bf16.gmra.mxu0 %v1212
        %v1342 = vpop.f32.mrf.mxu0
        %v1343 = vadd.f32 0.0, %v1342
        %v1344 = vpop.f32.mrf.mxu0
        %v1345 = vadd.f32 0.0, %v1344
        %1346 = vmatmul.bf16.gmra.mxu0 %v1215
        %v1347 = vpop.f32.mrf.mxu0
        %v1348 = vadd.f32 0.0, %v1347
        %v1349 = vpop.f32.mrf.mxu0
        %v1350 = vadd.f32 0.0, %v1349
        %1351 = vmatmul.bf16.gmra.mxu0 %v1218
        %v1352 = vpop.f32.mrf.mxu0
        %v1353 = vadd.f32 0.0, %v1352
        %v1354 = vpop.f32.mrf.mxu0
        %v1355 = vadd.f32 0.0, %v1354
        %1356 = vmatmul.bf16.gmra.mxu0 %v1221
        %v1357 = vpop.f32.mrf.mxu0
        %v1358 = vadd.f32 0.0, %v1357
        %v1359 = vpop.f32.mrf.mxu0
        %v1360 = vadd.f32 0.0, %v1359
        %1361 = vmatmul.bf16.gmra.mxu0 %v1224
        %v1362 = vpop.f32.mrf.mxu0
        %v1363 = vadd.f32 0.0, %v1362
        %v1364 = vpop.f32.mrf.mxu0
        %v1365 = vadd.f32 0.0, %v1364
        %1366 = vmatmul.bf16.gmra.mxu0 %v1227
        %v1367 = vpop.f32.mrf.mxu0
        %v1368 = vadd.f32 0.0, %v1367
        %v1369 = vpop.f32.mrf.mxu0
        %v1370 = vadd.f32 0.0, %v1369
        %1371 = vmatmul.bf16.gmra.mxu0 %v1230
        %v1372 = vpop.f32.mrf.mxu0
        %v1373 = vadd.f32 0.0, %v1372
        %v1374 = vpop.f32.mrf.mxu0
        %v1375 = vadd.f32 0.0, %v1374
        %1376 = vmatmul.bf16.gmra.mxu0 %v1233
        %v1377 = vpop.f32.mrf.mxu0
        %v1378 = vadd.f32 0.0, %v1377
        %v1379 = vpop.f32.mrf.mxu0
        %v1380 = vadd.f32 0.0, %v1379
        %1381 = vmatmul.bf16.gmra.mxu0 %v1236
        %v1382 = vpop.f32.mrf.mxu0
        %v1383 = vadd.f32 0.0, %v1382
        %v1384 = vpop.f32.mrf.mxu0
        %v1385 = vadd.f32 0.0, %v1384
        %1386 = vmatmul.bf16.gmra.mxu0 %v1239
        %v1387 = vpop.f32.mrf.mxu0
        %v1388 = vadd.f32 0.0, %v1387
        %v1389 = vpop.f32.mrf.mxu0
        %v1390 = vadd.f32 0.0, %v1389
        %1391 = vmatmul.bf16.gmra.mxu0 %v1242
        %v1392 = vpop.f32.mrf.mxu0
        %v1393 = vadd.f32 0.0, %v1392
        %v1394 = vpop.f32.mrf.mxu0
        %v1395 = vadd.f32 0.0, %v1394
        %1396 = vmatmul.bf16.gmra.mxu0 %v1245
        %v1397 = vpop.f32.mrf.mxu0
        %v1398 = vadd.f32 0.0, %v1397
        %v1399 = vpop.f32.mrf.mxu0
        %v1400 = vadd.f32 0.0, %v1399
        %1401 = vmatmul.bf16.gmra.mxu0 %v1248
        %v1402 = vpop.f32.mrf.mxu0
        %v1403 = vadd.f32 0.0, %v1402
        %v1404 = vpop.f32.mrf.mxu0
        %v1405 = vadd.f32 0.0, %v1404
        %1406 = vmatmul.bf16.gmra.mxu0 %v1251
        %v1407 = vpop.f32.mrf.mxu0
        %v1408 = vadd.f32 0.0, %v1407
        %v1409 = vpop.f32.mrf.mxu0
        %v1410 = vadd.f32 0.0, %v1409
        %1411 = vmatmul.bf16.gmra.mxu0 %v1254
        %v1412 = vpop.f32.mrf.mxu0
        %v1413 = vadd.f32 0.0, %v1412
        %v1414 = vpop.f32.mrf.mxu0
        %v1415 = vadd.f32 0.0, %v1414
        %1416 = vmatmul.bf16.gmra.mxu0 %v1257
        %v1417 = vpop.f32.mrf.mxu0
        %v1418 = vadd.f32 0.0, %v1417
        %v1419 = vpop.f32.mrf.mxu0
        %v1420 = vadd.f32 0.0, %v1419
        %1421 = vmatmul.bf16.gmra.mxu0 %v1260
        %v1422 = vpop.f32.mrf.mxu0
        %v1423 = vadd.f32 0.0, %v1422
        %v1424 = vpop.f32.mrf.mxu0
        %v1425 = vadd.f32 0.0, %v1424
        %1426 = vmatmul.bf16.gmra.mxu0 %v1263
        %v1427 = vpop.f32.mrf.mxu0
        %v1428 = vadd.f32 0.0, %v1427
        %v1429 = vpop.f32.mrf.mxu0
        %v1430 = vadd.f32 0.0, %v1429
        %1431 = vmatmul.bf16.gmra.mxu0 %v1266
        %v1432 = vpop.f32.mrf.mxu0
        %v1433 = vadd.f32 0.0, %v1432
        %v1434 = vpop.f32.mrf.mxu0
        %v1435 = vadd.f32 0.0, %v1434
        %1436 = vdwg.mxu0
        %v1437 = vld [vmem:[%s7] sm:$0x1]
        %v1438 = vperm.slane %v1437, 0
        %v1439 = vadd.f32 %v1278, %v1438
        %v1440 = vadd.f32 %v1280, %v1438
        %v1441 = vadd.f32 %v1283, %v1438
        %v1442 = vadd.f32 %v1285, %v1438
        %v1443 = vadd.f32 %v1288, %v1438
        %v1444 = vadd.f32 %v1290, %v1438
        %v1445 = vadd.f32 %v1293, %v1438
        %v1446 = vadd.f32 %v1295, %v1438
        %v1447 = vadd.f32 %v1298, %v1438
        %v1448 = vadd.f32 %v1300, %v1438
        %v1449 = vadd.f32 %v1303, %v1438
        %v1450 = vadd.f32 %v1305, %v1438
        %v1451 = vadd.f32 %v1308, %v1438
        %v1452 = vadd.f32 %v1310, %v1438
        %v1453 = vadd.f32 %v1313, %v1438
        %v1454 = vadd.f32 %v1315, %v1438
        %v1455 = vadd.f32 %v1318, %v1438
        %v1456 = vadd.f32 %v1320, %v1438
        %v1457 = vadd.f32 %v1323, %v1438
        %v1458 = vadd.f32 %v1325, %v1438
        %v1459 = vadd.f32 %v1328, %v1438
        %v1460 = vadd.f32 %v1330, %v1438
        %v1461 = vadd.f32 %v1333, %v1438
        %v1462 = vadd.f32 %v1335, %v1438
        %v1463 = vadd.f32 %v1338, %v1438
        %v1464 = vadd.f32 %v1340, %v1438
        %v1465 = vadd.f32 %v1343, %v1438
        %v1466 = vadd.f32 %v1345, %v1438
        %v1467 = vadd.f32 %v1348, %v1438
        %v1468 = vadd.f32 %v1350, %v1438
        %v1469 = vadd.f32 %v1353, %v1438
        %v1470 = vadd.f32 %v1355, %v1438
        %v1471 = vadd.f32 %v1358, %v1438
        %v1472 = vadd.f32 %v1360, %v1438
        %v1473 = vadd.f32 %v1363, %v1438
        %v1474 = vadd.f32 %v1365, %v1438
        %v1475 = vadd.f32 %v1368, %v1438
        %v1476 = vadd.f32 %v1370, %v1438
        %v1477 = vadd.f32 %v1373, %v1438
        %v1478 = vadd.f32 %v1375, %v1438
        %v1479 = vadd.f32 %v1378, %v1438
        %v1480 = vadd.f32 %v1380, %v1438
        %v1481 = vadd.f32 %v1383, %v1438
        %v1482 = vadd.f32 %v1385, %v1438
        %v1483 = vadd.f32 %v1388, %v1438
        %v1484 = vadd.f32 %v1390, %v1438
        %v1485 = vadd.f32 %v1393, %v1438
        %v1486 = vadd.f32 %v1395, %v1438
        %v1487 = vadd.f32 %v1398, %v1438
        %v1488 = vadd.f32 %v1400, %v1438
        %v1489 = vadd.f32 %v1403, %v1438
        %v1490 = vadd.f32 %v1405, %v1438
        %v1491 = vadd.f32 %v1408, %v1438
        %v1492 = vadd.f32 %v1410, %v1438
        %v1493 = vadd.f32 %v1413, %v1438
        %v1494 = vadd.f32 %v1415, %v1438
        %v1495 = vadd.f32 %v1418, %v1438
        %v1496 = vadd.f32 %v1420, %v1438
        %v1497 = vadd.f32 %v1423, %v1438
        %v1498 = vadd.f32 %v1425, %v1438
        %v1499 = vadd.f32 %v1428, %v1438
        %v1500 = vadd.f32 %v1430, %v1438
        %v1501 = vadd.f32 %v1433, %v1438
        %v1502 = vadd.f32 %v1435, %v1438
        %v1503 = vld [vmem:[%s7 + $0x1] sm:$0x1]
        %v1504 = vperm.slane %v1503, 0
        %1506 = vrot.lane.b32.xlu0 %v1504, 32
        %v1507 = vpop.permute.xlu0 %1506
        %v1509 = vadd.f32 %v1278, %v1507
        %v1510 = vadd.f32 %v1280, %v1507
        %v1511 = vadd.f32 %v1283, %v1507
        %v1512 = vadd.f32 %v1285, %v1507
        %v1513 = vadd.f32 %v1288, %v1507
        %v1514 = vadd.f32 %v1290, %v1507
        %v1515 = vadd.f32 %v1293, %v1507
        %v1516 = vadd.f32 %v1295, %v1507
        %v1517 = vadd.f32 %v1298, %v1507
        %v1518 = vadd.f32 %v1300, %v1507
        %v1519 = vadd.f32 %v1303, %v1507
        %v1520 = vadd.f32 %v1305, %v1507
        %v1521 = vadd.f32 %v1308, %v1507
        %v1522 = vadd.f32 %v1310, %v1507
        %v1523 = vadd.f32 %v1313, %v1507
        %v1524 = vadd.f32 %v1315, %v1507
        %v1525 = vadd.f32 %v1318, %v1507
        %v1526 = vadd.f32 %v1320, %v1507
        %v1527 = vadd.f32 %v1323, %v1507
        %v1528 = vadd.f32 %v1325, %v1507
        %v1529 = vadd.f32 %v1328, %v1507
        %v1530 = vadd.f32 %v1330, %v1507
        %v1531 = vadd.f32 %v1333, %v1507
        %v1532 = vadd.f32 %v1335, %v1507
        %v1533 = vadd.f32 %v1338, %v1507
        %v1534 = vadd.f32 %v1340, %v1507
        %v1535 = vadd.f32 %v1343, %v1507
        %v1536 = vadd.f32 %v1345, %v1507
        %v1537 = vadd.f32 %v1348, %v1507
        %v1538 = vadd.f32 %v1350, %v1507
        %v1539 = vadd.f32 %v1353, %v1507
        %v1540 = vadd.f32 %v1355, %v1507
        %v1541 = vadd.f32 %v1358, %v1507
        %v1542 = vadd.f32 %v1360, %v1507
        %v1543 = vadd.f32 %v1363, %v1507
        %v1544 = vadd.f32 %v1365, %v1507
        %v1545 = vadd.f32 %v1368, %v1507
        %v1546 = vadd.f32 %v1370, %v1507
        %v1547 = vadd.f32 %v1373, %v1507
        %v1548 = vadd.f32 %v1375, %v1507
        %v1549 = vadd.f32 %v1378, %v1507
        %v1550 = vadd.f32 %v1380, %v1507
        %v1551 = vadd.f32 %v1383, %v1507
        %v1552 = vadd.f32 %v1385, %v1507
        %v1553 = vadd.f32 %v1388, %v1507
        %v1554 = vadd.f32 %v1390, %v1507
        %v1555 = vadd.f32 %v1393, %v1507
        %v1556 = vadd.f32 %v1395, %v1507
        %v1557 = vadd.f32 %v1398, %v1507
        %v1558 = vadd.f32 %v1400, %v1507
        %v1559 = vadd.f32 %v1403, %v1507
        %v1560 = vadd.f32 %v1405, %v1507
        %v1561 = vadd.f32 %v1408, %v1507
        %v1562 = vadd.f32 %v1410, %v1507
        %v1563 = vadd.f32 %v1413, %v1507
        %v1564 = vadd.f32 %v1415, %v1507
        %v1565 = vadd.f32 %v1418, %v1507
        %v1566 = vadd.f32 %v1420, %v1507
        %v1567 = vadd.f32 %v1423, %v1507
        %v1568 = vadd.f32 %v1425, %v1507
        %v1569 = vadd.f32 %v1428, %v1507
        %v1570 = vadd.f32 %v1430, %v1507
        %v1571 = vadd.f32 %v1433, %v1507
        %v1572 = vadd.f32 %v1435, %v1507
        %v1573 = vld [vmem:[%s401] sm:$0xf]
        %v1574 = vld [vmem:[%s401 + $0x4] sm:$0xf]
        %v1575 = vld [vmem:[%s401 + $0x8] sm:$0xf]
        %v1576 = vld [vmem:[%s401 + $0xc] sm:$0xf]
        %v1577 = vld [vmem:[%s401 + $0x10] sm:$0xf]
        %v1578 = vld [vmem:[%s401 + $0x14] sm:$0xf]
        %v1579 = vld [vmem:[%s401 + $0x18] sm:$0xf]
        %v1580 = vld [vmem:[%s401 + $0x1c] sm:$0xf]
        %v1581 = vld [vmem:[%s4] sm:$0xf]
        %v1582 = vld [vmem:[%s4 + $0x4] sm:$0xf]
        %v1583 = vld [vmem:[%s4 + $0x8] sm:$0xf]
        %v1584 = vld [vmem:[%s4 + $0xc] sm:$0xf]
        %v1585 = vld [vmem:[%s4 + $0x10] sm:$0xf]
        %v1586 = vld [vmem:[%s4 + $0x14] sm:$0xf]
        %v1587 = vld [vmem:[%s4 + $0x18] sm:$0xf]
        %v1588 = vld [vmem:[%s4 + $0x1c] sm:$0xf]
        %v1597 = vunpack.c.l.b16 %v1573
        %v1598 = vunpack.c.l.b16 %v1574
        %v1599 = vunpack.c.l.b16 %v1575
        %v1600 = vunpack.c.l.b16 %v1576
        %v1601 = vunpack.c.l.b16 %v1577
        %v1602 = vunpack.c.l.b16 %v1578
        %v1603 = vunpack.c.l.b16 %v1579
        %v1604 = vunpack.c.l.b16 %v1580
        %v1605 = vpack.c.b16 %v1598, %v1597
        %v1606 = vpack.c.b16 %v1600, %v1599
        %v1607 = vpack.c.b16 %v1602, %v1601
        %v1608 = vpack.c.b16 %v1604, %v1603
        %v1617 = vunpack.c.l.b16 %v1581
        %v1618 = vunpack.c.l.b16 %v1582
        %v1619 = vunpack.c.l.b16 %v1583
        %v1620 = vunpack.c.l.b16 %v1584
        %v1621 = vunpack.c.l.b16 %v1585
        %v1622 = vunpack.c.l.b16 %v1586
        %v1623 = vunpack.c.l.b16 %v1587
        %v1624 = vunpack.c.l.b16 %v1588
        %v1625 = vpack.c.b16 %v1618, %v1617
        %v1626 = vpack.c.b16 %v1620, %v1619
        %v1627 = vpack.c.b16 %v1622, %v1621
        %v1628 = vpack.c.b16 %v1624, %v1623
        %v1634 = vsel %vm1171, %v1605, 0
        %v1637 = vsel %vm1171, %v1606, 0
        %v1640 = vsel %vm1171, %v1607, 0
        %v1643 = vsel %vm1171, %v1608, 0
        %1645 = vmatpush.bf16.msra.mxu0 0
        %1646 = vmatpush.bf16.msra.mxu0 0
        %1647 = vmatpush.bf16.msra.mxu0 0
        %1648 = vmatpush.bf16.msra.mxu0 0
        %1649 = vmatpush.bf16.msra.mxu0 %v1628
        %1650 = vmatpush.bf16.msra.mxu0 %v1627
        %1651 = vmatpush.bf16.msra.mxu0 %v1626
        %1652 = vmatpush.bf16.msra.mxu0 %v1625
        %1653 = vmatmul.bf16.gmra.mxu0 %v1634
        %v1654 = vpop.f32.mrf.mxu0
        %v1655 = vadd.f32 0.0, %v1654
        %v1656 = vpop.f32.mrf.mxu0
        %v1657 = vadd.f32 0.0, %v1656
        %1658 = vmatmul.bf16.gmra.mxu0 %v1637
        %v1659 = vpop.f32.mrf.mxu0
        %v1660 = vadd.f32 0.0, %v1659
        %v1661 = vpop.f32.mrf.mxu0
        %v1662 = vadd.f32 0.0, %v1661
        %1663 = vmatmul.bf16.gmra.mxu0 %v1640
        %v1664 = vpop.f32.mrf.mxu0
        %v1665 = vadd.f32 0.0, %v1664
        %v1666 = vpop.f32.mrf.mxu0
        %v1667 = vadd.f32 0.0, %v1666
        %1668 = vmatmul.bf16.gmra.mxu0 %v1643
        %v1669 = vpop.f32.mrf.mxu0
        %v1670 = vadd.f32 0.0, %v1669
        %v1671 = vpop.f32.mrf.mxu0
        %v1672 = vadd.f32 0.0, %v1671
        %1673 = vdwg.mxu0
        %v1674 = vld [vmem:[%s7 + $0x2] sm:$0x1]
        %v1675 = vld [vmem:[%s7 + $0x9] sm:$0x1]
        %s1676 = sld [smem:[#allocation5]]
        %v1677 = vperm.slane %v480, 0
        %v1678 = vlaneseq
        %v1679 = vshrl.u32 %v1678, 7
        %1681 = vset.pattern.permute.xlu0 %v1679
        %1682 = vperm.xlu0 %1681, %v1677
        %v1683 = vpop.permute.xlu0 %1682
        %v1684 = vperm.slane %v480, 1
        %v1685 = vlaneseq
        %v1686 = vshrl.u32 %v1685, 7
        %1688 = vset.pattern.permute.xlu0 %v1686
        %1689 = vperm.xlu0 %1688, %v1684
        %v1690 = vpop.permute.xlu0 %1689
        %v1691 = vperm.slane %v480, 2
        %v1692 = vlaneseq
        %v1693 = vshrl.u32 %v1692, 7
        %1695 = vset.pattern.permute.xlu0 %v1693
        %1696 = vperm.xlu0 %1695, %v1691
        %v1697 = vpop.permute.xlu0 %1696
        %v1698 = vperm.slane %v480, 3
        %v1699 = vlaneseq
        %v1700 = vshrl.u32 %v1699, 7
        %1702 = vset.pattern.permute.xlu0 %v1700
        %1703 = vperm.xlu0 %1702, %v1698
        %v1704 = vpop.permute.xlu0 %1703
        %v1705 = vperm.slane %v480, 4
        %v1706 = vlaneseq
        %v1707 = vshrl.u32 %v1706, 7
        %1709 = vset.pattern.permute.xlu0 %v1707
        %1710 = vperm.xlu0 %1709, %v1705
        %v1711 = vpop.permute.xlu0 %1710
        %v1712 = vperm.slane %v480, 5
        %v1713 = vlaneseq
        %v1714 = vshrl.u32 %v1713, 7
        %1716 = vset.pattern.permute.xlu0 %v1714
        %1717 = vperm.xlu0 %1716, %v1712
        %v1718 = vpop.permute.xlu0 %1717
        %v1719 = vperm.slane %v480, 6
        %v1720 = vlaneseq
        %v1721 = vshrl.u32 %v1720, 7
        %1723 = vset.pattern.permute.xlu0 %v1721
        %1724 = vperm.xlu0 %1723, %v1719
        %v1725 = vpop.permute.xlu0 %1724
        %v1726 = vperm.slane %v480, 7
        %v1727 = vlaneseq
        %v1728 = vshrl.u32 %v1727, 7
        %1730 = vset.pattern.permute.xlu0 %v1728
        %1731 = vperm.xlu0 %1730, %v1726
        %v1732 = vpop.permute.xlu0 %1731
        %v1733 = vperm.slane %v481, 0
        %v1734 = vlaneseq
        %v1735 = vshrl.u32 %v1734, 7
        %1737 = vset.pattern.permute.xlu0 %v1735
        %1738 = vperm.xlu0 %1737, %v1733
        %v1739 = vpop.permute.xlu0 %1738
        %v1740 = vperm.slane %v481, 1
        %v1741 = vlaneseq
        %v1742 = vshrl.u32 %v1741, 7
        %1744 = vset.pattern.permute.xlu0 %v1742
        %1745 = vperm.xlu0 %1744, %v1740
        %v1746 = vpop.permute.xlu0 %1745
        %v1747 = vperm.slane %v481, 2
        %v1748 = vlaneseq
        %v1749 = vshrl.u32 %v1748, 7
        %1751 = vset.pattern.permute.xlu0 %v1749
        %1752 = vperm.xlu0 %1751, %v1747
        %v1753 = vpop.permute.xlu0 %1752
        %v1754 = vperm.slane %v481, 3
        %v1755 = vlaneseq
        %v1756 = vshrl.u32 %v1755, 7
        %1758 = vset.pattern.permute.xlu0 %v1756
        %1759 = vperm.xlu0 %1758, %v1754
        %v1760 = vpop.permute.xlu0 %1759
        %v1761 = vperm.slane %v481, 4
        %v1762 = vlaneseq
        %v1763 = vshrl.u32 %v1762, 7
        %1765 = vset.pattern.permute.xlu0 %v1763
        %1766 = vperm.xlu0 %1765, %v1761
        %v1767 = vpop.permute.xlu0 %1766
        %v1768 = vperm.slane %v481, 5
        %v1769 = vlaneseq
        %v1770 = vshrl.u32 %v1769, 7
        %1772 = vset.pattern.permute.xlu0 %v1770
        %1773 = vperm.xlu0 %1772, %v1768
        %v1774 = vpop.permute.xlu0 %1773
        %v1775 = vperm.slane %v481, 6
        %v1776 = vlaneseq
        %v1777 = vshrl.u32 %v1776, 7
        %1779 = vset.pattern.permute.xlu0 %v1777
        %1780 = vperm.xlu0 %1779, %v1775
        %v1781 = vpop.permute.xlu0 %1780
        %v1782 = vperm.slane %v481, 7
        %v1783 = vlaneseq
        %v1784 = vshrl.u32 %v1783, 7
        %1786 = vset.pattern.permute.xlu0 %v1784
        %1787 = vperm.xlu0 %1786, %v1782
        %v1788 = vpop.permute.xlu0 %1787
        %v1789 = vperm.slane %v482, 0
        %v1790 = vlaneseq
        %v1791 = vshrl.u32 %v1790, 7
        %1793 = vset.pattern.permute.xlu0 %v1791
        %1794 = vperm.xlu0 %1793, %v1789
        %v1795 = vpop.permute.xlu0 %1794
        %v1796 = vperm.slane %v482, 1
        %v1797 = vlaneseq
        %v1798 = vshrl.u32 %v1797, 7
        %1800 = vset.pattern.permute.xlu0 %v1798
        %1801 = vperm.xlu0 %1800, %v1796
        %v1802 = vpop.permute.xlu0 %1801
        %v1803 = vperm.slane %v482, 2
        %v1804 = vlaneseq
        %v1805 = vshrl.u32 %v1804, 7
        %1807 = vset.pattern.permute.xlu0 %v1805
        %1808 = vperm.xlu0 %1807, %v1803
        %v1809 = vpop.permute.xlu0 %1808
        %v1810 = vperm.slane %v482, 3
        %v1811 = vlaneseq
        %v1812 = vshrl.u32 %v1811, 7
        %1814 = vset.pattern.permute.xlu0 %v1812
        %1815 = vperm.xlu0 %1814, %v1810
        %v1816 = vpop.permute.xlu0 %1815
        %v1817 = vperm.slane %v482, 4
        %v1818 = vlaneseq
        %v1819 = vshrl.u32 %v1818, 7
        %1821 = vset.pattern.permute.xlu0 %v1819
        %1822 = vperm.xlu0 %1821, %v1817
        %v1823 = vpop.permute.xlu0 %1822
        %v1824 = vperm.slane %v482, 5
        %v1825 = vlaneseq
        %v1826 = vshrl.u32 %v1825, 7
        %1828 = vset.pattern.permute.xlu0 %v1826
        %1829 = vperm.xlu0 %1828, %v1824
        %v1830 = vpop.permute.xlu0 %1829
        %v1831 = vperm.slane %v482, 6
        %v1832 = vlaneseq
        %v1833 = vshrl.u32 %v1832, 7
        %1835 = vset.pattern.permute.xlu0 %v1833
        %1836 = vperm.xlu0 %1835, %v1831
        %v1837 = vpop.permute.xlu0 %1836
        %v1838 = vperm.slane %v482, 7
        %v1839 = vlaneseq
        %v1840 = vshrl.u32 %v1839, 7
        %1842 = vset.pattern.permute.xlu0 %v1840
        %1843 = vperm.xlu0 %1842, %v1838
        %v1844 = vpop.permute.xlu0 %1843
        %v1845 = vperm.slane %v483, 0
        %v1846 = vlaneseq
        %v1847 = vshrl.u32 %v1846, 7
        %1849 = vset.pattern.permute.xlu0 %v1847
        %1850 = vperm.xlu0 %1849, %v1845
        %v1851 = vpop.permute.xlu0 %1850
        %v1852 = vperm.slane %v483, 1
        %v1853 = vlaneseq
        %v1854 = vshrl.u32 %v1853, 7
        %1856 = vset.pattern.permute.xlu0 %v1854
        %1857 = vperm.xlu0 %1856, %v1852
        %v1858 = vpop.permute.xlu0 %1857
        %v1859 = vperm.slane %v483, 2
        %v1860 = vlaneseq
        %v1861 = vshrl.u32 %v1860, 7
        %1863 = vset.pattern.permute.xlu0 %v1861
        %1864 = vperm.xlu0 %1863, %v1859
        %v1865 = vpop.permute.xlu0 %1864
        %v1866 = vperm.slane %v483, 3
        %v1867 = vlaneseq
        %v1868 = vshrl.u32 %v1867, 7
        %1870 = vset.pattern.permute.xlu0 %v1868
        %1871 = vperm.xlu0 %1870, %v1866
        %v1872 = vpop.permute.xlu0 %1871
        %v1873 = vperm.slane %v483, 4
        %v1874 = vlaneseq
        %v1875 = vshrl.u32 %v1874, 7
        %1877 = vset.pattern.permute.xlu0 %v1875
        %1878 = vperm.xlu0 %1877, %v1873
        %v1879 = vpop.permute.xlu0 %1878
        %v1880 = vperm.slane %v483, 5
        %v1881 = vlaneseq
        %v1882 = vshrl.u32 %v1881, 7
        %1884 = vset.pattern.permute.xlu0 %v1882
        %1885 = vperm.xlu0 %1884, %v1880
        %v1886 = vpop.permute.xlu0 %1885
        %v1887 = vperm.slane %v483, 6
        %v1888 = vlaneseq
        %v1889 = vshrl.u32 %v1888, 7
        %1891 = vset.pattern.permute.xlu0 %v1889
        %1892 = vperm.xlu0 %1891, %v1887
        %v1893 = vpop.permute.xlu0 %1892
        %v1894 = vperm.slane %v483, 7
        %v1895 = vlaneseq
        %v1896 = vshrl.u32 %v1895, 7
        %1898 = vset.pattern.permute.xlu0 %v1896
        %1899 = vperm.xlu0 %1898, %v1894
        %v1900 = vpop.permute.xlu0 %1899
        %v1901 = vperm.slane %v484, 0
        %v1902 = vlaneseq
        %v1903 = vshrl.u32 %v1902, 7
        %1905 = vset.pattern.permute.xlu0 %v1903
        %1906 = vperm.xlu0 %1905, %v1901
        %v1907 = vpop.permute.xlu0 %1906
        %v1908 = vperm.slane %v484, 1
        %v1909 = vlaneseq
        %v1910 = vshrl.u32 %v1909, 7
        %1912 = vset.pattern.permute.xlu0 %v1910
        %1913 = vperm.xlu0 %1912, %v1908
        %v1914 = vpop.permute.xlu0 %1913
        %v1915 = vperm.slane %v484, 2
        %v1916 = vlaneseq
        %v1917 = vshrl.u32 %v1916, 7
        %1919 = vset.pattern.permute.xlu0 %v1917
        %1920 = vperm.xlu0 %1919, %v1915
        %v1921 = vpop.permute.xlu0 %1920
        %v1922 = vperm.slane %v484, 3
        %v1923 = vlaneseq
        %v1924 = vshrl.u32 %v1923, 7
        %1926 = vset.pattern.permute.xlu0 %v1924
        %1927 = vperm.xlu0 %1926, %v1922
        %v1928 = vpop.permute.xlu0 %1927
        %v1929 = vperm.slane %v484, 4
        %v1930 = vlaneseq
        %v1931 = vshrl.u32 %v1930, 7
        %1933 = vset.pattern.permute.xlu0 %v1931
        %1934 = vperm.xlu0 %1933, %v1929
        %v1935 = vpop.permute.xlu0 %1934
        %v1936 = vperm.slane %v484, 5
        %v1937 = vlaneseq
        %v1938 = vshrl.u32 %v1937, 7
        %1940 = vset.pattern.permute.xlu0 %v1938
        %1941 = vperm.xlu0 %1940, %v1936
        %v1942 = vpop.permute.xlu0 %1941
        %v1943 = vperm.slane %v484, 6
        %v1944 = vlaneseq
        %v1945 = vshrl.u32 %v1944, 7
        %1947 = vset.pattern.permute.xlu0 %v1945
        %1948 = vperm.xlu0 %1947, %v1943
        %v1949 = vpop.permute.xlu0 %1948
        %v1950 = vperm.slane %v484, 7
        %v1951 = vlaneseq
        %v1952 = vshrl.u32 %v1951, 7
        %1954 = vset.pattern.permute.xlu0 %v1952
        %1955 = vperm.xlu0 %1954, %v1950
        %v1956 = vpop.permute.xlu0 %1955
        %v1957 = vperm.slane %v485, 0
        %v1958 = vlaneseq
        %v1959 = vshrl.u32 %v1958, 7
        %1961 = vset.pattern.permute.xlu0 %v1959
        %1962 = vperm.xlu0 %1961, %v1957
        %v1963 = vpop.permute.xlu0 %1962
        %v1964 = vperm.slane %v485, 1
        %v1965 = vlaneseq
        %v1966 = vshrl.u32 %v1965, 7
        %1968 = vset.pattern.permute.xlu0 %v1966
        %1969 = vperm.xlu0 %1968, %v1964
        %v1970 = vpop.permute.xlu0 %1969
        %v1971 = vperm.slane %v485, 2
        %v1972 = vlaneseq
        %v1973 = vshrl.u32 %v1972, 7
        %1975 = vset.pattern.permute.xlu0 %v1973
        %1976 = vperm.xlu0 %1975, %v1971
        %v1977 = vpop.permute.xlu0 %1976
        %v1978 = vperm.slane %v485, 3
        %v1979 = vlaneseq
        %v1980 = vshrl.u32 %v1979, 7
        %1982 = vset.pattern.permute.xlu0 %v1980
        %1983 = vperm.xlu0 %1982, %v1978
        %v1984 = vpop.permute.xlu0 %1983
        %v1985 = vperm.slane %v485, 4
        %v1986 = vlaneseq
        %v1987 = vshrl.u32 %v1986, 7
        %1989 = vset.pattern.permute.xlu0 %v1987
        %1990 = vperm.xlu0 %1989, %v1985
        %v1991 = vpop.permute.xlu0 %1990
        %v1992 = vperm.slane %v485, 5
        %v1993 = vlaneseq
        %v1994 = vshrl.u32 %v1993, 7
        %1996 = vset.pattern.permute.xlu0 %v1994
        %1997 = vperm.xlu0 %1996, %v1992
        %v1998 = vpop.permute.xlu0 %1997
        %v1999 = vperm.slane %v485, 6
        %v2000 = vlaneseq
        %v2001 = vshrl.u32 %v2000, 7
        %2003 = vset.pattern.permute.xlu0 %v2001
        %2004 = vperm.xlu0 %2003, %v1999
        %v2005 = vpop.permute.xlu0 %2004
        %v2006 = vperm.slane %v485, 7
        %v2007 = vlaneseq
        %v2008 = vshrl.u32 %v2007, 7
        %2010 = vset.pattern.permute.xlu0 %v2008
        %2011 = vperm.xlu0 %2010, %v2006
        %v2012 = vpop.permute.xlu0 %2011
        %v2013 = vperm.slane %v486, 0
        %v2014 = vlaneseq
        %v2015 = vshrl.u32 %v2014, 7
        %2017 = vset.pattern.permute.xlu0 %v2015
        %2018 = vperm.xlu0 %2017, %v2013
        %v2019 = vpop.permute.xlu0 %2018
        %v2020 = vperm.slane %v486, 1
        %v2021 = vlaneseq
        %v2022 = vshrl.u32 %v2021, 7
        %2024 = vset.pattern.permute.xlu0 %v2022
        %2025 = vperm.xlu0 %2024, %v2020
        %v2026 = vpop.permute.xlu0 %2025
        %v2027 = vperm.slane %v486, 2
        %v2028 = vlaneseq
        %v2029 = vshrl.u32 %v2028, 7
        %2031 = vset.pattern.permute.xlu0 %v2029
        %2032 = vperm.xlu0 %2031, %v2027
        %v2033 = vpop.permute.xlu0 %2032
        %v2034 = vperm.slane %v486, 3
        %v2035 = vlaneseq
        %v2036 = vshrl.u32 %v2035, 7
        %2038 = vset.pattern.permute.xlu0 %v2036
        %2039 = vperm.xlu0 %2038, %v2034
        %v2040 = vpop.permute.xlu0 %2039
        %v2041 = vperm.slane %v486, 4
        %v2042 = vlaneseq
        %v2043 = vshrl.u32 %v2042, 7
        %2045 = vset.pattern.permute.xlu0 %v2043
        %2046 = vperm.xlu0 %2045, %v2041
        %v2047 = vpop.permute.xlu0 %2046
        %v2048 = vperm.slane %v486, 5
        %v2049 = vlaneseq
        %v2050 = vshrl.u32 %v2049, 7
        %2052 = vset.pattern.permute.xlu0 %v2050
        %2053 = vperm.xlu0 %2052, %v2048
        %v2054 = vpop.permute.xlu0 %2053
        %v2055 = vperm.slane %v486, 6
        %v2056 = vlaneseq
        %v2057 = vshrl.u32 %v2056, 7
        %2059 = vset.pattern.permute.xlu0 %v2057
        %2060 = vperm.xlu0 %2059, %v2055
        %v2061 = vpop.permute.xlu0 %2060
        %v2062 = vperm.slane %v486, 7
        %v2063 = vlaneseq
        %v2064 = vshrl.u32 %v2063, 7
        %2066 = vset.pattern.permute.xlu0 %v2064
        %2067 = vperm.xlu0 %2066, %v2062
        %v2068 = vpop.permute.xlu0 %2067
        %v2069 = vperm.slane %v487, 0
        %v2070 = vlaneseq
        %v2071 = vshrl.u32 %v2070, 7
        %2073 = vset.pattern.permute.xlu0 %v2071
        %2074 = vperm.xlu0 %2073, %v2069
        %v2075 = vpop.permute.xlu0 %2074
        %v2076 = vperm.slane %v487, 1
        %v2077 = vlaneseq
        %v2078 = vshrl.u32 %v2077, 7
        %2080 = vset.pattern.permute.xlu0 %v2078
        %2081 = vperm.xlu0 %2080, %v2076
        %v2082 = vpop.permute.xlu0 %2081
        %v2083 = vperm.slane %v487, 2
        %v2084 = vlaneseq
        %v2085 = vshrl.u32 %v2084, 7
        %2087 = vset.pattern.permute.xlu0 %v2085
        %2088 = vperm.xlu0 %2087, %v2083
        %v2089 = vpop.permute.xlu0 %2088
        %v2090 = vperm.slane %v487, 3
        %v2091 = vlaneseq
        %v2092 = vshrl.u32 %v2091, 7
        %2094 = vset.pattern.permute.xlu0 %v2092
        %2095 = vperm.xlu0 %2094, %v2090
        %v2096 = vpop.permute.xlu0 %2095
        %v2097 = vperm.slane %v487, 4
        %v2098 = vlaneseq
        %v2099 = vshrl.u32 %v2098, 7
        %2101 = vset.pattern.permute.xlu0 %v2099
        %2102 = vperm.xlu0 %2101, %v2097
        %v2103 = vpop.permute.xlu0 %2102
        %v2104 = vperm.slane %v487, 5
        %v2105 = vlaneseq
        %v2106 = vshrl.u32 %v2105, 7
        %2108 = vset.pattern.permute.xlu0 %v2106
        %2109 = vperm.xlu0 %2108, %v2104
        %v2110 = vpop.permute.xlu0 %2109
        %v2111 = vperm.slane %v487, 6
        %v2112 = vlaneseq
        %v2113 = vshrl.u32 %v2112, 7
        %2115 = vset.pattern.permute.xlu0 %v2113
        %2116 = vperm.xlu0 %2115, %v2111
        %v2117 = vpop.permute.xlu0 %2116
        %v2118 = vperm.slane %v487, 7
        %v2119 = vlaneseq
        %v2120 = vshrl.u32 %v2119, 7
        %2122 = vset.pattern.permute.xlu0 %v2120
        %2123 = vperm.xlu0 %2122, %v2118
        %v2124 = vpop.permute.xlu0 %2123
        %v2133 = vrot.slane %v1655, 1
        %v2134 = vrot.slane %v1655, 2
        %v2135 = vrot.slane %v1655, 3
        %v2136 = vrot.slane %v1655, 4
        %v2137 = vrot.slane %v1655, 5
        %v2138 = vrot.slane %v1655, 6
        %v2139 = vrot.slane %v1655, 7
        %v2140 = vrot.slane %v1657, 1
        %v2141 = vrot.slane %v1657, 2
        %v2142 = vrot.slane %v1657, 3
        %v2143 = vrot.slane %v1657, 4
        %v2144 = vrot.slane %v1657, 5
        %v2145 = vrot.slane %v1657, 6
        %v2146 = vrot.slane %v1657, 7
        %v2147 = vrot.slane %v1660, 1
        %v2148 = vrot.slane %v1660, 2
        %v2149 = vrot.slane %v1660, 3
        %v2150 = vrot.slane %v1660, 4
        %v2151 = vrot.slane %v1660, 5
        %v2152 = vrot.slane %v1660, 6
        %v2153 = vrot.slane %v1660, 7
        %v2154 = vrot.slane %v1662, 1
        %v2155 = vrot.slane %v1662, 2
        %v2156 = vrot.slane %v1662, 3
        %v2157 = vrot.slane %v1662, 4
        %v2158 = vrot.slane %v1662, 5
        %v2159 = vrot.slane %v1662, 6
        %v2160 = vrot.slane %v1662, 7
        %v2161 = vrot.slane %v1665, 1
        %v2162 = vrot.slane %v1665, 2
        %v2163 = vrot.slane %v1665, 3
        %v2164 = vrot.slane %v1665, 4
        %v2165 = vrot.slane %v1665, 5
        %v2166 = vrot.slane %v1665, 6
        %v2167 = vrot.slane %v1665, 7
        %v2168 = vrot.slane %v1667, 1
        %v2169 = vrot.slane %v1667, 2
        %v2170 = vrot.slane %v1667, 3
        %v2171 = vrot.slane %v1667, 4
        %v2172 = vrot.slane %v1667, 5
        %v2173 = vrot.slane %v1667, 6
        %v2174 = vrot.slane %v1667, 7
        %v2175 = vrot.slane %v1670, 1
        %v2176 = vrot.slane %v1670, 2
        %v2177 = vrot.slane %v1670, 3
        %v2178 = vrot.slane %v1670, 4
        %v2179 = vrot.slane %v1670, 5
        %v2180 = vrot.slane %v1670, 6
        %v2181 = vrot.slane %v1670, 7
        %v2182 = vrot.slane %v1672, 1
        %v2183 = vrot.slane %v1672, 2
        %v2184 = vrot.slane %v1672, 3
        %v2185 = vrot.slane %v1672, 4
        %v2186 = vrot.slane %v1672, 5
        %v2187 = vrot.slane %v1672, 6
        %v2188 = vrot.slane %v1672, 7
        %v2189 = vperm.slane %v1655, 0
        %v2190 = vperm.slane %v2133, 0
        %v2191 = vperm.slane %v2134, 0
        %v2192 = vperm.slane %v2135, 0
        %v2193 = vperm.slane %v2136, 0
        %v2194 = vperm.slane %v2137, 0
        %v2195 = vperm.slane %v2138, 0
        %v2196 = vperm.slane %v2139, 0
        %v2197 = vperm.slane %v1657, 0
        %v2198 = vperm.slane %v2140, 0
        %v2199 = vperm.slane %v2141, 0
        %v2200 = vperm.slane %v2142, 0
        %v2201 = vperm.slane %v2143, 0
        %v2202 = vperm.slane %v2144, 0
        %v2203 = vperm.slane %v2145, 0
        %v2204 = vperm.slane %v2146, 0
        %v2205 = vperm.slane %v1660, 0
        %v2206 = vperm.slane %v2147, 0
        %v2207 = vperm.slane %v2148, 0
        %v2208 = vperm.slane %v2149, 0
        %v2209 = vperm.slane %v2150, 0
        %v2210 = vperm.slane %v2151, 0
        %v2211 = vperm.slane %v2152, 0
        %v2212 = vperm.slane %v2153, 0
        %v2213 = vperm.slane %v1662, 0
        %v2214 = vperm.slane %v2154, 0
        %v2215 = vperm.slane %v2155, 0
        %v2216 = vperm.slane %v2156, 0
        %v2217 = vperm.slane %v2157, 0
        %v2218 = vperm.slane %v2158, 0
        %v2219 = vperm.slane %v2159, 0
        %v2220 = vperm.slane %v2160, 0
        %v2221 = vperm.slane %v1665, 0
        %v2222 = vperm.slane %v2161, 0
        %v2223 = vperm.slane %v2162, 0
        %v2224 = vperm.slane %v2163, 0
        %v2225 = vperm.slane %v2164, 0
        %v2226 = vperm.slane %v2165, 0
        %v2227 = vperm.slane %v2166, 0
        %v2228 = vperm.slane %v2167, 0
        %v2229 = vperm.slane %v1667, 0
        %v2230 = vperm.slane %v2168, 0
        %v2231 = vperm.slane %v2169, 0
        %v2232 = vperm.slane %v2170, 0
        %v2233 = vperm.slane %v2171, 0
        %v2234 = vperm.slane %v2172, 0
        %v2235 = vperm.slane %v2173, 0
        %v2236 = vperm.slane %v2174, 0
        %v2237 = vperm.slane %v1670, 0
        %v2238 = vperm.slane %v2175, 0
        %v2239 = vperm.slane %v2176, 0
        %v2240 = vperm.slane %v2177, 0
        %v2241 = vperm.slane %v2178, 0
        %v2242 = vperm.slane %v2179, 0
        %v2243 = vperm.slane %v2180, 0
        %v2244 = vperm.slane %v2181, 0
        %v2245 = vperm.slane %v1672, 0
        %v2246 = vperm.slane %v2182, 0
        %v2247 = vperm.slane %v2183, 0
        %v2248 = vperm.slane %v2184, 0
        %v2249 = vperm.slane %v2185, 0
        %v2250 = vperm.slane %v2186, 0
        %v2251 = vperm.slane %v2187, 0
        %v2252 = vperm.slane %v2188, 0
        %v2317 = vmul.f32 %v1683, %v2189
        %v2318 = vmul.f32 %v1690, %v2190
        %v2319 = vmul.f32 %v1697, %v2191
        %v2320 = vmul.f32 %v1704, %v2192
        %v2321 = vmul.f32 %v1711, %v2193
        %v2322 = vmul.f32 %v1718, %v2194
        %v2323 = vmul.f32 %v1725, %v2195
        %v2324 = vmul.f32 %v1732, %v2196
        %v2325 = vmul.f32 %v1739, %v2197
        %v2326 = vmul.f32 %v1746, %v2198
        %v2327 = vmul.f32 %v1753, %v2199
        %v2328 = vmul.f32 %v1760, %v2200
        %v2329 = vmul.f32 %v1767, %v2201
        %v2330 = vmul.f32 %v1774, %v2202
        %v2331 = vmul.f32 %v1781, %v2203
        %v2332 = vmul.f32 %v1788, %v2204
        %v2333 = vmul.f32 %v1795, %v2205
        %v2334 = vmul.f32 %v1802, %v2206
        %v2335 = vmul.f32 %v1809, %v2207
        %v2336 = vmul.f32 %v1816, %v2208
        %v2337 = vmul.f32 %v1823, %v2209
        %v2338 = vmul.f32 %v1830, %v2210
        %v2339 = vmul.f32 %v1837, %v2211
        %v2340 = vmul.f32 %v1844, %v2212
        %v2341 = vmul.f32 %v1851, %v2213
        %v2342 = vmul.f32 %v1858, %v2214
        %v2343 = vmul.f32 %v1865, %v2215
        %v2344 = vmul.f32 %v1872, %v2216
        %v2345 = vmul.f32 %v1879, %v2217
        %v2346 = vmul.f32 %v1886, %v2218
        %v2347 = vmul.f32 %v1893, %v2219
        %v2348 = vmul.f32 %v1900, %v2220
        %v2349 = vmul.f32 %v1907, %v2221
        %v2350 = vmul.f32 %v1914, %v2222
        %v2351 = vmul.f32 %v1921, %v2223
        %v2352 = vmul.f32 %v1928, %v2224
        %v2353 = vmul.f32 %v1935, %v2225
        %v2354 = vmul.f32 %v1942, %v2226
        %v2355 = vmul.f32 %v1949, %v2227
        %v2356 = vmul.f32 %v1956, %v2228
        %v2357 = vmul.f32 %v1963, %v2229
        %v2358 = vmul.f32 %v1970, %v2230
        %v2359 = vmul.f32 %v1977, %v2231
        %v2360 = vmul.f32 %v1984, %v2232
        %v2361 = vmul.f32 %v1991, %v2233
        %v2362 = vmul.f32 %v1998, %v2234
        %v2363 = vmul.f32 %v2005, %v2235
        %v2364 = vmul.f32 %v2012, %v2236
        %v2365 = vmul.f32 %v2019, %v2237
        %v2366 = vmul.f32 %v2026, %v2238
        %v2367 = vmul.f32 %v2033, %v2239
        %v2368 = vmul.f32 %v2040, %v2240
        %v2369 = vmul.f32 %v2047, %v2241
        %v2370 = vmul.f32 %v2054, %v2242
        %v2371 = vmul.f32 %v2061, %v2243
        %v2372 = vmul.f32 %v2068, %v2244
        %v2373 = vmul.f32 %v2075, %v2245
        %v2374 = vmul.f32 %v2082, %v2246
        %v2375 = vmul.f32 %v2089, %v2247
        %v2376 = vmul.f32 %v2096, %v2248
        %v2377 = vmul.f32 %v2103, %v2249
        %v2378 = vmul.f32 %v2110, %v2250
        %v2379 = vmul.f32 %v2117, %v2251
        %v2380 = vmul.f32 %v2124, %v2252
        %2445 = vrot.lane.b32.xlu0 %v2317, 64
        %v2446 = vpop.permute.xlu0 %2445
        %2447 = vrot.lane.b32.xlu0 %v2318, 64
        %v2448 = vpop.permute.xlu0 %2447
        %2449 = vrot.lane.b32.xlu0 %v2319, 64
        %v2450 = vpop.permute.xlu0 %2449
        %2451 = vrot.lane.b32.xlu0 %v2320, 64
        %v2452 = vpop.permute.xlu0 %2451
        %2453 = vrot.lane.b32.xlu0 %v2321, 64
        %v2454 = vpop.permute.xlu0 %2453
        %2455 = vrot.lane.b32.xlu0 %v2322, 64
        %v2456 = vpop.permute.xlu0 %2455
        %2457 = vrot.lane.b32.xlu0 %v2323, 64
        %v2458 = vpop.permute.xlu0 %2457
        %2459 = vrot.lane.b32.xlu0 %v2324, 64
        %v2460 = vpop.permute.xlu0 %2459
        %2461 = vrot.lane.b32.xlu0 %v2325, 64
        %v2462 = vpop.permute.xlu0 %2461
        %2463 = vrot.lane.b32.xlu0 %v2326, 64
        %v2464 = vpop.permute.xlu0 %2463
        %2465 = vrot.lane.b32.xlu0 %v2327, 64
        %v2466 = vpop.permute.xlu0 %2465
        %2467 = vrot.lane.b32.xlu0 %v2328, 64
        %v2468 = vpop.permute.xlu0 %2467
        %2469 = vrot.lane.b32.xlu0 %v2329, 64
        %v2470 = vpop.permute.xlu0 %2469
        %2471 = vrot.lane.b32.xlu0 %v2330, 64
        %v2472 = vpop.permute.xlu0 %2471
        %2473 = vrot.lane.b32.xlu0 %v2331, 64
        %v2474 = vpop.permute.xlu0 %2473
        %2475 = vrot.lane.b32.xlu0 %v2332, 64
        %v2476 = vpop.permute.xlu0 %2475
        %2477 = vrot.lane.b32.xlu0 %v2333, 64
        %v2478 = vpop.permute.xlu0 %2477
        %2479 = vrot.lane.b32.xlu0 %v2334, 64
        %v2480 = vpop.permute.xlu0 %2479
        %2481 = vrot.lane.b32.xlu0 %v2335, 64
        %v2482 = vpop.permute.xlu0 %2481
        %2483 = vrot.lane.b32.xlu0 %v2336, 64
        %v2484 = vpop.permute.xlu0 %2483
        %2485 = vrot.lane.b32.xlu0 %v2337, 64
        %v2486 = vpop.permute.xlu0 %2485
        %2487 = vrot.lane.b32.xlu0 %v2338, 64
        %v2488 = vpop.permute.xlu0 %2487
        %2489 = vrot.lane.b32.xlu0 %v2339, 64
        %v2490 = vpop.permute.xlu0 %2489
        %2491 = vrot.lane.b32.xlu0 %v2340, 64
        %v2492 = vpop.permute.xlu0 %2491
        %2493 = vrot.lane.b32.xlu0 %v2341, 64
        %v2494 = vpop.permute.xlu0 %2493
        %2495 = vrot.lane.b32.xlu0 %v2342, 64
        %v2496 = vpop.permute.xlu0 %2495
        %2497 = vrot.lane.b32.xlu0 %v2343, 64
        %v2498 = vpop.permute.xlu0 %2497
        %2499 = vrot.lane.b32.xlu0 %v2344, 64
        %v2500 = vpop.permute.xlu0 %2499
        %2501 = vrot.lane.b32.xlu0 %v2345, 64
        %v2502 = vpop.permute.xlu0 %2501
        %2503 = vrot.lane.b32.xlu0 %v2346, 64
        %v2504 = vpop.permute.xlu0 %2503
        %2505 = vrot.lane.b32.xlu0 %v2347, 64
        %v2506 = vpop.permute.xlu0 %2505
        %2507 = vrot.lane.b32.xlu0 %v2348, 64
        %v2508 = vpop.permute.xlu0 %2507
        %2509 = vrot.lane.b32.xlu0 %v2349, 64
        %v2510 = vpop.permute.xlu0 %2509
        %2511 = vrot.lane.b32.xlu0 %v2350, 64
        %v2512 = vpop.permute.xlu0 %2511
        %2513 = vrot.lane.b32.xlu0 %v2351, 64
        %v2514 = vpop.permute.xlu0 %2513
        %2515 = vrot.lane.b32.xlu0 %v2352, 64
        %v2516 = vpop.permute.xlu0 %2515
        %2517 = vrot.lane.b32.xlu0 %v2353, 64
        %v2518 = vpop.permute.xlu0 %2517
        %2519 = vrot.lane.b32.xlu0 %v2354, 64
        %v2520 = vpop.permute.xlu0 %2519
        %2521 = vrot.lane.b32.xlu0 %v2355, 64
        %v2522 = vpop.permute.xlu0 %2521
        %2523 = vrot.lane.b32.xlu0 %v2356, 64
        %v2524 = vpop.permute.xlu0 %2523
        %2525 = vrot.lane.b32.xlu0 %v2357, 64
        %v2526 = vpop.permute.xlu0 %2525
        %2527 = vrot.lane.b32.xlu0 %v2358, 64
        %v2528 = vpop.permute.xlu0 %2527
        %2529 = vrot.lane.b32.xlu0 %v2359, 64
        %v2530 = vpop.permute.xlu0 %2529
        %2531 = vrot.lane.b32.xlu0 %v2360, 64
        %v2532 = vpop.permute.xlu0 %2531
        %2533 = vrot.lane.b32.xlu0 %v2361, 64
        %v2534 = vpop.permute.xlu0 %2533
        %2535 = vrot.lane.b32.xlu0 %v2362, 64
        %v2536 = vpop.permute.xlu0 %2535
        %2537 = vrot.lane.b32.xlu0 %v2363, 64
        %v2538 = vpop.permute.xlu0 %2537
        %2539 = vrot.lane.b32.xlu0 %v2364, 64
        %v2540 = vpop.permute.xlu0 %2539
        %2541 = vrot.lane.b32.xlu0 %v2365, 64
        %v2542 = vpop.permute.xlu0 %2541
        %2543 = vrot.lane.b32.xlu0 %v2366, 64
        %v2544 = vpop.permute.xlu0 %2543
        %2545 = vrot.lane.b32.xlu0 %v2367, 64
        %v2546 = vpop.permute.xlu0 %2545
        %2547 = vrot.lane.b32.xlu0 %v2368, 64
        %v2548 = vpop.permute.xlu0 %2547
        %2549 = vrot.lane.b32.xlu0 %v2369, 64
        %v2550 = vpop.permute.xlu0 %2549
        %2551 = vrot.lane.b32.xlu0 %v2370, 64
        %v2552 = vpop.permute.xlu0 %2551
        %2553 = vrot.lane.b32.xlu0 %v2371, 64
        %v2554 = vpop.permute.xlu0 %2553
        %2555 = vrot.lane.b32.xlu0 %v2372, 64
        %v2556 = vpop.permute.xlu0 %2555
        %2557 = vrot.lane.b32.xlu0 %v2373, 64
        %v2558 = vpop.permute.xlu0 %2557
        %2559 = vrot.lane.b32.xlu0 %v2374, 64
        %v2560 = vpop.permute.xlu0 %2559
        %2561 = vrot.lane.b32.xlu0 %v2375, 64
        %v2562 = vpop.permute.xlu0 %2561
        %2563 = vrot.lane.b32.xlu0 %v2376, 64
        %v2564 = vpop.permute.xlu0 %2563
        %2565 = vrot.lane.b32.xlu0 %v2377, 64
        %v2566 = vpop.permute.xlu0 %2565
        %2567 = vrot.lane.b32.xlu0 %v2378, 64
        %v2568 = vpop.permute.xlu0 %2567
        %2569 = vrot.lane.b32.xlu0 %v2379, 64
        %v2570 = vpop.permute.xlu0 %2569
        %2571 = vrot.lane.b32.xlu0 %v2380, 64
        %v2572 = vpop.permute.xlu0 %2571
        %v2637 = vadd.f32 %v754, %v2446
        %v2638 = vadd.f32 %v756, %v2448
        %v2639 = vadd.f32 %v759, %v2450
        %v2640 = vadd.f32 %v761, %v2452
        %v2641 = vadd.f32 %v764, %v2454
        %v2642 = vadd.f32 %v766, %v2456
        %v2643 = vadd.f32 %v769, %v2458
        %v2644 = vadd.f32 %v771, %v2460
        %v2645 = vadd.f32 %v774, %v2462
        %v2646 = vadd.f32 %v776, %v2464
        %v2647 = vadd.f32 %v779, %v2466
        %v2648 = vadd.f32 %v781, %v2468
        %v2649 = vadd.f32 %v784, %v2470
        %v2650 = vadd.f32 %v786, %v2472
        %v2651 = vadd.f32 %v789, %v2474
        %v2652 = vadd.f32 %v791, %v2476
        %v2653 = vadd.f32 %v794, %v2478
        %v2654 = vadd.f32 %v796, %v2480
        %v2655 = vadd.f32 %v799, %v2482
        %v2656 = vadd.f32 %v801, %v2484
        %v2657 = vadd.f32 %v804, %v2486
        %v2658 = vadd.f32 %v806, %v2488
        %v2659 = vadd.f32 %v809, %v2490
        %v2660 = vadd.f32 %v811, %v2492
        %v2661 = vadd.f32 %v814, %v2494
        %v2662 = vadd.f32 %v816, %v2496
        %v2663 = vadd.f32 %v819, %v2498
        %v2664 = vadd.f32 %v821, %v2500
        %v2665 = vadd.f32 %v824, %v2502
        %v2666 = vadd.f32 %v826, %v2504
        %v2667 = vadd.f32 %v829, %v2506
        %v2668 = vadd.f32 %v831, %v2508
        %v2669 = vadd.f32 %v834, %v2510
        %v2670 = vadd.f32 %v836, %v2512
        %v2671 = vadd.f32 %v839, %v2514
        %v2672 = vadd.f32 %v841, %v2516
        %v2673 = vadd.f32 %v844, %v2518
        %v2674 = vadd.f32 %v846, %v2520
        %v2675 = vadd.f32 %v849, %v2522
        %v2676 = vadd.f32 %v851, %v2524
        %v2677 = vadd.f32 %v854, %v2526
        %v2678 = vadd.f32 %v856, %v2528
        %v2679 = vadd.f32 %v859, %v2530
        %v2680 = vadd.f32 %v861, %v2532
        %v2681 = vadd.f32 %v864, %v2534
        %v2682 = vadd.f32 %v866, %v2536
        %v2683 = vadd.f32 %v869, %v2538
        %v2684 = vadd.f32 %v871, %v2540
        %v2685 = vadd.f32 %v874, %v2542
        %v2686 = vadd.f32 %v876, %v2544
        %v2687 = vadd.f32 %v879, %v2546
        %v2688 = vadd.f32 %v881, %v2548
        %v2689 = vadd.f32 %v884, %v2550
        %v2690 = vadd.f32 %v886, %v2552
        %v2691 = vadd.f32 %v889, %v2554
        %v2692 = vadd.f32 %v891, %v2556
        %v2693 = vadd.f32 %v894, %v2558
        %v2694 = vadd.f32 %v896, %v2560
        %v2695 = vadd.f32 %v899, %v2562
        %v2696 = vadd.f32 %v901, %v2564
        %v2697 = vadd.f32 %v904, %v2566
        %v2698 = vadd.f32 %v906, %v2568
        %v2699 = vadd.f32 %v909, %v2570
        %v2700 = vadd.f32 %v911, %v2572
        %v2701 = vperm.slane %v1674, 0
        %2703 = vrot.lane.b32.xlu0 %v2701, 64
        %v2704 = vpop.permute.xlu0 %2703
        %v2706 = vadd.f32 %v2637, %v2704
        %v2707 = vadd.f32 %v2638, %v2704
        %v2708 = vadd.f32 %v2639, %v2704
        %v2709 = vadd.f32 %v2640, %v2704
        %v2710 = vadd.f32 %v2641, %v2704
        %v2711 = vadd.f32 %v2642, %v2704
        %v2712 = vadd.f32 %v2643, %v2704
        %v2713 = vadd.f32 %v2644, %v2704
        %v2714 = vadd.f32 %v2645, %v2704
        %v2715 = vadd.f32 %v2646, %v2704
        %v2716 = vadd.f32 %v2647, %v2704
        %v2717 = vadd.f32 %v2648, %v2704
        %v2718 = vadd.f32 %v2649, %v2704
        %v2719 = vadd.f32 %v2650, %v2704
        %v2720 = vadd.f32 %v2651, %v2704
        %v2721 = vadd.f32 %v2652, %v2704
        %v2722 = vadd.f32 %v2653, %v2704
        %v2723 = vadd.f32 %v2654, %v2704
        %v2724 = vadd.f32 %v2655, %v2704
        %v2725 = vadd.f32 %v2656, %v2704
        %v2726 = vadd.f32 %v2657, %v2704
        %v2727 = vadd.f32 %v2658, %v2704
        %v2728 = vadd.f32 %v2659, %v2704
        %v2729 = vadd.f32 %v2660, %v2704
        %v2730 = vadd.f32 %v2661, %v2704
        %v2731 = vadd.f32 %v2662, %v2704
        %v2732 = vadd.f32 %v2663, %v2704
        %v2733 = vadd.f32 %v2664, %v2704
        %v2734 = vadd.f32 %v2665, %v2704
        %v2735 = vadd.f32 %v2666, %v2704
        %v2736 = vadd.f32 %v2667, %v2704
        %v2737 = vadd.f32 %v2668, %v2704
        %v2738 = vadd.f32 %v2669, %v2704
        %v2739 = vadd.f32 %v2670, %v2704
        %v2740 = vadd.f32 %v2671, %v2704
        %v2741 = vadd.f32 %v2672, %v2704
        %v2742 = vadd.f32 %v2673, %v2704
        %v2743 = vadd.f32 %v2674, %v2704
        %v2744 = vadd.f32 %v2675, %v2704
        %v2745 = vadd.f32 %v2676, %v2704
        %v2746 = vadd.f32 %v2677, %v2704
        %v2747 = vadd.f32 %v2678, %v2704
        %v2748 = vadd.f32 %v2679, %v2704
        %v2749 = vadd.f32 %v2680, %v2704
        %v2750 = vadd.f32 %v2681, %v2704
        %v2751 = vadd.f32 %v2682, %v2704
        %v2752 = vadd.f32 %v2683, %v2704
        %v2753 = vadd.f32 %v2684, %v2704
        %v2754 = vadd.f32 %v2685, %v2704
        %v2755 = vadd.f32 %v2686, %v2704
        %v2756 = vadd.f32 %v2687, %v2704
        %v2757 = vadd.f32 %v2688, %v2704
        %v2758 = vadd.f32 %v2689, %v2704
        %v2759 = vadd.f32 %v2690, %v2704
        %v2760 = vadd.f32 %v2691, %v2704
        %v2761 = vadd.f32 %v2692, %v2704
        %v2762 = vadd.f32 %v2693, %v2704
        %v2763 = vadd.f32 %v2694, %v2704
        %v2764 = vadd.f32 %v2695, %v2704
        %v2765 = vadd.f32 %v2696, %v2704
        %v2766 = vadd.f32 %v2697, %v2704
        %v2767 = vadd.f32 %v2698, %v2704
        %v2768 = vadd.f32 %v2699, %v2704
        %v2769 = vadd.f32 %v2700, %v2704
        %v2770 = vmul.f32 %v2706, 0.2
        %v2771 = vmul.f32 %v2707, 0.2
        %v2772 = vmul.f32 %v2708, 0.2
        %v2773 = vmul.f32 %v2709, 0.2
        %v2774 = vmul.f32 %v2710, 0.2
        %v2775 = vmul.f32 %v2711, 0.2
        %v2776 = vmul.f32 %v2712, 0.2
        %v2777 = vmul.f32 %v2713, 0.2
        %v2778 = vmul.f32 %v2714, 0.2
        %v2779 = vmul.f32 %v2715, 0.2
        %v2780 = vmul.f32 %v2716, 0.2
        %v2781 = vmul.f32 %v2717, 0.2
        %v2782 = vmul.f32 %v2718, 0.2
        %v2783 = vmul.f32 %v2719, 0.2
        %v2784 = vmul.f32 %v2720, 0.2
        %v2785 = vmul.f32 %v2721, 0.2
        %v2786 = vmul.f32 %v2722, 0.2
        %v2787 = vmul.f32 %v2723, 0.2
        %v2788 = vmul.f32 %v2724, 0.2
        %v2789 = vmul.f32 %v2725, 0.2
        %v2790 = vmul.f32 %v2726, 0.2
        %v2791 = vmul.f32 %v2727, 0.2
        %v2792 = vmul.f32 %v2728, 0.2
        %v2793 = vmul.f32 %v2729, 0.2
        %v2794 = vmul.f32 %v2730, 0.2
        %v2795 = vmul.f32 %v2731, 0.2
        %v2796 = vmul.f32 %v2732, 0.2
        %v2797 = vmul.f32 %v2733, 0.2
        %v2798 = vmul.f32 %v2734, 0.2
        %v2799 = vmul.f32 %v2735, 0.2
        %v2800 = vmul.f32 %v2736, 0.2
        %v2801 = vmul.f32 %v2737, 0.2
        %v2802 = vmul.f32 %v2738, 0.2
        %v2803 = vmul.f32 %v2739, 0.2
        %v2804 = vmul.f32 %v2740, 0.2
        %v2805 = vmul.f32 %v2741, 0.2
        %v2806 = vmul.f32 %v2742, 0.2
        %v2807 = vmul.f32 %v2743, 0.2
        %v2808 = vmul.f32 %v2744, 0.2
        %v2809 = vmul.f32 %v2745, 0.2
        %v2810 = vmul.f32 %v2746, 0.2
        %v2811 = vmul.f32 %v2747, 0.2
        %v2812 = vmul.f32 %v2748, 0.2
        %v2813 = vmul.f32 %v2749, 0.2
        %v2814 = vmul.f32 %v2750, 0.2
        %v2815 = vmul.f32 %v2751, 0.2
        %v2816 = vmul.f32 %v2752, 0.2
        %v2817 = vmul.f32 %v2753, 0.2
        %v2818 = vmul.f32 %v2754, 0.2
        %v2819 = vmul.f32 %v2755, 0.2
        %v2820 = vmul.f32 %v2756, 0.2
        %v2821 = vmul.f32 %v2757, 0.2
        %v2822 = vmul.f32 %v2758, 0.2
        %v2823 = vmul.f32 %v2759, 0.2
        %v2824 = vmul.f32 %v2760, 0.2
        %v2825 = vmul.f32 %v2761, 0.2
        %v2826 = vmul.f32 %v2762, 0.2
        %v2827 = vmul.f32 %v2763, 0.2
        %v2828 = vmul.f32 %v2764, 0.2
        %v2829 = vmul.f32 %v2765, 0.2
        %v2830 = vmul.f32 %v2766, 0.2
        %v2831 = vmul.f32 %v2767, 0.2
        %v2832 = vmul.f32 %v2768, 0.2
        %v2833 = vmul.f32 %v2769, 0.2
        %v2834 = vmax.f32 %v2706, %v2770
        %v2835 = vmax.f32 %v2707, %v2771
        %v2836 = vmax.f32 %v2708, %v2772
        %v2837 = vmax.f32 %v2709, %v2773
        %v2838 = vmax.f32 %v2710, %v2774
        %v2839 = vmax.f32 %v2711, %v2775
        %v2840 = vmax.f32 %v2712, %v2776
        %v2841 = vmax.f32 %v2713, %v2777
        %v2842 = vmax.f32 %v2714, %v2778
        %v2843 = vmax.f32 %v2715, %v2779
        %v2844 = vmax.f32 %v2716, %v2780
        %v2845 = vmax.f32 %v2717, %v2781
        %v2846 = vmax.f32 %v2718, %v2782
        %v2847 = vmax.f32 %v2719, %v2783
        %v2848 = vmax.f32 %v2720, %v2784
        %v2849 = vmax.f32 %v2721, %v2785
        %v2850 = vmax.f32 %v2722, %v2786
        %v2851 = vmax.f32 %v2723, %v2787
        %v2852 = vmax.f32 %v2724, %v2788
        %v2853 = vmax.f32 %v2725, %v2789
        %v2854 = vmax.f32 %v2726, %v2790
        %v2855 = vmax.f32 %v2727, %v2791
        %v2856 = vmax.f32 %v2728, %v2792
        %v2857 = vmax.f32 %v2729, %v2793
        %v2858 = vmax.f32 %v2730, %v2794
        %v2859 = vmax.f32 %v2731, %v2795
        %v2860 = vmax.f32 %v2732, %v2796
        %v2861 = vmax.f32 %v2733, %v2797
        %v2862 = vmax.f32 %v2734, %v2798
        %v2863 = vmax.f32 %v2735, %v2799
        %v2864 = vmax.f32 %v2736, %v2800
        %v2865 = vmax.f32 %v2737, %v2801
        %v2866 = vmax.f32 %v2738, %v2802
        %v2867 = vmax.f32 %v2739, %v2803
        %v2868 = vmax.f32 %v2740, %v2804
        %v2869 = vmax.f32 %v2741, %v2805
        %v2870 = vmax.f32 %v2742, %v2806
        %v2871 = vmax.f32 %v2743, %v2807
        %v2872 = vmax.f32 %v2744, %v2808
        %v2873 = vmax.f32 %v2745, %v2809
        %v2874 = vmax.f32 %v2746, %v2810
        %v2875 = vmax.f32 %v2747, %v2811
        %v2876 = vmax.f32 %v2748, %v2812
        %v2877 = vmax.f32 %v2749, %v2813
        %v2878 = vmax.f32 %v2750, %v2814
        %v2879 = vmax.f32 %v2751, %v2815
        %v2880 = vmax.f32 %v2752, %v2816
        %v2881 = vmax.f32 %v2753, %v2817
        %v2882 = vmax.f32 %v2754, %v2818
        %v2883 = vmax.f32 %v2755, %v2819
        %v2884 = vmax.f32 %v2756, %v2820
        %v2885 = vmax.f32 %v2757, %v2821
        %v2886 = vmax.f32 %v2758, %v2822
        %v2887 = vmax.f32 %v2759, %v2823
        %v2888 = vmax.f32 %v2760, %v2824
        %v2889 = vmax.f32 %v2761, %v2825
        %v2890 = vmax.f32 %v2762, %v2826
        %v2891 = vmax.f32 %v2763, %v2827
        %v2892 = vmax.f32 %v2764, %v2828
        %v2893 = vmax.f32 %v2765, %v2829
        %v2894 = vmax.f32 %v2766, %v2830
        %v2895 = vmax.f32 %v2767, %v2831
        %v2896 = vmax.f32 %v2768, %v2832
        %v2897 = vmax.f32 %v2769, %v2833
        %v2898 = vperm.slane %v1675, 0
        %2900 = vrot.lane.b32.xlu0 %v2898, 64
        %v2901 = vpop.permute.xlu0 %2900
        %v2903 = vmul.f32 %v2834, %v2901
        %v2904 = vmul.f32 %v2835, %v2901
        %v2905 = vmul.f32 %v2836, %v2901
        %v2906 = vmul.f32 %v2837, %v2901
        %v2907 = vmul.f32 %v2838, %v2901
        %v2908 = vmul.f32 %v2839, %v2901
        %v2909 = vmul.f32 %v2840, %v2901
        %v2910 = vmul.f32 %v2841, %v2901
        %v2911 = vmul.f32 %v2842, %v2901
        %v2912 = vmul.f32 %v2843, %v2901
        %v2913 = vmul.f32 %v2844, %v2901
        %v2914 = vmul.f32 %v2845, %v2901
        %v2915 = vmul.f32 %v2846, %v2901
        %v2916 = vmul.f32 %v2847, %v2901
        %v2917 = vmul.f32 %v2848, %v2901
        %v2918 = vmul.f32 %v2849, %v2901
        %v2919 = vmul.f32 %v2850, %v2901
        %v2920 = vmul.f32 %v2851, %v2901
        %v2921 = vmul.f32 %v2852, %v2901
        %v2922 = vmul.f32 %v2853, %v2901
        %v2923 = vmul.f32 %v2854, %v2901
        %v2924 = vmul.f32 %v2855, %v2901
        %v2925 = vmul.f32 %v2856, %v2901
        %v2926 = vmul.f32 %v2857, %v2901
        %v2927 = vmul.f32 %v2858, %v2901
        %v2928 = vmul.f32 %v2859, %v2901
        %v2929 = vmul.f32 %v2860, %v2901
        %v2930 = vmul.f32 %v2861, %v2901
        %v2931 = vmul.f32 %v2862, %v2901
        %v2932 = vmul.f32 %v2863, %v2901
        %v2933 = vmul.f32 %v2864, %v2901
        %v2934 = vmul.f32 %v2865, %v2901
        %v2935 = vmul.f32 %v2866, %v2901
        %v2936 = vmul.f32 %v2867, %v2901
        %v2937 = vmul.f32 %v2868, %v2901
        %v2938 = vmul.f32 %v2869, %v2901
        %v2939 = vmul.f32 %v2870, %v2901
        %v2940 = vmul.f32 %v2871, %v2901
        %v2941 = vmul.f32 %v2872, %v2901
        %v2942 = vmul.f32 %v2873, %v2901
        %v2943 = vmul.f32 %v2874, %v2901
        %v2944 = vmul.f32 %v2875, %v2901
        %v2945 = vmul.f32 %v2876, %v2901
        %v2946 = vmul.f32 %v2877, %v2901
        %v2947 = vmul.f32 %v2878, %v2901
        %v2948 = vmul.f32 %v2879, %v2901
        %v2949 = vmul.f32 %v2880, %v2901
        %v2950 = vmul.f32 %v2881, %v2901
        %v2951 = vmul.f32 %v2882, %v2901
        %v2952 = vmul.f32 %v2883, %v2901
        %v2953 = vmul.f32 %v2884, %v2901
        %v2954 = vmul.f32 %v2885, %v2901
        %v2955 = vmul.f32 %v2886, %v2901
        %v2956 = vmul.f32 %v2887, %v2901
        %v2957 = vmul.f32 %v2888, %v2901
        %v2958 = vmul.f32 %v2889, %v2901
        %v2959 = vmul.f32 %v2890, %v2901
        %v2960 = vmul.f32 %v2891, %v2901
        %v2961 = vmul.f32 %v2892, %v2901
        %v2962 = vmul.f32 %v2893, %v2901
        %v2963 = vmul.f32 %v2894, %v2901
        %v2964 = vmul.f32 %v2895, %v2901
        %v2965 = vmul.f32 %v2896, %v2901
        %v2966 = vmul.f32 %v2897, %v2901
        %3031 = vrot.lane.b32.xlu0 %v2903, 64
        %v3032 = vpop.permute.xlu0 %3031
        %3033 = vrot.lane.b32.xlu0 %v2904, 64
        %v3034 = vpop.permute.xlu0 %3033
        %3035 = vrot.lane.b32.xlu0 %v2905, 64
        %v3036 = vpop.permute.xlu0 %3035
        %3037 = vrot.lane.b32.xlu0 %v2906, 64
        %v3038 = vpop.permute.xlu0 %3037
        %3039 = vrot.lane.b32.xlu0 %v2907, 64
        %v3040 = vpop.permute.xlu0 %3039
        %3041 = vrot.lane.b32.xlu0 %v2908, 64
        %v3042 = vpop.permute.xlu0 %3041
        %3043 = vrot.lane.b32.xlu0 %v2909, 64
        %v3044 = vpop.permute.xlu0 %3043
        %3045 = vrot.lane.b32.xlu0 %v2910, 64
        %v3046 = vpop.permute.xlu0 %3045
        %3047 = vrot.lane.b32.xlu0 %v2911, 64
        %v3048 = vpop.permute.xlu0 %3047
        %3049 = vrot.lane.b32.xlu0 %v2912, 64
        %v3050 = vpop.permute.xlu0 %3049
        %3051 = vrot.lane.b32.xlu0 %v2913, 64
        %v3052 = vpop.permute.xlu0 %3051
        %3053 = vrot.lane.b32.xlu0 %v2914, 64
        %v3054 = vpop.permute.xlu0 %3053
        %3055 = vrot.lane.b32.xlu0 %v2915, 64
        %v3056 = vpop.permute.xlu0 %3055
        %3057 = vrot.lane.b32.xlu0 %v2916, 64
        %v3058 = vpop.permute.xlu0 %3057
        %3059 = vrot.lane.b32.xlu0 %v2917, 64
        %v3060 = vpop.permute.xlu0 %3059
        %3061 = vrot.lane.b32.xlu0 %v2918, 64
        %v3062 = vpop.permute.xlu0 %3061
        %3063 = vrot.lane.b32.xlu0 %v2919, 64
        %v3064 = vpop.permute.xlu0 %3063
        %3065 = vrot.lane.b32.xlu0 %v2920, 64
        %v3066 = vpop.permute.xlu0 %3065
        %3067 = vrot.lane.b32.xlu0 %v2921, 64
        %v3068 = vpop.permute.xlu0 %3067
        %3069 = vrot.lane.b32.xlu0 %v2922, 64
        %v3070 = vpop.permute.xlu0 %3069
        %3071 = vrot.lane.b32.xlu0 %v2923, 64
        %v3072 = vpop.permute.xlu0 %3071
        %3073 = vrot.lane.b32.xlu0 %v2924, 64
        %v3074 = vpop.permute.xlu0 %3073
        %3075 = vrot.lane.b32.xlu0 %v2925, 64
        %v3076 = vpop.permute.xlu0 %3075
        %3077 = vrot.lane.b32.xlu0 %v2926, 64
        %v3078 = vpop.permute.xlu0 %3077
        %3079 = vrot.lane.b32.xlu0 %v2927, 64
        %v3080 = vpop.permute.xlu0 %3079
        %3081 = vrot.lane.b32.xlu0 %v2928, 64
        %v3082 = vpop.permute.xlu0 %3081
        %3083 = vrot.lane.b32.xlu0 %v2929, 64
        %v3084 = vpop.permute.xlu0 %3083
        %3085 = vrot.lane.b32.xlu0 %v2930, 64
        %v3086 = vpop.permute.xlu0 %3085
        %3087 = vrot.lane.b32.xlu0 %v2931, 64
        %v3088 = vpop.permute.xlu0 %3087
        %3089 = vrot.lane.b32.xlu0 %v2932, 64
        %v3090 = vpop.permute.xlu0 %3089
        %3091 = vrot.lane.b32.xlu0 %v2933, 64
        %v3092 = vpop.permute.xlu0 %3091
        %3093 = vrot.lane.b32.xlu0 %v2934, 64
        %v3094 = vpop.permute.xlu0 %3093
        %3095 = vrot.lane.b32.xlu0 %v2935, 64
        %v3096 = vpop.permute.xlu0 %3095
        %3097 = vrot.lane.b32.xlu0 %v2936, 64
        %v3098 = vpop.permute.xlu0 %3097
        %3099 = vrot.lane.b32.xlu0 %v2937, 64
        %v3100 = vpop.permute.xlu0 %3099
        %3101 = vrot.lane.b32.xlu0 %v2938, 64
        %v3102 = vpop.permute.xlu0 %3101
        %3103 = vrot.lane.b32.xlu0 %v2939, 64
        %v3104 = vpop.permute.xlu0 %3103
        %3105 = vrot.lane.b32.xlu0 %v2940, 64
        %v3106 = vpop.permute.xlu0 %3105
        %3107 = vrot.lane.b32.xlu0 %v2941, 64
        %v3108 = vpop.permute.xlu0 %3107
        %3109 = vrot.lane.b32.xlu0 %v2942, 64
        %v3110 = vpop.permute.xlu0 %3109
        %3111 = vrot.lane.b32.xlu0 %v2943, 64
        %v3112 = vpop.permute.xlu0 %3111
        %3113 = vrot.lane.b32.xlu0 %v2944, 64
        %v3114 = vpop.permute.xlu0 %3113
        %3115 = vrot.lane.b32.xlu0 %v2945, 64
        %v3116 = vpop.permute.xlu0 %3115
        %3117 = vrot.lane.b32.xlu0 %v2946, 64
        %v3118 = vpop.permute.xlu0 %3117
        %3119 = vrot.lane.b32.xlu0 %v2947, 64
        %v3120 = vpop.permute.xlu0 %3119
        %3121 = vrot.lane.b32.xlu0 %v2948, 64
        %v3122 = vpop.permute.xlu0 %3121
        %3123 = vrot.lane.b32.xlu0 %v2949, 64
        %v3124 = vpop.permute.xlu0 %3123
        %3125 = vrot.lane.b32.xlu0 %v2950, 64
        %v3126 = vpop.permute.xlu0 %3125
        %3127 = vrot.lane.b32.xlu0 %v2951, 64
        %v3128 = vpop.permute.xlu0 %3127
        %3129 = vrot.lane.b32.xlu0 %v2952, 64
        %v3130 = vpop.permute.xlu0 %3129
        %3131 = vrot.lane.b32.xlu0 %v2953, 64
        %v3132 = vpop.permute.xlu0 %3131
        %3133 = vrot.lane.b32.xlu0 %v2954, 64
        %v3134 = vpop.permute.xlu0 %3133
        %3135 = vrot.lane.b32.xlu0 %v2955, 64
        %v3136 = vpop.permute.xlu0 %3135
        %3137 = vrot.lane.b32.xlu0 %v2956, 64
        %v3138 = vpop.permute.xlu0 %3137
        %3139 = vrot.lane.b32.xlu0 %v2957, 64
        %v3140 = vpop.permute.xlu0 %3139
        %3141 = vrot.lane.b32.xlu0 %v2958, 64
        %v3142 = vpop.permute.xlu0 %3141
        %3143 = vrot.lane.b32.xlu0 %v2959, 64
        %v3144 = vpop.permute.xlu0 %3143
        %3145 = vrot.lane.b32.xlu0 %v2960, 64
        %v3146 = vpop.permute.xlu0 %3145
        %3147 = vrot.lane.b32.xlu0 %v2961, 64
        %v3148 = vpop.permute.xlu0 %3147
        %3149 = vrot.lane.b32.xlu0 %v2962, 64
        %v3150 = vpop.permute.xlu0 %3149
        %3151 = vrot.lane.b32.xlu0 %v2963, 64
        %v3152 = vpop.permute.xlu0 %3151
        %3153 = vrot.lane.b32.xlu0 %v2964, 64
        %v3154 = vpop.permute.xlu0 %3153
        %3155 = vrot.lane.b32.xlu0 %v2965, 64
        %v3156 = vpop.permute.xlu0 %3155
        %3157 = vrot.lane.b32.xlu0 %v2966, 64
        %v3158 = vpop.permute.xlu0 %3157
        %vm3223 = vcmask 261120
        %v3224 = vsel %vm3223, %v3032, 0.0
        %3225 = vadd.xlane.f32.xlu0 %v3224
        %v3226 = vpop.xlane.xlu0 %3225
        %v3227 = vsel %vm3223, %v3034, 0.0
        %3228 = vadd.xlane.f32.xlu0 %v3227
        %v3229 = vpop.xlane.xlu0 %3228
        %v3230 = vsel %vm3223, %v3036, 0.0
        %3231 = vadd.xlane.f32.xlu0 %v3230
        %v3232 = vpop.xlane.xlu0 %3231
        %v3233 = vsel %vm3223, %v3038, 0.0
        %3234 = vadd.xlane.f32.xlu0 %v3233
        %v3235 = vpop.xlane.xlu0 %3234
        %v3236 = vsel %vm3223, %v3040, 0.0
        %3237 = vadd.xlane.f32.xlu0 %v3236
        %v3238 = vpop.xlane.xlu0 %3237
        %v3239 = vsel %vm3223, %v3042, 0.0
        %3240 = vadd.xlane.f32.xlu0 %v3239
        %v3241 = vpop.xlane.xlu0 %3240
        %v3242 = vsel %vm3223, %v3044, 0.0
        %3243 = vadd.xlane.f32.xlu0 %v3242
        %v3244 = vpop.xlane.xlu0 %3243
        %v3245 = vsel %vm3223, %v3046, 0.0
        %3246 = vadd.xlane.f32.xlu0 %v3245
        %v3247 = vpop.xlane.xlu0 %3246
        %v3248 = vsel %vm3223, %v3048, 0.0
        %3249 = vadd.xlane.f32.xlu0 %v3248
        %v3250 = vpop.xlane.xlu0 %3249
        %v3251 = vsel %vm3223, %v3050, 0.0
        %3252 = vadd.xlane.f32.xlu0 %v3251
        %v3253 = vpop.xlane.xlu0 %3252
        %v3254 = vsel %vm3223, %v3052, 0.0
        %3255 = vadd.xlane.f32.xlu0 %v3254
        %v3256 = vpop.xlane.xlu0 %3255
        %v3257 = vsel %vm3223, %v3054, 0.0
        %3258 = vadd.xlane.f32.xlu0 %v3257
        %v3259 = vpop.xlane.xlu0 %3258
        %v3260 = vsel %vm3223, %v3056, 0.0
        %3261 = vadd.xlane.f32.xlu0 %v3260
        %v3262 = vpop.xlane.xlu0 %3261
        %v3263 = vsel %vm3223, %v3058, 0.0
        %3264 = vadd.xlane.f32.xlu0 %v3263
        %v3265 = vpop.xlane.xlu0 %3264
        %v3266 = vsel %vm3223, %v3060, 0.0
        %3267 = vadd.xlane.f32.xlu0 %v3266
        %v3268 = vpop.xlane.xlu0 %3267
        %v3269 = vsel %vm3223, %v3062, 0.0
        %3270 = vadd.xlane.f32.xlu0 %v3269
        %v3271 = vpop.xlane.xlu0 %3270
        %v3272 = vsel %vm3223, %v3064, 0.0
        %3273 = vadd.xlane.f32.xlu0 %v3272
        %v3274 = vpop.xlane.xlu0 %3273
        %v3275 = vsel %vm3223, %v3066, 0.0
        %3276 = vadd.xlane.f32.xlu0 %v3275
        %v3277 = vpop.xlane.xlu0 %3276
        %v3278 = vsel %vm3223, %v3068, 0.0
        %3279 = vadd.xlane.f32.xlu0 %v3278
        %v3280 = vpop.xlane.xlu0 %3279
        %v3281 = vsel %vm3223, %v3070, 0.0
        %3282 = vadd.xlane.f32.xlu0 %v3281
        %v3283 = vpop.xlane.xlu0 %3282
        %v3284 = vsel %vm3223, %v3072, 0.0
        %3285 = vadd.xlane.f32.xlu0 %v3284
        %v3286 = vpop.xlane.xlu0 %3285
        %v3287 = vsel %vm3223, %v3074, 0.0
        %3288 = vadd.xlane.f32.xlu0 %v3287
        %v3289 = vpop.xlane.xlu0 %3288
        %v3290 = vsel %vm3223, %v3076, 0.0
        %3291 = vadd.xlane.f32.xlu0 %v3290
        %v3292 = vpop.xlane.xlu0 %3291
        %v3293 = vsel %vm3223, %v3078, 0.0
        %3294 = vadd.xlane.f32.xlu0 %v3293
        %v3295 = vpop.xlane.xlu0 %3294
        %v3296 = vsel %vm3223, %v3080, 0.0
        %3297 = vadd.xlane.f32.xlu0 %v3296
        %v3298 = vpop.xlane.xlu0 %3297
        %v3299 = vsel %vm3223, %v3082, 0.0
        %3300 = vadd.xlane.f32.xlu0 %v3299
        %v3301 = vpop.xlane.xlu0 %3300
        %v3302 = vsel %vm3223, %v3084, 0.0
        %3303 = vadd.xlane.f32.xlu0 %v3302
        %v3304 = vpop.xlane.xlu0 %3303
        %v3305 = vsel %vm3223, %v3086, 0.0
        %3306 = vadd.xlane.f32.xlu0 %v3305
        %v3307 = vpop.xlane.xlu0 %3306
        %v3308 = vsel %vm3223, %v3088, 0.0
        %3309 = vadd.xlane.f32.xlu0 %v3308
        %v3310 = vpop.xlane.xlu0 %3309
        %v3311 = vsel %vm3223, %v3090, 0.0
        %3312 = vadd.xlane.f32.xlu0 %v3311
        %v3313 = vpop.xlane.xlu0 %3312
        %v3314 = vsel %vm3223, %v3092, 0.0
        %3315 = vadd.xlane.f32.xlu0 %v3314
        %v3316 = vpop.xlane.xlu0 %3315
        %v3317 = vsel %vm3223, %v3094, 0.0
        %3318 = vadd.xlane.f32.xlu0 %v3317
        %v3319 = vpop.xlane.xlu0 %3318
        %v3320 = vsel %vm3223, %v3096, 0.0
        %3321 = vadd.xlane.f32.xlu0 %v3320
        %v3322 = vpop.xlane.xlu0 %3321
        %v3323 = vsel %vm3223, %v3098, 0.0
        %3324 = vadd.xlane.f32.xlu0 %v3323
        %v3325 = vpop.xlane.xlu0 %3324
        %v3326 = vsel %vm3223, %v3100, 0.0
        %3327 = vadd.xlane.f32.xlu0 %v3326
        %v3328 = vpop.xlane.xlu0 %3327
        %v3329 = vsel %vm3223, %v3102, 0.0
        %3330 = vadd.xlane.f32.xlu0 %v3329
        %v3331 = vpop.xlane.xlu0 %3330
        %v3332 = vsel %vm3223, %v3104, 0.0
        %3333 = vadd.xlane.f32.xlu0 %v3332
        %v3334 = vpop.xlane.xlu0 %3333
        %v3335 = vsel %vm3223, %v3106, 0.0
        %3336 = vadd.xlane.f32.xlu0 %v3335
        %v3337 = vpop.xlane.xlu0 %3336
        %v3338 = vsel %vm3223, %v3108, 0.0
        %3339 = vadd.xlane.f32.xlu0 %v3338
        %v3340 = vpop.xlane.xlu0 %3339
        %v3341 = vsel %vm3223, %v3110, 0.0
        %3342 = vadd.xlane.f32.xlu0 %v3341
        %v3343 = vpop.xlane.xlu0 %3342
        %v3344 = vsel %vm3223, %v3112, 0.0
        %3345 = vadd.xlane.f32.xlu0 %v3344
        %v3346 = vpop.xlane.xlu0 %3345
        %v3347 = vsel %vm3223, %v3114, 0.0
        %3348 = vadd.xlane.f32.xlu0 %v3347
        %v3349 = vpop.xlane.xlu0 %3348
        %v3350 = vsel %vm3223, %v3116, 0.0
        %3351 = vadd.xlane.f32.xlu0 %v3350
        %v3352 = vpop.xlane.xlu0 %3351
        %v3353 = vsel %vm3223, %v3118, 0.0
        %3354 = vadd.xlane.f32.xlu0 %v3353
        %v3355 = vpop.xlane.xlu0 %3354
        %v3356 = vsel %vm3223, %v3120, 0.0
        %3357 = vadd.xlane.f32.xlu0 %v3356
        %v3358 = vpop.xlane.xlu0 %3357
        %v3359 = vsel %vm3223, %v3122, 0.0
        %3360 = vadd.xlane.f32.xlu0 %v3359
        %v3361 = vpop.xlane.xlu0 %3360
        %v3362 = vsel %vm3223, %v3124, 0.0
        %3363 = vadd.xlane.f32.xlu0 %v3362
        %v3364 = vpop.xlane.xlu0 %3363
        %v3365 = vsel %vm3223, %v3126, 0.0
        %3366 = vadd.xlane.f32.xlu0 %v3365
        %v3367 = vpop.xlane.xlu0 %3366
        %v3368 = vsel %vm3223, %v3128, 0.0
        %3369 = vadd.xlane.f32.xlu0 %v3368
        %v3370 = vpop.xlane.xlu0 %3369
        %v3371 = vsel %vm3223, %v3130, 0.0
        %3372 = vadd.xlane.f32.xlu0 %v3371
        %v3373 = vpop.xlane.xlu0 %3372
        %v3374 = vsel %vm3223, %v3132, 0.0
        %3375 = vadd.xlane.f32.xlu0 %v3374
        %v3376 = vpop.xlane.xlu0 %3375
        %v3377 = vsel %vm3223, %v3134, 0.0
        %3378 = vadd.xlane.f32.xlu0 %v3377
        %v3379 = vpop.xlane.xlu0 %3378
        %v3380 = vsel %vm3223, %v3136, 0.0
        %3381 = vadd.xlane.f32.xlu0 %v3380
        %v3382 = vpop.xlane.xlu0 %3381
        %v3383 = vsel %vm3223, %v3138, 0.0
        %3384 = vadd.xlane.f32.xlu0 %v3383
        %v3385 = vpop.xlane.xlu0 %3384
        %v3386 = vsel %vm3223, %v3140, 0.0
        %3387 = vadd.xlane.f32.xlu0 %v3386
        %v3388 = vpop.xlane.xlu0 %3387
        %v3389 = vsel %vm3223, %v3142, 0.0
        %3390 = vadd.xlane.f32.xlu0 %v3389
        %v3391 = vpop.xlane.xlu0 %3390
        %v3392 = vsel %vm3223, %v3144, 0.0
        %3393 = vadd.xlane.f32.xlu0 %v3392
        %v3394 = vpop.xlane.xlu0 %3393
        %v3395 = vsel %vm3223, %v3146, 0.0
        %3396 = vadd.xlane.f32.xlu0 %v3395
        %v3397 = vpop.xlane.xlu0 %3396
        %v3398 = vsel %vm3223, %v3148, 0.0
        %3399 = vadd.xlane.f32.xlu0 %v3398
        %v3400 = vpop.xlane.xlu0 %3399
        %v3401 = vsel %vm3223, %v3150, 0.0
        %3402 = vadd.xlane.f32.xlu0 %v3401
        %v3403 = vpop.xlane.xlu0 %3402
        %v3404 = vsel %vm3223, %v3152, 0.0
        %3405 = vadd.xlane.f32.xlu0 %v3404
        %v3406 = vpop.xlane.xlu0 %3405
        %v3407 = vsel %vm3223, %v3154, 0.0
        %3408 = vadd.xlane.f32.xlu0 %v3407
        %v3409 = vpop.xlane.xlu0 %3408
        %v3410 = vsel %vm3223, %v3156, 0.0
        %3411 = vadd.xlane.f32.xlu0 %v3410
        %v3412 = vpop.xlane.xlu0 %3411
        %v3413 = vsel %vm3223, %v3158, 0.0
        %3414 = vadd.xlane.f32.xlu0 %v3413
        %v3415 = vpop.xlane.xlu0 %3414
        %v3416 = vstv %s1676
        %v3417 = vadd.f32 %v3226, %v3416
        %v3418 = vadd.f32 %v3229, %v3416
        %v3419 = vadd.f32 %v3232, %v3416
        %v3420 = vadd.f32 %v3235, %v3416
        %v3421 = vadd.f32 %v3238, %v3416
        %v3422 = vadd.f32 %v3241, %v3416
        %v3423 = vadd.f32 %v3244, %v3416
        %v3424 = vadd.f32 %v3247, %v3416
        %v3425 = vadd.f32 %v3250, %v3416
        %v3426 = vadd.f32 %v3253, %v3416
        %v3427 = vadd.f32 %v3256, %v3416
        %v3428 = vadd.f32 %v3259, %v3416
        %v3429 = vadd.f32 %v3262, %v3416
        %v3430 = vadd.f32 %v3265, %v3416
        %v3431 = vadd.f32 %v3268, %v3416
        %v3432 = vadd.f32 %v3271, %v3416
        %v3433 = vadd.f32 %v3274, %v3416
        %v3434 = vadd.f32 %v3277, %v3416
        %v3435 = vadd.f32 %v3280, %v3416
        %v3436 = vadd.f32 %v3283, %v3416
        %v3437 = vadd.f32 %v3286, %v3416
        %v3438 = vadd.f32 %v3289, %v3416
        %v3439 = vadd.f32 %v3292, %v3416
        %v3440 = vadd.f32 %v3295, %v3416
        %v3441 = vadd.f32 %v3298, %v3416
        %v3442 = vadd.f32 %v3301, %v3416
        %v3443 = vadd.f32 %v3304, %v3416
        %v3444 = vadd.f32 %v3307, %v3416
        %v3445 = vadd.f32 %v3310, %v3416
        %v3446 = vadd.f32 %v3313, %v3416
        %v3447 = vadd.f32 %v3316, %v3416
        %v3448 = vadd.f32 %v3319, %v3416
        %v3449 = vadd.f32 %v3322, %v3416
        %v3450 = vadd.f32 %v3325, %v3416
        %v3451 = vadd.f32 %v3328, %v3416
        %v3452 = vadd.f32 %v3331, %v3416
        %v3453 = vadd.f32 %v3334, %v3416
        %v3454 = vadd.f32 %v3337, %v3416
        %v3455 = vadd.f32 %v3340, %v3416
        %v3456 = vadd.f32 %v3343, %v3416
        %v3457 = vadd.f32 %v3346, %v3416
        %v3458 = vadd.f32 %v3349, %v3416
        %v3459 = vadd.f32 %v3352, %v3416
        %v3460 = vadd.f32 %v3355, %v3416
        %v3461 = vadd.f32 %v3358, %v3416
        %v3462 = vadd.f32 %v3361, %v3416
        %v3463 = vadd.f32 %v3364, %v3416
        %v3464 = vadd.f32 %v3367, %v3416
        %v3465 = vadd.f32 %v3370, %v3416
        %v3466 = vadd.f32 %v3373, %v3416
        %v3467 = vadd.f32 %v3376, %v3416
        %v3468 = vadd.f32 %v3379, %v3416
        %v3469 = vadd.f32 %v3382, %v3416
        %v3470 = vadd.f32 %v3385, %v3416
        %v3471 = vadd.f32 %v3388, %v3416
        %v3472 = vadd.f32 %v3391, %v3416
        %v3473 = vadd.f32 %v3394, %v3416
        %v3474 = vadd.f32 %v3397, %v3416
        %v3475 = vadd.f32 %v3400, %v3416
        %v3476 = vadd.f32 %v3403, %v3416
        %v3477 = vadd.f32 %v3406, %v3416
        %v3478 = vadd.f32 %v3409, %v3416
        %v3479 = vadd.f32 %v3412, %v3416
        %v3480 = vadd.f32 %v3415, %v3416
        %v3481 = vmul.f32 %v3417, 1.442695
        %v3482 = vpow.pop %v3481
        %v3483 = vmul.f32 %v3418, 1.442695
        %v3484 = vpow.pop %v3483
        %v3485 = vmul.f32 %v3419, 1.442695
        %v3486 = vpow.pop %v3485
        %v3487 = vmul.f32 %v3420, 1.442695
        %v3488 = vpow.pop %v3487
        %v3489 = vmul.f32 %v3421, 1.442695
        %v3490 = vpow.pop %v3489
        %v3491 = vmul.f32 %v3422, 1.442695
        %v3492 = vpow.pop %v3491
        %v3493 = vmul.f32 %v3423, 1.442695
        %v3494 = vpow.pop %v3493
        %v3495 = vmul.f32 %v3424, 1.442695
        %v3496 = vpow.pop %v3495
        %v3497 = vmul.f32 %v3425, 1.442695
        %v3498 = vpow.pop %v3497
        %v3499 = vmul.f32 %v3426, 1.442695
        %v3500 = vpow.pop %v3499
        %v3501 = vmul.f32 %v3427, 1.442695
        %v3502 = vpow.pop %v3501
        %v3503 = vmul.f32 %v3428, 1.442695
        %v3504 = vpow.pop %v3503
        %v3505 = vmul.f32 %v3429, 1.442695
        %v3506 = vpow.pop %v3505
        %v3507 = vmul.f32 %v3430, 1.442695
        %v3508 = vpow.pop %v3507
        %v3509 = vmul.f32 %v3431, 1.442695
        %v3510 = vpow.pop %v3509
        %v3511 = vmul.f32 %v3432, 1.442695
        %v3512 = vpow.pop %v3511
        %v3513 = vmul.f32 %v3433, 1.442695
        %v3514 = vpow.pop %v3513
        %v3515 = vmul.f32 %v3434, 1.442695
        %v3516 = vpow.pop %v3515
        %v3517 = vmul.f32 %v3435, 1.442695
        %v3518 = vpow.pop %v3517
        %v3519 = vmul.f32 %v3436, 1.442695
        %v3520 = vpow.pop %v3519
        %v3521 = vmul.f32 %v3437, 1.442695
        %v3522 = vpow.pop %v3521
        %v3523 = vmul.f32 %v3438, 1.442695
        %v3524 = vpow.pop %v3523
        %v3525 = vmul.f32 %v3439, 1.442695
        %v3526 = vpow.pop %v3525
        %v3527 = vmul.f32 %v3440, 1.442695
        %v3528 = vpow.pop %v3527
        %v3529 = vmul.f32 %v3441, 1.442695
        %v3530 = vpow.pop %v3529
        %v3531 = vmul.f32 %v3442, 1.442695
        %v3532 = vpow.pop %v3531
        %v3533 = vmul.f32 %v3443, 1.442695
        %v3534 = vpow.pop %v3533
        %v3535 = vmul.f32 %v3444, 1.442695
        %v3536 = vpow.pop %v3535
        %v3537 = vmul.f32 %v3445, 1.442695
        %v3538 = vpow.pop %v3537
        %v3539 = vmul.f32 %v3446, 1.442695
        %v3540 = vpow.pop %v3539
        %v3541 = vmul.f32 %v3447, 1.442695
        %v3542 = vpow.pop %v3541
        %v3543 = vmul.f32 %v3448, 1.442695
        %v3544 = vpow.pop %v3543
        %v3545 = vmul.f32 %v3449, 1.442695
        %v3546 = vpow.pop %v3545
        %v3547 = vmul.f32 %v3450, 1.442695
        %v3548 = vpow.pop %v3547
        %v3549 = vmul.f32 %v3451, 1.442695
        %v3550 = vpow.pop %v3549
        %v3551 = vmul.f32 %v3452, 1.442695
        %v3552 = vpow.pop %v3551
        %v3553 = vmul.f32 %v3453, 1.442695
        %v3554 = vpow.pop %v3553
        %v3555 = vmul.f32 %v3454, 1.442695
        %v3556 = vpow.pop %v3555
        %v3557 = vmul.f32 %v3455, 1.442695
        %v3558 = vpow.pop %v3557
        %v3559 = vmul.f32 %v3456, 1.442695
        %v3560 = vpow.pop %v3559
        %v3561 = vmul.f32 %v3457, 1.442695
        %v3562 = vpow.pop %v3561
        %v3563 = vmul.f32 %v3458, 1.442695
        %v3564 = vpow.pop %v3563
        %v3565 = vmul.f32 %v3459, 1.442695
        %v3566 = vpow.pop %v3565
        %v3567 = vmul.f32 %v3460, 1.442695
        %v3568 = vpow.pop %v3567
        %v3569 = vmul.f32 %v3461, 1.442695
        %v3570 = vpow.pop %v3569
        %v3571 = vmul.f32 %v3462, 1.442695
        %v3572 = vpow.pop %v3571
        %v3573 = vmul.f32 %v3463, 1.442695
        %v3574 = vpow.pop %v3573
        %v3575 = vmul.f32 %v3464, 1.442695
        %v3576 = vpow.pop %v3575
        %v3577 = vmul.f32 %v3465, 1.442695
        %v3578 = vpow.pop %v3577
        %v3579 = vmul.f32 %v3466, 1.442695
        %v3580 = vpow.pop %v3579
        %v3581 = vmul.f32 %v3467, 1.442695
        %v3582 = vpow.pop %v3581
        %v3583 = vmul.f32 %v3468, 1.442695
        %v3584 = vpow.pop %v3583
        %v3585 = vmul.f32 %v3469, 1.442695
        %v3586 = vpow.pop %v3585
        %v3587 = vmul.f32 %v3470, 1.442695
        %v3588 = vpow.pop %v3587
        %v3589 = vmul.f32 %v3471, 1.442695
        %v3590 = vpow.pop %v3589
        %v3591 = vmul.f32 %v3472, 1.442695
        %v3592 = vpow.pop %v3591
        %v3593 = vmul.f32 %v3473, 1.442695
        %v3594 = vpow.pop %v3593
        %v3595 = vmul.f32 %v3474, 1.442695
        %v3596 = vpow.pop %v3595
        %v3597 = vmul.f32 %v3475, 1.442695
        %v3598 = vpow.pop %v3597
        %v3599 = vmul.f32 %v3476, 1.442695
        %v3600 = vpow.pop %v3599
        %v3601 = vmul.f32 %v3477, 1.442695
        %v3602 = vpow.pop %v3601
        %v3603 = vmul.f32 %v3478, 1.442695
        %v3604 = vpow.pop %v3603
        %v3605 = vmul.f32 %v3479, 1.442695
        %v3606 = vpow.pop %v3605
        %v3607 = vmul.f32 %v3480, 1.442695
        %v3608 = vpow.pop %v3607
        %v3617 = vperm.slane %v480, 0
        %v3618 = vlaneseq
        %v3619 = vshrl.u32 %v3618, 7
        %3621 = vset.pattern.permute.xlu0 %v3619
        %3622 = vperm.xlu0 %3621, %v3617
        %v3623 = vpop.permute.xlu0 %3622
        %v3624 = vperm.slane %v480, 1
        %v3625 = vlaneseq
        %v3626 = vshrl.u32 %v3625, 7
        %3628 = vset.pattern.permute.xlu0 %v3626
        %3629 = vperm.xlu0 %3628, %v3624
        %v3630 = vpop.permute.xlu0 %3629
        %v3631 = vperm.slane %v480, 2
        %v3632 = vlaneseq
        %v3633 = vshrl.u32 %v3632, 7
        %3635 = vset.pattern.permute.xlu0 %v3633
        %3636 = vperm.xlu0 %3635, %v3631
        %v3637 = vpop.permute.xlu0 %3636
        %v3638 = vperm.slane %v480, 3
        %v3639 = vlaneseq
        %v3640 = vshrl.u32 %v3639, 7
        %3642 = vset.pattern.permute.xlu0 %v3640
        %3643 = vperm.xlu0 %3642, %v3638
        %v3644 = vpop.permute.xlu0 %3643
        %v3645 = vperm.slane %v480, 4
        %v3646 = vlaneseq
        %v3647 = vshrl.u32 %v3646, 7
        %3649 = vset.pattern.permute.xlu0 %v3647
        %3650 = vperm.xlu0 %3649, %v3645
        %v3651 = vpop.permute.xlu0 %3650
        %v3652 = vperm.slane %v480, 5
        %v3653 = vlaneseq
        %v3654 = vshrl.u32 %v3653, 7
        %3656 = vset.pattern.permute.xlu0 %v3654
        %3657 = vperm.xlu0 %3656, %v3652
        %v3658 = vpop.permute.xlu0 %3657
        %v3659 = vperm.slane %v480, 6
        %v3660 = vlaneseq
        %v3661 = vshrl.u32 %v3660, 7
        %3663 = vset.pattern.permute.xlu0 %v3661
        %3664 = vperm.xlu0 %3663, %v3659
        %v3665 = vpop.permute.xlu0 %3664
        %v3666 = vperm.slane %v480, 7
        %v3667 = vlaneseq
        %v3668 = vshrl.u32 %v3667, 7
        %3670 = vset.pattern.permute.xlu0 %v3668
        %3671 = vperm.xlu0 %3670, %v3666
        %v3672 = vpop.permute.xlu0 %3671
        %v3673 = vperm.slane %v481, 0
        %v3674 = vlaneseq
        %v3675 = vshrl.u32 %v3674, 7
        %3677 = vset.pattern.permute.xlu0 %v3675
        %3678 = vperm.xlu0 %3677, %v3673
        %v3679 = vpop.permute.xlu0 %3678
        %v3680 = vperm.slane %v481, 1
        %v3681 = vlaneseq
        %v3682 = vshrl.u32 %v3681, 7
        %3684 = vset.pattern.permute.xlu0 %v3682
        %3685 = vperm.xlu0 %3684, %v3680
        %v3686 = vpop.permute.xlu0 %3685
        %v3687 = vperm.slane %v481, 2
        %v3688 = vlaneseq
        %v3689 = vshrl.u32 %v3688, 7
        %3691 = vset.pattern.permute.xlu0 %v3689
        %3692 = vperm.xlu0 %3691, %v3687
        %v3693 = vpop.permute.xlu0 %3692
        %v3694 = vperm.slane %v481, 3
        %v3695 = vlaneseq
        %v3696 = vshrl.u32 %v3695, 7
        %3698 = vset.pattern.permute.xlu0 %v3696
        %3699 = vperm.xlu0 %3698, %v3694
        %v3700 = vpop.permute.xlu0 %3699
        %v3701 = vperm.slane %v481, 4
        %v3702 = vlaneseq
        %v3703 = vshrl.u32 %v3702, 7
        %3705 = vset.pattern.permute.xlu0 %v3703
        %3706 = vperm.xlu0 %3705, %v3701
        %v3707 = vpop.permute.xlu0 %3706
        %v3708 = vperm.slane %v481, 5
        %v3709 = vlaneseq
        %v3710 = vshrl.u32 %v3709, 7
        %3712 = vset.pattern.permute.xlu0 %v3710
        %3713 = vperm.xlu0 %3712, %v3708
        %v3714 = vpop.permute.xlu0 %3713
        %v3715 = vperm.slane %v481, 6
        %v3716 = vlaneseq
        %v3717 = vshrl.u32 %v3716, 7
        %3719 = vset.pattern.permute.xlu0 %v3717
        %3720 = vperm.xlu0 %3719, %v3715
        %v3721 = vpop.permute.xlu0 %3720
        %v3722 = vperm.slane %v481, 7
        %v3723 = vlaneseq
        %v3724 = vshrl.u32 %v3723, 7
        %3726 = vset.pattern.permute.xlu0 %v3724
        %3727 = vperm.xlu0 %3726, %v3722
        %v3728 = vpop.permute.xlu0 %3727
        %v3729 = vperm.slane %v482, 0
        %v3730 = vlaneseq
        %v3731 = vshrl.u32 %v3730, 7
        %3733 = vset.pattern.permute.xlu0 %v3731
        %3734 = vperm.xlu0 %3733, %v3729
        %v3735 = vpop.permute.xlu0 %3734
        %v3736 = vperm.slane %v482, 1
        %v3737 = vlaneseq
        %v3738 = vshrl.u32 %v3737, 7
        %3740 = vset.pattern.permute.xlu0 %v3738
        %3741 = vperm.xlu0 %3740, %v3736
        %v3742 = vpop.permute.xlu0 %3741
        %v3743 = vperm.slane %v482, 2
        %v3744 = vlaneseq
        %v3745 = vshrl.u32 %v3744, 7
        %3747 = vset.pattern.permute.xlu0 %v3745
        %3748 = vperm.xlu0 %3747, %v3743
        %v3749 = vpop.permute.xlu0 %3748
        %v3750 = vperm.slane %v482, 3
        %v3751 = vlaneseq
        %v3752 = vshrl.u32 %v3751, 7
        %3754 = vset.pattern.permute.xlu0 %v3752
        %3755 = vperm.xlu0 %3754, %v3750
        %v3756 = vpop.permute.xlu0 %3755
        %v3757 = vperm.slane %v482, 4
        %v3758 = vlaneseq
        %v3759 = vshrl.u32 %v3758, 7
        %3761 = vset.pattern.permute.xlu0 %v3759
        %3762 = vperm.xlu0 %3761, %v3757
        %v3763 = vpop.permute.xlu0 %3762
        %v3764 = vperm.slane %v482, 5
        %v3765 = vlaneseq
        %v3766 = vshrl.u32 %v3765, 7
        %3768 = vset.pattern.permute.xlu0 %v3766
        %3769 = vperm.xlu0 %3768, %v3764
        %v3770 = vpop.permute.xlu0 %3769
        %v3771 = vperm.slane %v482, 6
        %v3772 = vlaneseq
        %v3773 = vshrl.u32 %v3772, 7
        %3775 = vset.pattern.permute.xlu0 %v3773
        %3776 = vperm.xlu0 %3775, %v3771
        %v3777 = vpop.permute.xlu0 %3776
        %v3778 = vperm.slane %v482, 7
        %v3779 = vlaneseq
        %v3780 = vshrl.u32 %v3779, 7
        %3782 = vset.pattern.permute.xlu0 %v3780
        %3783 = vperm.xlu0 %3782, %v3778
        %v3784 = vpop.permute.xlu0 %3783
        %v3785 = vperm.slane %v483, 0
        %v3786 = vlaneseq
        %v3787 = vshrl.u32 %v3786, 7
        %3789 = vset.pattern.permute.xlu0 %v3787
        %3790 = vperm.xlu0 %3789, %v3785
        %v3791 = vpop.permute.xlu0 %3790
        %v3792 = vperm.slane %v483, 1
        %v3793 = vlaneseq
        %v3794 = vshrl.u32 %v3793, 7
        %3796 = vset.pattern.permute.xlu0 %v3794
        %3797 = vperm.xlu0 %3796, %v3792
        %v3798 = vpop.permute.xlu0 %3797
        %v3799 = vperm.slane %v483, 2
        %v3800 = vlaneseq
        %v3801 = vshrl.u32 %v3800, 7
        %3803 = vset.pattern.permute.xlu0 %v3801
        %3804 = vperm.xlu0 %3803, %v3799
        %v3805 = vpop.permute.xlu0 %3804
        %v3806 = vperm.slane %v483, 3
        %v3807 = vlaneseq
        %v3808 = vshrl.u32 %v3807, 7
        %3810 = vset.pattern.permute.xlu0 %v3808
        %3811 = vperm.xlu0 %3810, %v3806
        %v3812 = vpop.permute.xlu0 %3811
        %v3813 = vperm.slane %v483, 4
        %v3814 = vlaneseq
        %v3815 = vshrl.u32 %v3814, 7
        %3817 = vset.pattern.permute.xlu0 %v3815
        %3818 = vperm.xlu0 %3817, %v3813
        %v3819 = vpop.permute.xlu0 %3818
        %v3820 = vperm.slane %v483, 5
        %v3821 = vlaneseq
        %v3822 = vshrl.u32 %v3821, 7
        %3824 = vset.pattern.permute.xlu0 %v3822
        %3825 = vperm.xlu0 %3824, %v3820
        %v3826 = vpop.permute.xlu0 %3825
        %v3827 = vperm.slane %v483, 6
        %v3828 = vlaneseq
        %v3829 = vshrl.u32 %v3828, 7
        %3831 = vset.pattern.permute.xlu0 %v3829
        %3832 = vperm.xlu0 %3831, %v3827
        %v3833 = vpop.permute.xlu0 %3832
        %v3834 = vperm.slane %v483, 7
        %v3835 = vlaneseq
        %v3836 = vshrl.u32 %v3835, 7
        %3838 = vset.pattern.permute.xlu0 %v3836
        %3839 = vperm.xlu0 %3838, %v3834
        %v3840 = vpop.permute.xlu0 %3839
        %v3841 = vperm.slane %v484, 0
        %v3842 = vlaneseq
        %v3843 = vshrl.u32 %v3842, 7
        %3845 = vset.pattern.permute.xlu0 %v3843
        %3846 = vperm.xlu0 %3845, %v3841
        %v3847 = vpop.permute.xlu0 %3846
        %v3848 = vperm.slane %v484, 1
        %v3849 = vlaneseq
        %v3850 = vshrl.u32 %v3849, 7
        %3852 = vset.pattern.permute.xlu0 %v3850
        %3853 = vperm.xlu0 %3852, %v3848
        %v3854 = vpop.permute.xlu0 %3853
        %v3855 = vperm.slane %v484, 2
        %v3856 = vlaneseq
        %v3857 = vshrl.u32 %v3856, 7
        %3859 = vset.pattern.permute.xlu0 %v3857
        %3860 = vperm.xlu0 %3859, %v3855
        %v3861 = vpop.permute.xlu0 %3860
        %v3862 = vperm.slane %v484, 3
        %v3863 = vlaneseq
        %v3864 = vshrl.u32 %v3863, 7
        %3866 = vset.pattern.permute.xlu0 %v3864
        %3867 = vperm.xlu0 %3866, %v3862
        %v3868 = vpop.permute.xlu0 %3867
        %v3869 = vperm.slane %v484, 4
        %v3870 = vlaneseq
        %v3871 = vshrl.u32 %v3870, 7
        %3873 = vset.pattern.permute.xlu0 %v3871
        %3874 = vperm.xlu0 %3873, %v3869
        %v3875 = vpop.permute.xlu0 %3874
        %v3876 = vperm.slane %v484, 5
        %v3877 = vlaneseq
        %v3878 = vshrl.u32 %v3877, 7
        %3880 = vset.pattern.permute.xlu0 %v3878
        %3881 = vperm.xlu0 %3880, %v3876
        %v3882 = vpop.permute.xlu0 %3881
        %v3883 = vperm.slane %v484, 6
        %v3884 = vlaneseq
        %v3885 = vshrl.u32 %v3884, 7
        %3887 = vset.pattern.permute.xlu0 %v3885
        %3888 = vperm.xlu0 %3887, %v3883
        %v3889 = vpop.permute.xlu0 %3888
        %v3890 = vperm.slane %v484, 7
        %v3891 = vlaneseq
        %v3892 = vshrl.u32 %v3891, 7
        %3894 = vset.pattern.permute.xlu0 %v3892
        %3895 = vperm.xlu0 %3894, %v3890
        %v3896 = vpop.permute.xlu0 %3895
        %v3897 = vperm.slane %v485, 0
        %v3898 = vlaneseq
        %v3899 = vshrl.u32 %v3898, 7
        %3901 = vset.pattern.permute.xlu0 %v3899
        %3902 = vperm.xlu0 %3901, %v3897
        %v3903 = vpop.permute.xlu0 %3902
        %v3904 = vperm.slane %v485, 1
        %v3905 = vlaneseq
        %v3906 = vshrl.u32 %v3905, 7
        %3908 = vset.pattern.permute.xlu0 %v3906
        %3909 = vperm.xlu0 %3908, %v3904
        %v3910 = vpop.permute.xlu0 %3909
        %v3911 = vperm.slane %v485, 2
        %v3912 = vlaneseq
        %v3913 = vshrl.u32 %v3912, 7
        %3915 = vset.pattern.permute.xlu0 %v3913
        %3916 = vperm.xlu0 %3915, %v3911
        %v3917 = vpop.permute.xlu0 %3916
        %v3918 = vperm.slane %v485, 3
        %v3919 = vlaneseq
        %v3920 = vshrl.u32 %v3919, 7
        %3922 = vset.pattern.permute.xlu0 %v3920
        %3923 = vperm.xlu0 %3922, %v3918
        %v3924 = vpop.permute.xlu0 %3923
        %v3925 = vperm.slane %v485, 4
        %v3926 = vlaneseq
        %v3927 = vshrl.u32 %v3926, 7
        %3929 = vset.pattern.permute.xlu0 %v3927
        %3930 = vperm.xlu0 %3929, %v3925
        %v3931 = vpop.permute.xlu0 %3930
        %v3932 = vperm.slane %v485, 5
        %v3933 = vlaneseq
        %v3934 = vshrl.u32 %v3933, 7
        %3936 = vset.pattern.permute.xlu0 %v3934
        %3937 = vperm.xlu0 %3936, %v3932
        %v3938 = vpop.permute.xlu0 %3937
        %v3939 = vperm.slane %v485, 6
        %v3940 = vlaneseq
        %v3941 = vshrl.u32 %v3940, 7
        %3943 = vset.pattern.permute.xlu0 %v3941
        %3944 = vperm.xlu0 %3943, %v3939
        %v3945 = vpop.permute.xlu0 %3944
        %v3946 = vperm.slane %v485, 7
        %v3947 = vlaneseq
        %v3948 = vshrl.u32 %v3947, 7
        %3950 = vset.pattern.permute.xlu0 %v3948
        %3951 = vperm.xlu0 %3950, %v3946
        %v3952 = vpop.permute.xlu0 %3951
        %v3953 = vperm.slane %v486, 0
        %v3954 = vlaneseq
        %v3955 = vshrl.u32 %v3954, 7
        %3957 = vset.pattern.permute.xlu0 %v3955
        %3958 = vperm.xlu0 %3957, %v3953
        %v3959 = vpop.permute.xlu0 %3958
        %v3960 = vperm.slane %v486, 1
        %v3961 = vlaneseq
        %v3962 = vshrl.u32 %v3961, 7
        %3964 = vset.pattern.permute.xlu0 %v3962
        %3965 = vperm.xlu0 %3964, %v3960
        %v3966 = vpop.permute.xlu0 %3965
        %v3967 = vperm.slane %v486, 2
        %v3968 = vlaneseq
        %v3969 = vshrl.u32 %v3968, 7
        %3971 = vset.pattern.permute.xlu0 %v3969
        %3972 = vperm.xlu0 %3971, %v3967
        %v3973 = vpop.permute.xlu0 %3972
        %v3974 = vperm.slane %v486, 3
        %v3975 = vlaneseq
        %v3976 = vshrl.u32 %v3975, 7
        %3978 = vset.pattern.permute.xlu0 %v3976
        %3979 = vperm.xlu0 %3978, %v3974
        %v3980 = vpop.permute.xlu0 %3979
        %v3981 = vperm.slane %v486, 4
        %v3982 = vlaneseq
        %v3983 = vshrl.u32 %v3982, 7
        %3985 = vset.pattern.permute.xlu0 %v3983
        %3986 = vperm.xlu0 %3985, %v3981
        %v3987 = vpop.permute.xlu0 %3986
        %v3988 = vperm.slane %v486, 5
        %v3989 = vlaneseq
        %v3990 = vshrl.u32 %v3989, 7
        %3992 = vset.pattern.permute.xlu0 %v3990
        %3993 = vperm.xlu0 %3992, %v3988
        %v3994 = vpop.permute.xlu0 %3993
        %v3995 = vperm.slane %v486, 6
        %v3996 = vlaneseq
        %v3997 = vshrl.u32 %v3996, 7
        %3999 = vset.pattern.permute.xlu0 %v3997
        %4000 = vperm.xlu0 %3999, %v3995
        %v4001 = vpop.permute.xlu0 %4000
        %v4002 = vperm.slane %v486, 7
        %v4003 = vlaneseq
        %v4004 = vshrl.u32 %v4003, 7
        %4006 = vset.pattern.permute.xlu0 %v4004
        %4007 = vperm.xlu0 %4006, %v4002
        %v4008 = vpop.permute.xlu0 %4007
        %v4009 = vperm.slane %v487, 0
        %v4010 = vlaneseq
        %v4011 = vshrl.u32 %v4010, 7
        %4013 = vset.pattern.permute.xlu0 %v4011
        %4014 = vperm.xlu0 %4013, %v4009
        %v4015 = vpop.permute.xlu0 %4014
        %v4016 = vperm.slane %v487, 1
        %v4017 = vlaneseq
        %v4018 = vshrl.u32 %v4017, 7
        %4020 = vset.pattern.permute.xlu0 %v4018
        %4021 = vperm.xlu0 %4020, %v4016
        %v4022 = vpop.permute.xlu0 %4021
        %v4023 = vperm.slane %v487, 2
        %v4024 = vlaneseq
        %v4025 = vshrl.u32 %v4024, 7
        %4027 = vset.pattern.permute.xlu0 %v4025
        %4028 = vperm.xlu0 %4027, %v4023
        %v4029 = vpop.permute.xlu0 %4028
        %v4030 = vperm.slane %v487, 3
        %v4031 = vlaneseq
        %v4032 = vshrl.u32 %v4031, 7
        %4034 = vset.pattern.permute.xlu0 %v4032
        %4035 = vperm.xlu0 %4034, %v4030
        %v4036 = vpop.permute.xlu0 %4035
        %v4037 = vperm.slane %v487, 4
        %v4038 = vlaneseq
        %v4039 = vshrl.u32 %v4038, 7
        %4041 = vset.pattern.permute.xlu0 %v4039
        %4042 = vperm.xlu0 %4041, %v4037
        %v4043 = vpop.permute.xlu0 %4042
        %v4044 = vperm.slane %v487, 5
        %v4045 = vlaneseq
        %v4046 = vshrl.u32 %v4045, 7
        %4048 = vset.pattern.permute.xlu0 %v4046
        %4049 = vperm.xlu0 %4048, %v4044
        %v4050 = vpop.permute.xlu0 %4049
        %v4051 = vperm.slane %v487, 6
        %v4052 = vlaneseq
        %v4053 = vshrl.u32 %v4052, 7
        %4055 = vset.pattern.permute.xlu0 %v4053
        %4056 = vperm.xlu0 %4055, %v4051
        %v4057 = vpop.permute.xlu0 %4056
        %v4058 = vperm.slane %v487, 7
        %v4059 = vlaneseq
        %v4060 = vshrl.u32 %v4059, 7
        %4062 = vset.pattern.permute.xlu0 %v4060
        %4063 = vperm.xlu0 %4062, %v4058
        %v4064 = vpop.permute.xlu0 %4063
        %v4129 = vmul.f32 %v3482, %v3623
        %v4130 = vmul.f32 %v3484, %v3630
        %v4131 = vmul.f32 %v3486, %v3637
        %v4132 = vmul.f32 %v3488, %v3644
        %v4133 = vmul.f32 %v3490, %v3651
        %v4134 = vmul.f32 %v3492, %v3658
        %v4135 = vmul.f32 %v3494, %v3665
        %v4136 = vmul.f32 %v3496, %v3672
        %v4137 = vmul.f32 %v3498, %v3679
        %v4138 = vmul.f32 %v3500, %v3686
        %v4139 = vmul.f32 %v3502, %v3693
        %v4140 = vmul.f32 %v3504, %v3700
        %v4141 = vmul.f32 %v3506, %v3707
        %v4142 = vmul.f32 %v3508, %v3714
        %v4143 = vmul.f32 %v3510, %v3721
        %v4144 = vmul.f32 %v3512, %v3728
        %v4145 = vmul.f32 %v3514, %v3735
        %v4146 = vmul.f32 %v3516, %v3742
        %v4147 = vmul.f32 %v3518, %v3749
        %v4148 = vmul.f32 %v3520, %v3756
        %v4149 = vmul.f32 %v3522, %v3763
        %v4150 = vmul.f32 %v3524, %v3770
        %v4151 = vmul.f32 %v3526, %v3777
        %v4152 = vmul.f32 %v3528, %v3784
        %v4153 = vmul.f32 %v3530, %v3791
        %v4154 = vmul.f32 %v3532, %v3798
        %v4155 = vmul.f32 %v3534, %v3805
        %v4156 = vmul.f32 %v3536, %v3812
        %v4157 = vmul.f32 %v3538, %v3819
        %v4158 = vmul.f32 %v3540, %v3826
        %v4159 = vmul.f32 %v3542, %v3833
        %v4160 = vmul.f32 %v3544, %v3840
        %v4161 = vmul.f32 %v3546, %v3847
        %v4162 = vmul.f32 %v3548, %v3854
        %v4163 = vmul.f32 %v3550, %v3861
        %v4164 = vmul.f32 %v3552, %v3868
        %v4165 = vmul.f32 %v3554, %v3875
        %v4166 = vmul.f32 %v3556, %v3882
        %v4167 = vmul.f32 %v3558, %v3889
        %v4168 = vmul.f32 %v3560, %v3896
        %v4169 = vmul.f32 %v3562, %v3903
        %v4170 = vmul.f32 %v3564, %v3910
        %v4171 = vmul.f32 %v3566, %v3917
        %v4172 = vmul.f32 %v3568, %v3924
        %v4173 = vmul.f32 %v3570, %v3931
        %v4174 = vmul.f32 %v3572, %v3938
        %v4175 = vmul.f32 %v3574, %v3945
        %v4176 = vmul.f32 %v3576, %v3952
        %v4177 = vmul.f32 %v3578, %v3959
        %v4178 = vmul.f32 %v3580, %v3966
        %v4179 = vmul.f32 %v3582, %v3973
        %v4180 = vmul.f32 %v3584, %v3980
        %v4181 = vmul.f32 %v3586, %v3987
        %v4182 = vmul.f32 %v3588, %v3994
        %v4183 = vmul.f32 %v3590, %v4001
        %v4184 = vmul.f32 %v3592, %v4008
        %v4185 = vmul.f32 %v3594, %v4015
        %v4186 = vmul.f32 %v3596, %v4022
        %v4187 = vmul.f32 %v3598, %v4029
        %v4188 = vmul.f32 %v3600, %v4036
        %v4189 = vmul.f32 %v3602, %v4043
        %v4190 = vmul.f32 %v3604, %v4050
        %v4191 = vmul.f32 %v3606, %v4057
        %v4192 = vmul.f32 %v3608, %v4064
        %4257 = vset.pattern.permute.xlu0 0
        %4258 = vperm.xlu0 %4257, %v4129
        %v4259 = vpop.permute.xlu0 %4258
        %4260 = vset.pattern.permute.xlu0 0
        %4261 = vperm.xlu0 %4260, %v4130
        %v4262 = vpop.permute.xlu0 %4261
        %4263 = vset.pattern.permute.xlu0 0
        %4264 = vperm.xlu0 %4263, %v4131
        %v4265 = vpop.permute.xlu0 %4264
        %4266 = vset.pattern.permute.xlu0 0
        %4267 = vperm.xlu0 %4266, %v4132
        %v4268 = vpop.permute.xlu0 %4267
        %4269 = vset.pattern.permute.xlu0 0
        %4270 = vperm.xlu0 %4269, %v4133
        %v4271 = vpop.permute.xlu0 %4270
        %4272 = vset.pattern.permute.xlu0 0
        %4273 = vperm.xlu0 %4272, %v4134
        %v4274 = vpop.permute.xlu0 %4273
        %4275 = vset.pattern.permute.xlu0 0
        %4276 = vperm.xlu0 %4275, %v4135
        %v4277 = vpop.permute.xlu0 %4276
        %4278 = vset.pattern.permute.xlu0 0
        %4279 = vperm.xlu0 %4278, %v4136
        %v4280 = vpop.permute.xlu0 %4279
        %4281 = vset.pattern.permute.xlu0 0
        %4282 = vperm.xlu0 %4281, %v4137
        %v4283 = vpop.permute.xlu0 %4282
        %4284 = vset.pattern.permute.xlu0 0
        %4285 = vperm.xlu0 %4284, %v4138
        %v4286 = vpop.permute.xlu0 %4285
        %4287 = vset.pattern.permute.xlu0 0
        %4288 = vperm.xlu0 %4287, %v4139
        %v4289 = vpop.permute.xlu0 %4288
        %4290 = vset.pattern.permute.xlu0 0
        %4291 = vperm.xlu0 %4290, %v4140
        %v4292 = vpop.permute.xlu0 %4291
        %4293 = vset.pattern.permute.xlu0 0
        %4294 = vperm.xlu0 %4293, %v4141
        %v4295 = vpop.permute.xlu0 %4294
        %4296 = vset.pattern.permute.xlu0 0
        %4297 = vperm.xlu0 %4296, %v4142
        %v4298 = vpop.permute.xlu0 %4297
        %4299 = vset.pattern.permute.xlu0 0
        %4300 = vperm.xlu0 %4299, %v4143
        %v4301 = vpop.permute.xlu0 %4300
        %4302 = vset.pattern.permute.xlu0 0
        %4303 = vperm.xlu0 %4302, %v4144
        %v4304 = vpop.permute.xlu0 %4303
        %4305 = vset.pattern.permute.xlu0 0
        %4306 = vperm.xlu0 %4305, %v4145
        %v4307 = vpop.permute.xlu0 %4306
        %4308 = vset.pattern.permute.xlu0 0
        %4309 = vperm.xlu0 %4308, %v4146
        %v4310 = vpop.permute.xlu0 %4309
        %4311 = vset.pattern.permute.xlu0 0
        %4312 = vperm.xlu0 %4311, %v4147
        %v4313 = vpop.permute.xlu0 %4312
        %4314 = vset.pattern.permute.xlu0 0
        %4315 = vperm.xlu0 %4314, %v4148
        %v4316 = vpop.permute.xlu0 %4315
        %4317 = vset.pattern.permute.xlu0 0
        %4318 = vperm.xlu0 %4317, %v4149
        %v4319 = vpop.permute.xlu0 %4318
        %4320 = vset.pattern.permute.xlu0 0
        %4321 = vperm.xlu0 %4320, %v4150
        %v4322 = vpop.permute.xlu0 %4321
        %4323 = vset.pattern.permute.xlu0 0
        %4324 = vperm.xlu0 %4323, %v4151
        %v4325 = vpop.permute.xlu0 %4324
        %4326 = vset.pattern.permute.xlu0 0
        %4327 = vperm.xlu0 %4326, %v4152
        %v4328 = vpop.permute.xlu0 %4327
        %4329 = vset.pattern.permute.xlu0 0
        %4330 = vperm.xlu0 %4329, %v4153
        %v4331 = vpop.permute.xlu0 %4330
        %4332 = vset.pattern.permute.xlu0 0
        %4333 = vperm.xlu0 %4332, %v4154
        %v4334 = vpop.permute.xlu0 %4333
        %4335 = vset.pattern.permute.xlu0 0
        %4336 = vperm.xlu0 %4335, %v4155
        %v4337 = vpop.permute.xlu0 %4336
        %4338 = vset.pattern.permute.xlu0 0
        %4339 = vperm.xlu0 %4338, %v4156
        %v4340 = vpop.permute.xlu0 %4339
        %4341 = vset.pattern.permute.xlu0 0
        %4342 = vperm.xlu0 %4341, %v4157
        %v4343 = vpop.permute.xlu0 %4342
        %4344 = vset.pattern.permute.xlu0 0
        %4345 = vperm.xlu0 %4344, %v4158
        %v4346 = vpop.permute.xlu0 %4345
        %4347 = vset.pattern.permute.xlu0 0
        %4348 = vperm.xlu0 %4347, %v4159
        %v4349 = vpop.permute.xlu0 %4348
        %4350 = vset.pattern.permute.xlu0 0
        %4351 = vperm.xlu0 %4350, %v4160
        %v4352 = vpop.permute.xlu0 %4351
        %4353 = vset.pattern.permute.xlu0 0
        %4354 = vperm.xlu0 %4353, %v4161
        %v4355 = vpop.permute.xlu0 %4354
        %4356 = vset.pattern.permute.xlu0 0
        %4357 = vperm.xlu0 %4356, %v4162
        %v4358 = vpop.permute.xlu0 %4357
        %4359 = vset.pattern.permute.xlu0 0
        %4360 = vperm.xlu0 %4359, %v4163
        %v4361 = vpop.permute.xlu0 %4360
        %4362 = vset.pattern.permute.xlu0 0
        %4363 = vperm.xlu0 %4362, %v4164
        %v4364 = vpop.permute.xlu0 %4363
        %4365 = vset.pattern.permute.xlu0 0
        %4366 = vperm.xlu0 %4365, %v4165
        %v4367 = vpop.permute.xlu0 %4366
        %4368 = vset.pattern.permute.xlu0 0
        %4369 = vperm.xlu0 %4368, %v4166
        %v4370 = vpop.permute.xlu0 %4369
        %4371 = vset.pattern.permute.xlu0 0
        %4372 = vperm.xlu0 %4371, %v4167
        %v4373 = vpop.permute.xlu0 %4372
        %4374 = vset.pattern.permute.xlu0 0
        %4375 = vperm.xlu0 %4374, %v4168
        %v4376 = vpop.permute.xlu0 %4375
        %4377 = vset.pattern.permute.xlu0 0
        %4378 = vperm.xlu0 %4377, %v4169
        %v4379 = vpop.permute.xlu0 %4378
        %4380 = vset.pattern.permute.xlu0 0
        %4381 = vperm.xlu0 %4380, %v4170
        %v4382 = vpop.permute.xlu0 %4381
        %4383 = vset.pattern.permute.xlu0 0
        %4384 = vperm.xlu0 %4383, %v4171
        %v4385 = vpop.permute.xlu0 %4384
        %4386 = vset.pattern.permute.xlu0 0
        %4387 = vperm.xlu0 %4386, %v4172
        %v4388 = vpop.permute.xlu0 %4387
        %4389 = vset.pattern.permute.xlu0 0
        %4390 = vperm.xlu0 %4389, %v4173
        %v4391 = vpop.permute.xlu0 %4390
        %4392 = vset.pattern.permute.xlu0 0
        %4393 = vperm.xlu0 %4392, %v4174
        %v4394 = vpop.permute.xlu0 %4393
        %4395 = vset.pattern.permute.xlu0 0
        %4396 = vperm.xlu0 %4395, %v4175
        %v4397 = vpop.permute.xlu0 %4396
        %4398 = vset.pattern.permute.xlu0 0
        %4399 = vperm.xlu0 %4398, %v4176
        %v4400 = vpop.permute.xlu0 %4399
        %4401 = vset.pattern.permute.xlu0 0
        %4402 = vperm.xlu0 %4401, %v4177
        %v4403 = vpop.permute.xlu0 %4402
        %4404 = vset.pattern.permute.xlu0 0
        %4405 = vperm.xlu0 %4404, %v4178
        %v4406 = vpop.permute.xlu0 %4405
        %4407 = vset.pattern.permute.xlu0 0
        %4408 = vperm.xlu0 %4407, %v4179
        %v4409 = vpop.permute.xlu0 %4408
        %4410 = vset.pattern.permute.xlu0 0
        %4411 = vperm.xlu0 %4410, %v4180
        %v4412 = vpop.permute.xlu0 %4411
        %4413 = vset.pattern.permute.xlu0 0
        %4414 = vperm.xlu0 %4413, %v4181
        %v4415 = vpop.permute.xlu0 %4414
        %4416 = vset.pattern.permute.xlu0 0
        %4417 = vperm.xlu0 %4416, %v4182
        %v4418 = vpop.permute.xlu0 %4417
        %4419 = vset.pattern.permute.xlu0 0
        %4420 = vperm.xlu0 %4419, %v4183
        %v4421 = vpop.permute.xlu0 %4420
        %4422 = vset.pattern.permute.xlu0 0
        %4423 = vperm.xlu0 %4422, %v4184
        %v4424 = vpop.permute.xlu0 %4423
        %4425 = vset.pattern.permute.xlu0 0
        %4426 = vperm.xlu0 %4425, %v4185
        %v4427 = vpop.permute.xlu0 %4426
        %4428 = vset.pattern.permute.xlu0 0
        %4429 = vperm.xlu0 %4428, %v4186
        %v4430 = vpop.permute.xlu0 %4429
        %4431 = vset.pattern.permute.xlu0 0
        %4432 = vperm.xlu0 %4431, %v4187
        %v4433 = vpop.permute.xlu0 %4432
        %4434 = vset.pattern.permute.xlu0 0
        %4435 = vperm.xlu0 %4434, %v4188
        %v4436 = vpop.permute.xlu0 %4435
        %4437 = vset.pattern.permute.xlu0 0
        %4438 = vperm.xlu0 %4437, %v4189
        %v4439 = vpop.permute.xlu0 %4438
        %4440 = vset.pattern.permute.xlu0 0
        %4441 = vperm.xlu0 %4440, %v4190
        %v4442 = vpop.permute.xlu0 %4441
        %4443 = vset.pattern.permute.xlu0 0
        %4444 = vperm.xlu0 %4443, %v4191
        %v4445 = vpop.permute.xlu0 %4444
        %4446 = vset.pattern.permute.xlu0 0
        %4447 = vperm.xlu0 %4446, %v4192
        %v4448 = vpop.permute.xlu0 %4447
        %v4449 = vlaneseq
        %v4450 = vand.u32 %v4449, 127
        %v4451 = vperm.slane %v4259, %v4450
        %v4452 = vperm.slane %v4262, %v4450
        %v4453 = vperm.slane %v4265, %v4450
        %v4454 = vperm.slane %v4268, %v4450
        %v4455 = vperm.slane %v4271, %v4450
        %v4456 = vperm.slane %v4274, %v4450
        %v4457 = vperm.slane %v4277, %v4450
        %v4458 = vperm.slane %v4280, %v4450
        %v4459 = vperm.slane %v4283, %v4450
        %v4460 = vperm.slane %v4286, %v4450
        %v4461 = vperm.slane %v4289, %v4450
        %v4462 = vperm.slane %v4292, %v4450
        %v4463 = vperm.slane %v4295, %v4450
        %v4464 = vperm.slane %v4298, %v4450
        %v4465 = vperm.slane %v4301, %v4450
        %v4466 = vperm.slane %v4304, %v4450
        %v4467 = vperm.slane %v4307, %v4450
        %v4468 = vperm.slane %v4310, %v4450
        %v4469 = vperm.slane %v4313, %v4450
        %v4470 = vperm.slane %v4316, %v4450
        %v4471 = vperm.slane %v4319, %v4450
        %v4472 = vperm.slane %v4322, %v4450
        %v4473 = vperm.slane %v4325, %v4450
        %v4474 = vperm.slane %v4328, %v4450
        %v4475 = vperm.slane %v4331, %v4450
        %v4476 = vperm.slane %v4334, %v4450
        %v4477 = vperm.slane %v4337, %v4450
        %v4478 = vperm.slane %v4340, %v4450
        %v4479 = vperm.slane %v4343, %v4450
        %v4480 = vperm.slane %v4346, %v4450
        %v4481 = vperm.slane %v4349, %v4450
        %v4482 = vperm.slane %v4352, %v4450
        %v4483 = vperm.slane %v4355, %v4450
        %v4484 = vperm.slane %v4358, %v4450
        %v4485 = vperm.slane %v4361, %v4450
        %v4486 = vperm.slane %v4364, %v4450
        %v4487 = vperm.slane %v4367, %v4450
        %v4488 = vperm.slane %v4370, %v4450
        %v4489 = vperm.slane %v4373, %v4450
        %v4490 = vperm.slane %v4376, %v4450
        %v4491 = vperm.slane %v4379, %v4450
        %v4492 = vperm.slane %v4382, %v4450
        %v4493 = vperm.slane %v4385, %v4450
        %v4494 = vperm.slane %v4388, %v4450
        %v4495 = vperm.slane %v4391, %v4450
        %v4496 = vperm.slane %v4394, %v4450
        %v4497 = vperm.slane %v4397, %v4450
        %v4498 = vperm.slane %v4400, %v4450
        %v4499 = vperm.slane %v4403, %v4450
        %v4500 = vperm.slane %v4406, %v4450
        %v4501 = vperm.slane %v4409, %v4450
        %v4502 = vperm.slane %v4412, %v4450
        %v4503 = vperm.slane %v4415, %v4450
        %v4504 = vperm.slane %v4418, %v4450
        %v4505 = vperm.slane %v4421, %v4450
        %v4506 = vperm.slane %v4424, %v4450
        %v4507 = vperm.slane %v4427, %v4450
        %v4508 = vperm.slane %v4430, %v4450
        %v4509 = vperm.slane %v4433, %v4450
        %v4510 = vperm.slane %v4436, %v4450
        %v4511 = vperm.slane %v4439, %v4450
        %v4512 = vperm.slane %v4442, %v4450
        %v4513 = vperm.slane %v4445, %v4450
        %v4514 = vperm.slane %v4448, %v4450
        %vm4515 = vcmask 1041409
        %v4516 = vsel %vm4515, %v4452, %v4451
        %vm4517 = vcmask 1042434
        %v4518 = vsel %vm4517, %v4453, %v4516
        %vm4519 = vcmask 1043459
        %v4520 = vsel %vm4519, %v4454, %v4518
        %vm4521 = vcmask 1044484
        %v4522 = vsel %vm4521, %v4455, %v4520
        %vm4523 = vcmask 1045509
        %v4524 = vsel %vm4523, %v4456, %v4522
        %vm4525 = vcmask 1046534
        %v4526 = vsel %vm4525, %v4457, %v4524
        %vm4527 = vcmask 1047559
        %v4528 = vsel %vm4527, %v4458, %v4526
        %v4529 = vsel %vm4515, %v4460, %v4459
        %v4530 = vsel %vm4517, %v4461, %v4529
        %v4531 = vsel %vm4519, %v4462, %v4530
        %v4532 = vsel %vm4521, %v4463, %v4531
        %v4533 = vsel %vm4523, %v4464, %v4532
        %v4534 = vsel %vm4525, %v4465, %v4533
        %v4535 = vsel %vm4527, %v4466, %v4534
        %v4536 = vsel %vm4515, %v4468, %v4467
        %v4537 = vsel %vm4517, %v4469, %v4536
        %v4538 = vsel %vm4519, %v4470, %v4537
        %v4539 = vsel %vm4521, %v4471, %v4538
        %v4540 = vsel %vm4523, %v4472, %v4539
        %v4541 = vsel %vm4525, %v4473, %v4540
        %v4542 = vsel %vm4527, %v4474, %v4541
        %v4543 = vsel %vm4515, %v4476, %v4475
        %v4544 = vsel %vm4517, %v4477, %v4543
        %v4545 = vsel %vm4519, %v4478, %v4544
        %v4546 = vsel %vm4521, %v4479, %v4545
        %v4547 = vsel %vm4523, %v4480, %v4546
        %v4548 = vsel %vm4525, %v4481, %v4547
        %v4549 = vsel %vm4527, %v4482, %v4548
        %v4550 = vsel %vm4515, %v4484, %v4483
        %v4551 = vsel %vm4517, %v4485, %v4550
        %v4552 = vsel %vm4519, %v4486, %v4551
        %v4553 = vsel %vm4521, %v4487, %v4552
        %v4554 = vsel %vm4523, %v4488, %v4553
        %v4555 = vsel %vm4525, %v4489, %v4554
        %v4556 = vsel %vm4527, %v4490, %v4555
        %v4557 = vsel %vm4515, %v4492, %v4491
        %v4558 = vsel %vm4517, %v4493, %v4557
        %v4559 = vsel %vm4519, %v4494, %v4558
        %v4560 = vsel %vm4521, %v4495, %v4559
        %v4561 = vsel %vm4523, %v4496, %v4560
        %v4562 = vsel %vm4525, %v4497, %v4561
        %v4563 = vsel %vm4527, %v4498, %v4562
        %v4564 = vsel %vm4515, %v4500, %v4499
        %v4565 = vsel %vm4517, %v4501, %v4564
        %v4566 = vsel %vm4519, %v4502, %v4565
        %v4567 = vsel %vm4521, %v4503, %v4566
        %v4568 = vsel %vm4523, %v4504, %v4567
        %v4569 = vsel %vm4525, %v4505, %v4568
        %v4570 = vsel %vm4527, %v4506, %v4569
        %v4571 = vsel %vm4515, %v4508, %v4507
        %v4572 = vsel %vm4517, %v4509, %v4571
        %v4573 = vsel %vm4519, %v4510, %v4572
        %v4574 = vsel %vm4521, %v4511, %v4573
        %v4575 = vsel %vm4523, %v4512, %v4574
        %v4576 = vsel %vm4525, %v4513, %v4575
        %v4577 = vsel %vm4527, %v4514, %v4576
        %vm4586 = vcmask 64512
        %v4587 = vsel %vm4586, %v4528, 0.0
        %4588 = vadd.xlane.f32.xlu0 %v4587
        %v4589 = vpop.xlane.xlu0 %4588
        %v4590 = vsel %vm4586, %v4535, 0.0
        %4591 = vadd.xlane.f32.xlu0 %v4590
        %v4592 = vpop.xlane.xlu0 %4591
        %v4593 = vsel %vm4586, %v4542, 0.0
        %4594 = vadd.xlane.f32.xlu0 %v4593
        %v4595 = vpop.xlane.xlu0 %4594
        %v4596 = vsel %vm4586, %v4549, 0.0
        %4597 = vadd.xlane.f32.xlu0 %v4596
        %v4598 = vpop.xlane.xlu0 %4597
        %v4599 = vsel %vm4586, %v4556, 0.0
        %4600 = vadd.xlane.f32.xlu0 %v4599
        %v4601 = vpop.xlane.xlu0 %4600
        %v4602 = vsel %vm4586, %v4563, 0.0
        %4603 = vadd.xlane.f32.xlu0 %v4602
        %v4604 = vpop.xlane.xlu0 %4603
        %v4605 = vsel %vm4586, %v4570, 0.0
        %4606 = vadd.xlane.f32.xlu0 %v4605
        %v4607 = vpop.xlane.xlu0 %4606
        %v4608 = vsel %vm4586, %v4577, 0.0
        %4609 = vadd.xlane.f32.xlu0 %v4608
        %v4610 = vpop.xlane.xlu0 %4609
        %v4611 = vadd.f32 %v4589, 1e-10
        %v4612 = vadd.f32 %v4592, 1e-10
        %v4613 = vadd.f32 %v4595, 1e-10
        %v4614 = vadd.f32 %v4598, 1e-10
        %v4615 = vadd.f32 %v4601, 1e-10
        %v4616 = vadd.f32 %v4604, 1e-10
        %v4617 = vadd.f32 %v4607, 1e-10
        %v4618 = vadd.f32 %v4610, 1e-10
        %v4619 = vrcp.pop %v4611
        %v4620 = vrcp.pop %v4612
        %v4621 = vrcp.pop %v4613
        %v4622 = vrcp.pop %v4614
        %v4623 = vrcp.pop %v4615
        %v4624 = vrcp.pop %v4616
        %v4625 = vrcp.pop %v4617
        %v4626 = vrcp.pop %v4618
        %v4635 = vperm.slane %v4619, 0
        %v4636 = vperm.slane %v4619, 1
        %v4637 = vperm.slane %v4619, 2
        %v4638 = vperm.slane %v4619, 3
        %v4639 = vperm.slane %v4619, 4
        %v4640 = vperm.slane %v4619, 5
        %v4641 = vperm.slane %v4619, 6
        %v4642 = vperm.slane %v4619, 7
        %v4643 = vperm.slane %v4620, 0
        %v4644 = vperm.slane %v4620, 1
        %v4645 = vperm.slane %v4620, 2
        %v4646 = vperm.slane %v4620, 3
        %v4647 = vperm.slane %v4620, 4
        %v4648 = vperm.slane %v4620, 5
        %v4649 = vperm.slane %v4620, 6
        %v4650 = vperm.slane %v4620, 7
        %v4651 = vperm.slane %v4621, 0
        %v4652 = vperm.slane %v4621, 1
        %v4653 = vperm.slane %v4621, 2
        %v4654 = vperm.slane %v4621, 3
        %v4655 = vperm.slane %v4621, 4
        %v4656 = vperm.slane %v4621, 5
        %v4657 = vperm.slane %v4621, 6
        %v4658 = vperm.slane %v4621, 7
        %v4659 = vperm.slane %v4622, 0
        %v4660 = vperm.slane %v4622, 1
        %v4661 = vperm.slane %v4622, 2
        %v4662 = vperm.slane %v4622, 3
        %v4663 = vperm.slane %v4622, 4
        %v4664 = vperm.slane %v4622, 5
        %v4665 = vperm.slane %v4622, 6
        %v4666 = vperm.slane %v4622, 7
        %v4667 = vperm.slane %v4623, 0
        %v4668 = vperm.slane %v4623, 1
        %v4669 = vperm.slane %v4623, 2
        %v4670 = vperm.slane %v4623, 3
        %v4671 = vperm.slane %v4623, 4
        %v4672 = vperm.slane %v4623, 5
        %v4673 = vperm.slane %v4623, 6
        %v4674 = vperm.slane %v4623, 7
        %v4675 = vperm.slane %v4624, 0
        %v4676 = vperm.slane %v4624, 1
        %v4677 = vperm.slane %v4624, 2
        %v4678 = vperm.slane %v4624, 3
        %v4679 = vperm.slane %v4624, 4
        %v4680 = vperm.slane %v4624, 5
        %v4681 = vperm.slane %v4624, 6
        %v4682 = vperm.slane %v4624, 7
        %v4683 = vperm.slane %v4625, 0
        %v4684 = vperm.slane %v4625, 1
        %v4685 = vperm.slane %v4625, 2
        %v4686 = vperm.slane %v4625, 3
        %v4687 = vperm.slane %v4625, 4
        %v4688 = vperm.slane %v4625, 5
        %v4689 = vperm.slane %v4625, 6
        %v4690 = vperm.slane %v4625, 7
        %v4691 = vperm.slane %v4626, 0
        %v4692 = vperm.slane %v4626, 1
        %v4693 = vperm.slane %v4626, 2
        %v4694 = vperm.slane %v4626, 3
        %v4695 = vperm.slane %v4626, 4
        %v4696 = vperm.slane %v4626, 5
        %v4697 = vperm.slane %v4626, 6
        %v4698 = vperm.slane %v4626, 7
        %v4763 = vmul.f32 %v4129, %v4635
        %v4764 = vmul.f32 %v4130, %v4636
        %v4765 = vmul.f32 %v4131, %v4637
        %v4766 = vmul.f32 %v4132, %v4638
        %v4767 = vmul.f32 %v4133, %v4639
        %v4768 = vmul.f32 %v4134, %v4640
        %v4769 = vmul.f32 %v4135, %v4641
        %v4770 = vmul.f32 %v4136, %v4642
        %v4771 = vmul.f32 %v4137, %v4643
        %v4772 = vmul.f32 %v4138, %v4644
        %v4773 = vmul.f32 %v4139, %v4645
        %v4774 = vmul.f32 %v4140, %v4646
        %v4775 = vmul.f32 %v4141, %v4647
        %v4776 = vmul.f32 %v4142, %v4648
        %v4777 = vmul.f32 %v4143, %v4649
        %v4778 = vmul.f32 %v4144, %v4650
        %v4779 = vmul.f32 %v4145, %v4651
        %v4780 = vmul.f32 %v4146, %v4652
        %v4781 = vmul.f32 %v4147, %v4653
        %v4782 = vmul.f32 %v4148, %v4654
        %v4783 = vmul.f32 %v4149, %v4655
        %v4784 = vmul.f32 %v4150, %v4656
        %v4785 = vmul.f32 %v4151, %v4657
        %v4786 = vmul.f32 %v4152, %v4658
        %v4787 = vmul.f32 %v4153, %v4659
        %v4788 = vmul.f32 %v4154, %v4660
        %v4789 = vmul.f32 %v4155, %v4661
        %v4790 = vmul.f32 %v4156, %v4662
        %v4791 = vmul.f32 %v4157, %v4663
        %v4792 = vmul.f32 %v4158, %v4664
        %v4793 = vmul.f32 %v4159, %v4665
        %v4794 = vmul.f32 %v4160, %v4666
        %v4795 = vmul.f32 %v4161, %v4667
        %v4796 = vmul.f32 %v4162, %v4668
        %v4797 = vmul.f32 %v4163, %v4669
        %v4798 = vmul.f32 %v4164, %v4670
        %v4799 = vmul.f32 %v4165, %v4671
        %v4800 = vmul.f32 %v4166, %v4672
        %v4801 = vmul.f32 %v4167, %v4673
        %v4802 = vmul.f32 %v4168, %v4674
        %v4803 = vmul.f32 %v4169, %v4675
        %v4804 = vmul.f32 %v4170, %v4676
        %v4805 = vmul.f32 %v4171, %v4677
        %v4806 = vmul.f32 %v4172, %v4678
        %v4807 = vmul.f32 %v4173, %v4679
        %v4808 = vmul.f32 %v4174, %v4680
        %v4809 = vmul.f32 %v4175, %v4681
        %v4810 = vmul.f32 %v4176, %v4682
        %v4811 = vmul.f32 %v4177, %v4683
        %v4812 = vmul.f32 %v4178, %v4684
        %v4813 = vmul.f32 %v4179, %v4685
        %v4814 = vmul.f32 %v4180, %v4686
        %v4815 = vmul.f32 %v4181, %v4687
        %v4816 = vmul.f32 %v4182, %v4688
        %v4817 = vmul.f32 %v4183, %v4689
        %v4818 = vmul.f32 %v4184, %v4690
        %v4819 = vmul.f32 %v4185, %v4691
        %v4820 = vmul.f32 %v4186, %v4692
        %v4821 = vmul.f32 %v4187, %v4693
        %v4822 = vmul.f32 %v4188, %v4694
        %v4823 = vmul.f32 %v4189, %v4695
        %v4824 = vmul.f32 %v4190, %v4696
        %v4825 = vmul.f32 %v4191, %v4697
        %v4826 = vmul.f32 %v4192, %v4698
        %v4827 = vld [vmem:[%s7 + $0x3] sm:$0x1]
        %v4828 = vld [vmem:[%s7 + $0xa] sm:$0x1]
        %s4829 = sld [smem:[#allocation5 + $0x1]]
        %v4830 = vlaneseq
        %v4831 = vshrl.u32 %v4830, 7
        %v4832 = vadd.s32 %v4831, 8
        %4833 = vset.pattern.permute.xlu0 %v4832
        %4834 = vperm.xlu0 %4833, %v1677
        %v4835 = vpop.permute.xlu0 %4834
        %v4836 = vlaneseq
        %v4837 = vshrl.u32 %v4836, 7
        %v4838 = vadd.s32 %v4837, 8
        %4839 = vset.pattern.permute.xlu0 %v4838
        %4840 = vperm.xlu0 %4839, %v1684
        %v4841 = vpop.permute.xlu0 %4840
        %v4842 = vlaneseq
        %v4843 = vshrl.u32 %v4842, 7
        %v4844 = vadd.s32 %v4843, 8
        %4845 = vset.pattern.permute.xlu0 %v4844
        %4846 = vperm.xlu0 %4845, %v1691
        %v4847 = vpop.permute.xlu0 %4846
        %v4848 = vlaneseq
        %v4849 = vshrl.u32 %v4848, 7
        %v4850 = vadd.s32 %v4849, 8
        %4851 = vset.pattern.permute.xlu0 %v4850
        %4852 = vperm.xlu0 %4851, %v1698
        %v4853 = vpop.permute.xlu0 %4852
        %v4854 = vlaneseq
        %v4855 = vshrl.u32 %v4854, 7
        %v4856 = vadd.s32 %v4855, 8
        %4857 = vset.pattern.permute.xlu0 %v4856
        %4858 = vperm.xlu0 %4857, %v1705
        %v4859 = vpop.permute.xlu0 %4858
        %v4860 = vlaneseq
        %v4861 = vshrl.u32 %v4860, 7
        %v4862 = vadd.s32 %v4861, 8
        %4863 = vset.pattern.permute.xlu0 %v4862
        %4864 = vperm.xlu0 %4863, %v1712
        %v4865 = vpop.permute.xlu0 %4864
        %v4866 = vlaneseq
        %v4867 = vshrl.u32 %v4866, 7
        %v4868 = vadd.s32 %v4867, 8
        %4869 = vset.pattern.permute.xlu0 %v4868
        %4870 = vperm.xlu0 %4869, %v1719
        %v4871 = vpop.permute.xlu0 %4870
        %v4872 = vlaneseq
        %v4873 = vshrl.u32 %v4872, 7
        %v4874 = vadd.s32 %v4873, 8
        %4875 = vset.pattern.permute.xlu0 %v4874
        %4876 = vperm.xlu0 %4875, %v1726
        %v4877 = vpop.permute.xlu0 %4876
        %v4878 = vlaneseq
        %v4879 = vshrl.u32 %v4878, 7
        %v4880 = vadd.s32 %v4879, 8
        %4881 = vset.pattern.permute.xlu0 %v4880
        %4882 = vperm.xlu0 %4881, %v1733
        %v4883 = vpop.permute.xlu0 %4882
        %v4884 = vlaneseq
        %v4885 = vshrl.u32 %v4884, 7
        %v4886 = vadd.s32 %v4885, 8
        %4887 = vset.pattern.permute.xlu0 %v4886
        %4888 = vperm.xlu0 %4887, %v1740
        %v4889 = vpop.permute.xlu0 %4888
        %v4890 = vlaneseq
        %v4891 = vshrl.u32 %v4890, 7
        %v4892 = vadd.s32 %v4891, 8
        %4893 = vset.pattern.permute.xlu0 %v4892
        %4894 = vperm.xlu0 %4893, %v1747
        %v4895 = vpop.permute.xlu0 %4894
        %v4896 = vlaneseq
        %v4897 = vshrl.u32 %v4896, 7
        %v4898 = vadd.s32 %v4897, 8
        %4899 = vset.pattern.permute.xlu0 %v4898
        %4900 = vperm.xlu0 %4899, %v1754
        %v4901 = vpop.permute.xlu0 %4900
        %v4902 = vlaneseq
        %v4903 = vshrl.u32 %v4902, 7
        %v4904 = vadd.s32 %v4903, 8
        %4905 = vset.pattern.permute.xlu0 %v4904
        %4906 = vperm.xlu0 %4905, %v1761
        %v4907 = vpop.permute.xlu0 %4906
        %v4908 = vlaneseq
        %v4909 = vshrl.u32 %v4908, 7
        %v4910 = vadd.s32 %v4909, 8
        %4911 = vset.pattern.permute.xlu0 %v4910
        %4912 = vperm.xlu0 %4911, %v1768
        %v4913 = vpop.permute.xlu0 %4912
        %v4914 = vlaneseq
        %v4915 = vshrl.u32 %v4914, 7
        %v4916 = vadd.s32 %v4915, 8
        %4917 = vset.pattern.permute.xlu0 %v4916
        %4918 = vperm.xlu0 %4917, %v1775
        %v4919 = vpop.permute.xlu0 %4918
        %v4920 = vlaneseq
        %v4921 = vshrl.u32 %v4920, 7
        %v4922 = vadd.s32 %v4921, 8
        %4923 = vset.pattern.permute.xlu0 %v4922
        %4924 = vperm.xlu0 %4923, %v1782
        %v4925 = vpop.permute.xlu0 %4924
        %v4926 = vlaneseq
        %v4927 = vshrl.u32 %v4926, 7
        %v4928 = vadd.s32 %v4927, 8
        %4929 = vset.pattern.permute.xlu0 %v4928
        %4930 = vperm.xlu0 %4929, %v1789
        %v4931 = vpop.permute.xlu0 %4930
        %v4932 = vlaneseq
        %v4933 = vshrl.u32 %v4932, 7
        %v4934 = vadd.s32 %v4933, 8
        %4935 = vset.pattern.permute.xlu0 %v4934
        %4936 = vperm.xlu0 %4935, %v1796
        %v4937 = vpop.permute.xlu0 %4936
        %v4938 = vlaneseq
        %v4939 = vshrl.u32 %v4938, 7
        %v4940 = vadd.s32 %v4939, 8
        %4941 = vset.pattern.permute.xlu0 %v4940
        %4942 = vperm.xlu0 %4941, %v1803
        %v4943 = vpop.permute.xlu0 %4942
        %v4944 = vlaneseq
        %v4945 = vshrl.u32 %v4944, 7
        %v4946 = vadd.s32 %v4945, 8
        %4947 = vset.pattern.permute.xlu0 %v4946
        %4948 = vperm.xlu0 %4947, %v1810
        %v4949 = vpop.permute.xlu0 %4948
        %v4950 = vlaneseq
        %v4951 = vshrl.u32 %v4950, 7
        %v4952 = vadd.s32 %v4951, 8
        %4953 = vset.pattern.permute.xlu0 %v4952
        %4954 = vperm.xlu0 %4953, %v1817
        %v4955 = vpop.permute.xlu0 %4954
        %v4956 = vlaneseq
        %v4957 = vshrl.u32 %v4956, 7
        %v4958 = vadd.s32 %v4957, 8
        %4959 = vset.pattern.permute.xlu0 %v4958
        %4960 = vperm.xlu0 %4959, %v1824
        %v4961 = vpop.permute.xlu0 %4960
        %v4962 = vlaneseq
        %v4963 = vshrl.u32 %v4962, 7
        %v4964 = vadd.s32 %v4963, 8
        %4965 = vset.pattern.permute.xlu0 %v4964
        %4966 = vperm.xlu0 %4965, %v1831
        %v4967 = vpop.permute.xlu0 %4966
        %v4968 = vlaneseq
        %v4969 = vshrl.u32 %v4968, 7
        %v4970 = vadd.s32 %v4969, 8
        %4971 = vset.pattern.permute.xlu0 %v4970
        %4972 = vperm.xlu0 %4971, %v1838
        %v4973 = vpop.permute.xlu0 %4972
        %v4974 = vlaneseq
        %v4975 = vshrl.u32 %v4974, 7
        %v4976 = vadd.s32 %v4975, 8
        %4977 = vset.pattern.permute.xlu0 %v4976
        %4978 = vperm.xlu0 %4977, %v1845
        %v4979 = vpop.permute.xlu0 %4978
        %v4980 = vlaneseq
        %v4981 = vshrl.u32 %v4980, 7
        %v4982 = vadd.s32 %v4981, 8
        %4983 = vset.pattern.permute.xlu0 %v4982
        %4984 = vperm.xlu0 %4983, %v1852
        %v4985 = vpop.permute.xlu0 %4984
        %v4986 = vlaneseq
        %v4987 = vshrl.u32 %v4986, 7
        %v4988 = vadd.s32 %v4987, 8
        %4989 = vset.pattern.permute.xlu0 %v4988
        %4990 = vperm.xlu0 %4989, %v1859
        %v4991 = vpop.permute.xlu0 %4990
        %v4992 = vlaneseq
        %v4993 = vshrl.u32 %v4992, 7
        %v4994 = vadd.s32 %v4993, 8
        %4995 = vset.pattern.permute.xlu0 %v4994
        %4996 = vperm.xlu0 %4995, %v1866
        %v4997 = vpop.permute.xlu0 %4996
        %v4998 = vlaneseq
        %v4999 = vshrl.u32 %v4998, 7
        %v5000 = vadd.s32 %v4999, 8
        %5001 = vset.pattern.permute.xlu0 %v5000
        %5002 = vperm.xlu0 %5001, %v1873
        %v5003 = vpop.permute.xlu0 %5002
        %v5004 = vlaneseq
        %v5005 = vshrl.u32 %v5004, 7
        %v5006 = vadd.s32 %v5005, 8
        %5007 = vset.pattern.permute.xlu0 %v5006
        %5008 = vperm.xlu0 %5007, %v1880
        %v5009 = vpop.permute.xlu0 %5008
        %v5010 = vlaneseq
        %v5011 = vshrl.u32 %v5010, 7
        %v5012 = vadd.s32 %v5011, 8
        %5013 = vset.pattern.permute.xlu0 %v5012
        %5014 = vperm.xlu0 %5013, %v1887
        %v5015 = vpop.permute.xlu0 %5014
        %v5016 = vlaneseq
        %v5017 = vshrl.u32 %v5016, 7
        %v5018 = vadd.s32 %v5017, 8
        %5019 = vset.pattern.permute.xlu0 %v5018
        %5020 = vperm.xlu0 %5019, %v1894
        %v5021 = vpop.permute.xlu0 %5020
        %v5022 = vlaneseq
        %v5023 = vshrl.u32 %v5022, 7
        %v5024 = vadd.s32 %v5023, 8
        %5025 = vset.pattern.permute.xlu0 %v5024
        %5026 = vperm.xlu0 %5025, %v1901
        %v5027 = vpop.permute.xlu0 %5026
        %v5028 = vlaneseq
        %v5029 = vshrl.u32 %v5028, 7
        %v5030 = vadd.s32 %v5029, 8
        %5031 = vset.pattern.permute.xlu0 %v5030
        %5032 = vperm.xlu0 %5031, %v1908
        %v5033 = vpop.permute.xlu0 %5032
        %v5034 = vlaneseq
        %v5035 = vshrl.u32 %v5034, 7
        %v5036 = vadd.s32 %v5035, 8
        %5037 = vset.pattern.permute.xlu0 %v5036
        %5038 = vperm.xlu0 %5037, %v1915
        %v5039 = vpop.permute.xlu0 %5038
        %v5040 = vlaneseq
        %v5041 = vshrl.u32 %v5040, 7
        %v5042 = vadd.s32 %v5041, 8
        %5043 = vset.pattern.permute.xlu0 %v5042
        %5044 = vperm.xlu0 %5043, %v1922
        %v5045 = vpop.permute.xlu0 %5044
        %v5046 = vlaneseq
        %v5047 = vshrl.u32 %v5046, 7
        %v5048 = vadd.s32 %v5047, 8
        %5049 = vset.pattern.permute.xlu0 %v5048
        %5050 = vperm.xlu0 %5049, %v1929
        %v5051 = vpop.permute.xlu0 %5050
        %v5052 = vlaneseq
        %v5053 = vshrl.u32 %v5052, 7
        %v5054 = vadd.s32 %v5053, 8
        %5055 = vset.pattern.permute.xlu0 %v5054
        %5056 = vperm.xlu0 %5055, %v1936
        %v5057 = vpop.permute.xlu0 %5056
        %v5058 = vlaneseq
        %v5059 = vshrl.u32 %v5058, 7
        %v5060 = vadd.s32 %v5059, 8
        %5061 = vset.pattern.permute.xlu0 %v5060
        %5062 = vperm.xlu0 %5061, %v1943
        %v5063 = vpop.permute.xlu0 %5062
        %v5064 = vlaneseq
        %v5065 = vshrl.u32 %v5064, 7
        %v5066 = vadd.s32 %v5065, 8
        %5067 = vset.pattern.permute.xlu0 %v5066
        %5068 = vperm.xlu0 %5067, %v1950
        %v5069 = vpop.permute.xlu0 %5068
        %v5070 = vlaneseq
        %v5071 = vshrl.u32 %v5070, 7
        %v5072 = vadd.s32 %v5071, 8
        %5073 = vset.pattern.permute.xlu0 %v5072
        %5074 = vperm.xlu0 %5073, %v1957
        %v5075 = vpop.permute.xlu0 %5074
        %v5076 = vlaneseq
        %v5077 = vshrl.u32 %v5076, 7
        %v5078 = vadd.s32 %v5077, 8
        %5079 = vset.pattern.permute.xlu0 %v5078
        %5080 = vperm.xlu0 %5079, %v1964
        %v5081 = vpop.permute.xlu0 %5080
        %v5082 = vlaneseq
        %v5083 = vshrl.u32 %v5082, 7
        %v5084 = vadd.s32 %v5083, 8
        %5085 = vset.pattern.permute.xlu0 %v5084
        %5086 = vperm.xlu0 %5085, %v1971
        %v5087 = vpop.permute.xlu0 %5086
        %v5088 = vlaneseq
        %v5089 = vshrl.u32 %v5088, 7
        %v5090 = vadd.s32 %v5089, 8
        %5091 = vset.pattern.permute.xlu0 %v5090
        %5092 = vperm.xlu0 %5091, %v1978
        %v5093 = vpop.permute.xlu0 %5092
        %v5094 = vlaneseq
        %v5095 = vshrl.u32 %v5094, 7
        %v5096 = vadd.s32 %v5095, 8
        %5097 = vset.pattern.permute.xlu0 %v5096
        %5098 = vperm.xlu0 %5097, %v1985
        %v5099 = vpop.permute.xlu0 %5098
        %v5100 = vlaneseq
        %v5101 = vshrl.u32 %v5100, 7
        %v5102 = vadd.s32 %v5101, 8
        %5103 = vset.pattern.permute.xlu0 %v5102
        %5104 = vperm.xlu0 %5103, %v1992
        %v5105 = vpop.permute.xlu0 %5104
        %v5106 = vlaneseq
        %v5107 = vshrl.u32 %v5106, 7
        %v5108 = vadd.s32 %v5107, 8
        %5109 = vset.pattern.permute.xlu0 %v5108
        %5110 = vperm.xlu0 %5109, %v1999
        %v5111 = vpop.permute.xlu0 %5110
        %v5112 = vlaneseq
        %v5113 = vshrl.u32 %v5112, 7
        %v5114 = vadd.s32 %v5113, 8
        %5115 = vset.pattern.permute.xlu0 %v5114
        %5116 = vperm.xlu0 %5115, %v2006
        %v5117 = vpop.permute.xlu0 %5116
        %v5118 = vlaneseq
        %v5119 = vshrl.u32 %v5118, 7
        %v5120 = vadd.s32 %v5119, 8
        %5121 = vset.pattern.permute.xlu0 %v5120
        %5122 = vperm.xlu0 %5121, %v2013
        %v5123 = vpop.permute.xlu0 %5122
        %v5124 = vlaneseq
        %v5125 = vshrl.u32 %v5124, 7
        %v5126 = vadd.s32 %v5125, 8
        %5127 = vset.pattern.permute.xlu0 %v5126
        %5128 = vperm.xlu0 %5127, %v2020
        %v5129 = vpop.permute.xlu0 %5128
        %v5130 = vlaneseq
        %v5131 = vshrl.u32 %v5130, 7
        %v5132 = vadd.s32 %v5131, 8
        %5133 = vset.pattern.permute.xlu0 %v5132
        %5134 = vperm.xlu0 %5133, %v2027
        %v5135 = vpop.permute.xlu0 %5134
        %v5136 = vlaneseq
        %v5137 = vshrl.u32 %v5136, 7
        %v5138 = vadd.s32 %v5137, 8
        %5139 = vset.pattern.permute.xlu0 %v5138
        %5140 = vperm.xlu0 %5139, %v2034
        %v5141 = vpop.permute.xlu0 %5140
        %v5142 = vlaneseq
        %v5143 = vshrl.u32 %v5142, 7
        %v5144 = vadd.s32 %v5143, 8
        %5145 = vset.pattern.permute.xlu0 %v5144
        %5146 = vperm.xlu0 %5145, %v2041
        %v5147 = vpop.permute.xlu0 %5146
        %v5148 = vlaneseq
        %v5149 = vshrl.u32 %v5148, 7
        %v5150 = vadd.s32 %v5149, 8
        %5151 = vset.pattern.permute.xlu0 %v5150
        %5152 = vperm.xlu0 %5151, %v2048
        %v5153 = vpop.permute.xlu0 %5152
        %v5154 = vlaneseq
        %v5155 = vshrl.u32 %v5154, 7
        %v5156 = vadd.s32 %v5155, 8
        %5157 = vset.pattern.permute.xlu0 %v5156
        %5158 = vperm.xlu0 %5157, %v2055
        %v5159 = vpop.permute.xlu0 %5158
        %v5160 = vlaneseq
        %v5161 = vshrl.u32 %v5160, 7
        %v5162 = vadd.s32 %v5161, 8
        %5163 = vset.pattern.permute.xlu0 %v5162
        %5164 = vperm.xlu0 %5163, %v2062
        %v5165 = vpop.permute.xlu0 %5164
        %v5166 = vlaneseq
        %v5167 = vshrl.u32 %v5166, 7
        %v5168 = vadd.s32 %v5167, 8
        %5169 = vset.pattern.permute.xlu0 %v5168
        %5170 = vperm.xlu0 %5169, %v2069
        %v5171 = vpop.permute.xlu0 %5170
        %v5172 = vlaneseq
        %v5173 = vshrl.u32 %v5172, 7
        %v5174 = vadd.s32 %v5173, 8
        %5175 = vset.pattern.permute.xlu0 %v5174
        %5176 = vperm.xlu0 %5175, %v2076
        %v5177 = vpop.permute.xlu0 %5176
        %v5178 = vlaneseq
        %v5179 = vshrl.u32 %v5178, 7
        %v5180 = vadd.s32 %v5179, 8
        %5181 = vset.pattern.permute.xlu0 %v5180
        %5182 = vperm.xlu0 %5181, %v2083
        %v5183 = vpop.permute.xlu0 %5182
        %v5184 = vlaneseq
        %v5185 = vshrl.u32 %v5184, 7
        %v5186 = vadd.s32 %v5185, 8
        %5187 = vset.pattern.permute.xlu0 %v5186
        %5188 = vperm.xlu0 %5187, %v2090
        %v5189 = vpop.permute.xlu0 %5188
        %v5190 = vlaneseq
        %v5191 = vshrl.u32 %v5190, 7
        %v5192 = vadd.s32 %v5191, 8
        %5193 = vset.pattern.permute.xlu0 %v5192
        %5194 = vperm.xlu0 %5193, %v2097
        %v5195 = vpop.permute.xlu0 %5194
        %v5196 = vlaneseq
        %v5197 = vshrl.u32 %v5196, 7
        %v5198 = vadd.s32 %v5197, 8
        %5199 = vset.pattern.permute.xlu0 %v5198
        %5200 = vperm.xlu0 %5199, %v2104
        %v5201 = vpop.permute.xlu0 %5200
        %v5202 = vlaneseq
        %v5203 = vshrl.u32 %v5202, 7
        %v5204 = vadd.s32 %v5203, 8
        %5205 = vset.pattern.permute.xlu0 %v5204
        %5206 = vperm.xlu0 %5205, %v2111
        %v5207 = vpop.permute.xlu0 %5206
        %v5208 = vlaneseq
        %v5209 = vshrl.u32 %v5208, 7
        %v5210 = vadd.s32 %v5209, 8
        %5211 = vset.pattern.permute.xlu0 %v5210
        %5212 = vperm.xlu0 %5211, %v2118
        %v5213 = vpop.permute.xlu0 %5212
        %v5214 = vmul.f32 %v4835, %v2189
        %v5215 = vmul.f32 %v4841, %v2190
        %v5216 = vmul.f32 %v4847, %v2191
        %v5217 = vmul.f32 %v4853, %v2192
        %v5218 = vmul.f32 %v4859, %v2193
        %v5219 = vmul.f32 %v4865, %v2194
        %v5220 = vmul.f32 %v4871, %v2195
        %v5221 = vmul.f32 %v4877, %v2196
        %v5222 = vmul.f32 %v4883, %v2197
        %v5223 = vmul.f32 %v4889, %v2198
        %v5224 = vmul.f32 %v4895, %v2199
        %v5225 = vmul.f32 %v4901, %v2200
        %v5226 = vmul.f32 %v4907, %v2201
        %v5227 = vmul.f32 %v4913, %v2202
        %v5228 = vmul.f32 %v4919, %v2203
        %v5229 = vmul.f32 %v4925, %v2204
        %v5230 = vmul.f32 %v4931, %v2205
        %v5231 = vmul.f32 %v4937, %v2206
        %v5232 = vmul.f32 %v4943, %v2207
        %v5233 = vmul.f32 %v4949, %v2208
        %v5234 = vmul.f32 %v4955, %v2209
        %v5235 = vmul.f32 %v4961, %v2210
        %v5236 = vmul.f32 %v4967, %v2211
        %v5237 = vmul.f32 %v4973, %v2212
        %v5238 = vmul.f32 %v4979, %v2213
        %v5239 = vmul.f32 %v4985, %v2214
        %v5240 = vmul.f32 %v4991, %v2215
        %v5241 = vmul.f32 %v4997, %v2216
        %v5242 = vmul.f32 %v5003, %v2217
        %v5243 = vmul.f32 %v5009, %v2218
        %v5244 = vmul.f32 %v5015, %v2219
        %v5245 = vmul.f32 %v5021, %v2220
        %v5246 = vmul.f32 %v5027, %v2221
        %v5247 = vmul.f32 %v5033, %v2222
        %v5248 = vmul.f32 %v5039, %v2223
        %v5249 = vmul.f32 %v5045, %v2224
        %v5250 = vmul.f32 %v5051, %v2225
        %v5251 = vmul.f32 %v5057, %v2226
        %v5252 = vmul.f32 %v5063, %v2227
        %v5253 = vmul.f32 %v5069, %v2228
        %v5254 = vmul.f32 %v5075, %v2229
        %v5255 = vmul.f32 %v5081, %v2230
        %v5256 = vmul.f32 %v5087, %v2231
        %v5257 = vmul.f32 %v5093, %v2232
        %v5258 = vmul.f32 %v5099, %v2233
        %v5259 = vmul.f32 %v5105, %v2234
        %v5260 = vmul.f32 %v5111, %v2235
        %v5261 = vmul.f32 %v5117, %v2236
        %v5262 = vmul.f32 %v5123, %v2237
        %v5263 = vmul.f32 %v5129, %v2238
        %v5264 = vmul.f32 %v5135, %v2239
        %v5265 = vmul.f32 %v5141, %v2240
        %v5266 = vmul.f32 %v5147, %v2241
        %v5267 = vmul.f32 %v5153, %v2242
        %v5268 = vmul.f32 %v5159, %v2243
        %v5269 = vmul.f32 %v5165, %v2244
        %v5270 = vmul.f32 %v5171, %v2245
        %v5271 = vmul.f32 %v5177, %v2246
        %v5272 = vmul.f32 %v5183, %v2247
        %v5273 = vmul.f32 %v5189, %v2248
        %v5274 = vmul.f32 %v5195, %v2249
        %v5275 = vmul.f32 %v5201, %v2250
        %v5276 = vmul.f32 %v5207, %v2251
        %v5277 = vmul.f32 %v5213, %v2252
        %5342 = vrot.lane.b32.xlu0 %v5214, 32
        %v5343 = vpop.permute.xlu0 %5342
        %5344 = vrot.lane.b32.xlu0 %v5215, 32
        %v5345 = vpop.permute.xlu0 %5344
        %5346 = vrot.lane.b32.xlu0 %v5216, 32
        %v5347 = vpop.permute.xlu0 %5346
        %5348 = vrot.lane.b32.xlu0 %v5217, 32
        %v5349 = vpop.permute.xlu0 %5348
        %5350 = vrot.lane.b32.xlu0 %v5218, 32
        %v5351 = vpop.permute.xlu0 %5350
        %5352 = vrot.lane.b32.xlu0 %v5219, 32
        %v5353 = vpop.permute.xlu0 %5352
        %5354 = vrot.lane.b32.xlu0 %v5220, 32
        %v5355 = vpop.permute.xlu0 %5354
        %5356 = vrot.lane.b32.xlu0 %v5221, 32
        %v5357 = vpop.permute.xlu0 %5356
        %5358 = vrot.lane.b32.xlu0 %v5222, 32
        %v5359 = vpop.permute.xlu0 %5358
        %5360 = vrot.lane.b32.xlu0 %v5223, 32
        %v5361 = vpop.permute.xlu0 %5360
        %5362 = vrot.lane.b32.xlu0 %v5224, 32
        %v5363 = vpop.permute.xlu0 %5362
        %5364 = vrot.lane.b32.xlu0 %v5225, 32
        %v5365 = vpop.permute.xlu0 %5364
        %5366 = vrot.lane.b32.xlu0 %v5226, 32
        %v5367 = vpop.permute.xlu0 %5366
        %5368 = vrot.lane.b32.xlu0 %v5227, 32
        %v5369 = vpop.permute.xlu0 %5368
        %5370 = vrot.lane.b32.xlu0 %v5228, 32
        %v5371 = vpop.permute.xlu0 %5370
        %5372 = vrot.lane.b32.xlu0 %v5229, 32
        %v5373 = vpop.permute.xlu0 %5372
        %5374 = vrot.lane.b32.xlu0 %v5230, 32
        %v5375 = vpop.permute.xlu0 %5374
        %5376 = vrot.lane.b32.xlu0 %v5231, 32
        %v5377 = vpop.permute.xlu0 %5376
        %5378 = vrot.lane.b32.xlu0 %v5232, 32
        %v5379 = vpop.permute.xlu0 %5378
        %5380 = vrot.lane.b32.xlu0 %v5233, 32
        %v5381 = vpop.permute.xlu0 %5380
        %5382 = vrot.lane.b32.xlu0 %v5234, 32
        %v5383 = vpop.permute.xlu0 %5382
        %5384 = vrot.lane.b32.xlu0 %v5235, 32
        %v5385 = vpop.permute.xlu0 %5384
        %5386 = vrot.lane.b32.xlu0 %v5236, 32
        %v5387 = vpop.permute.xlu0 %5386
        %5388 = vrot.lane.b32.xlu0 %v5237, 32
        %v5389 = vpop.permute.xlu0 %5388
        %5390 = vrot.lane.b32.xlu0 %v5238, 32
        %v5391 = vpop.permute.xlu0 %5390
        %5392 = vrot.lane.b32.xlu0 %v5239, 32
        %v5393 = vpop.permute.xlu0 %5392
        %5394 = vrot.lane.b32.xlu0 %v5240, 32
        %v5395 = vpop.permute.xlu0 %5394
        %5396 = vrot.lane.b32.xlu0 %v5241, 32
        %v5397 = vpop.permute.xlu0 %5396
        %5398 = vrot.lane.b32.xlu0 %v5242, 32
        %v5399 = vpop.permute.xlu0 %5398
        %5400 = vrot.lane.b32.xlu0 %v5243, 32
        %v5401 = vpop.permute.xlu0 %5400
        %5402 = vrot.lane.b32.xlu0 %v5244, 32
        %v5403 = vpop.permute.xlu0 %5402
        %5404 = vrot.lane.b32.xlu0 %v5245, 32
        %v5405 = vpop.permute.xlu0 %5404
        %5406 = vrot.lane.b32.xlu0 %v5246, 32
        %v5407 = vpop.permute.xlu0 %5406
        %5408 = vrot.lane.b32.xlu0 %v5247, 32
        %v5409 = vpop.permute.xlu0 %5408
        %5410 = vrot.lane.b32.xlu0 %v5248, 32
        %v5411 = vpop.permute.xlu0 %5410
        %5412 = vrot.lane.b32.xlu0 %v5249, 32
        %v5413 = vpop.permute.xlu0 %5412
        %5414 = vrot.lane.b32.xlu0 %v5250, 32
        %v5415 = vpop.permute.xlu0 %5414
        %5416 = vrot.lane.b32.xlu0 %v5251, 32
        %v5417 = vpop.permute.xlu0 %5416
        %5418 = vrot.lane.b32.xlu0 %v5252, 32
        %v5419 = vpop.permute.xlu0 %5418
        %5420 = vrot.lane.b32.xlu0 %v5253, 32
        %v5421 = vpop.permute.xlu0 %5420
        %5422 = vrot.lane.b32.xlu0 %v5254, 32
        %v5423 = vpop.permute.xlu0 %5422
        %5424 = vrot.lane.b32.xlu0 %v5255, 32
        %v5425 = vpop.permute.xlu0 %5424
        %5426 = vrot.lane.b32.xlu0 %v5256, 32
        %v5427 = vpop.permute.xlu0 %5426
        %5428 = vrot.lane.b32.xlu0 %v5257, 32
        %v5429 = vpop.permute.xlu0 %5428
        %5430 = vrot.lane.b32.xlu0 %v5258, 32
        %v5431 = vpop.permute.xlu0 %5430
        %5432 = vrot.lane.b32.xlu0 %v5259, 32
        %v5433 = vpop.permute.xlu0 %5432
        %5434 = vrot.lane.b32.xlu0 %v5260, 32
        %v5435 = vpop.permute.xlu0 %5434
        %5436 = vrot.lane.b32.xlu0 %v5261, 32
        %v5437 = vpop.permute.xlu0 %5436
        %5438 = vrot.lane.b32.xlu0 %v5262, 32
        %v5439 = vpop.permute.xlu0 %5438
        %5440 = vrot.lane.b32.xlu0 %v5263, 32
        %v5441 = vpop.permute.xlu0 %5440
        %5442 = vrot.lane.b32.xlu0 %v5264, 32
        %v5443 = vpop.permute.xlu0 %5442
        %5444 = vrot.lane.b32.xlu0 %v5265, 32
        %v5445 = vpop.permute.xlu0 %5444
        %5446 = vrot.lane.b32.xlu0 %v5266, 32
        %v5447 = vpop.permute.xlu0 %5446
        %5448 = vrot.lane.b32.xlu0 %v5267, 32
        %v5449 = vpop.permute.xlu0 %5448
        %5450 = vrot.lane.b32.xlu0 %v5268, 32
        %v5451 = vpop.permute.xlu0 %5450
        %5452 = vrot.lane.b32.xlu0 %v5269, 32
        %v5453 = vpop.permute.xlu0 %5452
        %5454 = vrot.lane.b32.xlu0 %v5270, 32
        %v5455 = vpop.permute.xlu0 %5454
        %5456 = vrot.lane.b32.xlu0 %v5271, 32
        %v5457 = vpop.permute.xlu0 %5456
        %5458 = vrot.lane.b32.xlu0 %v5272, 32
        %v5459 = vpop.permute.xlu0 %5458
        %5460 = vrot.lane.b32.xlu0 %v5273, 32
        %v5461 = vpop.permute.xlu0 %5460
        %5462 = vrot.lane.b32.xlu0 %v5274, 32
        %v5463 = vpop.permute.xlu0 %5462
        %5464 = vrot.lane.b32.xlu0 %v5275, 32
        %v5465 = vpop.permute.xlu0 %5464
        %5466 = vrot.lane.b32.xlu0 %v5276, 32
        %v5467 = vpop.permute.xlu0 %5466
        %5468 = vrot.lane.b32.xlu0 %v5277, 32
        %v5469 = vpop.permute.xlu0 %5468
        %v5534 = vadd.f32 %v1278, %v5343
        %v5535 = vadd.f32 %v1280, %v5345
        %v5536 = vadd.f32 %v1283, %v5347
        %v5537 = vadd.f32 %v1285, %v5349
        %v5538 = vadd.f32 %v1288, %v5351
        %v5539 = vadd.f32 %v1290, %v5353
        %v5540 = vadd.f32 %v1293, %v5355
        %v5541 = vadd.f32 %v1295, %v5357
        %v5542 = vadd.f32 %v1298, %v5359
        %v5543 = vadd.f32 %v1300, %v5361
        %v5544 = vadd.f32 %v1303, %v5363
        %v5545 = vadd.f32 %v1305, %v5365
        %v5546 = vadd.f32 %v1308, %v5367
        %v5547 = vadd.f32 %v1310, %v5369
        %v5548 = vadd.f32 %v1313, %v5371
        %v5549 = vadd.f32 %v1315, %v5373
        %v5550 = vadd.f32 %v1318, %v5375
        %v5551 = vadd.f32 %v1320, %v5377
        %v5552 = vadd.f32 %v1323, %v5379
        %v5553 = vadd.f32 %v1325, %v5381
        %v5554 = vadd.f32 %v1328, %v5383
        %v5555 = vadd.f32 %v1330, %v5385
        %v5556 = vadd.f32 %v1333, %v5387
        %v5557 = vadd.f32 %v1335, %v5389
        %v5558 = vadd.f32 %v1338, %v5391
        %v5559 = vadd.f32 %v1340, %v5393
        %v5560 = vadd.f32 %v1343, %v5395
        %v5561 = vadd.f32 %v1345, %v5397
        %v5562 = vadd.f32 %v1348, %v5399
        %v5563 = vadd.f32 %v1350, %v5401
        %v5564 = vadd.f32 %v1353, %v5403
        %v5565 = vadd.f32 %v1355, %v5405
        %v5566 = vadd.f32 %v1358, %v5407
        %v5567 = vadd.f32 %v1360, %v5409
        %v5568 = vadd.f32 %v1363, %v5411
        %v5569 = vadd.f32 %v1365, %v5413
        %v5570 = vadd.f32 %v1368, %v5415
        %v5571 = vadd.f32 %v1370, %v5417
        %v5572 = vadd.f32 %v1373, %v5419
        %v5573 = vadd.f32 %v1375, %v5421
        %v5574 = vadd.f32 %v1378, %v5423
        %v5575 = vadd.f32 %v1380, %v5425
        %v5576 = vadd.f32 %v1383, %v5427
        %v5577 = vadd.f32 %v1385, %v5429
        %v5578 = vadd.f32 %v1388, %v5431
        %v5579 = vadd.f32 %v1390, %v5433
        %v5580 = vadd.f32 %v1393, %v5435
        %v5581 = vadd.f32 %v1395, %v5437
        %v5582 = vadd.f32 %v1398, %v5439
        %v5583 = vadd.f32 %v1400, %v5441
        %v5584 = vadd.f32 %v1403, %v5443
        %v5585 = vadd.f32 %v1405, %v5445
        %v5586 = vadd.f32 %v1408, %v5447
        %v5587 = vadd.f32 %v1410, %v5449
        %v5588 = vadd.f32 %v1413, %v5451
        %v5589 = vadd.f32 %v1415, %v5453
        %v5590 = vadd.f32 %v1418, %v5455
        %v5591 = vadd.f32 %v1420, %v5457
        %v5592 = vadd.f32 %v1423, %v5459
        %v5593 = vadd.f32 %v1425, %v5461
        %v5594 = vadd.f32 %v1428, %v5463
        %v5595 = vadd.f32 %v1430, %v5465
        %v5596 = vadd.f32 %v1433, %v5467
        %v5597 = vadd.f32 %v1435, %v5469
        %v5598 = vperm.slane %v4827, 0
        %5600 = vrot.lane.b32.xlu0 %v5598, 64
        %v5601 = vpop.permute.xlu0 %5600
        %v5603 = vadd.f32 %v5534, %v5601
        %v5604 = vadd.f32 %v5535, %v5601
        %v5605 = vadd.f32 %v5536, %v5601
        %v5606 = vadd.f32 %v5537, %v5601
        %v5607 = vadd.f32 %v5538, %v5601
        %v5608 = vadd.f32 %v5539, %v5601
        %v5609 = vadd.f32 %v5540, %v5601
        %v5610 = vadd.f32 %v5541, %v5601
        %v5611 = vadd.f32 %v5542, %v5601
        %v5612 = vadd.f32 %v5543, %v5601
        %v5613 = vadd.f32 %v5544, %v5601
        %v5614 = vadd.f32 %v5545, %v5601
        %v5615 = vadd.f32 %v5546, %v5601
        %v5616 = vadd.f32 %v5547, %v5601
        %v5617 = vadd.f32 %v5548, %v5601
        %v5618 = vadd.f32 %v5549, %v5601
        %v5619 = vadd.f32 %v5550, %v5601
        %v5620 = vadd.f32 %v5551, %v5601
        %v5621 = vadd.f32 %v5552, %v5601
        %v5622 = vadd.f32 %v5553, %v5601
        %v5623 = vadd.f32 %v5554, %v5601
        %v5624 = vadd.f32 %v5555, %v5601
        %v5625 = vadd.f32 %v5556, %v5601
        %v5626 = vadd.f32 %v5557, %v5601
        %v5627 = vadd.f32 %v5558, %v5601
        %v5628 = vadd.f32 %v5559, %v5601
        %v5629 = vadd.f32 %v5560, %v5601
        %v5630 = vadd.f32 %v5561, %v5601
        %v5631 = vadd.f32 %v5562, %v5601
        %v5632 = vadd.f32 %v5563, %v5601
        %v5633 = vadd.f32 %v5564, %v5601
        %v5634 = vadd.f32 %v5565, %v5601
        %v5635 = vadd.f32 %v5566, %v5601
        %v5636 = vadd.f32 %v5567, %v5601
        %v5637 = vadd.f32 %v5568, %v5601
        %v5638 = vadd.f32 %v5569, %v5601
        %v5639 = vadd.f32 %v5570, %v5601
        %v5640 = vadd.f32 %v5571, %v5601
        %v5641 = vadd.f32 %v5572, %v5601
        %v5642 = vadd.f32 %v5573, %v5601
        %v5643 = vadd.f32 %v5574, %v5601
        %v5644 = vadd.f32 %v5575, %v5601
        %v5645 = vadd.f32 %v5576, %v5601
        %v5646 = vadd.f32 %v5577, %v5601
        %v5647 = vadd.f32 %v5578, %v5601
        %v5648 = vadd.f32 %v5579, %v5601
        %v5649 = vadd.f32 %v5580, %v5601
        %v5650 = vadd.f32 %v5581, %v5601
        %v5651 = vadd.f32 %v5582, %v5601
        %v5652 = vadd.f32 %v5583, %v5601
        %v5653 = vadd.f32 %v5584, %v5601
        %v5654 = vadd.f32 %v5585, %v5601
        %v5655 = vadd.f32 %v5586, %v5601
        %v5656 = vadd.f32 %v5587, %v5601
        %v5657 = vadd.f32 %v5588, %v5601
        %v5658 = vadd.f32 %v5589, %v5601
        %v5659 = vadd.f32 %v5590, %v5601
        %v5660 = vadd.f32 %v5591, %v5601
        %v5661 = vadd.f32 %v5592, %v5601
        %v5662 = vadd.f32 %v5593, %v5601
        %v5663 = vadd.f32 %v5594, %v5601
        %v5664 = vadd.f32 %v5595, %v5601
        %v5665 = vadd.f32 %v5596, %v5601
        %v5666 = vadd.f32 %v5597, %v5601
        %v5667 = vmul.f32 %v5603, 0.2
        %v5668 = vmul.f32 %v5604, 0.2
        %v5669 = vmul.f32 %v5605, 0.2
        %v5670 = vmul.f32 %v5606, 0.2
        %v5671 = vmul.f32 %v5607, 0.2
        %v5672 = vmul.f32 %v5608, 0.2
        %v5673 = vmul.f32 %v5609, 0.2
        %v5674 = vmul.f32 %v5610, 0.2
        %v5675 = vmul.f32 %v5611, 0.2
        %v5676 = vmul.f32 %v5612, 0.2
        %v5677 = vmul.f32 %v5613, 0.2
        %v5678 = vmul.f32 %v5614, 0.2
        %v5679 = vmul.f32 %v5615, 0.2
        %v5680 = vmul.f32 %v5616, 0.2
        %v5681 = vmul.f32 %v5617, 0.2
        %v5682 = vmul.f32 %v5618, 0.2
        %v5683 = vmul.f32 %v5619, 0.2
        %v5684 = vmul.f32 %v5620, 0.2
        %v5685 = vmul.f32 %v5621, 0.2
        %v5686 = vmul.f32 %v5622, 0.2
        %v5687 = vmul.f32 %v5623, 0.2
        %v5688 = vmul.f32 %v5624, 0.2
        %v5689 = vmul.f32 %v5625, 0.2
        %v5690 = vmul.f32 %v5626, 0.2
        %v5691 = vmul.f32 %v5627, 0.2
        %v5692 = vmul.f32 %v5628, 0.2
        %v5693 = vmul.f32 %v5629, 0.2
        %v5694 = vmul.f32 %v5630, 0.2
        %v5695 = vmul.f32 %v5631, 0.2
        %v5696 = vmul.f32 %v5632, 0.2
        %v5697 = vmul.f32 %v5633, 0.2
        %v5698 = vmul.f32 %v5634, 0.2
        %v5699 = vmul.f32 %v5635, 0.2
        %v5700 = vmul.f32 %v5636, 0.2
        %v5701 = vmul.f32 %v5637, 0.2
        %v5702 = vmul.f32 %v5638, 0.2
        %v5703 = vmul.f32 %v5639, 0.2
        %v5704 = vmul.f32 %v5640, 0.2
        %v5705 = vmul.f32 %v5641, 0.2
        %v5706 = vmul.f32 %v5642, 0.2
        %v5707 = vmul.f32 %v5643, 0.2
        %v5708 = vmul.f32 %v5644, 0.2
        %v5709 = vmul.f32 %v5645, 0.2
        %v5710 = vmul.f32 %v5646, 0.2
        %v5711 = vmul.f32 %v5647, 0.2
        %v5712 = vmul.f32 %v5648, 0.2
        %v5713 = vmul.f32 %v5649, 0.2
        %v5714 = vmul.f32 %v5650, 0.2
        %v5715 = vmul.f32 %v5651, 0.2
        %v5716 = vmul.f32 %v5652, 0.2
        %v5717 = vmul.f32 %v5653, 0.2
        %v5718 = vmul.f32 %v5654, 0.2
        %v5719 = vmul.f32 %v5655, 0.2
        %v5720 = vmul.f32 %v5656, 0.2
        %v5721 = vmul.f32 %v5657, 0.2
        %v5722 = vmul.f32 %v5658, 0.2
        %v5723 = vmul.f32 %v5659, 0.2
        %v5724 = vmul.f32 %v5660, 0.2
        %v5725 = vmul.f32 %v5661, 0.2
        %v5726 = vmul.f32 %v5662, 0.2
        %v5727 = vmul.f32 %v5663, 0.2
        %v5728 = vmul.f32 %v5664, 0.2
        %v5729 = vmul.f32 %v5665, 0.2
        %v5730 = vmul.f32 %v5666, 0.2
        %v5731 = vmax.f32 %v5603, %v5667
        %v5732 = vmax.f32 %v5604, %v5668
        %v5733 = vmax.f32 %v5605, %v5669
        %v5734 = vmax.f32 %v5606, %v5670
        %v5735 = vmax.f32 %v5607, %v5671
        %v5736 = vmax.f32 %v5608, %v5672
        %v5737 = vmax.f32 %v5609, %v5673
        %v5738 = vmax.f32 %v5610, %v5674
        %v5739 = vmax.f32 %v5611, %v5675
        %v5740 = vmax.f32 %v5612, %v5676
        %v5741 = vmax.f32 %v5613, %v5677
        %v5742 = vmax.f32 %v5614, %v5678
        %v5743 = vmax.f32 %v5615, %v5679
        %v5744 = vmax.f32 %v5616, %v5680
        %v5745 = vmax.f32 %v5617, %v5681
        %v5746 = vmax.f32 %v5618, %v5682
        %v5747 = vmax.f32 %v5619, %v5683
        %v5748 = vmax.f32 %v5620, %v5684
        %v5749 = vmax.f32 %v5621, %v5685
        %v5750 = vmax.f32 %v5622, %v5686
        %v5751 = vmax.f32 %v5623, %v5687
        %v5752 = vmax.f32 %v5624, %v5688
        %v5753 = vmax.f32 %v5625, %v5689
        %v5754 = vmax.f32 %v5626, %v5690
        %v5755 = vmax.f32 %v5627, %v5691
        %v5756 = vmax.f32 %v5628, %v5692
        %v5757 = vmax.f32 %v5629, %v5693
        %v5758 = vmax.f32 %v5630, %v5694
        %v5759 = vmax.f32 %v5631, %v5695
        %v5760 = vmax.f32 %v5632, %v5696
        %v5761 = vmax.f32 %v5633, %v5697
        %v5762 = vmax.f32 %v5634, %v5698
        %v5763 = vmax.f32 %v5635, %v5699
        %v5764 = vmax.f32 %v5636, %v5700
        %v5765 = vmax.f32 %v5637, %v5701
        %v5766 = vmax.f32 %v5638, %v5702
        %v5767 = vmax.f32 %v5639, %v5703
        %v5768 = vmax.f32 %v5640, %v5704
        %v5769 = vmax.f32 %v5641, %v5705
        %v5770 = vmax.f32 %v5642, %v5706
        %v5771 = vmax.f32 %v5643, %v5707
        %v5772 = vmax.f32 %v5644, %v5708
        %v5773 = vmax.f32 %v5645, %v5709
        %v5774 = vmax.f32 %v5646, %v5710
        %v5775 = vmax.f32 %v5647, %v5711
        %v5776 = vmax.f32 %v5648, %v5712
        %v5777 = vmax.f32 %v5649, %v5713
        %v5778 = vmax.f32 %v5650, %v5714
        %v5779 = vmax.f32 %v5651, %v5715
        %v5780 = vmax.f32 %v5652, %v5716
        %v5781 = vmax.f32 %v5653, %v5717
        %v5782 = vmax.f32 %v5654, %v5718
        %v5783 = vmax.f32 %v5655, %v5719
        %v5784 = vmax.f32 %v5656, %v5720
        %v5785 = vmax.f32 %v5657, %v5721
        %v5786 = vmax.f32 %v5658, %v5722
        %v5787 = vmax.f32 %v5659, %v5723
        %v5788 = vmax.f32 %v5660, %v5724
        %v5789 = vmax.f32 %v5661, %v5725
        %v5790 = vmax.f32 %v5662, %v5726
        %v5791 = vmax.f32 %v5663, %v5727
        %v5792 = vmax.f32 %v5664, %v5728
        %v5793 = vmax.f32 %v5665, %v5729
        %v5794 = vmax.f32 %v5666, %v5730
        %v5795 = vperm.slane %v4828, 0
        %5797 = vrot.lane.b32.xlu0 %v5795, 64
        %v5798 = vpop.permute.xlu0 %5797
        %v5800 = vmul.f32 %v5731, %v5798
        %v5801 = vmul.f32 %v5732, %v5798
        %v5802 = vmul.f32 %v5733, %v5798
        %v5803 = vmul.f32 %v5734, %v5798
        %v5804 = vmul.f32 %v5735, %v5798
        %v5805 = vmul.f32 %v5736, %v5798
        %v5806 = vmul.f32 %v5737, %v5798
        %v5807 = vmul.f32 %v5738, %v5798
        %v5808 = vmul.f32 %v5739, %v5798
        %v5809 = vmul.f32 %v5740, %v5798
        %v5810 = vmul.f32 %v5741, %v5798
        %v5811 = vmul.f32 %v5742, %v5798
        %v5812 = vmul.f32 %v5743, %v5798
        %v5813 = vmul.f32 %v5744, %v5798
        %v5814 = vmul.f32 %v5745, %v5798
        %v5815 = vmul.f32 %v5746, %v5798
        %v5816 = vmul.f32 %v5747, %v5798
        %v5817 = vmul.f32 %v5748, %v5798
        %v5818 = vmul.f32 %v5749, %v5798
        %v5819 = vmul.f32 %v5750, %v5798
        %v5820 = vmul.f32 %v5751, %v5798
        %v5821 = vmul.f32 %v5752, %v5798
        %v5822 = vmul.f32 %v5753, %v5798
        %v5823 = vmul.f32 %v5754, %v5798
        %v5824 = vmul.f32 %v5755, %v5798
        %v5825 = vmul.f32 %v5756, %v5798
        %v5826 = vmul.f32 %v5757, %v5798
        %v5827 = vmul.f32 %v5758, %v5798
        %v5828 = vmul.f32 %v5759, %v5798
        %v5829 = vmul.f32 %v5760, %v5798
        %v5830 = vmul.f32 %v5761, %v5798
        %v5831 = vmul.f32 %v5762, %v5798
        %v5832 = vmul.f32 %v5763, %v5798
        %v5833 = vmul.f32 %v5764, %v5798
        %v5834 = vmul.f32 %v5765, %v5798
        %v5835 = vmul.f32 %v5766, %v5798
        %v5836 = vmul.f32 %v5767, %v5798
        %v5837 = vmul.f32 %v5768, %v5798
        %v5838 = vmul.f32 %v5769, %v5798
        %v5839 = vmul.f32 %v5770, %v5798
        %v5840 = vmul.f32 %v5771, %v5798
        %v5841 = vmul.f32 %v5772, %v5798
        %v5842 = vmul.f32 %v5773, %v5798
        %v5843 = vmul.f32 %v5774, %v5798
        %v5844 = vmul.f32 %v5775, %v5798
        %v5845 = vmul.f32 %v5776, %v5798
        %v5846 = vmul.f32 %v5777, %v5798
        %v5847 = vmul.f32 %v5778, %v5798
        %v5848 = vmul.f32 %v5779, %v5798
        %v5849 = vmul.f32 %v5780, %v5798
        %v5850 = vmul.f32 %v5781, %v5798
        %v5851 = vmul.f32 %v5782, %v5798
        %v5852 = vmul.f32 %v5783, %v5798
        %v5853 = vmul.f32 %v5784, %v5798
        %v5854 = vmul.f32 %v5785, %v5798
        %v5855 = vmul.f32 %v5786, %v5798
        %v5856 = vmul.f32 %v5787, %v5798
        %v5857 = vmul.f32 %v5788, %v5798
        %v5858 = vmul.f32 %v5789, %v5798
        %v5859 = vmul.f32 %v5790, %v5798
        %v5860 = vmul.f32 %v5791, %v5798
        %v5861 = vmul.f32 %v5792, %v5798
        %v5862 = vmul.f32 %v5793, %v5798
        %v5863 = vmul.f32 %v5794, %v5798
        %5928 = vrot.lane.b32.xlu0 %v5800, 64
        %v5929 = vpop.permute.xlu0 %5928
        %5930 = vrot.lane.b32.xlu0 %v5801, 64
        %v5931 = vpop.permute.xlu0 %5930
        %5932 = vrot.lane.b32.xlu0 %v5802, 64
        %v5933 = vpop.permute.xlu0 %5932
        %5934 = vrot.lane.b32.xlu0 %v5803, 64
        %v5935 = vpop.permute.xlu0 %5934
        %5936 = vrot.lane.b32.xlu0 %v5804, 64
        %v5937 = vpop.permute.xlu0 %5936
        %5938 = vrot.lane.b32.xlu0 %v5805, 64
        %v5939 = vpop.permute.xlu0 %5938
        %5940 = vrot.lane.b32.xlu0 %v5806, 64
        %v5941 = vpop.permute.xlu0 %5940
        %5942 = vrot.lane.b32.xlu0 %v5807, 64
        %v5943 = vpop.permute.xlu0 %5942
        %5944 = vrot.lane.b32.xlu0 %v5808, 64
        %v5945 = vpop.permute.xlu0 %5944
        %5946 = vrot.lane.b32.xlu0 %v5809, 64
        %v5947 = vpop.permute.xlu0 %5946
        %5948 = vrot.lane.b32.xlu0 %v5810, 64
        %v5949 = vpop.permute.xlu0 %5948
        %5950 = vrot.lane.b32.xlu0 %v5811, 64
        %v5951 = vpop.permute.xlu0 %5950
        %5952 = vrot.lane.b32.xlu0 %v5812, 64
        %v5953 = vpop.permute.xlu0 %5952
        %5954 = vrot.lane.b32.xlu0 %v5813, 64
        %v5955 = vpop.permute.xlu0 %5954
        %5956 = vrot.lane.b32.xlu0 %v5814, 64
        %v5957 = vpop.permute.xlu0 %5956
        %5958 = vrot.lane.b32.xlu0 %v5815, 64
        %v5959 = vpop.permute.xlu0 %5958
        %5960 = vrot.lane.b32.xlu0 %v5816, 64
        %v5961 = vpop.permute.xlu0 %5960
        %5962 = vrot.lane.b32.xlu0 %v5817, 64
        %v5963 = vpop.permute.xlu0 %5962
        %5964 = vrot.lane.b32.xlu0 %v5818, 64
        %v5965 = vpop.permute.xlu0 %5964
        %5966 = vrot.lane.b32.xlu0 %v5819, 64
        %v5967 = vpop.permute.xlu0 %5966
        %5968 = vrot.lane.b32.xlu0 %v5820, 64
        %v5969 = vpop.permute.xlu0 %5968
        %5970 = vrot.lane.b32.xlu0 %v5821, 64
        %v5971 = vpop.permute.xlu0 %5970
        %5972 = vrot.lane.b32.xlu0 %v5822, 64
        %v5973 = vpop.permute.xlu0 %5972
        %5974 = vrot.lane.b32.xlu0 %v5823, 64
        %v5975 = vpop.permute.xlu0 %5974
        %5976 = vrot.lane.b32.xlu0 %v5824, 64
        %v5977 = vpop.permute.xlu0 %5976
        %5978 = vrot.lane.b32.xlu0 %v5825, 64
        %v5979 = vpop.permute.xlu0 %5978
        %5980 = vrot.lane.b32.xlu0 %v5826, 64
        %v5981 = vpop.permute.xlu0 %5980
        %5982 = vrot.lane.b32.xlu0 %v5827, 64
        %v5983 = vpop.permute.xlu0 %5982
        %5984 = vrot.lane.b32.xlu0 %v5828, 64
        %v5985 = vpop.permute.xlu0 %5984
        %5986 = vrot.lane.b32.xlu0 %v5829, 64
        %v5987 = vpop.permute.xlu0 %5986
        %5988 = vrot.lane.b32.xlu0 %v5830, 64
        %v5989 = vpop.permute.xlu0 %5988
        %5990 = vrot.lane.b32.xlu0 %v5831, 64
        %v5991 = vpop.permute.xlu0 %5990
        %5992 = vrot.lane.b32.xlu0 %v5832, 64
        %v5993 = vpop.permute.xlu0 %5992
        %5994 = vrot.lane.b32.xlu0 %v5833, 64
        %v5995 = vpop.permute.xlu0 %5994
        %5996 = vrot.lane.b32.xlu0 %v5834, 64
        %v5997 = vpop.permute.xlu0 %5996
        %5998 = vrot.lane.b32.xlu0 %v5835, 64
        %v5999 = vpop.permute.xlu0 %5998
        %6000 = vrot.lane.b32.xlu0 %v5836, 64
        %v6001 = vpop.permute.xlu0 %6000
        %6002 = vrot.lane.b32.xlu0 %v5837, 64
        %v6003 = vpop.permute.xlu0 %6002
        %6004 = vrot.lane.b32.xlu0 %v5838, 64
        %v6005 = vpop.permute.xlu0 %6004
        %6006 = vrot.lane.b32.xlu0 %v5839, 64
        %v6007 = vpop.permute.xlu0 %6006
        %6008 = vrot.lane.b32.xlu0 %v5840, 64
        %v6009 = vpop.permute.xlu0 %6008
        %6010 = vrot.lane.b32.xlu0 %v5841, 64
        %v6011 = vpop.permute.xlu0 %6010
        %6012 = vrot.lane.b32.xlu0 %v5842, 64
        %v6013 = vpop.permute.xlu0 %6012
        %6014 = vrot.lane.b32.xlu0 %v5843, 64
        %v6015 = vpop.permute.xlu0 %6014
        %6016 = vrot.lane.b32.xlu0 %v5844, 64
        %v6017 = vpop.permute.xlu0 %6016
        %6018 = vrot.lane.b32.xlu0 %v5845, 64
        %v6019 = vpop.permute.xlu0 %6018
        %6020 = vrot.lane.b32.xlu0 %v5846, 64
        %v6021 = vpop.permute.xlu0 %6020
        %6022 = vrot.lane.b32.xlu0 %v5847, 64
        %v6023 = vpop.permute.xlu0 %6022
        %6024 = vrot.lane.b32.xlu0 %v5848, 64
        %v6025 = vpop.permute.xlu0 %6024
        %6026 = vrot.lane.b32.xlu0 %v5849, 64
        %v6027 = vpop.permute.xlu0 %6026
        %6028 = vrot.lane.b32.xlu0 %v5850, 64
        %v6029 = vpop.permute.xlu0 %6028
        %6030 = vrot.lane.b32.xlu0 %v5851, 64
        %v6031 = vpop.permute.xlu0 %6030
        %6032 = vrot.lane.b32.xlu0 %v5852, 64
        %v6033 = vpop.permute.xlu0 %6032
        %6034 = vrot.lane.b32.xlu0 %v5853, 64
        %v6035 = vpop.permute.xlu0 %6034
        %6036 = vrot.lane.b32.xlu0 %v5854, 64
        %v6037 = vpop.permute.xlu0 %6036
        %6038 = vrot.lane.b32.xlu0 %v5855, 64
        %v6039 = vpop.permute.xlu0 %6038
        %6040 = vrot.lane.b32.xlu0 %v5856, 64
        %v6041 = vpop.permute.xlu0 %6040
        %6042 = vrot.lane.b32.xlu0 %v5857, 64
        %v6043 = vpop.permute.xlu0 %6042
        %6044 = vrot.lane.b32.xlu0 %v5858, 64
        %v6045 = vpop.permute.xlu0 %6044
        %6046 = vrot.lane.b32.xlu0 %v5859, 64
        %v6047 = vpop.permute.xlu0 %6046
        %6048 = vrot.lane.b32.xlu0 %v5860, 64
        %v6049 = vpop.permute.xlu0 %6048
        %6050 = vrot.lane.b32.xlu0 %v5861, 64
        %v6051 = vpop.permute.xlu0 %6050
        %6052 = vrot.lane.b32.xlu0 %v5862, 64
        %v6053 = vpop.permute.xlu0 %6052
        %6054 = vrot.lane.b32.xlu0 %v5863, 64
        %v6055 = vpop.permute.xlu0 %6054
        %v6120 = vsel %vm3223, %v5929, 0.0
        %6121 = vadd.xlane.f32.xlu0 %v6120
        %v6122 = vpop.xlane.xlu0 %6121
        %v6123 = vsel %vm3223, %v5931, 0.0
        %6124 = vadd.xlane.f32.xlu0 %v6123
        %v6125 = vpop.xlane.xlu0 %6124
        %v6126 = vsel %vm3223, %v5933, 0.0
        %6127 = vadd.xlane.f32.xlu0 %v6126
        %v6128 = vpop.xlane.xlu0 %6127
        %v6129 = vsel %vm3223, %v5935, 0.0
        %6130 = vadd.xlane.f32.xlu0 %v6129
        %v6131 = vpop.xlane.xlu0 %6130
        %v6132 = vsel %vm3223, %v5937, 0.0
        %6133 = vadd.xlane.f32.xlu0 %v6132
        %v6134 = vpop.xlane.xlu0 %6133
        %v6135 = vsel %vm3223, %v5939, 0.0
        %6136 = vadd.xlane.f32.xlu0 %v6135
        %v6137 = vpop.xlane.xlu0 %6136
        %v6138 = vsel %vm3223, %v5941, 0.0
        %6139 = vadd.xlane.f32.xlu0 %v6138
        %v6140 = vpop.xlane.xlu0 %6139
        %v6141 = vsel %vm3223, %v5943, 0.0
        %6142 = vadd.xlane.f32.xlu0 %v6141
        %v6143 = vpop.xlane.xlu0 %6142
        %v6144 = vsel %vm3223, %v5945, 0.0
        %6145 = vadd.xlane.f32.xlu0 %v6144
        %v6146 = vpop.xlane.xlu0 %6145
        %v6147 = vsel %vm3223, %v5947, 0.0
        %6148 = vadd.xlane.f32.xlu0 %v6147
        %v6149 = vpop.xlane.xlu0 %6148
        %v6150 = vsel %vm3223, %v5949, 0.0
        %6151 = vadd.xlane.f32.xlu0 %v6150
        %v6152 = vpop.xlane.xlu0 %6151
        %v6153 = vsel %vm3223, %v5951, 0.0
        %6154 = vadd.xlane.f32.xlu0 %v6153
        %v6155 = vpop.xlane.xlu0 %6154
        %v6156 = vsel %vm3223, %v5953, 0.0
        %6157 = vadd.xlane.f32.xlu0 %v6156
        %v6158 = vpop.xlane.xlu0 %6157
        %v6159 = vsel %vm3223, %v5955, 0.0
        %6160 = vadd.xlane.f32.xlu0 %v6159
        %v6161 = vpop.xlane.xlu0 %6160
        %v6162 = vsel %vm3223, %v5957, 0.0
        %6163 = vadd.xlane.f32.xlu0 %v6162
        %v6164 = vpop.xlane.xlu0 %6163
        %v6165 = vsel %vm3223, %v5959, 0.0
        %6166 = vadd.xlane.f32.xlu0 %v6165
        %v6167 = vpop.xlane.xlu0 %6166
        %v6168 = vsel %vm3223, %v5961, 0.0
        %6169 = vadd.xlane.f32.xlu0 %v6168
        %v6170 = vpop.xlane.xlu0 %6169
        %v6171 = vsel %vm3223, %v5963, 0.0
        %6172 = vadd.xlane.f32.xlu0 %v6171
        %v6173 = vpop.xlane.xlu0 %6172
        %v6174 = vsel %vm3223, %v5965, 0.0
        %6175 = vadd.xlane.f32.xlu0 %v6174
        %v6176 = vpop.xlane.xlu0 %6175
        %v6177 = vsel %vm3223, %v5967, 0.0
        %6178 = vadd.xlane.f32.xlu0 %v6177
        %v6179 = vpop.xlane.xlu0 %6178
        %v6180 = vsel %vm3223, %v5969, 0.0
        %6181 = vadd.xlane.f32.xlu0 %v6180
        %v6182 = vpop.xlane.xlu0 %6181
        %v6183 = vsel %vm3223, %v5971, 0.0
        %6184 = vadd.xlane.f32.xlu0 %v6183
        %v6185 = vpop.xlane.xlu0 %6184
        %v6186 = vsel %vm3223, %v5973, 0.0
        %6187 = vadd.xlane.f32.xlu0 %v6186
        %v6188 = vpop.xlane.xlu0 %6187
        %v6189 = vsel %vm3223, %v5975, 0.0
        %6190 = vadd.xlane.f32.xlu0 %v6189
        %v6191 = vpop.xlane.xlu0 %6190
        %v6192 = vsel %vm3223, %v5977, 0.0
        %6193 = vadd.xlane.f32.xlu0 %v6192
        %v6194 = vpop.xlane.xlu0 %6193
        %v6195 = vsel %vm3223, %v5979, 0.0
        %6196 = vadd.xlane.f32.xlu0 %v6195
        %v6197 = vpop.xlane.xlu0 %6196
        %v6198 = vsel %vm3223, %v5981, 0.0
        %6199 = vadd.xlane.f32.xlu0 %v6198
        %v6200 = vpop.xlane.xlu0 %6199
        %v6201 = vsel %vm3223, %v5983, 0.0
        %6202 = vadd.xlane.f32.xlu0 %v6201
        %v6203 = vpop.xlane.xlu0 %6202
        %v6204 = vsel %vm3223, %v5985, 0.0
        %6205 = vadd.xlane.f32.xlu0 %v6204
        %v6206 = vpop.xlane.xlu0 %6205
        %v6207 = vsel %vm3223, %v5987, 0.0
        %6208 = vadd.xlane.f32.xlu0 %v6207
        %v6209 = vpop.xlane.xlu0 %6208
        %v6210 = vsel %vm3223, %v5989, 0.0
        %6211 = vadd.xlane.f32.xlu0 %v6210
        %v6212 = vpop.xlane.xlu0 %6211
        %v6213 = vsel %vm3223, %v5991, 0.0
        %6214 = vadd.xlane.f32.xlu0 %v6213
        %v6215 = vpop.xlane.xlu0 %6214
        %v6216 = vsel %vm3223, %v5993, 0.0
        %6217 = vadd.xlane.f32.xlu0 %v6216
        %v6218 = vpop.xlane.xlu0 %6217
        %v6219 = vsel %vm3223, %v5995, 0.0
        %6220 = vadd.xlane.f32.xlu0 %v6219
        %v6221 = vpop.xlane.xlu0 %6220
        %v6222 = vsel %vm3223, %v5997, 0.0
        %6223 = vadd.xlane.f32.xlu0 %v6222
        %v6224 = vpop.xlane.xlu0 %6223
        %v6225 = vsel %vm3223, %v5999, 0.0
        %6226 = vadd.xlane.f32.xlu0 %v6225
        %v6227 = vpop.xlane.xlu0 %6226
        %v6228 = vsel %vm3223, %v6001, 0.0
        %6229 = vadd.xlane.f32.xlu0 %v6228
        %v6230 = vpop.xlane.xlu0 %6229
        %v6231 = vsel %vm3223, %v6003, 0.0
        %6232 = vadd.xlane.f32.xlu0 %v6231
        %v6233 = vpop.xlane.xlu0 %6232
        %v6234 = vsel %vm3223, %v6005, 0.0
        %6235 = vadd.xlane.f32.xlu0 %v6234
        %v6236 = vpop.xlane.xlu0 %6235
        %v6237 = vsel %vm3223, %v6007, 0.0
        %6238 = vadd.xlane.f32.xlu0 %v6237
        %v6239 = vpop.xlane.xlu0 %6238
        %v6240 = vsel %vm3223, %v6009, 0.0
        %6241 = vadd.xlane.f32.xlu0 %v6240
        %v6242 = vpop.xlane.xlu0 %6241
        %v6243 = vsel %vm3223, %v6011, 0.0
        %6244 = vadd.xlane.f32.xlu0 %v6243
        %v6245 = vpop.xlane.xlu0 %6244
        %v6246 = vsel %vm3223, %v6013, 0.0
        %6247 = vadd.xlane.f32.xlu0 %v6246
        %v6248 = vpop.xlane.xlu0 %6247
        %v6249 = vsel %vm3223, %v6015, 0.0
        %6250 = vadd.xlane.f32.xlu0 %v6249
        %v6251 = vpop.xlane.xlu0 %6250
        %v6252 = vsel %vm3223, %v6017, 0.0
        %6253 = vadd.xlane.f32.xlu0 %v6252
        %v6254 = vpop.xlane.xlu0 %6253
        %v6255 = vsel %vm3223, %v6019, 0.0
        %6256 = vadd.xlane.f32.xlu0 %v6255
        %v6257 = vpop.xlane.xlu0 %6256
        %v6258 = vsel %vm3223, %v6021, 0.0
        %6259 = vadd.xlane.f32.xlu0 %v6258
        %v6260 = vpop.xlane.xlu0 %6259
        %v6261 = vsel %vm3223, %v6023, 0.0
        %6262 = vadd.xlane.f32.xlu0 %v6261
        %v6263 = vpop.xlane.xlu0 %6262
        %v6264 = vsel %vm3223, %v6025, 0.0
        %6265 = vadd.xlane.f32.xlu0 %v6264
        %v6266 = vpop.xlane.xlu0 %6265
        %v6267 = vsel %vm3223, %v6027, 0.0
        %6268 = vadd.xlane.f32.xlu0 %v6267
        %v6269 = vpop.xlane.xlu0 %6268
        %v6270 = vsel %vm3223, %v6029, 0.0
        %6271 = vadd.xlane.f32.xlu0 %v6270
        %v6272 = vpop.xlane.xlu0 %6271
        %v6273 = vsel %vm3223, %v6031, 0.0
        %6274 = vadd.xlane.f32.xlu0 %v6273
        %v6275 = vpop.xlane.xlu0 %6274
        %v6276 = vsel %vm3223, %v6033, 0.0
        %6277 = vadd.xlane.f32.xlu0 %v6276
        %v6278 = vpop.xlane.xlu0 %6277
        %v6279 = vsel %vm3223, %v6035, 0.0
        %6280 = vadd.xlane.f32.xlu0 %v6279
        %v6281 = vpop.xlane.xlu0 %6280
        %v6282 = vsel %vm3223, %v6037, 0.0
        %6283 = vadd.xlane.f32.xlu0 %v6282
        %v6284 = vpop.xlane.xlu0 %6283
        %v6285 = vsel %vm3223, %v6039, 0.0
        %6286 = vadd.xlane.f32.xlu0 %v6285
        %v6287 = vpop.xlane.xlu0 %6286
        %v6288 = vsel %vm3223, %v6041, 0.0
        %6289 = vadd.xlane.f32.xlu0 %v6288
        %v6290 = vpop.xlane.xlu0 %6289
        %v6291 = vsel %vm3223, %v6043, 0.0
        %6292 = vadd.xlane.f32.xlu0 %v6291
        %v6293 = vpop.xlane.xlu0 %6292
        %v6294 = vsel %vm3223, %v6045, 0.0
        %6295 = vadd.xlane.f32.xlu0 %v6294
        %v6296 = vpop.xlane.xlu0 %6295
        %v6297 = vsel %vm3223, %v6047, 0.0
        %6298 = vadd.xlane.f32.xlu0 %v6297
        %v6299 = vpop.xlane.xlu0 %6298
        %v6300 = vsel %vm3223, %v6049, 0.0
        %6301 = vadd.xlane.f32.xlu0 %v6300
        %v6302 = vpop.xlane.xlu0 %6301
        %v6303 = vsel %vm3223, %v6051, 0.0
        %6304 = vadd.xlane.f32.xlu0 %v6303
        %v6305 = vpop.xlane.xlu0 %6304
        %v6306 = vsel %vm3223, %v6053, 0.0
        %6307 = vadd.xlane.f32.xlu0 %v6306
        %v6308 = vpop.xlane.xlu0 %6307
        %v6309 = vsel %vm3223, %v6055, 0.0
        %6310 = vadd.xlane.f32.xlu0 %v6309
        %v6311 = vpop.xlane.xlu0 %6310
        %v6312 = vstv %s4829
        %v6313 = vadd.f32 %v6122, %v6312
        %v6314 = vadd.f32 %v6125, %v6312
        %v6315 = vadd.f32 %v6128, %v6312
        %v6316 = vadd.f32 %v6131, %v6312
        %v6317 = vadd.f32 %v6134, %v6312
        %v6318 = vadd.f32 %v6137, %v6312
        %v6319 = vadd.f32 %v6140, %v6312
        %v6320 = vadd.f32 %v6143, %v6312
        %v6321 = vadd.f32 %v6146, %v6312
        %v6322 = vadd.f32 %v6149, %v6312
        %v6323 = vadd.f32 %v6152, %v6312
        %v6324 = vadd.f32 %v6155, %v6312
        %v6325 = vadd.f32 %v6158, %v6312
        %v6326 = vadd.f32 %v6161, %v6312
        %v6327 = vadd.f32 %v6164, %v6312
        %v6328 = vadd.f32 %v6167, %v6312
        %v6329 = vadd.f32 %v6170, %v6312
        %v6330 = vadd.f32 %v6173, %v6312
        %v6331 = vadd.f32 %v6176, %v6312
        %v6332 = vadd.f32 %v6179, %v6312
        %v6333 = vadd.f32 %v6182, %v6312
        %v6334 = vadd.f32 %v6185, %v6312
        %v6335 = vadd.f32 %v6188, %v6312
        %v6336 = vadd.f32 %v6191, %v6312
        %v6337 = vadd.f32 %v6194, %v6312
        %v6338 = vadd.f32 %v6197, %v6312
        %v6339 = vadd.f32 %v6200, %v6312
        %v6340 = vadd.f32 %v6203, %v6312
        %v6341 = vadd.f32 %v6206, %v6312
        %v6342 = vadd.f32 %v6209, %v6312
        %v6343 = vadd.f32 %v6212, %v6312
        %v6344 = vadd.f32 %v6215, %v6312
        %v6345 = vadd.f32 %v6218, %v6312
        %v6346 = vadd.f32 %v6221, %v6312
        %v6347 = vadd.f32 %v6224, %v6312
        %v6348 = vadd.f32 %v6227, %v6312
        %v6349 = vadd.f32 %v6230, %v6312
        %v6350 = vadd.f32 %v6233, %v6312
        %v6351 = vadd.f32 %v6236, %v6312
        %v6352 = vadd.f32 %v6239, %v6312
        %v6353 = vadd.f32 %v6242, %v6312
        %v6354 = vadd.f32 %v6245, %v6312
        %v6355 = vadd.f32 %v6248, %v6312
        %v6356 = vadd.f32 %v6251, %v6312
        %v6357 = vadd.f32 %v6254, %v6312
        %v6358 = vadd.f32 %v6257, %v6312
        %v6359 = vadd.f32 %v6260, %v6312
        %v6360 = vadd.f32 %v6263, %v6312
        %v6361 = vadd.f32 %v6266, %v6312
        %v6362 = vadd.f32 %v6269, %v6312
        %v6363 = vadd.f32 %v6272, %v6312
        %v6364 = vadd.f32 %v6275, %v6312
        %v6365 = vadd.f32 %v6278, %v6312
        %v6366 = vadd.f32 %v6281, %v6312
        %v6367 = vadd.f32 %v6284, %v6312
        %v6368 = vadd.f32 %v6287, %v6312
        %v6369 = vadd.f32 %v6290, %v6312
        %v6370 = vadd.f32 %v6293, %v6312
        %v6371 = vadd.f32 %v6296, %v6312
        %v6372 = vadd.f32 %v6299, %v6312
        %v6373 = vadd.f32 %v6302, %v6312
        %v6374 = vadd.f32 %v6305, %v6312
        %v6375 = vadd.f32 %v6308, %v6312
        %v6376 = vadd.f32 %v6311, %v6312
        %v6377 = vmul.f32 %v6313, 1.442695
        %v6378 = vpow.pop %v6377
        %v6379 = vmul.f32 %v6314, 1.442695
        %v6380 = vpow.pop %v6379
        %v6381 = vmul.f32 %v6315, 1.442695
        %v6382 = vpow.pop %v6381
        %v6383 = vmul.f32 %v6316, 1.442695
        %v6384 = vpow.pop %v6383
        %v6385 = vmul.f32 %v6317, 1.442695
        %v6386 = vpow.pop %v6385
        %v6387 = vmul.f32 %v6318, 1.442695
        %v6388 = vpow.pop %v6387
        %v6389 = vmul.f32 %v6319, 1.442695
        %v6390 = vpow.pop %v6389
        %v6391 = vmul.f32 %v6320, 1.442695
        %v6392 = vpow.pop %v6391
        %v6393 = vmul.f32 %v6321, 1.442695
        %v6394 = vpow.pop %v6393
        %v6395 = vmul.f32 %v6322, 1.442695
        %v6396 = vpow.pop %v6395
        %v6397 = vmul.f32 %v6323, 1.442695
        %v6398 = vpow.pop %v6397
        %v6399 = vmul.f32 %v6324, 1.442695
        %v6400 = vpow.pop %v6399
        %v6401 = vmul.f32 %v6325, 1.442695
        %v6402 = vpow.pop %v6401
        %v6403 = vmul.f32 %v6326, 1.442695
        %v6404 = vpow.pop %v6403
        %v6405 = vmul.f32 %v6327, 1.442695
        %v6406 = vpow.pop %v6405
        %v6407 = vmul.f32 %v6328, 1.442695
        %v6408 = vpow.pop %v6407
        %v6409 = vmul.f32 %v6329, 1.442695
        %v6410 = vpow.pop %v6409
        %v6411 = vmul.f32 %v6330, 1.442695
        %v6412 = vpow.pop %v6411
        %v6413 = vmul.f32 %v6331, 1.442695
        %v6414 = vpow.pop %v6413
        %v6415 = vmul.f32 %v6332, 1.442695
        %v6416 = vpow.pop %v6415
        %v6417 = vmul.f32 %v6333, 1.442695
        %v6418 = vpow.pop %v6417
        %v6419 = vmul.f32 %v6334, 1.442695
        %v6420 = vpow.pop %v6419
        %v6421 = vmul.f32 %v6335, 1.442695
        %v6422 = vpow.pop %v6421
        %v6423 = vmul.f32 %v6336, 1.442695
        %v6424 = vpow.pop %v6423
        %v6425 = vmul.f32 %v6337, 1.442695
        %v6426 = vpow.pop %v6425
        %v6427 = vmul.f32 %v6338, 1.442695
        %v6428 = vpow.pop %v6427
        %v6429 = vmul.f32 %v6339, 1.442695
        %v6430 = vpow.pop %v6429
        %v6431 = vmul.f32 %v6340, 1.442695
        %v6432 = vpow.pop %v6431
        %v6433 = vmul.f32 %v6341, 1.442695
        %v6434 = vpow.pop %v6433
        %v6435 = vmul.f32 %v6342, 1.442695
        %v6436 = vpow.pop %v6435
        %v6437 = vmul.f32 %v6343, 1.442695
        %v6438 = vpow.pop %v6437
        %v6439 = vmul.f32 %v6344, 1.442695
        %v6440 = vpow.pop %v6439
        %v6441 = vmul.f32 %v6345, 1.442695
        %v6442 = vpow.pop %v6441
        %v6443 = vmul.f32 %v6346, 1.442695
        %v6444 = vpow.pop %v6443
        %v6445 = vmul.f32 %v6347, 1.442695
        %v6446 = vpow.pop %v6445
        %v6447 = vmul.f32 %v6348, 1.442695
        %v6448 = vpow.pop %v6447
        %v6449 = vmul.f32 %v6349, 1.442695
        %v6450 = vpow.pop %v6449
        %v6451 = vmul.f32 %v6350, 1.442695
        %v6452 = vpow.pop %v6451
        %v6453 = vmul.f32 %v6351, 1.442695
        %v6454 = vpow.pop %v6453
        %v6455 = vmul.f32 %v6352, 1.442695
        %v6456 = vpow.pop %v6455
        %v6457 = vmul.f32 %v6353, 1.442695
        %v6458 = vpow.pop %v6457
        %v6459 = vmul.f32 %v6354, 1.442695
        %v6460 = vpow.pop %v6459
        %v6461 = vmul.f32 %v6355, 1.442695
        %v6462 = vpow.pop %v6461
        %v6463 = vmul.f32 %v6356, 1.442695
        %v6464 = vpow.pop %v6463
        %v6465 = vmul.f32 %v6357, 1.442695
        %v6466 = vpow.pop %v6465
        %v6467 = vmul.f32 %v6358, 1.442695
        %v6468 = vpow.pop %v6467
        %v6469 = vmul.f32 %v6359, 1.442695
        %v6470 = vpow.pop %v6469
        %v6471 = vmul.f32 %v6360, 1.442695
        %v6472 = vpow.pop %v6471
        %v6473 = vmul.f32 %v6361, 1.442695
        %v6474 = vpow.pop %v6473
        %v6475 = vmul.f32 %v6362, 1.442695
        %v6476 = vpow.pop %v6475
        %v6477 = vmul.f32 %v6363, 1.442695
        %v6478 = vpow.pop %v6477
        %v6479 = vmul.f32 %v6364, 1.442695
        %v6480 = vpow.pop %v6479
        %v6481 = vmul.f32 %v6365, 1.442695
        %v6482 = vpow.pop %v6481
        %v6483 = vmul.f32 %v6366, 1.442695
        %v6484 = vpow.pop %v6483
        %v6485 = vmul.f32 %v6367, 1.442695
        %v6486 = vpow.pop %v6485
        %v6487 = vmul.f32 %v6368, 1.442695
        %v6488 = vpow.pop %v6487
        %v6489 = vmul.f32 %v6369, 1.442695
        %v6490 = vpow.pop %v6489
        %v6491 = vmul.f32 %v6370, 1.442695
        %v6492 = vpow.pop %v6491
        %v6493 = vmul.f32 %v6371, 1.442695
        %v6494 = vpow.pop %v6493
        %v6495 = vmul.f32 %v6372, 1.442695
        %v6496 = vpow.pop %v6495
        %v6497 = vmul.f32 %v6373, 1.442695
        %v6498 = vpow.pop %v6497
        %v6499 = vmul.f32 %v6374, 1.442695
        %v6500 = vpow.pop %v6499
        %v6501 = vmul.f32 %v6375, 1.442695
        %v6502 = vpow.pop %v6501
        %v6503 = vmul.f32 %v6376, 1.442695
        %v6504 = vpow.pop %v6503
        %v6505 = vlaneseq
        %v6506 = vshrl.u32 %v6505, 7
        %v6507 = vadd.s32 %v6506, 8
        %6508 = vset.pattern.permute.xlu0 %v6507
        %6509 = vperm.xlu0 %6508, %v3617
        %v6510 = vpop.permute.xlu0 %6509
        %v6511 = vlaneseq
        %v6512 = vshrl.u32 %v6511, 7
        %v6513 = vadd.s32 %v6512, 8
        %6514 = vset.pattern.permute.xlu0 %v6513
        %6515 = vperm.xlu0 %6514, %v3624
        %v6516 = vpop.permute.xlu0 %6515
        %v6517 = vlaneseq
        %v6518 = vshrl.u32 %v6517, 7
        %v6519 = vadd.s32 %v6518, 8
        %6520 = vset.pattern.permute.xlu0 %v6519
        %6521 = vperm.xlu0 %6520, %v3631
        %v6522 = vpop.permute.xlu0 %6521
        %v6523 = vlaneseq
        %v6524 = vshrl.u32 %v6523, 7
        %v6525 = vadd.s32 %v6524, 8
        %6526 = vset.pattern.permute.xlu0 %v6525
        %6527 = vperm.xlu0 %6526, %v3638
        %v6528 = vpop.permute.xlu0 %6527
        %v6529 = vlaneseq
        %v6530 = vshrl.u32 %v6529, 7
        %v6531 = vadd.s32 %v6530, 8
        %6532 = vset.pattern.permute.xlu0 %v6531
        %6533 = vperm.xlu0 %6532, %v3645
        %v6534 = vpop.permute.xlu0 %6533
        %v6535 = vlaneseq
        %v6536 = vshrl.u32 %v6535, 7
        %v6537 = vadd.s32 %v6536, 8
        %6538 = vset.pattern.permute.xlu0 %v6537
        %6539 = vperm.xlu0 %6538, %v3652
        %v6540 = vpop.permute.xlu0 %6539
        %v6541 = vlaneseq
        %v6542 = vshrl.u32 %v6541, 7
        %v6543 = vadd.s32 %v6542, 8
        %6544 = vset.pattern.permute.xlu0 %v6543
        %6545 = vperm.xlu0 %6544, %v3659
        %v6546 = vpop.permute.xlu0 %6545
        %v6547 = vlaneseq
        %v6548 = vshrl.u32 %v6547, 7
        %v6549 = vadd.s32 %v6548, 8
        %6550 = vset.pattern.permute.xlu0 %v6549
        %6551 = vperm.xlu0 %6550, %v3666
        %v6552 = vpop.permute.xlu0 %6551
        %v6553 = vlaneseq
        %v6554 = vshrl.u32 %v6553, 7
        %v6555 = vadd.s32 %v6554, 8
        %6556 = vset.pattern.permute.xlu0 %v6555
        %6557 = vperm.xlu0 %6556, %v3673
        %v6558 = vpop.permute.xlu0 %6557
        %v6559 = vlaneseq
        %v6560 = vshrl.u32 %v6559, 7
        %v6561 = vadd.s32 %v6560, 8
        %6562 = vset.pattern.permute.xlu0 %v6561
        %6563 = vperm.xlu0 %6562, %v3680
        %v6564 = vpop.permute.xlu0 %6563
        %v6565 = vlaneseq
        %v6566 = vshrl.u32 %v6565, 7
        %v6567 = vadd.s32 %v6566, 8
        %6568 = vset.pattern.permute.xlu0 %v6567
        %6569 = vperm.xlu0 %6568, %v3687
        %v6570 = vpop.permute.xlu0 %6569
        %v6571 = vlaneseq
        %v6572 = vshrl.u32 %v6571, 7
        %v6573 = vadd.s32 %v6572, 8
        %6574 = vset.pattern.permute.xlu0 %v6573
        %6575 = vperm.xlu0 %6574, %v3694
        %v6576 = vpop.permute.xlu0 %6575
        %v6577 = vlaneseq
        %v6578 = vshrl.u32 %v6577, 7
        %v6579 = vadd.s32 %v6578, 8
        %6580 = vset.pattern.permute.xlu0 %v6579
        %6581 = vperm.xlu0 %6580, %v3701
        %v6582 = vpop.permute.xlu0 %6581
        %v6583 = vlaneseq
        %v6584 = vshrl.u32 %v6583, 7
        %v6585 = vadd.s32 %v6584, 8
        %6586 = vset.pattern.permute.xlu0 %v6585
        %6587 = vperm.xlu0 %6586, %v3708
        %v6588 = vpop.permute.xlu0 %6587
        %v6589 = vlaneseq
        %v6590 = vshrl.u32 %v6589, 7
        %v6591 = vadd.s32 %v6590, 8
        %6592 = vset.pattern.permute.xlu0 %v6591
        %6593 = vperm.xlu0 %6592, %v3715
        %v6594 = vpop.permute.xlu0 %6593
        %v6595 = vlaneseq
        %v6596 = vshrl.u32 %v6595, 7
        %v6597 = vadd.s32 %v6596, 8
        %6598 = vset.pattern.permute.xlu0 %v6597
        %6599 = vperm.xlu0 %6598, %v3722
        %v6600 = vpop.permute.xlu0 %6599
        %v6601 = vlaneseq
        %v6602 = vshrl.u32 %v6601, 7
        %v6603 = vadd.s32 %v6602, 8
        %6604 = vset.pattern.permute.xlu0 %v6603
        %6605 = vperm.xlu0 %6604, %v3729
        %v6606 = vpop.permute.xlu0 %6605
        %v6607 = vlaneseq
        %v6608 = vshrl.u32 %v6607, 7
        %v6609 = vadd.s32 %v6608, 8
        %6610 = vset.pattern.permute.xlu0 %v6609
        %6611 = vperm.xlu0 %6610, %v3736
        %v6612 = vpop.permute.xlu0 %6611
        %v6613 = vlaneseq
        %v6614 = vshrl.u32 %v6613, 7
        %v6615 = vadd.s32 %v6614, 8
        %6616 = vset.pattern.permute.xlu0 %v6615
        %6617 = vperm.xlu0 %6616, %v3743
        %v6618 = vpop.permute.xlu0 %6617
        %v6619 = vlaneseq
        %v6620 = vshrl.u32 %v6619, 7
        %v6621 = vadd.s32 %v6620, 8
        %6622 = vset.pattern.permute.xlu0 %v6621
        %6623 = vperm.xlu0 %6622, %v3750
        %v6624 = vpop.permute.xlu0 %6623
        %v6625 = vlaneseq
        %v6626 = vshrl.u32 %v6625, 7
        %v6627 = vadd.s32 %v6626, 8
        %6628 = vset.pattern.permute.xlu0 %v6627
        %6629 = vperm.xlu0 %6628, %v3757
        %v6630 = vpop.permute.xlu0 %6629
        %v6631 = vlaneseq
        %v6632 = vshrl.u32 %v6631, 7
        %v6633 = vadd.s32 %v6632, 8
        %6634 = vset.pattern.permute.xlu0 %v6633
        %6635 = vperm.xlu0 %6634, %v3764
        %v6636 = vpop.permute.xlu0 %6635
        %v6637 = vlaneseq
        %v6638 = vshrl.u32 %v6637, 7
        %v6639 = vadd.s32 %v6638, 8
        %6640 = vset.pattern.permute.xlu0 %v6639
        %6641 = vperm.xlu0 %6640, %v3771
        %v6642 = vpop.permute.xlu0 %6641
        %v6643 = vlaneseq
        %v6644 = vshrl.u32 %v6643, 7
        %v6645 = vadd.s32 %v6644, 8
        %6646 = vset.pattern.permute.xlu0 %v6645
        %6647 = vperm.xlu0 %6646, %v3778
        %v6648 = vpop.permute.xlu0 %6647
        %v6649 = vlaneseq
        %v6650 = vshrl.u32 %v6649, 7
        %v6651 = vadd.s32 %v6650, 8
        %6652 = vset.pattern.permute.xlu0 %v6651
        %6653 = vperm.xlu0 %6652, %v3785
        %v6654 = vpop.permute.xlu0 %6653
        %v6655 = vlaneseq
        %v6656 = vshrl.u32 %v6655, 7
        %v6657 = vadd.s32 %v6656, 8
        %6658 = vset.pattern.permute.xlu0 %v6657
        %6659 = vperm.xlu0 %6658, %v3792
        %v6660 = vpop.permute.xlu0 %6659
        %v6661 = vlaneseq
        %v6662 = vshrl.u32 %v6661, 7
        %v6663 = vadd.s32 %v6662, 8
        %6664 = vset.pattern.permute.xlu0 %v6663
        %6665 = vperm.xlu0 %6664, %v3799
        %v6666 = vpop.permute.xlu0 %6665
        %v6667 = vlaneseq
        %v6668 = vshrl.u32 %v6667, 7
        %v6669 = vadd.s32 %v6668, 8
        %6670 = vset.pattern.permute.xlu0 %v6669
        %6671 = vperm.xlu0 %6670, %v3806
        %v6672 = vpop.permute.xlu0 %6671
        %v6673 = vlaneseq
        %v6674 = vshrl.u32 %v6673, 7
        %v6675 = vadd.s32 %v6674, 8
        %6676 = vset.pattern.permute.xlu0 %v6675
        %6677 = vperm.xlu0 %6676, %v3813
        %v6678 = vpop.permute.xlu0 %6677
        %v6679 = vlaneseq
        %v6680 = vshrl.u32 %v6679, 7
        %v6681 = vadd.s32 %v6680, 8
        %6682 = vset.pattern.permute.xlu0 %v6681
        %6683 = vperm.xlu0 %6682, %v3820
        %v6684 = vpop.permute.xlu0 %6683
        %v6685 = vlaneseq
        %v6686 = vshrl.u32 %v6685, 7
        %v6687 = vadd.s32 %v6686, 8
        %6688 = vset.pattern.permute.xlu0 %v6687
        %6689 = vperm.xlu0 %6688, %v3827
        %v6690 = vpop.permute.xlu0 %6689
        %v6691 = vlaneseq
        %v6692 = vshrl.u32 %v6691, 7
        %v6693 = vadd.s32 %v6692, 8
        %6694 = vset.pattern.permute.xlu0 %v6693
        %6695 = vperm.xlu0 %6694, %v3834
        %v6696 = vpop.permute.xlu0 %6695
        %v6697 = vlaneseq
        %v6698 = vshrl.u32 %v6697, 7
        %v6699 = vadd.s32 %v6698, 8
        %6700 = vset.pattern.permute.xlu0 %v6699
        %6701 = vperm.xlu0 %6700, %v3841
        %v6702 = vpop.permute.xlu0 %6701
        %v6703 = vlaneseq
        %v6704 = vshrl.u32 %v6703, 7
        %v6705 = vadd.s32 %v6704, 8
        %6706 = vset.pattern.permute.xlu0 %v6705
        %6707 = vperm.xlu0 %6706, %v3848
        %v6708 = vpop.permute.xlu0 %6707
        %v6709 = vlaneseq
        %v6710 = vshrl.u32 %v6709, 7
        %v6711 = vadd.s32 %v6710, 8
        %6712 = vset.pattern.permute.xlu0 %v6711
        %6713 = vperm.xlu0 %6712, %v3855
        %v6714 = vpop.permute.xlu0 %6713
        %v6715 = vlaneseq
        %v6716 = vshrl.u32 %v6715, 7
        %v6717 = vadd.s32 %v6716, 8
        %6718 = vset.pattern.permute.xlu0 %v6717
        %6719 = vperm.xlu0 %6718, %v3862
        %v6720 = vpop.permute.xlu0 %6719
        %v6721 = vlaneseq
        %v6722 = vshrl.u32 %v6721, 7
        %v6723 = vadd.s32 %v6722, 8
        %6724 = vset.pattern.permute.xlu0 %v6723
        %6725 = vperm.xlu0 %6724, %v3869
        %v6726 = vpop.permute.xlu0 %6725
        %v6727 = vlaneseq
        %v6728 = vshrl.u32 %v6727, 7
        %v6729 = vadd.s32 %v6728, 8
        %6730 = vset.pattern.permute.xlu0 %v6729
        %6731 = vperm.xlu0 %6730, %v3876
        %v6732 = vpop.permute.xlu0 %6731
        %v6733 = vlaneseq
        %v6734 = vshrl.u32 %v6733, 7
        %v6735 = vadd.s32 %v6734, 8
        %6736 = vset.pattern.permute.xlu0 %v6735
        %6737 = vperm.xlu0 %6736, %v3883
        %v6738 = vpop.permute.xlu0 %6737
        %v6739 = vlaneseq
        %v6740 = vshrl.u32 %v6739, 7
        %v6741 = vadd.s32 %v6740, 8
        %6742 = vset.pattern.permute.xlu0 %v6741
        %6743 = vperm.xlu0 %6742, %v3890
        %v6744 = vpop.permute.xlu0 %6743
        %v6745 = vlaneseq
        %v6746 = vshrl.u32 %v6745, 7
        %v6747 = vadd.s32 %v6746, 8
        %6748 = vset.pattern.permute.xlu0 %v6747
        %6749 = vperm.xlu0 %6748, %v3897
        %v6750 = vpop.permute.xlu0 %6749
        %v6751 = vlaneseq
        %v6752 = vshrl.u32 %v6751, 7
        %v6753 = vadd.s32 %v6752, 8
        %6754 = vset.pattern.permute.xlu0 %v6753
        %6755 = vperm.xlu0 %6754, %v3904
        %v6756 = vpop.permute.xlu0 %6755
        %v6757 = vlaneseq
        %v6758 = vshrl.u32 %v6757, 7
        %v6759 = vadd.s32 %v6758, 8
        %6760 = vset.pattern.permute.xlu0 %v6759
        %6761 = vperm.xlu0 %6760, %v3911
        %v6762 = vpop.permute.xlu0 %6761
        %v6763 = vlaneseq
        %v6764 = vshrl.u32 %v6763, 7
        %v6765 = vadd.s32 %v6764, 8
        %6766 = vset.pattern.permute.xlu0 %v6765
        %6767 = vperm.xlu0 %6766, %v3918
        %v6768 = vpop.permute.xlu0 %6767
        %v6769 = vlaneseq
        %v6770 = vshrl.u32 %v6769, 7
        %v6771 = vadd.s32 %v6770, 8
        %6772 = vset.pattern.permute.xlu0 %v6771
        %6773 = vperm.xlu0 %6772, %v3925
        %v6774 = vpop.permute.xlu0 %6773
        %v6775 = vlaneseq
        %v6776 = vshrl.u32 %v6775, 7
        %v6777 = vadd.s32 %v6776, 8
        %6778 = vset.pattern.permute.xlu0 %v6777
        %6779 = vperm.xlu0 %6778, %v3932
        %v6780 = vpop.permute.xlu0 %6779
        %v6781 = vlaneseq
        %v6782 = vshrl.u32 %v6781, 7
        %v6783 = vadd.s32 %v6782, 8
        %6784 = vset.pattern.permute.xlu0 %v6783
        %6785 = vperm.xlu0 %6784, %v3939
        %v6786 = vpop.permute.xlu0 %6785
        %v6787 = vlaneseq
        %v6788 = vshrl.u32 %v6787, 7
        %v6789 = vadd.s32 %v6788, 8
        %6790 = vset.pattern.permute.xlu0 %v6789
        %6791 = vperm.xlu0 %6790, %v3946
        %v6792 = vpop.permute.xlu0 %6791
        %v6793 = vlaneseq
        %v6794 = vshrl.u32 %v6793, 7
        %v6795 = vadd.s32 %v6794, 8
        %6796 = vset.pattern.permute.xlu0 %v6795
        %6797 = vperm.xlu0 %6796, %v3953
        %v6798 = vpop.permute.xlu0 %6797
        %v6799 = vlaneseq
        %v6800 = vshrl.u32 %v6799, 7
        %v6801 = vadd.s32 %v6800, 8
        %6802 = vset.pattern.permute.xlu0 %v6801
        %6803 = vperm.xlu0 %6802, %v3960
        %v6804 = vpop.permute.xlu0 %6803
        %v6805 = vlaneseq
        %v6806 = vshrl.u32 %v6805, 7
        %v6807 = vadd.s32 %v6806, 8
        %6808 = vset.pattern.permute.xlu0 %v6807
        %6809 = vperm.xlu0 %6808, %v3967
        %v6810 = vpop.permute.xlu0 %6809
        %v6811 = vlaneseq
        %v6812 = vshrl.u32 %v6811, 7
        %v6813 = vadd.s32 %v6812, 8
        %6814 = vset.pattern.permute.xlu0 %v6813
        %6815 = vperm.xlu0 %6814, %v3974
        %v6816 = vpop.permute.xlu0 %6815
        %v6817 = vlaneseq
        %v6818 = vshrl.u32 %v6817, 7
        %v6819 = vadd.s32 %v6818, 8
        %6820 = vset.pattern.permute.xlu0 %v6819
        %6821 = vperm.xlu0 %6820, %v3981
        %v6822 = vpop.permute.xlu0 %6821
        %v6823 = vlaneseq
        %v6824 = vshrl.u32 %v6823, 7
        %v6825 = vadd.s32 %v6824, 8
        %6826 = vset.pattern.permute.xlu0 %v6825
        %6827 = vperm.xlu0 %6826, %v3988
        %v6828 = vpop.permute.xlu0 %6827
        %v6829 = vlaneseq
        %v6830 = vshrl.u32 %v6829, 7
        %v6831 = vadd.s32 %v6830, 8
        %6832 = vset.pattern.permute.xlu0 %v6831
        %6833 = vperm.xlu0 %6832, %v3995
        %v6834 = vpop.permute.xlu0 %6833
        %v6835 = vlaneseq
        %v6836 = vshrl.u32 %v6835, 7
        %v6837 = vadd.s32 %v6836, 8
        %6838 = vset.pattern.permute.xlu0 %v6837
        %6839 = vperm.xlu0 %6838, %v4002
        %v6840 = vpop.permute.xlu0 %6839
        %v6841 = vlaneseq
        %v6842 = vshrl.u32 %v6841, 7
        %v6843 = vadd.s32 %v6842, 8
        %6844 = vset.pattern.permute.xlu0 %v6843
        %6845 = vperm.xlu0 %6844, %v4009
        %v6846 = vpop.permute.xlu0 %6845
        %v6847 = vlaneseq
        %v6848 = vshrl.u32 %v6847, 7
        %v6849 = vadd.s32 %v6848, 8
        %6850 = vset.pattern.permute.xlu0 %v6849
        %6851 = vperm.xlu0 %6850, %v4016
        %v6852 = vpop.permute.xlu0 %6851
        %v6853 = vlaneseq
        %v6854 = vshrl.u32 %v6853, 7
        %v6855 = vadd.s32 %v6854, 8
        %6856 = vset.pattern.permute.xlu0 %v6855
        %6857 = vperm.xlu0 %6856, %v4023
        %v6858 = vpop.permute.xlu0 %6857
        %v6859 = vlaneseq
        %v6860 = vshrl.u32 %v6859, 7
        %v6861 = vadd.s32 %v6860, 8
        %6862 = vset.pattern.permute.xlu0 %v6861
        %6863 = vperm.xlu0 %6862, %v4030
        %v6864 = vpop.permute.xlu0 %6863
        %v6865 = vlaneseq
        %v6866 = vshrl.u32 %v6865, 7
        %v6867 = vadd.s32 %v6866, 8
        %6868 = vset.pattern.permute.xlu0 %v6867
        %6869 = vperm.xlu0 %6868, %v4037
        %v6870 = vpop.permute.xlu0 %6869
        %v6871 = vlaneseq
        %v6872 = vshrl.u32 %v6871, 7
        %v6873 = vadd.s32 %v6872, 8
        %6874 = vset.pattern.permute.xlu0 %v6873
        %6875 = vperm.xlu0 %6874, %v4044
        %v6876 = vpop.permute.xlu0 %6875
        %v6877 = vlaneseq
        %v6878 = vshrl.u32 %v6877, 7
        %v6879 = vadd.s32 %v6878, 8
        %6880 = vset.pattern.permute.xlu0 %v6879
        %6881 = vperm.xlu0 %6880, %v4051
        %v6882 = vpop.permute.xlu0 %6881
        %v6883 = vlaneseq
        %v6884 = vshrl.u32 %v6883, 7
        %v6885 = vadd.s32 %v6884, 8
        %6886 = vset.pattern.permute.xlu0 %v6885
        %6887 = vperm.xlu0 %6886, %v4058
        %v6888 = vpop.permute.xlu0 %6887
        %v6953 = vmul.f32 %v6378, %v6510
        %v6954 = vmul.f32 %v6380, %v6516
        %v6955 = vmul.f32 %v6382, %v6522
        %v6956 = vmul.f32 %v6384, %v6528
        %v6957 = vmul.f32 %v6386, %v6534
        %v6958 = vmul.f32 %v6388, %v6540
        %v6959 = vmul.f32 %v6390, %v6546
        %v6960 = vmul.f32 %v6392, %v6552
        %v6961 = vmul.f32 %v6394, %v6558
        %v6962 = vmul.f32 %v6396, %v6564
        %v6963 = vmul.f32 %v6398, %v6570
        %v6964 = vmul.f32 %v6400, %v6576
        %v6965 = vmul.f32 %v6402, %v6582
        %v6966 = vmul.f32 %v6404, %v6588
        %v6967 = vmul.f32 %v6406, %v6594
        %v6968 = vmul.f32 %v6408, %v6600
        %v6969 = vmul.f32 %v6410, %v6606
        %v6970 = vmul.f32 %v6412, %v6612
        %v6971 = vmul.f32 %v6414, %v6618
        %v6972 = vmul.f32 %v6416, %v6624
        %v6973 = vmul.f32 %v6418, %v6630
        %v6974 = vmul.f32 %v6420, %v6636
        %v6975 = vmul.f32 %v6422, %v6642
        %v6976 = vmul.f32 %v6424, %v6648
        %v6977 = vmul.f32 %v6426, %v6654
        %v6978 = vmul.f32 %v6428, %v6660
        %v6979 = vmul.f32 %v6430, %v6666
        %v6980 = vmul.f32 %v6432, %v6672
        %v6981 = vmul.f32 %v6434, %v6678
        %v6982 = vmul.f32 %v6436, %v6684
        %v6983 = vmul.f32 %v6438, %v6690
        %v6984 = vmul.f32 %v6440, %v6696
        %v6985 = vmul.f32 %v6442, %v6702
        %v6986 = vmul.f32 %v6444, %v6708
        %v6987 = vmul.f32 %v6446, %v6714
        %v6988 = vmul.f32 %v6448, %v6720
        %v6989 = vmul.f32 %v6450, %v6726
        %v6990 = vmul.f32 %v6452, %v6732
        %v6991 = vmul.f32 %v6454, %v6738
        %v6992 = vmul.f32 %v6456, %v6744
        %v6993 = vmul.f32 %v6458, %v6750
        %v6994 = vmul.f32 %v6460, %v6756
        %v6995 = vmul.f32 %v6462, %v6762
        %v6996 = vmul.f32 %v6464, %v6768
        %v6997 = vmul.f32 %v6466, %v6774
        %v6998 = vmul.f32 %v6468, %v6780
        %v6999 = vmul.f32 %v6470, %v6786
        %v7000 = vmul.f32 %v6472, %v6792
        %v7001 = vmul.f32 %v6474, %v6798
        %v7002 = vmul.f32 %v6476, %v6804
        %v7003 = vmul.f32 %v6478, %v6810
        %v7004 = vmul.f32 %v6480, %v6816
        %v7005 = vmul.f32 %v6482, %v6822
        %v7006 = vmul.f32 %v6484, %v6828
        %v7007 = vmul.f32 %v6486, %v6834
        %v7008 = vmul.f32 %v6488, %v6840
        %v7009 = vmul.f32 %v6490, %v6846
        %v7010 = vmul.f32 %v6492, %v6852
        %v7011 = vmul.f32 %v6494, %v6858
        %v7012 = vmul.f32 %v6496, %v6864
        %v7013 = vmul.f32 %v6498, %v6870
        %v7014 = vmul.f32 %v6500, %v6876
        %v7015 = vmul.f32 %v6502, %v6882
        %v7016 = vmul.f32 %v6504, %v6888
        %7081 = vset.pattern.permute.xlu0 0
        %7082 = vperm.xlu0 %7081, %v6953
        %v7083 = vpop.permute.xlu0 %7082
        %7084 = vset.pattern.permute.xlu0 0
        %7085 = vperm.xlu0 %7084, %v6954
        %v7086 = vpop.permute.xlu0 %7085
        %7087 = vset.pattern.permute.xlu0 0
        %7088 = vperm.xlu0 %7087, %v6955
        %v7089 = vpop.permute.xlu0 %7088
        %7090 = vset.pattern.permute.xlu0 0
        %7091 = vperm.xlu0 %7090, %v6956
        %v7092 = vpop.permute.xlu0 %7091
        %7093 = vset.pattern.permute.xlu0 0
        %7094 = vperm.xlu0 %7093, %v6957
        %v7095 = vpop.permute.xlu0 %7094
        %7096 = vset.pattern.permute.xlu0 0
        %7097 = vperm.xlu0 %7096, %v6958
        %v7098 = vpop.permute.xlu0 %7097
        %7099 = vset.pattern.permute.xlu0 0
        %7100 = vperm.xlu0 %7099, %v6959
        %v7101 = vpop.permute.xlu0 %7100
        %7102 = vset.pattern.permute.xlu0 0
        %7103 = vperm.xlu0 %7102, %v6960
        %v7104 = vpop.permute.xlu0 %7103
        %7105 = vset.pattern.permute.xlu0 0
        %7106 = vperm.xlu0 %7105, %v6961
        %v7107 = vpop.permute.xlu0 %7106
        %7108 = vset.pattern.permute.xlu0 0
        %7109 = vperm.xlu0 %7108, %v6962
        %v7110 = vpop.permute.xlu0 %7109
        %7111 = vset.pattern.permute.xlu0 0
        %7112 = vperm.xlu0 %7111, %v6963
        %v7113 = vpop.permute.xlu0 %7112
        %7114 = vset.pattern.permute.xlu0 0
        %7115 = vperm.xlu0 %7114, %v6964
        %v7116 = vpop.permute.xlu0 %7115
        %7117 = vset.pattern.permute.xlu0 0
        %7118 = vperm.xlu0 %7117, %v6965
        %v7119 = vpop.permute.xlu0 %7118
        %7120 = vset.pattern.permute.xlu0 0
        %7121 = vperm.xlu0 %7120, %v6966
        %v7122 = vpop.permute.xlu0 %7121
        %7123 = vset.pattern.permute.xlu0 0
        %7124 = vperm.xlu0 %7123, %v6967
        %v7125 = vpop.permute.xlu0 %7124
        %7126 = vset.pattern.permute.xlu0 0
        %7127 = vperm.xlu0 %7126, %v6968
        %v7128 = vpop.permute.xlu0 %7127
        %7129 = vset.pattern.permute.xlu0 0
        %7130 = vperm.xlu0 %7129, %v6969
        %v7131 = vpop.permute.xlu0 %7130
        %7132 = vset.pattern.permute.xlu0 0
        %7133 = vperm.xlu0 %7132, %v6970
        %v7134 = vpop.permute.xlu0 %7133
        %7135 = vset.pattern.permute.xlu0 0
        %7136 = vperm.xlu0 %7135, %v6971
        %v7137 = vpop.permute.xlu0 %7136
        %7138 = vset.pattern.permute.xlu0 0
        %7139 = vperm.xlu0 %7138, %v6972
        %v7140 = vpop.permute.xlu0 %7139
        %7141 = vset.pattern.permute.xlu0 0
        %7142 = vperm.xlu0 %7141, %v6973
        %v7143 = vpop.permute.xlu0 %7142
        %7144 = vset.pattern.permute.xlu0 0
        %7145 = vperm.xlu0 %7144, %v6974
        %v7146 = vpop.permute.xlu0 %7145
        %7147 = vset.pattern.permute.xlu0 0
        %7148 = vperm.xlu0 %7147, %v6975
        %v7149 = vpop.permute.xlu0 %7148
        %7150 = vset.pattern.permute.xlu0 0
        %7151 = vperm.xlu0 %7150, %v6976
        %v7152 = vpop.permute.xlu0 %7151
        %7153 = vset.pattern.permute.xlu0 0
        %7154 = vperm.xlu0 %7153, %v6977
        %v7155 = vpop.permute.xlu0 %7154
        %7156 = vset.pattern.permute.xlu0 0
        %7157 = vperm.xlu0 %7156, %v6978
        %v7158 = vpop.permute.xlu0 %7157
        %7159 = vset.pattern.permute.xlu0 0
        %7160 = vperm.xlu0 %7159, %v6979
        %v7161 = vpop.permute.xlu0 %7160
        %7162 = vset.pattern.permute.xlu0 0
        %7163 = vperm.xlu0 %7162, %v6980
        %v7164 = vpop.permute.xlu0 %7163
        %7165 = vset.pattern.permute.xlu0 0
        %7166 = vperm.xlu0 %7165, %v6981
        %v7167 = vpop.permute.xlu0 %7166
        %7168 = vset.pattern.permute.xlu0 0
        %7169 = vperm.xlu0 %7168, %v6982
        %v7170 = vpop.permute.xlu0 %7169
        %7171 = vset.pattern.permute.xlu0 0
        %7172 = vperm.xlu0 %7171, %v6983
        %v7173 = vpop.permute.xlu0 %7172
        %7174 = vset.pattern.permute.xlu0 0
        %7175 = vperm.xlu0 %7174, %v6984
        %v7176 = vpop.permute.xlu0 %7175
        %7177 = vset.pattern.permute.xlu0 0
        %7178 = vperm.xlu0 %7177, %v6985
        %v7179 = vpop.permute.xlu0 %7178
        %7180 = vset.pattern.permute.xlu0 0
        %7181 = vperm.xlu0 %7180, %v6986
        %v7182 = vpop.permute.xlu0 %7181
        %7183 = vset.pattern.permute.xlu0 0
        %7184 = vperm.xlu0 %7183, %v6987
        %v7185 = vpop.permute.xlu0 %7184
        %7186 = vset.pattern.permute.xlu0 0
        %7187 = vperm.xlu0 %7186, %v6988
        %v7188 = vpop.permute.xlu0 %7187
        %7189 = vset.pattern.permute.xlu0 0
        %7190 = vperm.xlu0 %7189, %v6989
        %v7191 = vpop.permute.xlu0 %7190
        %7192 = vset.pattern.permute.xlu0 0
        %7193 = vperm.xlu0 %7192, %v6990
        %v7194 = vpop.permute.xlu0 %7193
        %7195 = vset.pattern.permute.xlu0 0
        %7196 = vperm.xlu0 %7195, %v6991
        %v7197 = vpop.permute.xlu0 %7196
        %7198 = vset.pattern.permute.xlu0 0
        %7199 = vperm.xlu0 %7198, %v6992
        %v7200 = vpop.permute.xlu0 %7199
        %7201 = vset.pattern.permute.xlu0 0
        %7202 = vperm.xlu0 %7201, %v6993
        %v7203 = vpop.permute.xlu0 %7202
        %7204 = vset.pattern.permute.xlu0 0
        %7205 = vperm.xlu0 %7204, %v6994
        %v7206 = vpop.permute.xlu0 %7205
        %7207 = vset.pattern.permute.xlu0 0
        %7208 = vperm.xlu0 %7207, %v6995
        %v7209 = vpop.permute.xlu0 %7208
        %7210 = vset.pattern.permute.xlu0 0
        %7211 = vperm.xlu0 %7210, %v6996
        %v7212 = vpop.permute.xlu0 %7211
        %7213 = vset.pattern.permute.xlu0 0
        %7214 = vperm.xlu0 %7213, %v6997
        %v7215 = vpop.permute.xlu0 %7214
        %7216 = vset.pattern.permute.xlu0 0
        %7217 = vperm.xlu0 %7216, %v6998
        %v7218 = vpop.permute.xlu0 %7217
        %7219 = vset.pattern.permute.xlu0 0
        %7220 = vperm.xlu0 %7219, %v6999
        %v7221 = vpop.permute.xlu0 %7220
        %7222 = vset.pattern.permute.xlu0 0
        %7223 = vperm.xlu0 %7222, %v7000
        %v7224 = vpop.permute.xlu0 %7223
        %7225 = vset.pattern.permute.xlu0 0
        %7226 = vperm.xlu0 %7225, %v7001
        %v7227 = vpop.permute.xlu0 %7226
        %7228 = vset.pattern.permute.xlu0 0
        %7229 = vperm.xlu0 %7228, %v7002
        %v7230 = vpop.permute.xlu0 %7229
        %7231 = vset.pattern.permute.xlu0 0
        %7232 = vperm.xlu0 %7231, %v7003
        %v7233 = vpop.permute.xlu0 %7232
        %7234 = vset.pattern.permute.xlu0 0
        %7235 = vperm.xlu0 %7234, %v7004
        %v7236 = vpop.permute.xlu0 %7235
        %7237 = vset.pattern.permute.xlu0 0
        %7238 = vperm.xlu0 %7237, %v7005
        %v7239 = vpop.permute.xlu0 %7238
        %7240 = vset.pattern.permute.xlu0 0
        %7241 = vperm.xlu0 %7240, %v7006
        %v7242 = vpop.permute.xlu0 %7241
        %7243 = vset.pattern.permute.xlu0 0
        %7244 = vperm.xlu0 %7243, %v7007
        %v7245 = vpop.permute.xlu0 %7244
        %7246 = vset.pattern.permute.xlu0 0
        %7247 = vperm.xlu0 %7246, %v7008
        %v7248 = vpop.permute.xlu0 %7247
        %7249 = vset.pattern.permute.xlu0 0
        %7250 = vperm.xlu0 %7249, %v7009
        %v7251 = vpop.permute.xlu0 %7250
        %7252 = vset.pattern.permute.xlu0 0
        %7253 = vperm.xlu0 %7252, %v7010
        %v7254 = vpop.permute.xlu0 %7253
        %7255 = vset.pattern.permute.xlu0 0
        %7256 = vperm.xlu0 %7255, %v7011
        %v7257 = vpop.permute.xlu0 %7256
        %7258 = vset.pattern.permute.xlu0 0
        %7259 = vperm.xlu0 %7258, %v7012
        %v7260 = vpop.permute.xlu0 %7259
        %7261 = vset.pattern.permute.xlu0 0
        %7262 = vperm.xlu0 %7261, %v7013
        %v7263 = vpop.permute.xlu0 %7262
        %7264 = vset.pattern.permute.xlu0 0
        %7265 = vperm.xlu0 %7264, %v7014
        %v7266 = vpop.permute.xlu0 %7265
        %7267 = vset.pattern.permute.xlu0 0
        %7268 = vperm.xlu0 %7267, %v7015
        %v7269 = vpop.permute.xlu0 %7268
        %7270 = vset.pattern.permute.xlu0 0
        %7271 = vperm.xlu0 %7270, %v7016
        %v7272 = vpop.permute.xlu0 %7271
        %v7273 = vperm.slane %v7083, %v4450
        %v7274 = vperm.slane %v7086, %v4450
        %v7275 = vperm.slane %v7089, %v4450
        %v7276 = vperm.slane %v7092, %v4450
        %v7277 = vperm.slane %v7095, %v4450
        %v7278 = vperm.slane %v7098, %v4450
        %v7279 = vperm.slane %v7101, %v4450
        %v7280 = vperm.slane %v7104, %v4450
        %v7281 = vperm.slane %v7107, %v4450
        %v7282 = vperm.slane %v7110, %v4450
        %v7283 = vperm.slane %v7113, %v4450
        %v7284 = vperm.slane %v7116, %v4450
        %v7285 = vperm.slane %v7119, %v4450
        %v7286 = vperm.slane %v7122, %v4450
        %v7287 = vperm.slane %v7125, %v4450
        %v7288 = vperm.slane %v7128, %v4450
        %v7289 = vperm.slane %v7131, %v4450
        %v7290 = vperm.slane %v7134, %v4450
        %v7291 = vperm.slane %v7137, %v4450
        %v7292 = vperm.slane %v7140, %v4450
        %v7293 = vperm.slane %v7143, %v4450
        %v7294 = vperm.slane %v7146, %v4450
        %v7295 = vperm.slane %v7149, %v4450
        %v7296 = vperm.slane %v7152, %v4450
        %v7297 = vperm.slane %v7155, %v4450
        %v7298 = vperm.slane %v7158, %v4450
        %v7299 = vperm.slane %v7161, %v4450
        %v7300 = vperm.slane %v7164, %v4450
        %v7301 = vperm.slane %v7167, %v4450
        %v7302 = vperm.slane %v7170, %v4450
        %v7303 = vperm.slane %v7173, %v4450
        %v7304 = vperm.slane %v7176, %v4450
        %v7305 = vperm.slane %v7179, %v4450
        %v7306 = vperm.slane %v7182, %v4450
        %v7307 = vperm.slane %v7185, %v4450
        %v7308 = vperm.slane %v7188, %v4450
        %v7309 = vperm.slane %v7191, %v4450
        %v7310 = vperm.slane %v7194, %v4450
        %v7311 = vperm.slane %v7197, %v4450
        %v7312 = vperm.slane %v7200, %v4450
        %v7313 = vperm.slane %v7203, %v4450
        %v7314 = vperm.slane %v7206, %v4450
        %v7315 = vperm.slane %v7209, %v4450
        %v7316 = vperm.slane %v7212, %v4450
        %v7317 = vperm.slane %v7215, %v4450
        %v7318 = vperm.slane %v7218, %v4450
        %v7319 = vperm.slane %v7221, %v4450
        %v7320 = vperm.slane %v7224, %v4450
        %v7321 = vperm.slane %v7227, %v4450
        %v7322 = vperm.slane %v7230, %v4450
        %v7323 = vperm.slane %v7233, %v4450
        %v7324 = vperm.slane %v7236, %v4450
        %v7325 = vperm.slane %v7239, %v4450
        %v7326 = vperm.slane %v7242, %v4450
        %v7327 = vperm.slane %v7245, %v4450
        %v7328 = vperm.slane %v7248, %v4450
        %v7329 = vperm.slane %v7251, %v4450
        %v7330 = vperm.slane %v7254, %v4450
        %v7331 = vperm.slane %v7257, %v4450
        %v7332 = vperm.slane %v7260, %v4450
        %v7333 = vperm.slane %v7263, %v4450
        %v7334 = vperm.slane %v7266, %v4450
        %v7335 = vperm.slane %v7269, %v4450
        %v7336 = vperm.slane %v7272, %v4450
        %v7337 = vsel %vm4515, %v7274, %v7273
        %v7338 = vsel %vm4517, %v7275, %v7337
        %v7339 = vsel %vm4519, %v7276, %v7338
        %v7340 = vsel %vm4521, %v7277, %v7339
        %v7341 = vsel %vm4523, %v7278, %v7340
        %v7342 = vsel %vm4525, %v7279, %v7341
        %v7343 = vsel %vm4527, %v7280, %v7342
        %v7344 = vsel %vm4515, %v7282, %v7281
        %v7345 = vsel %vm4517, %v7283, %v7344
        %v7346 = vsel %vm4519, %v7284, %v7345
        %v7347 = vsel %vm4521, %v7285, %v7346
        %v7348 = vsel %vm4523, %v7286, %v7347
        %v7349 = vsel %vm4525, %v7287, %v7348
        %v7350 = vsel %vm4527, %v7288, %v7349
        %v7351 = vsel %vm4515, %v7290, %v7289
        %v7352 = vsel %vm4517, %v7291, %v7351
        %v7353 = vsel %vm4519, %v7292, %v7352
        %v7354 = vsel %vm4521, %v7293, %v7353
        %v7355 = vsel %vm4523, %v7294, %v7354
        %v7356 = vsel %vm4525, %v7295, %v7355
        %v7357 = vsel %vm4527, %v7296, %v7356
        %v7358 = vsel %vm4515, %v7298, %v7297
        %v7359 = vsel %vm4517, %v7299, %v7358
        %v7360 = vsel %vm4519, %v7300, %v7359
        %v7361 = vsel %vm4521, %v7301, %v7360
        %v7362 = vsel %vm4523, %v7302, %v7361
        %v7363 = vsel %vm4525, %v7303, %v7362
        %v7364 = vsel %vm4527, %v7304, %v7363
        %v7365 = vsel %vm4515, %v7306, %v7305
        %v7366 = vsel %vm4517, %v7307, %v7365
        %v7367 = vsel %vm4519, %v7308, %v7366
        %v7368 = vsel %vm4521, %v7309, %v7367
        %v7369 = vsel %vm4523, %v7310, %v7368
        %v7370 = vsel %vm4525, %v7311, %v7369
        %v7371 = vsel %vm4527, %v7312, %v7370
        %v7372 = vsel %vm4515, %v7314, %v7313
        %v7373 = vsel %vm4517, %v7315, %v7372
        %v7374 = vsel %vm4519, %v7316, %v7373
        %v7375 = vsel %vm4521, %v7317, %v7374
        %v7376 = vsel %vm4523, %v7318, %v7375
        %v7377 = vsel %vm4525, %v7319, %v7376
        %v7378 = vsel %vm4527, %v7320, %v7377
        %v7379 = vsel %vm4515, %v7322, %v7321
        %v7380 = vsel %vm4517, %v7323, %v7379
        %v7381 = vsel %vm4519, %v7324, %v7380
        %v7382 = vsel %vm4521, %v7325, %v7381
        %v7383 = vsel %vm4523, %v7326, %v7382
        %v7384 = vsel %vm4525, %v7327, %v7383
        %v7385 = vsel %vm4527, %v7328, %v7384
        %v7386 = vsel %vm4515, %v7330, %v7329
        %v7387 = vsel %vm4517, %v7331, %v7386
        %v7388 = vsel %vm4519, %v7332, %v7387
        %v7389 = vsel %vm4521, %v7333, %v7388
        %v7390 = vsel %vm4523, %v7334, %v7389
        %v7391 = vsel %vm4525, %v7335, %v7390
        %v7392 = vsel %vm4527, %v7336, %v7391
        %v7401 = vsel %vm4586, %v7343, 0.0
        %7402 = vadd.xlane.f32.xlu0 %v7401
        %v7403 = vpop.xlane.xlu0 %7402
        %v7404 = vsel %vm4586, %v7350, 0.0
        %7405 = vadd.xlane.f32.xlu0 %v7404
        %v7406 = vpop.xlane.xlu0 %7405
        %v7407 = vsel %vm4586, %v7357, 0.0
        %7408 = vadd.xlane.f32.xlu0 %v7407
        %v7409 = vpop.xlane.xlu0 %7408
        %v7410 = vsel %vm4586, %v7364, 0.0
        %7411 = vadd.xlane.f32.xlu0 %v7410
        %v7412 = vpop.xlane.xlu0 %7411
        %v7413 = vsel %vm4586, %v7371, 0.0
        %7414 = vadd.xlane.f32.xlu0 %v7413
        %v7415 = vpop.xlane.xlu0 %7414
        %v7416 = vsel %vm4586, %v7378, 0.0
        %7417 = vadd.xlane.f32.xlu0 %v7416
        %v7418 = vpop.xlane.xlu0 %7417
        %v7419 = vsel %vm4586, %v7385, 0.0
        %7420 = vadd.xlane.f32.xlu0 %v7419
        %v7421 = vpop.xlane.xlu0 %7420
        %v7422 = vsel %vm4586, %v7392, 0.0
        %7423 = vadd.xlane.f32.xlu0 %v7422
        %v7424 = vpop.xlane.xlu0 %7423
        %v7425 = vadd.f32 %v7403, 1e-10
        %v7426 = vadd.f32 %v7406, 1e-10
        %v7427 = vadd.f32 %v7409, 1e-10
        %v7428 = vadd.f32 %v7412, 1e-10
        %v7429 = vadd.f32 %v7415, 1e-10
        %v7430 = vadd.f32 %v7418, 1e-10
        %v7431 = vadd.f32 %v7421, 1e-10
        %v7432 = vadd.f32 %v7424, 1e-10
        %v7433 = vrcp.pop %v7425
        %v7434 = vrcp.pop %v7426
        %v7435 = vrcp.pop %v7427
        %v7436 = vrcp.pop %v7428
        %v7437 = vrcp.pop %v7429
        %v7438 = vrcp.pop %v7430
        %v7439 = vrcp.pop %v7431
        %v7440 = vrcp.pop %v7432
        %v7449 = vperm.slane %v7433, 0
        %v7450 = vperm.slane %v7433, 1
        %v7451 = vperm.slane %v7433, 2
        %v7452 = vperm.slane %v7433, 3
        %v7453 = vperm.slane %v7433, 4
        %v7454 = vperm.slane %v7433, 5
        %v7455 = vperm.slane %v7433, 6
        %v7456 = vperm.slane %v7433, 7
        %v7457 = vperm.slane %v7434, 0
        %v7458 = vperm.slane %v7434, 1
        %v7459 = vperm.slane %v7434, 2
        %v7460 = vperm.slane %v7434, 3
        %v7461 = vperm.slane %v7434, 4
        %v7462 = vperm.slane %v7434, 5
        %v7463 = vperm.slane %v7434, 6
        %v7464 = vperm.slane %v7434, 7
        %v7465 = vperm.slane %v7435, 0
        %v7466 = vperm.slane %v7435, 1
        %v7467 = vperm.slane %v7435, 2
        %v7468 = vperm.slane %v7435, 3
        %v7469 = vperm.slane %v7435, 4
        %v7470 = vperm.slane %v7435, 5
        %v7471 = vperm.slane %v7435, 6
        %v7472 = vperm.slane %v7435, 7
        %v7473 = vperm.slane %v7436, 0
        %v7474 = vperm.slane %v7436, 1
        %v7475 = vperm.slane %v7436, 2
        %v7476 = vperm.slane %v7436, 3
        %v7477 = vperm.slane %v7436, 4
        %v7478 = vperm.slane %v7436, 5
        %v7479 = vperm.slane %v7436, 6
        %v7480 = vperm.slane %v7436, 7
        %v7481 = vperm.slane %v7437, 0
        %v7482 = vperm.slane %v7437, 1
        %v7483 = vperm.slane %v7437, 2
        %v7484 = vperm.slane %v7437, 3
        %v7485 = vperm.slane %v7437, 4
        %v7486 = vperm.slane %v7437, 5
        %v7487 = vperm.slane %v7437, 6
        %v7488 = vperm.slane %v7437, 7
        %v7489 = vperm.slane %v7438, 0
        %v7490 = vperm.slane %v7438, 1
        %v7491 = vperm.slane %v7438, 2
        %v7492 = vperm.slane %v7438, 3
        %v7493 = vperm.slane %v7438, 4
        %v7494 = vperm.slane %v7438, 5
        %v7495 = vperm.slane %v7438, 6
        %v7496 = vperm.slane %v7438, 7
        %v7497 = vperm.slane %v7439, 0
        %v7498 = vperm.slane %v7439, 1
        %v7499 = vperm.slane %v7439, 2
        %v7500 = vperm.slane %v7439, 3
        %v7501 = vperm.slane %v7439, 4
        %v7502 = vperm.slane %v7439, 5
        %v7503 = vperm.slane %v7439, 6
        %v7504 = vperm.slane %v7439, 7
        %v7505 = vperm.slane %v7440, 0
        %v7506 = vperm.slane %v7440, 1
        %v7507 = vperm.slane %v7440, 2
        %v7508 = vperm.slane %v7440, 3
        %v7509 = vperm.slane %v7440, 4
        %v7510 = vperm.slane %v7440, 5
        %v7511 = vperm.slane %v7440, 6
        %v7512 = vperm.slane %v7440, 7
        %v7577 = vmul.f32 %v6953, %v7449
        %v7578 = vmul.f32 %v6954, %v7450
        %v7579 = vmul.f32 %v6955, %v7451
        %v7580 = vmul.f32 %v6956, %v7452
        %v7581 = vmul.f32 %v6957, %v7453
        %v7582 = vmul.f32 %v6958, %v7454
        %v7583 = vmul.f32 %v6959, %v7455
        %v7584 = vmul.f32 %v6960, %v7456
        %v7585 = vmul.f32 %v6961, %v7457
        %v7586 = vmul.f32 %v6962, %v7458
        %v7587 = vmul.f32 %v6963, %v7459
        %v7588 = vmul.f32 %v6964, %v7460
        %v7589 = vmul.f32 %v6965, %v7461
        %v7590 = vmul.f32 %v6966, %v7462
        %v7591 = vmul.f32 %v6967, %v7463
        %v7592 = vmul.f32 %v6968, %v7464
        %v7593 = vmul.f32 %v6969, %v7465
        %v7594 = vmul.f32 %v6970, %v7466
        %v7595 = vmul.f32 %v6971, %v7467
        %v7596 = vmul.f32 %v6972, %v7468
        %v7597 = vmul.f32 %v6973, %v7469
        %v7598 = vmul.f32 %v6974, %v7470
        %v7599 = vmul.f32 %v6975, %v7471
        %v7600 = vmul.f32 %v6976, %v7472
        %v7601 = vmul.f32 %v6977, %v7473
        %v7602 = vmul.f32 %v6978, %v7474
        %v7603 = vmul.f32 %v6979, %v7475
        %v7604 = vmul.f32 %v6980, %v7476
        %v7605 = vmul.f32 %v6981, %v7477
        %v7606 = vmul.f32 %v6982, %v7478
        %v7607 = vmul.f32 %v6983, %v7479
        %v7608 = vmul.f32 %v6984, %v7480
        %v7609 = vmul.f32 %v6985, %v7481
        %v7610 = vmul.f32 %v6986, %v7482
        %v7611 = vmul.f32 %v6987, %v7483
        %v7612 = vmul.f32 %v6988, %v7484
        %v7613 = vmul.f32 %v6989, %v7485
        %v7614 = vmul.f32 %v6990, %v7486
        %v7615 = vmul.f32 %v6991, %v7487
        %v7616 = vmul.f32 %v6992, %v7488
        %v7617 = vmul.f32 %v6993, %v7489
        %v7618 = vmul.f32 %v6994, %v7490
        %v7619 = vmul.f32 %v6995, %v7491
        %v7620 = vmul.f32 %v6996, %v7492
        %v7621 = vmul.f32 %v6997, %v7493
        %v7622 = vmul.f32 %v6998, %v7494
        %v7623 = vmul.f32 %v6999, %v7495
        %v7624 = vmul.f32 %v7000, %v7496
        %v7625 = vmul.f32 %v7001, %v7497
        %v7626 = vmul.f32 %v7002, %v7498
        %v7627 = vmul.f32 %v7003, %v7499
        %v7628 = vmul.f32 %v7004, %v7500
        %v7629 = vmul.f32 %v7005, %v7501
        %v7630 = vmul.f32 %v7006, %v7502
        %v7631 = vmul.f32 %v7007, %v7503
        %v7632 = vmul.f32 %v7008, %v7504
        %v7633 = vmul.f32 %v7009, %v7505
        %v7634 = vmul.f32 %v7010, %v7506
        %v7635 = vmul.f32 %v7011, %v7507
        %v7636 = vmul.f32 %v7012, %v7508
        %v7637 = vmul.f32 %v7013, %v7509
        %v7638 = vmul.f32 %v7014, %v7510
        %v7639 = vmul.f32 %v7015, %v7511
        %v7640 = vmul.f32 %v7016, %v7512
        %7642 = vset.pattern.permute.xlu0 0
        %7643 = vperm.xlu0 %7642, %v4763
        %v7644 = vpop.permute.xlu0 %7643
        %7647 = vset.pattern.permute.xlu0 0
        %7648 = vperm.xlu0 %7647, %v4764
        %v7649 = vpop.permute.xlu0 %7648
        %7652 = vset.pattern.permute.xlu0 0
        %7653 = vperm.xlu0 %7652, %v4765
        %v7654 = vpop.permute.xlu0 %7653
        %7657 = vset.pattern.permute.xlu0 0
        %7658 = vperm.xlu0 %7657, %v4766
        %v7659 = vpop.permute.xlu0 %7658
        %7662 = vset.pattern.permute.xlu0 0
        %7663 = vperm.xlu0 %7662, %v4767
        %v7664 = vpop.permute.xlu0 %7663
        %7667 = vset.pattern.permute.xlu0 0
        %7668 = vperm.xlu0 %7667, %v4768
        %v7669 = vpop.permute.xlu0 %7668
        %7672 = vset.pattern.permute.xlu0 0
        %7673 = vperm.xlu0 %7672, %v4769
        %v7674 = vpop.permute.xlu0 %7673
        %7677 = vset.pattern.permute.xlu0 0
        %7678 = vperm.xlu0 %7677, %v4770
        %v7679 = vpop.permute.xlu0 %7678
        %7682 = vset.pattern.permute.xlu0 0
        %7683 = vperm.xlu0 %7682, %v4771
        %v7684 = vpop.permute.xlu0 %7683
        %7687 = vset.pattern.permute.xlu0 0
        %7688 = vperm.xlu0 %7687, %v4772
        %v7689 = vpop.permute.xlu0 %7688
        %7692 = vset.pattern.permute.xlu0 0
        %7693 = vperm.xlu0 %7692, %v4773
        %v7694 = vpop.permute.xlu0 %7693
        %7697 = vset.pattern.permute.xlu0 0
        %7698 = vperm.xlu0 %7697, %v4774
        %v7699 = vpop.permute.xlu0 %7698
        %7702 = vset.pattern.permute.xlu0 0
        %7703 = vperm.xlu0 %7702, %v4775
        %v7704 = vpop.permute.xlu0 %7703
        %7707 = vset.pattern.permute.xlu0 0
        %7708 = vperm.xlu0 %7707, %v4776
        %v7709 = vpop.permute.xlu0 %7708
        %7712 = vset.pattern.permute.xlu0 0
        %7713 = vperm.xlu0 %7712, %v4777
        %v7714 = vpop.permute.xlu0 %7713
        %7717 = vset.pattern.permute.xlu0 0
        %7718 = vperm.xlu0 %7717, %v4778
        %v7719 = vpop.permute.xlu0 %7718
        %7722 = vset.pattern.permute.xlu0 0
        %7723 = vperm.xlu0 %7722, %v4779
        %v7724 = vpop.permute.xlu0 %7723
        %7727 = vset.pattern.permute.xlu0 0
        %7728 = vperm.xlu0 %7727, %v4780
        %v7729 = vpop.permute.xlu0 %7728
        %7732 = vset.pattern.permute.xlu0 0
        %7733 = vperm.xlu0 %7732, %v4781
        %v7734 = vpop.permute.xlu0 %7733
        %7737 = vset.pattern.permute.xlu0 0
        %7738 = vperm.xlu0 %7737, %v4782
        %v7739 = vpop.permute.xlu0 %7738
        %7742 = vset.pattern.permute.xlu0 0
        %7743 = vperm.xlu0 %7742, %v4783
        %v7744 = vpop.permute.xlu0 %7743
        %7747 = vset.pattern.permute.xlu0 0
        %7748 = vperm.xlu0 %7747, %v4784
        %v7749 = vpop.permute.xlu0 %7748
        %7752 = vset.pattern.permute.xlu0 0
        %7753 = vperm.xlu0 %7752, %v4785
        %v7754 = vpop.permute.xlu0 %7753
        %7757 = vset.pattern.permute.xlu0 0
        %7758 = vperm.xlu0 %7757, %v4786
        %v7759 = vpop.permute.xlu0 %7758
        %7762 = vset.pattern.permute.xlu0 0
        %7763 = vperm.xlu0 %7762, %v4787
        %v7764 = vpop.permute.xlu0 %7763
        %7767 = vset.pattern.permute.xlu0 0
        %7768 = vperm.xlu0 %7767, %v4788
        %v7769 = vpop.permute.xlu0 %7768
        %7772 = vset.pattern.permute.xlu0 0
        %7773 = vperm.xlu0 %7772, %v4789
        %v7774 = vpop.permute.xlu0 %7773
        %7777 = vset.pattern.permute.xlu0 0
        %7778 = vperm.xlu0 %7777, %v4790
        %v7779 = vpop.permute.xlu0 %7778
        %7782 = vset.pattern.permute.xlu0 0
        %7783 = vperm.xlu0 %7782, %v4791
        %v7784 = vpop.permute.xlu0 %7783
        %7787 = vset.pattern.permute.xlu0 0
        %7788 = vperm.xlu0 %7787, %v4792
        %v7789 = vpop.permute.xlu0 %7788
        %7792 = vset.pattern.permute.xlu0 0
        %7793 = vperm.xlu0 %7792, %v4793
        %v7794 = vpop.permute.xlu0 %7793
        %7797 = vset.pattern.permute.xlu0 0
        %7798 = vperm.xlu0 %7797, %v4794
        %v7799 = vpop.permute.xlu0 %7798
        %7802 = vset.pattern.permute.xlu0 0
        %7803 = vperm.xlu0 %7802, %v4795
        %v7804 = vpop.permute.xlu0 %7803
        %7807 = vset.pattern.permute.xlu0 0
        %7808 = vperm.xlu0 %7807, %v4796
        %v7809 = vpop.permute.xlu0 %7808
        %7812 = vset.pattern.permute.xlu0 0
        %7813 = vperm.xlu0 %7812, %v4797
        %v7814 = vpop.permute.xlu0 %7813
        %7817 = vset.pattern.permute.xlu0 0
        %7818 = vperm.xlu0 %7817, %v4798
        %v7819 = vpop.permute.xlu0 %7818
        %7822 = vset.pattern.permute.xlu0 0
        %7823 = vperm.xlu0 %7822, %v4799
        %v7824 = vpop.permute.xlu0 %7823
        %7827 = vset.pattern.permute.xlu0 0
        %7828 = vperm.xlu0 %7827, %v4800
        %v7829 = vpop.permute.xlu0 %7828
        %7832 = vset.pattern.permute.xlu0 0
        %7833 = vperm.xlu0 %7832, %v4801
        %v7834 = vpop.permute.xlu0 %7833
        %7837 = vset.pattern.permute.xlu0 0
        %7838 = vperm.xlu0 %7837, %v4802
        %v7839 = vpop.permute.xlu0 %7838
        %7842 = vset.pattern.permute.xlu0 0
        %7843 = vperm.xlu0 %7842, %v4803
        %v7844 = vpop.permute.xlu0 %7843
        %7847 = vset.pattern.permute.xlu0 0
        %7848 = vperm.xlu0 %7847, %v4804
        %v7849 = vpop.permute.xlu0 %7848
        %7852 = vset.pattern.permute.xlu0 0
        %7853 = vperm.xlu0 %7852, %v4805
        %v7854 = vpop.permute.xlu0 %7853
        %7857 = vset.pattern.permute.xlu0 0
        %7858 = vperm.xlu0 %7857, %v4806
        %v7859 = vpop.permute.xlu0 %7858
        %7862 = vset.pattern.permute.xlu0 0
        %7863 = vperm.xlu0 %7862, %v4807
        %v7864 = vpop.permute.xlu0 %7863
        %7867 = vset.pattern.permute.xlu0 0
        %7868 = vperm.xlu0 %7867, %v4808
        %v7869 = vpop.permute.xlu0 %7868
        %7872 = vset.pattern.permute.xlu0 0
        %7873 = vperm.xlu0 %7872, %v4809
        %v7874 = vpop.permute.xlu0 %7873
        %7877 = vset.pattern.permute.xlu0 0
        %7878 = vperm.xlu0 %7877, %v4810
        %v7879 = vpop.permute.xlu0 %7878
        %7882 = vset.pattern.permute.xlu0 0
        %7883 = vperm.xlu0 %7882, %v4811
        %v7884 = vpop.permute.xlu0 %7883
        %7887 = vset.pattern.permute.xlu0 0
        %7888 = vperm.xlu0 %7887, %v4812
        %v7889 = vpop.permute.xlu0 %7888
        %7892 = vset.pattern.permute.xlu0 0
        %7893 = vperm.xlu0 %7892, %v4813
        %v7894 = vpop.permute.xlu0 %7893
        %7897 = vset.pattern.permute.xlu0 0
        %7898 = vperm.xlu0 %7897, %v4814
        %v7899 = vpop.permute.xlu0 %7898
        %7902 = vset.pattern.permute.xlu0 0
        %7903 = vperm.xlu0 %7902, %v4815
        %v7904 = vpop.permute.xlu0 %7903
        %7907 = vset.pattern.permute.xlu0 0
        %7908 = vperm.xlu0 %7907, %v4816
        %v7909 = vpop.permute.xlu0 %7908
        %7912 = vset.pattern.permute.xlu0 0
        %7913 = vperm.xlu0 %7912, %v4817
        %v7914 = vpop.permute.xlu0 %7913
        %7917 = vset.pattern.permute.xlu0 0
        %7918 = vperm.xlu0 %7917, %v4818
        %v7919 = vpop.permute.xlu0 %7918
        %7922 = vset.pattern.permute.xlu0 0
        %7923 = vperm.xlu0 %7922, %v4819
        %v7924 = vpop.permute.xlu0 %7923
        %7927 = vset.pattern.permute.xlu0 0
        %7928 = vperm.xlu0 %7927, %v4820
        %v7929 = vpop.permute.xlu0 %7928
        %7932 = vset.pattern.permute.xlu0 0
        %7933 = vperm.xlu0 %7932, %v4821
        %v7934 = vpop.permute.xlu0 %7933
        %7937 = vset.pattern.permute.xlu0 0
        %7938 = vperm.xlu0 %7937, %v4822
        %v7939 = vpop.permute.xlu0 %7938
        %7942 = vset.pattern.permute.xlu0 0
        %7943 = vperm.xlu0 %7942, %v4823
        %v7944 = vpop.permute.xlu0 %7943
        %7947 = vset.pattern.permute.xlu0 0
        %7948 = vperm.xlu0 %7947, %v4824
        %v7949 = vpop.permute.xlu0 %7948
        %7952 = vset.pattern.permute.xlu0 0
        %7953 = vperm.xlu0 %7952, %v4825
        %v7954 = vpop.permute.xlu0 %7953
        %7957 = vset.pattern.permute.xlu0 0
        %7958 = vperm.xlu0 %7957, %v4826
        %v7959 = vpop.permute.xlu0 %7958
        %v7961 = vmul.f32 %v7644, %v1439
        %v7962 = vmul.f32 %v7649, %v1440
        %v7963 = vmul.f32 %v7654, %v1441
        %v7964 = vmul.f32 %v7659, %v1442
        %v7965 = vmul.f32 %v7664, %v1443
        %v7966 = vmul.f32 %v7669, %v1444
        %v7967 = vmul.f32 %v7674, %v1445
        %v7968 = vmul.f32 %v7679, %v1446
        %v7969 = vmul.f32 %v7684, %v1447
        %v7970 = vmul.f32 %v7689, %v1448
        %v7971 = vmul.f32 %v7694, %v1449
        %v7972 = vmul.f32 %v7699, %v1450
        %v7973 = vmul.f32 %v7704, %v1451
        %v7974 = vmul.f32 %v7709, %v1452
        %v7975 = vmul.f32 %v7714, %v1453
        %v7976 = vmul.f32 %v7719, %v1454
        %v7977 = vmul.f32 %v7724, %v1455
        %v7978 = vmul.f32 %v7729, %v1456
        %v7979 = vmul.f32 %v7734, %v1457
        %v7980 = vmul.f32 %v7739, %v1458
        %v7981 = vmul.f32 %v7744, %v1459
        %v7982 = vmul.f32 %v7749, %v1460
        %v7983 = vmul.f32 %v7754, %v1461
        %v7984 = vmul.f32 %v7759, %v1462
        %v7985 = vmul.f32 %v7764, %v1463
        %v7986 = vmul.f32 %v7769, %v1464
        %v7987 = vmul.f32 %v7774, %v1465
        %v7988 = vmul.f32 %v7779, %v1466
        %v7989 = vmul.f32 %v7784, %v1467
        %v7990 = vmul.f32 %v7789, %v1468
        %v7991 = vmul.f32 %v7794, %v1469
        %v7992 = vmul.f32 %v7799, %v1470
        %v7993 = vmul.f32 %v7804, %v1471
        %v7994 = vmul.f32 %v7809, %v1472
        %v7995 = vmul.f32 %v7814, %v1473
        %v7996 = vmul.f32 %v7819, %v1474
        %v7997 = vmul.f32 %v7824, %v1475
        %v7998 = vmul.f32 %v7829, %v1476
        %v7999 = vmul.f32 %v7834, %v1477
        %v8000 = vmul.f32 %v7839, %v1478
        %v8001 = vmul.f32 %v7844, %v1479
        %v8002 = vmul.f32 %v7849, %v1480
        %v8003 = vmul.f32 %v7854, %v1481
        %v8004 = vmul.f32 %v7859, %v1482
        %v8005 = vmul.f32 %v7864, %v1483
        %v8006 = vmul.f32 %v7869, %v1484
        %v8007 = vmul.f32 %v7874, %v1485
        %v8008 = vmul.f32 %v7879, %v1486
        %v8009 = vmul.f32 %v7884, %v1487
        %v8010 = vmul.f32 %v7889, %v1488
        %v8011 = vmul.f32 %v7894, %v1489
        %v8012 = vmul.f32 %v7899, %v1490
        %v8013 = vmul.f32 %v7904, %v1491
        %v8014 = vmul.f32 %v7909, %v1492
        %v8015 = vmul.f32 %v7914, %v1493
        %v8016 = vmul.f32 %v7919, %v1494
        %v8017 = vmul.f32 %v7924, %v1495
        %v8018 = vmul.f32 %v7929, %v1496
        %v8019 = vmul.f32 %v7934, %v1497
        %v8020 = vmul.f32 %v7939, %v1498
        %v8021 = vmul.f32 %v7944, %v1499
        %v8022 = vmul.f32 %v7949, %v1500
        %v8023 = vmul.f32 %v7954, %v1501
        %v8024 = vmul.f32 %v7959, %v1502
        %v8025 = vsel %vm3223, %v7961, 0.0
        %v8026 = vrot.slane %v8025, 4
        %v8027 = vadd.f32 %v8025, %v8026
        %v8028 = vrot.slane %v8027, 2
        %v8029 = vadd.f32 %v8027, %v8028
        %v8030 = vrot.slane %v8029, 1
        %v8031 = vadd.f32 %v8029, %v8030
        %v8032 = vsel %vm3223, %v7962, 0.0
        %v8033 = vrot.slane %v8032, 4
        %v8034 = vadd.f32 %v8032, %v8033
        %v8035 = vrot.slane %v8034, 2
        %v8036 = vadd.f32 %v8034, %v8035
        %v8037 = vrot.slane %v8036, 1
        %v8038 = vadd.f32 %v8036, %v8037
        %v8039 = vsel %vm3223, %v7963, 0.0
        %v8040 = vrot.slane %v8039, 4
        %v8041 = vadd.f32 %v8039, %v8040
        %v8042 = vrot.slane %v8041, 2
        %v8043 = vadd.f32 %v8041, %v8042
        %v8044 = vrot.slane %v8043, 1
        %v8045 = vadd.f32 %v8043, %v8044
        %v8046 = vsel %vm3223, %v7964, 0.0
        %v8047 = vrot.slane %v8046, 4
        %v8048 = vadd.f32 %v8046, %v8047
        %v8049 = vrot.slane %v8048, 2
        %v8050 = vadd.f32 %v8048, %v8049
        %v8051 = vrot.slane %v8050, 1
        %v8052 = vadd.f32 %v8050, %v8051
        %v8053 = vsel %vm3223, %v7965, 0.0
        %v8054 = vrot.slane %v8053, 4
        %v8055 = vadd.f32 %v8053, %v8054
        %v8056 = vrot.slane %v8055, 2
        %v8057 = vadd.f32 %v8055, %v8056
        %v8058 = vrot.slane %v8057, 1
        %v8059 = vadd.f32 %v8057, %v8058
        %v8060 = vsel %vm3223, %v7966, 0.0
        %v8061 = vrot.slane %v8060, 4
        %v8062 = vadd.f32 %v8060, %v8061
        %v8063 = vrot.slane %v8062, 2
        %v8064 = vadd.f32 %v8062, %v8063
        %v8065 = vrot.slane %v8064, 1
        %v8066 = vadd.f32 %v8064, %v8065
        %v8067 = vsel %vm3223, %v7967, 0.0
        %v8068 = vrot.slane %v8067, 4
        %v8069 = vadd.f32 %v8067, %v8068
        %v8070 = vrot.slane %v8069, 2
        %v8071 = vadd.f32 %v8069, %v8070
        %v8072 = vrot.slane %v8071, 1
        %v8073 = vadd.f32 %v8071, %v8072
        %v8074 = vsel %vm3223, %v7968, 0.0
        %v8075 = vrot.slane %v8074, 4
        %v8076 = vadd.f32 %v8074, %v8075
        %v8077 = vrot.slane %v8076, 2
        %v8078 = vadd.f32 %v8076, %v8077
        %v8079 = vrot.slane %v8078, 1
        %v8080 = vadd.f32 %v8078, %v8079
        %v8081 = vsel %vm3223, %v7969, 0.0
        %v8082 = vrot.slane %v8081, 4
        %v8083 = vadd.f32 %v8081, %v8082
        %v8084 = vrot.slane %v8083, 2
        %v8085 = vadd.f32 %v8083, %v8084
        %v8086 = vrot.slane %v8085, 1
        %v8087 = vadd.f32 %v8085, %v8086
        %v8088 = vsel %vm3223, %v7970, 0.0
        %v8089 = vrot.slane %v8088, 4
        %v8090 = vadd.f32 %v8088, %v8089
        %v8091 = vrot.slane %v8090, 2
        %v8092 = vadd.f32 %v8090, %v8091
        %v8093 = vrot.slane %v8092, 1
        %v8094 = vadd.f32 %v8092, %v8093
        %v8095 = vsel %vm3223, %v7971, 0.0
        %v8096 = vrot.slane %v8095, 4
        %v8097 = vadd.f32 %v8095, %v8096
        %v8098 = vrot.slane %v8097, 2
        %v8099 = vadd.f32 %v8097, %v8098
        %v8100 = vrot.slane %v8099, 1
        %v8101 = vadd.f32 %v8099, %v8100
        %v8102 = vsel %vm3223, %v7972, 0.0
        %v8103 = vrot.slane %v8102, 4
        %v8104 = vadd.f32 %v8102, %v8103
        %v8105 = vrot.slane %v8104, 2
        %v8106 = vadd.f32 %v8104, %v8105
        %v8107 = vrot.slane %v8106, 1
        %v8108 = vadd.f32 %v8106, %v8107
        %v8109 = vsel %vm3223, %v7973, 0.0
        %v8110 = vrot.slane %v8109, 4
        %v8111 = vadd.f32 %v8109, %v8110
        %v8112 = vrot.slane %v8111, 2
        %v8113 = vadd.f32 %v8111, %v8112
        %v8114 = vrot.slane %v8113, 1
        %v8115 = vadd.f32 %v8113, %v8114
        %v8116 = vsel %vm3223, %v7974, 0.0
        %v8117 = vrot.slane %v8116, 4
        %v8118 = vadd.f32 %v8116, %v8117
        %v8119 = vrot.slane %v8118, 2
        %v8120 = vadd.f32 %v8118, %v8119
        %v8121 = vrot.slane %v8120, 1
        %v8122 = vadd.f32 %v8120, %v8121
        %v8123 = vsel %vm3223, %v7975, 0.0
        %v8124 = vrot.slane %v8123, 4
        %v8125 = vadd.f32 %v8123, %v8124
        %v8126 = vrot.slane %v8125, 2
        %v8127 = vadd.f32 %v8125, %v8126
        %v8128 = vrot.slane %v8127, 1
        %v8129 = vadd.f32 %v8127, %v8128
        %v8130 = vsel %vm3223, %v7976, 0.0
        %v8131 = vrot.slane %v8130, 4
        %v8132 = vadd.f32 %v8130, %v8131
        %v8133 = vrot.slane %v8132, 2
        %v8134 = vadd.f32 %v8132, %v8133
        %v8135 = vrot.slane %v8134, 1
        %v8136 = vadd.f32 %v8134, %v8135
        %v8137 = vsel %vm3223, %v7977, 0.0
        %v8138 = vrot.slane %v8137, 4
        %v8139 = vadd.f32 %v8137, %v8138
        %v8140 = vrot.slane %v8139, 2
        %v8141 = vadd.f32 %v8139, %v8140
        %v8142 = vrot.slane %v8141, 1
        %v8143 = vadd.f32 %v8141, %v8142
        %v8144 = vsel %vm3223, %v7978, 0.0
        %v8145 = vrot.slane %v8144, 4
        %v8146 = vadd.f32 %v8144, %v8145
        %v8147 = vrot.slane %v8146, 2
        %v8148 = vadd.f32 %v8146, %v8147
        %v8149 = vrot.slane %v8148, 1
        %v8150 = vadd.f32 %v8148, %v8149
        %v8151 = vsel %vm3223, %v7979, 0.0
        %v8152 = vrot.slane %v8151, 4
        %v8153 = vadd.f32 %v8151, %v8152
        %v8154 = vrot.slane %v8153, 2
        %v8155 = vadd.f32 %v8153, %v8154
        %v8156 = vrot.slane %v8155, 1
        %v8157 = vadd.f32 %v8155, %v8156
        %v8158 = vsel %vm3223, %v7980, 0.0
        %v8159 = vrot.slane %v8158, 4
        %v8160 = vadd.f32 %v8158, %v8159
        %v8161 = vrot.slane %v8160, 2
        %v8162 = vadd.f32 %v8160, %v8161
        %v8163 = vrot.slane %v8162, 1
        %v8164 = vadd.f32 %v8162, %v8163
        %v8165 = vsel %vm3223, %v7981, 0.0
        %v8166 = vrot.slane %v8165, 4
        %v8167 = vadd.f32 %v8165, %v8166
        %v8168 = vrot.slane %v8167, 2
        %v8169 = vadd.f32 %v8167, %v8168
        %v8170 = vrot.slane %v8169, 1
        %v8171 = vadd.f32 %v8169, %v8170
        %v8172 = vsel %vm3223, %v7982, 0.0
        %v8173 = vrot.slane %v8172, 4
        %v8174 = vadd.f32 %v8172, %v8173
        %v8175 = vrot.slane %v8174, 2
        %v8176 = vadd.f32 %v8174, %v8175
        %v8177 = vrot.slane %v8176, 1
        %v8178 = vadd.f32 %v8176, %v8177
        %v8179 = vsel %vm3223, %v7983, 0.0
        %v8180 = vrot.slane %v8179, 4
        %v8181 = vadd.f32 %v8179, %v8180
        %v8182 = vrot.slane %v8181, 2
        %v8183 = vadd.f32 %v8181, %v8182
        %v8184 = vrot.slane %v8183, 1
        %v8185 = vadd.f32 %v8183, %v8184
        %v8186 = vsel %vm3223, %v7984, 0.0
        %v8187 = vrot.slane %v8186, 4
        %v8188 = vadd.f32 %v8186, %v8187
        %v8189 = vrot.slane %v8188, 2
        %v8190 = vadd.f32 %v8188, %v8189
        %v8191 = vrot.slane %v8190, 1
        %v8192 = vadd.f32 %v8190, %v8191
        %v8193 = vsel %vm3223, %v7985, 0.0
        %v8194 = vrot.slane %v8193, 4
        %v8195 = vadd.f32 %v8193, %v8194
        %v8196 = vrot.slane %v8195, 2
        %v8197 = vadd.f32 %v8195, %v8196
        %v8198 = vrot.slane %v8197, 1
        %v8199 = vadd.f32 %v8197, %v8198
        %v8200 = vsel %vm3223, %v7986, 0.0
        %v8201 = vrot.slane %v8200, 4
        %v8202 = vadd.f32 %v8200, %v8201
        %v8203 = vrot.slane %v8202, 2
        %v8204 = vadd.f32 %v8202, %v8203
        %v8205 = vrot.slane %v8204, 1
        %v8206 = vadd.f32 %v8204, %v8205
        %v8207 = vsel %vm3223, %v7987, 0.0
        %v8208 = vrot.slane %v8207, 4
        %v8209 = vadd.f32 %v8207, %v8208
        %v8210 = vrot.slane %v8209, 2
        %v8211 = vadd.f32 %v8209, %v8210
        %v8212 = vrot.slane %v8211, 1
        %v8213 = vadd.f32 %v8211, %v8212
        %v8214 = vsel %vm3223, %v7988, 0.0
        %v8215 = vrot.slane %v8214, 4
        %v8216 = vadd.f32 %v8214, %v8215
        %v8217 = vrot.slane %v8216, 2
        %v8218 = vadd.f32 %v8216, %v8217
        %v8219 = vrot.slane %v8218, 1
        %v8220 = vadd.f32 %v8218, %v8219
        %v8221 = vsel %vm3223, %v7989, 0.0
        %v8222 = vrot.slane %v8221, 4
        %v8223 = vadd.f32 %v8221, %v8222
        %v8224 = vrot.slane %v8223, 2
        %v8225 = vadd.f32 %v8223, %v8224
        %v8226 = vrot.slane %v8225, 1
        %v8227 = vadd.f32 %v8225, %v8226
        %v8228 = vsel %vm3223, %v7990, 0.0
        %v8229 = vrot.slane %v8228, 4
        %v8230 = vadd.f32 %v8228, %v8229
        %v8231 = vrot.slane %v8230, 2
        %v8232 = vadd.f32 %v8230, %v8231
        %v8233 = vrot.slane %v8232, 1
        %v8234 = vadd.f32 %v8232, %v8233
        %v8235 = vsel %vm3223, %v7991, 0.0
        %v8236 = vrot.slane %v8235, 4
        %v8237 = vadd.f32 %v8235, %v8236
        %v8238 = vrot.slane %v8237, 2
        %v8239 = vadd.f32 %v8237, %v8238
        %v8240 = vrot.slane %v8239, 1
        %v8241 = vadd.f32 %v8239, %v8240
        %v8242 = vsel %vm3223, %v7992, 0.0
        %v8243 = vrot.slane %v8242, 4
        %v8244 = vadd.f32 %v8242, %v8243
        %v8245 = vrot.slane %v8244, 2
        %v8246 = vadd.f32 %v8244, %v8245
        %v8247 = vrot.slane %v8246, 1
        %v8248 = vadd.f32 %v8246, %v8247
        %v8249 = vsel %vm3223, %v7993, 0.0
        %v8250 = vrot.slane %v8249, 4
        %v8251 = vadd.f32 %v8249, %v8250
        %v8252 = vrot.slane %v8251, 2
        %v8253 = vadd.f32 %v8251, %v8252
        %v8254 = vrot.slane %v8253, 1
        %v8255 = vadd.f32 %v8253, %v8254
        %v8256 = vsel %vm3223, %v7994, 0.0
        %v8257 = vrot.slane %v8256, 4
        %v8258 = vadd.f32 %v8256, %v8257
        %v8259 = vrot.slane %v8258, 2
        %v8260 = vadd.f32 %v8258, %v8259
        %v8261 = vrot.slane %v8260, 1
        %v8262 = vadd.f32 %v8260, %v8261
        %v8263 = vsel %vm3223, %v7995, 0.0
        %v8264 = vrot.slane %v8263, 4
        %v8265 = vadd.f32 %v8263, %v8264
        %v8266 = vrot.slane %v8265, 2
        %v8267 = vadd.f32 %v8265, %v8266
        %v8268 = vrot.slane %v8267, 1
        %v8269 = vadd.f32 %v8267, %v8268
        %v8270 = vsel %vm3223, %v7996, 0.0
        %v8271 = vrot.slane %v8270, 4
        %v8272 = vadd.f32 %v8270, %v8271
        %v8273 = vrot.slane %v8272, 2
        %v8274 = vadd.f32 %v8272, %v8273
        %v8275 = vrot.slane %v8274, 1
        %v8276 = vadd.f32 %v8274, %v8275
        %v8277 = vsel %vm3223, %v7997, 0.0
        %v8278 = vrot.slane %v8277, 4
        %v8279 = vadd.f32 %v8277, %v8278
        %v8280 = vrot.slane %v8279, 2
        %v8281 = vadd.f32 %v8279, %v8280
        %v8282 = vrot.slane %v8281, 1
        %v8283 = vadd.f32 %v8281, %v8282
        %v8284 = vsel %vm3223, %v7998, 0.0
        %v8285 = vrot.slane %v8284, 4
        %v8286 = vadd.f32 %v8284, %v8285
        %v8287 = vrot.slane %v8286, 2
        %v8288 = vadd.f32 %v8286, %v8287
        %v8289 = vrot.slane %v8288, 1
        %v8290 = vadd.f32 %v8288, %v8289
        %v8291 = vsel %vm3223, %v7999, 0.0
        %v8292 = vrot.slane %v8291, 4
        %v8293 = vadd.f32 %v8291, %v8292
        %v8294 = vrot.slane %v8293, 2
        %v8295 = vadd.f32 %v8293, %v8294
        %v8296 = vrot.slane %v8295, 1
        %v8297 = vadd.f32 %v8295, %v8296
        %v8298 = vsel %vm3223, %v8000, 0.0
        %v8299 = vrot.slane %v8298, 4
        %v8300 = vadd.f32 %v8298, %v8299
        %v8301 = vrot.slane %v8300, 2
        %v8302 = vadd.f32 %v8300, %v8301
        %v8303 = vrot.slane %v8302, 1
        %v8304 = vadd.f32 %v8302, %v8303
        %v8305 = vsel %vm3223, %v8001, 0.0
        %v8306 = vrot.slane %v8305, 4
        %v8307 = vadd.f32 %v8305, %v8306
        %v8308 = vrot.slane %v8307, 2
        %v8309 = vadd.f32 %v8307, %v8308
        %v8310 = vrot.slane %v8309, 1
        %v8311 = vadd.f32 %v8309, %v8310
        %v8312 = vsel %vm3223, %v8002, 0.0
        %v8313 = vrot.slane %v8312, 4
        %v8314 = vadd.f32 %v8312, %v8313
        %v8315 = vrot.slane %v8314, 2
        %v8316 = vadd.f32 %v8314, %v8315
        %v8317 = vrot.slane %v8316, 1
        %v8318 = vadd.f32 %v8316, %v8317
        %v8319 = vsel %vm3223, %v8003, 0.0
        %v8320 = vrot.slane %v8319, 4
        %v8321 = vadd.f32 %v8319, %v8320
        %v8322 = vrot.slane %v8321, 2
        %v8323 = vadd.f32 %v8321, %v8322
        %v8324 = vrot.slane %v8323, 1
        %v8325 = vadd.f32 %v8323, %v8324
        %v8326 = vsel %vm3223, %v8004, 0.0
        %v8327 = vrot.slane %v8326, 4
        %v8328 = vadd.f32 %v8326, %v8327
        %v8329 = vrot.slane %v8328, 2
        %v8330 = vadd.f32 %v8328, %v8329
        %v8331 = vrot.slane %v8330, 1
        %v8332 = vadd.f32 %v8330, %v8331
        %v8333 = vsel %vm3223, %v8005, 0.0
        %v8334 = vrot.slane %v8333, 4
        %v8335 = vadd.f32 %v8333, %v8334
        %v8336 = vrot.slane %v8335, 2
        %v8337 = vadd.f32 %v8335, %v8336
        %v8338 = vrot.slane %v8337, 1
        %v8339 = vadd.f32 %v8337, %v8338
        %v8340 = vsel %vm3223, %v8006, 0.0
        %v8341 = vrot.slane %v8340, 4
        %v8342 = vadd.f32 %v8340, %v8341
        %v8343 = vrot.slane %v8342, 2
        %v8344 = vadd.f32 %v8342, %v8343
        %v8345 = vrot.slane %v8344, 1
        %v8346 = vadd.f32 %v8344, %v8345
        %v8347 = vsel %vm3223, %v8007, 0.0
        %v8348 = vrot.slane %v8347, 4
        %v8349 = vadd.f32 %v8347, %v8348
        %v8350 = vrot.slane %v8349, 2
        %v8351 = vadd.f32 %v8349, %v8350
        %v8352 = vrot.slane %v8351, 1
        %v8353 = vadd.f32 %v8351, %v8352
        %v8354 = vsel %vm3223, %v8008, 0.0
        %v8355 = vrot.slane %v8354, 4
        %v8356 = vadd.f32 %v8354, %v8355
        %v8357 = vrot.slane %v8356, 2
        %v8358 = vadd.f32 %v8356, %v8357
        %v8359 = vrot.slane %v8358, 1
        %v8360 = vadd.f32 %v8358, %v8359
        %v8361 = vsel %vm3223, %v8009, 0.0
        %v8362 = vrot.slane %v8361, 4
        %v8363 = vadd.f32 %v8361, %v8362
        %v8364 = vrot.slane %v8363, 2
        %v8365 = vadd.f32 %v8363, %v8364
        %v8366 = vrot.slane %v8365, 1
        %v8367 = vadd.f32 %v8365, %v8366
        %v8368 = vsel %vm3223, %v8010, 0.0
        %v8369 = vrot.slane %v8368, 4
        %v8370 = vadd.f32 %v8368, %v8369
        %v8371 = vrot.slane %v8370, 2
        %v8372 = vadd.f32 %v8370, %v8371
        %v8373 = vrot.slane %v8372, 1
        %v8374 = vadd.f32 %v8372, %v8373
        %v8375 = vsel %vm3223, %v8011, 0.0
        %v8376 = vrot.slane %v8375, 4
        %v8377 = vadd.f32 %v8375, %v8376
        %v8378 = vrot.slane %v8377, 2
        %v8379 = vadd.f32 %v8377, %v8378
        %v8380 = vrot.slane %v8379, 1
        %v8381 = vadd.f32 %v8379, %v8380
        %v8382 = vsel %vm3223, %v8012, 0.0
        %v8383 = vrot.slane %v8382, 4
        %v8384 = vadd.f32 %v8382, %v8383
        %v8385 = vrot.slane %v8384, 2
        %v8386 = vadd.f32 %v8384, %v8385
        %v8387 = vrot.slane %v8386, 1
        %v8388 = vadd.f32 %v8386, %v8387
        %v8389 = vsel %vm3223, %v8013, 0.0
        %v8390 = vrot.slane %v8389, 4
        %v8391 = vadd.f32 %v8389, %v8390
        %v8392 = vrot.slane %v8391, 2
        %v8393 = vadd.f32 %v8391, %v8392
        %v8394 = vrot.slane %v8393, 1
        %v8395 = vadd.f32 %v8393, %v8394
        %v8396 = vsel %vm3223, %v8014, 0.0
        %v8397 = vrot.slane %v8396, 4
        %v8398 = vadd.f32 %v8396, %v8397
        %v8399 = vrot.slane %v8398, 2
        %v8400 = vadd.f32 %v8398, %v8399
        %v8401 = vrot.slane %v8400, 1
        %v8402 = vadd.f32 %v8400, %v8401
        %v8403 = vsel %vm3223, %v8015, 0.0
        %v8404 = vrot.slane %v8403, 4
        %v8405 = vadd.f32 %v8403, %v8404
        %v8406 = vrot.slane %v8405, 2
        %v8407 = vadd.f32 %v8405, %v8406
        %v8408 = vrot.slane %v8407, 1
        %v8409 = vadd.f32 %v8407, %v8408
        %v8410 = vsel %vm3223, %v8016, 0.0
        %v8411 = vrot.slane %v8410, 4
        %v8412 = vadd.f32 %v8410, %v8411
        %v8413 = vrot.slane %v8412, 2
        %v8414 = vadd.f32 %v8412, %v8413
        %v8415 = vrot.slane %v8414, 1
        %v8416 = vadd.f32 %v8414, %v8415
        %v8417 = vsel %vm3223, %v8017, 0.0
        %v8418 = vrot.slane %v8417, 4
        %v8419 = vadd.f32 %v8417, %v8418
        %v8420 = vrot.slane %v8419, 2
        %v8421 = vadd.f32 %v8419, %v8420
        %v8422 = vrot.slane %v8421, 1
        %v8423 = vadd.f32 %v8421, %v8422
        %v8424 = vsel %vm3223, %v8018, 0.0
        %v8425 = vrot.slane %v8424, 4
        %v8426 = vadd.f32 %v8424, %v8425
        %v8427 = vrot.slane %v8426, 2
        %v8428 = vadd.f32 %v8426, %v8427
        %v8429 = vrot.slane %v8428, 1
        %v8430 = vadd.f32 %v8428, %v8429
        %v8431 = vsel %vm3223, %v8019, 0.0
        %v8432 = vrot.slane %v8431, 4
        %v8433 = vadd.f32 %v8431, %v8432
        %v8434 = vrot.slane %v8433, 2
        %v8435 = vadd.f32 %v8433, %v8434
        %v8436 = vrot.slane %v8435, 1
        %v8437 = vadd.f32 %v8435, %v8436
        %v8438 = vsel %vm3223, %v8020, 0.0
        %v8439 = vrot.slane %v8438, 4
        %v8440 = vadd.f32 %v8438, %v8439
        %v8441 = vrot.slane %v8440, 2
        %v8442 = vadd.f32 %v8440, %v8441
        %v8443 = vrot.slane %v8442, 1
        %v8444 = vadd.f32 %v8442, %v8443
        %v8445 = vsel %vm3223, %v8021, 0.0
        %v8446 = vrot.slane %v8445, 4
        %v8447 = vadd.f32 %v8445, %v8446
        %v8448 = vrot.slane %v8447, 2
        %v8449 = vadd.f32 %v8447, %v8448
        %v8450 = vrot.slane %v8449, 1
        %v8451 = vadd.f32 %v8449, %v8450
        %v8452 = vsel %vm3223, %v8022, 0.0
        %v8453 = vrot.slane %v8452, 4
        %v8454 = vadd.f32 %v8452, %v8453
        %v8455 = vrot.slane %v8454, 2
        %v8456 = vadd.f32 %v8454, %v8455
        %v8457 = vrot.slane %v8456, 1
        %v8458 = vadd.f32 %v8456, %v8457
        %v8459 = vsel %vm3223, %v8023, 0.0
        %v8460 = vrot.slane %v8459, 4
        %v8461 = vadd.f32 %v8459, %v8460
        %v8462 = vrot.slane %v8461, 2
        %v8463 = vadd.f32 %v8461, %v8462
        %v8464 = vrot.slane %v8463, 1
        %v8465 = vadd.f32 %v8463, %v8464
        %v8466 = vsel %vm3223, %v8024, 0.0
        %v8467 = vrot.slane %v8466, 4
        %v8468 = vadd.f32 %v8466, %v8467
        %v8469 = vrot.slane %v8468, 2
        %v8470 = vadd.f32 %v8468, %v8469
        %v8471 = vrot.slane %v8470, 1
        %v8472 = vadd.f32 %v8470, %v8471
        %v8473 = vperm.slane %v7644, %v4450
        %v8474 = vperm.slane %v7649, %v4450
        %v8475 = vperm.slane %v7654, %v4450
        %v8476 = vperm.slane %v7659, %v4450
        %v8477 = vperm.slane %v7664, %v4450
        %v8478 = vperm.slane %v7669, %v4450
        %v8479 = vperm.slane %v7674, %v4450
        %v8480 = vperm.slane %v7679, %v4450
        %v8481 = vperm.slane %v7684, %v4450
        %v8482 = vperm.slane %v7689, %v4450
        %v8483 = vperm.slane %v7694, %v4450
        %v8484 = vperm.slane %v7699, %v4450
        %v8485 = vperm.slane %v7704, %v4450
        %v8486 = vperm.slane %v7709, %v4450
        %v8487 = vperm.slane %v7714, %v4450
        %v8488 = vperm.slane %v7719, %v4450
        %v8489 = vperm.slane %v7724, %v4450
        %v8490 = vperm.slane %v7729, %v4450
        %v8491 = vperm.slane %v7734, %v4450
        %v8492 = vperm.slane %v7739, %v4450
        %v8493 = vperm.slane %v7744, %v4450
        %v8494 = vperm.slane %v7749, %v4450
        %v8495 = vperm.slane %v7754, %v4450
        %v8496 = vperm.slane %v7759, %v4450
        %v8497 = vperm.slane %v7764, %v4450
        %v8498 = vperm.slane %v7769, %v4450
        %v8499 = vperm.slane %v7774, %v4450
        %v8500 = vperm.slane %v7779, %v4450
        %v8501 = vperm.slane %v7784, %v4450
        %v8502 = vperm.slane %v7789, %v4450
        %v8503 = vperm.slane %v7794, %v4450
        %v8504 = vperm.slane %v7799, %v4450
        %v8505 = vperm.slane %v7804, %v4450
        %v8506 = vperm.slane %v7809, %v4450
        %v8507 = vperm.slane %v7814, %v4450
        %v8508 = vperm.slane %v7819, %v4450
        %v8509 = vperm.slane %v7824, %v4450
        %v8510 = vperm.slane %v7829, %v4450
        %v8511 = vperm.slane %v7834, %v4450
        %v8512 = vperm.slane %v7839, %v4450
        %v8513 = vperm.slane %v7844, %v4450
        %v8514 = vperm.slane %v7849, %v4450
        %v8515 = vperm.slane %v7854, %v4450
        %v8516 = vperm.slane %v7859, %v4450
        %v8517 = vperm.slane %v7864, %v4450
        %v8518 = vperm.slane %v7869, %v4450
        %v8519 = vperm.slane %v7874, %v4450
        %v8520 = vperm.slane %v7879, %v4450
        %v8521 = vperm.slane %v7884, %v4450
        %v8522 = vperm.slane %v7889, %v4450
        %v8523 = vperm.slane %v7894, %v4450
        %v8524 = vperm.slane %v7899, %v4450
        %v8525 = vperm.slane %v7904, %v4450
        %v8526 = vperm.slane %v7909, %v4450
        %v8527 = vperm.slane %v7914, %v4450
        %v8528 = vperm.slane %v7919, %v4450
        %v8529 = vperm.slane %v7924, %v4450
        %v8530 = vperm.slane %v7929, %v4450
        %v8531 = vperm.slane %v7934, %v4450
        %v8532 = vperm.slane %v7939, %v4450
        %v8533 = vperm.slane %v7944, %v4450
        %v8534 = vperm.slane %v7949, %v4450
        %v8535 = vperm.slane %v7954, %v4450
        %v8536 = vperm.slane %v7959, %v4450
        %v8537 = vsel %vm4515, %v8474, %v8473
        %v8538 = vsel %vm4517, %v8475, %v8537
        %v8539 = vsel %vm4519, %v8476, %v8538
        %v8540 = vsel %vm4521, %v8477, %v8539
        %v8541 = vsel %vm4523, %v8478, %v8540
        %v8542 = vsel %vm4525, %v8479, %v8541
        %v8543 = vsel %vm4527, %v8480, %v8542
        %v8544 = vsel %vm4515, %v8482, %v8481
        %v8545 = vsel %vm4517, %v8483, %v8544
        %v8546 = vsel %vm4519, %v8484, %v8545
        %v8547 = vsel %vm4521, %v8485, %v8546
        %v8548 = vsel %vm4523, %v8486, %v8547
        %v8549 = vsel %vm4525, %v8487, %v8548
        %v8550 = vsel %vm4527, %v8488, %v8549
        %v8551 = vsel %vm4515, %v8490, %v8489
        %v8552 = vsel %vm4517, %v8491, %v8551
        %v8553 = vsel %vm4519, %v8492, %v8552
        %v8554 = vsel %vm4521, %v8493, %v8553
        %v8555 = vsel %vm4523, %v8494, %v8554
        %v8556 = vsel %vm4525, %v8495, %v8555
        %v8557 = vsel %vm4527, %v8496, %v8556
        %v8558 = vsel %vm4515, %v8498, %v8497
        %v8559 = vsel %vm4517, %v8499, %v8558
        %v8560 = vsel %vm4519, %v8500, %v8559
        %v8561 = vsel %vm4521, %v8501, %v8560
        %v8562 = vsel %vm4523, %v8502, %v8561
        %v8563 = vsel %vm4525, %v8503, %v8562
        %v8564 = vsel %vm4527, %v8504, %v8563
        %v8565 = vsel %vm4515, %v8506, %v8505
        %v8566 = vsel %vm4517, %v8507, %v8565
        %v8567 = vsel %vm4519, %v8508, %v8566
        %v8568 = vsel %vm4521, %v8509, %v8567
        %v8569 = vsel %vm4523, %v8510, %v8568
        %v8570 = vsel %vm4525, %v8511, %v8569
        %v8571 = vsel %vm4527, %v8512, %v8570
        %v8572 = vsel %vm4515, %v8514, %v8513
        %v8573 = vsel %vm4517, %v8515, %v8572
        %v8574 = vsel %vm4519, %v8516, %v8573
        %v8575 = vsel %vm4521, %v8517, %v8574
        %v8576 = vsel %vm4523, %v8518, %v8575
        %v8577 = vsel %vm4525, %v8519, %v8576
        %v8578 = vsel %vm4527, %v8520, %v8577
        %v8579 = vsel %vm4515, %v8522, %v8521
        %v8580 = vsel %vm4517, %v8523, %v8579
        %v8581 = vsel %vm4519, %v8524, %v8580
        %v8582 = vsel %vm4521, %v8525, %v8581
        %v8583 = vsel %vm4523, %v8526, %v8582
        %v8584 = vsel %vm4525, %v8527, %v8583
        %v8585 = vsel %vm4527, %v8528, %v8584
        %v8586 = vsel %vm4515, %v8530, %v8529
        %v8587 = vsel %vm4517, %v8531, %v8586
        %v8588 = vsel %vm4519, %v8532, %v8587
        %v8589 = vsel %vm4521, %v8533, %v8588
        %v8590 = vsel %vm4523, %v8534, %v8589
        %v8591 = vsel %vm4525, %v8535, %v8590
        %v8592 = vsel %vm4527, %v8536, %v8591
        %v8601 = vsel %vm4586, %v8543, 0.0
        %8602 = vadd.xlane.f32.xlu0 %v8601
        %v8603 = vpop.xlane.xlu0 %8602
        %v8604 = vsel %vm4586, %v8550, 0.0
        %8605 = vadd.xlane.f32.xlu0 %v8604
        %v8606 = vpop.xlane.xlu0 %8605
        %v8607 = vsel %vm4586, %v8557, 0.0
        %8608 = vadd.xlane.f32.xlu0 %v8607
        %v8609 = vpop.xlane.xlu0 %8608
        %v8610 = vsel %vm4586, %v8564, 0.0
        %8611 = vadd.xlane.f32.xlu0 %v8610
        %v8612 = vpop.xlane.xlu0 %8611
        %v8613 = vsel %vm4586, %v8571, 0.0
        %8614 = vadd.xlane.f32.xlu0 %v8613
        %v8615 = vpop.xlane.xlu0 %8614
        %v8616 = vsel %vm4586, %v8578, 0.0
        %8617 = vadd.xlane.f32.xlu0 %v8616
        %v8618 = vpop.xlane.xlu0 %8617
        %v8619 = vsel %vm4586, %v8585, 0.0
        %8620 = vadd.xlane.f32.xlu0 %v8619
        %v8621 = vpop.xlane.xlu0 %8620
        %v8622 = vsel %vm4586, %v8592, 0.0
        %8623 = vadd.xlane.f32.xlu0 %v8622
        %v8624 = vpop.xlane.xlu0 %8623
        %v8625 = vld [vmem:[%s5] sm:$0xf]
        %v8626 = vld [vmem:[%s5 + $0x4] sm:$0xf]
        %v8627 = vld [vmem:[%s5 + $0x8] sm:$0xf]
        %v8628 = vld [vmem:[%s5 + $0xc] sm:$0xf]
        %v8629 = vpack.c.bf16 %v8031, %v8031
        %v8630 = vpack.c.bf16 %v8038, %v8038
        %v8631 = vpack.c.bf16 %v8045, %v8045
        %v8632 = vpack.c.bf16 %v8052, %v8052
        %v8633 = vpack.c.bf16 %v8059, %v8059
        %v8634 = vpack.c.bf16 %v8066, %v8066
        %v8635 = vpack.c.bf16 %v8073, %v8073
        %v8636 = vpack.c.bf16 %v8080, %v8080
        %v8637 = vpack.c.bf16 %v8087, %v8087
        %v8638 = vpack.c.bf16 %v8094, %v8094
        %v8639 = vpack.c.bf16 %v8101, %v8101
        %v8640 = vpack.c.bf16 %v8108, %v8108
        %v8641 = vpack.c.bf16 %v8115, %v8115
        %v8642 = vpack.c.bf16 %v8122, %v8122
        %v8643 = vpack.c.bf16 %v8129, %v8129
        %v8644 = vpack.c.bf16 %v8136, %v8136
        %v8645 = vpack.c.bf16 %v8143, %v8143
        %v8646 = vpack.c.bf16 %v8150, %v8150
        %v8647 = vpack.c.bf16 %v8157, %v8157
        %v8648 = vpack.c.bf16 %v8164, %v8164
        %v8649 = vpack.c.bf16 %v8171, %v8171
        %v8650 = vpack.c.bf16 %v8178, %v8178
        %v8651 = vpack.c.bf16 %v8185, %v8185
        %v8652 = vpack.c.bf16 %v8192, %v8192
        %v8653 = vpack.c.bf16 %v8199, %v8199
        %v8654 = vpack.c.bf16 %v8206, %v8206
        %v8655 = vpack.c.bf16 %v8213, %v8213
        %v8656 = vpack.c.bf16 %v8220, %v8220
        %v8657 = vpack.c.bf16 %v8227, %v8227
        %v8658 = vpack.c.bf16 %v8234, %v8234
        %v8659 = vpack.c.bf16 %v8241, %v8241
        %v8660 = vpack.c.bf16 %v8248, %v8248
        %v8661 = vpack.c.bf16 %v8255, %v8255
        %v8662 = vpack.c.bf16 %v8262, %v8262
        %v8663 = vpack.c.bf16 %v8269, %v8269
        %v8664 = vpack.c.bf16 %v8276, %v8276
        %v8665 = vpack.c.bf16 %v8283, %v8283
        %v8666 = vpack.c.bf16 %v8290, %v8290
        %v8667 = vpack.c.bf16 %v8297, %v8297
        %v8668 = vpack.c.bf16 %v8304, %v8304
        %v8669 = vpack.c.bf16 %v8311, %v8311
        %v8670 = vpack.c.bf16 %v8318, %v8318
        %v8671 = vpack.c.bf16 %v8325, %v8325
        %v8672 = vpack.c.bf16 %v8332, %v8332
        %v8673 = vpack.c.bf16 %v8339, %v8339
        %v8674 = vpack.c.bf16 %v8346, %v8346
        %v8675 = vpack.c.bf16 %v8353, %v8353
        %v8676 = vpack.c.bf16 %v8360, %v8360
        %v8677 = vpack.c.bf16 %v8367, %v8367
        %v8678 = vpack.c.bf16 %v8374, %v8374
        %v8679 = vpack.c.bf16 %v8381, %v8381
        %v8680 = vpack.c.bf16 %v8388, %v8388
        %v8681 = vpack.c.bf16 %v8395, %v8395
        %v8682 = vpack.c.bf16 %v8402, %v8402
        %v8683 = vpack.c.bf16 %v8409, %v8409
        %v8684 = vpack.c.bf16 %v8416, %v8416
        %v8685 = vpack.c.bf16 %v8423, %v8423
        %v8686 = vpack.c.bf16 %v8430, %v8430
        %v8687 = vpack.c.bf16 %v8437, %v8437
        %v8688 = vpack.c.bf16 %v8444, %v8444
        %v8689 = vpack.c.bf16 %v8451, %v8451
        %v8690 = vpack.c.bf16 %v8458, %v8458
        %v8691 = vpack.c.bf16 %v8465, %v8465
        %v8692 = vpack.c.bf16 %v8472, %v8472
        %v8693 = vld [vmem:[%s7 + $0x4] sm:$0x1]
        %v8694 = vperm.slane %v8693, 0
        %v8695 = vmul.f32 %v8603, %v8694
        %v8696 = vmul.f32 %v8606, %v8694
        %v8697 = vmul.f32 %v8609, %v8694
        %v8698 = vmul.f32 %v8612, %v8694
        %v8699 = vmul.f32 %v8615, %v8694
        %v8700 = vmul.f32 %v8618, %v8694
        %v8701 = vmul.f32 %v8621, %v8694
        %v8702 = vmul.f32 %v8624, %v8694
        %v8767 = vunpack.c.l.b16 %v8629
        %v8768 = vunpack.c.l.b16 %v8630
        %v8769 = vunpack.c.l.b16 %v8631
        %v8770 = vunpack.c.l.b16 %v8632
        %v8771 = vunpack.c.l.b16 %v8633
        %v8772 = vunpack.c.l.b16 %v8634
        %v8773 = vunpack.c.l.b16 %v8635
        %v8774 = vunpack.c.l.b16 %v8636
        %v8775 = vunpack.c.l.b16 %v8637
        %v8776 = vunpack.c.l.b16 %v8638
        %v8777 = vunpack.c.l.b16 %v8639
        %v8778 = vunpack.c.l.b16 %v8640
        %v8779 = vunpack.c.l.b16 %v8641
        %v8780 = vunpack.c.l.b16 %v8642
        %v8781 = vunpack.c.l.b16 %v8643
        %v8782 = vunpack.c.l.b16 %v8644
        %v8783 = vunpack.c.l.b16 %v8645
        %v8784 = vunpack.c.l.b16 %v8646
        %v8785 = vunpack.c.l.b16 %v8647
        %v8786 = vunpack.c.l.b16 %v8648
        %v8787 = vunpack.c.l.b16 %v8649
        %v8788 = vunpack.c.l.b16 %v8650
        %v8789 = vunpack.c.l.b16 %v8651
        %v8790 = vunpack.c.l.b16 %v8652
        %v8791 = vunpack.c.l.b16 %v8653
        %v8792 = vunpack.c.l.b16 %v8654
        %v8793 = vunpack.c.l.b16 %v8655
        %v8794 = vunpack.c.l.b16 %v8656
        %v8795 = vunpack.c.l.b16 %v8657
        %v8796 = vunpack.c.l.b16 %v8658
        %v8797 = vunpack.c.l.b16 %v8659
        %v8798 = vunpack.c.l.b16 %v8660
        %v8799 = vunpack.c.l.b16 %v8661
        %v8800 = vunpack.c.l.b16 %v8662
        %v8801 = vunpack.c.l.b16 %v8663
        %v8802 = vunpack.c.l.b16 %v8664
        %v8803 = vunpack.c.l.b16 %v8665
        %v8804 = vunpack.c.l.b16 %v8666
        %v8805 = vunpack.c.l.b16 %v8667
        %v8806 = vunpack.c.l.b16 %v8668
        %v8807 = vunpack.c.l.b16 %v8669
        %v8808 = vunpack.c.l.b16 %v8670
        %v8809 = vunpack.c.l.b16 %v8671
        %v8810 = vunpack.c.l.b16 %v8672
        %v8811 = vunpack.c.l.b16 %v8673
        %v8812 = vunpack.c.l.b16 %v8674
        %v8813 = vunpack.c.l.b16 %v8675
        %v8814 = vunpack.c.l.b16 %v8676
        %v8815 = vunpack.c.l.b16 %v8677
        %v8816 = vunpack.c.l.b16 %v8678
        %v8817 = vunpack.c.l.b16 %v8679
        %v8818 = vunpack.c.l.b16 %v8680
        %v8819 = vunpack.c.l.b16 %v8681
        %v8820 = vunpack.c.l.b16 %v8682
        %v8821 = vunpack.c.l.b16 %v8683
        %v8822 = vunpack.c.l.b16 %v8684
        %v8823 = vunpack.c.l.b16 %v8685
        %v8824 = vunpack.c.l.b16 %v8686
        %v8825 = vunpack.c.l.b16 %v8687
        %v8826 = vunpack.c.l.b16 %v8688
        %v8827 = vunpack.c.l.b16 %v8689
        %v8828 = vunpack.c.l.b16 %v8690
        %v8829 = vunpack.c.l.b16 %v8691
        %v8830 = vunpack.c.l.b16 %v8692
        %v8831 = vsel %vm4515, %v8768, %v8767
        %v8832 = vsel %vm4517, %v8769, %v8831
        %v8833 = vsel %vm4519, %v8770, %v8832
        %v8834 = vsel %vm4521, %v8771, %v8833
        %v8835 = vsel %vm4523, %v8772, %v8834
        %v8836 = vsel %vm4525, %v8773, %v8835
        %v8837 = vsel %vm4527, %v8774, %v8836
        %v8838 = vsel %vm4515, %v8776, %v8775
        %v8839 = vsel %vm4517, %v8777, %v8838
        %v8840 = vsel %vm4519, %v8778, %v8839
        %v8841 = vsel %vm4521, %v8779, %v8840
        %v8842 = vsel %vm4523, %v8780, %v8841
        %v8843 = vsel %vm4525, %v8781, %v8842
        %v8844 = vsel %vm4527, %v8782, %v8843
        %v8845 = vsel %vm4515, %v8784, %v8783
        %v8846 = vsel %vm4517, %v8785, %v8845
        %v8847 = vsel %vm4519, %v8786, %v8846
        %v8848 = vsel %vm4521, %v8787, %v8847
        %v8849 = vsel %vm4523, %v8788, %v8848
        %v8850 = vsel %vm4525, %v8789, %v8849
        %v8851 = vsel %vm4527, %v8790, %v8850
        %v8852 = vsel %vm4515, %v8792, %v8791
        %v8853 = vsel %vm4517, %v8793, %v8852
        %v8854 = vsel %vm4519, %v8794, %v8853
        %v8855 = vsel %vm4521, %v8795, %v8854
        %v8856 = vsel %vm4523, %v8796, %v8855
        %v8857 = vsel %vm4525, %v8797, %v8856
        %v8858 = vsel %vm4527, %v8798, %v8857
        %v8859 = vsel %vm4515, %v8800, %v8799
        %v8860 = vsel %vm4517, %v8801, %v8859
        %v8861 = vsel %vm4519, %v8802, %v8860
        %v8862 = vsel %vm4521, %v8803, %v8861
        %v8863 = vsel %vm4523, %v8804, %v8862
        %v8864 = vsel %vm4525, %v8805, %v8863
        %v8865 = vsel %vm4527, %v8806, %v8864
        %v8866 = vsel %vm4515, %v8808, %v8807
        %v8867 = vsel %vm4517, %v8809, %v8866
        %v8868 = vsel %vm4519, %v8810, %v8867
        %v8869 = vsel %vm4521, %v8811, %v8868
        %v8870 = vsel %vm4523, %v8812, %v8869
        %v8871 = vsel %vm4525, %v8813, %v8870
        %v8872 = vsel %vm4527, %v8814, %v8871
        %v8873 = vsel %vm4515, %v8816, %v8815
        %v8874 = vsel %vm4517, %v8817, %v8873
        %v8875 = vsel %vm4519, %v8818, %v8874
        %v8876 = vsel %vm4521, %v8819, %v8875
        %v8877 = vsel %vm4523, %v8820, %v8876
        %v8878 = vsel %vm4525, %v8821, %v8877
        %v8879 = vsel %vm4527, %v8822, %v8878
        %v8880 = vsel %vm4515, %v8824, %v8823
        %v8881 = vsel %vm4517, %v8825, %v8880
        %v8882 = vsel %vm4519, %v8826, %v8881
        %v8883 = vsel %vm4521, %v8827, %v8882
        %v8884 = vsel %vm4523, %v8828, %v8883
        %v8885 = vsel %vm4525, %v8829, %v8884
        %v8886 = vsel %vm4527, %v8830, %v8885
        %v8887 = vpack.c.b16 %v8844, %v8837
        %v8888 = vpack.c.b16 %v8858, %v8851
        %v8889 = vpack.c.b16 %v8872, %v8865
        %v8890 = vpack.c.b16 %v8886, %v8879
        %v8895 = vunpack.c.l.b16 %v8625
        %v8896 = vunpack.c.l.b16 %v8626
        %v8897 = vunpack.c.l.b16 %v8627
        %v8898 = vunpack.c.l.b16 %v8628
        %v8899 = vpack.c.b16 %v8896, %v8895
        %v8900 = vpack.c.b16 %v8898, %v8897
        %v8904 = vsel %vm3223, %v8887, 0
        %v8907 = vsel %vm3223, %v8888, 0
        %v8910 = vsel %vm3223, %v8889, 0
        %v8913 = vsel %vm3223, %v8890, 0
        %8915 = vmatpush.bf16.msra.mxu0 0
        %8916 = vmatpush.bf16.msra.mxu0 0
        %8917 = vmatpush.bf16.msra.mxu0 0
        %8918 = vmatpush.bf16.msra.mxu0 0
        %8919 = vmatpush.bf16.msra.mxu0 0
        %8920 = vmatpush.bf16.msra.mxu0 0
        %8921 = vmatpush.bf16.msra.mxu0 %v8900
        %8922 = vmatpush.bf16.msra.mxu0 %v8899
        %8923 = vmatmul.bf16.gmra.mxu0 %v8904
        %v8924 = vpop.f32.mrf.mxu0
        %v8925 = vadd.f32 %v8695, %v8924
        %v8926 = vpop.f32.mrf.mxu0
        %v8927 = vadd.f32 %v8696, %v8926
        %8928 = vmatmul.bf16.gmra.mxu0 %v8907
        %v8929 = vpop.f32.mrf.mxu0
        %v8930 = vadd.f32 %v8697, %v8929
        %v8931 = vpop.f32.mrf.mxu0
        %v8932 = vadd.f32 %v8698, %v8931
        %8933 = vmatmul.bf16.gmra.mxu0 %v8910
        %v8934 = vpop.f32.mrf.mxu0
        %v8935 = vadd.f32 %v8699, %v8934
        %v8936 = vpop.f32.mrf.mxu0
        %v8937 = vadd.f32 %v8700, %v8936
        %8938 = vmatmul.bf16.gmra.mxu0 %v8913
        %v8939 = vpop.f32.mrf.mxu0
        %v8940 = vadd.f32 %v8701, %v8939
        %v8941 = vpop.f32.mrf.mxu0
        %v8942 = vadd.f32 %v8702, %v8941
        %8943 = vdwg.mxu0
        %v8944 = vld [vmem:[%s7 + $0x5] sm:$0x1]
        %v8945 = vperm.slane %v8944, 0
        %v8946 = vadd.f32 %v8925, %v8945
        %v8947 = vadd.f32 %v8927, %v8945
        %v8948 = vadd.f32 %v8930, %v8945
        %v8949 = vadd.f32 %v8932, %v8945
        %v8950 = vadd.f32 %v8935, %v8945
        %v8951 = vadd.f32 %v8937, %v8945
        %v8952 = vadd.f32 %v8940, %v8945
        %v8953 = vadd.f32 %v8942, %v8945
        %v8954 = vmax.f32 %v8946, 0.0
        %v8955 = vmax.f32 %v8947, 0.0
        %v8956 = vmax.f32 %v8948, 0.0
        %v8957 = vmax.f32 %v8949, 0.0
        %v8958 = vmax.f32 %v8950, 0.0
        %v8959 = vmax.f32 %v8951, 0.0
        %v8960 = vmax.f32 %v8952, 0.0
        %v8961 = vmax.f32 %v8953, 0.0
        %8963 = vset.pattern.permute.xlu0 0
        %8964 = vperm.xlu0 %8963, %v7577
        %v8965 = vpop.permute.xlu0 %8964
        %8968 = vset.pattern.permute.xlu0 0
        %8969 = vperm.xlu0 %8968, %v7578
        %v8970 = vpop.permute.xlu0 %8969
        %8973 = vset.pattern.permute.xlu0 0
        %8974 = vperm.xlu0 %8973, %v7579
        %v8975 = vpop.permute.xlu0 %8974
        %8978 = vset.pattern.permute.xlu0 0
        %8979 = vperm.xlu0 %8978, %v7580
        %v8980 = vpop.permute.xlu0 %8979
        %8983 = vset.pattern.permute.xlu0 0
        %8984 = vperm.xlu0 %8983, %v7581
        %v8985 = vpop.permute.xlu0 %8984
        %8988 = vset.pattern.permute.xlu0 0
        %8989 = vperm.xlu0 %8988, %v7582
        %v8990 = vpop.permute.xlu0 %8989
        %8993 = vset.pattern.permute.xlu0 0
        %8994 = vperm.xlu0 %8993, %v7583
        %v8995 = vpop.permute.xlu0 %8994
        %8998 = vset.pattern.permute.xlu0 0
        %8999 = vperm.xlu0 %8998, %v7584
        %v9000 = vpop.permute.xlu0 %8999
        %9003 = vset.pattern.permute.xlu0 0
        %9004 = vperm.xlu0 %9003, %v7585
        %v9005 = vpop.permute.xlu0 %9004
        %9008 = vset.pattern.permute.xlu0 0
        %9009 = vperm.xlu0 %9008, %v7586
        %v9010 = vpop.permute.xlu0 %9009
        %9013 = vset.pattern.permute.xlu0 0
        %9014 = vperm.xlu0 %9013, %v7587
        %v9015 = vpop.permute.xlu0 %9014
        %9018 = vset.pattern.permute.xlu0 0
        %9019 = vperm.xlu0 %9018, %v7588
        %v9020 = vpop.permute.xlu0 %9019
        %9023 = vset.pattern.permute.xlu0 0
        %9024 = vperm.xlu0 %9023, %v7589
        %v9025 = vpop.permute.xlu0 %9024
        %9028 = vset.pattern.permute.xlu0 0
        %9029 = vperm.xlu0 %9028, %v7590
        %v9030 = vpop.permute.xlu0 %9029
        %9033 = vset.pattern.permute.xlu0 0
        %9034 = vperm.xlu0 %9033, %v7591
        %v9035 = vpop.permute.xlu0 %9034
        %9038 = vset.pattern.permute.xlu0 0
        %9039 = vperm.xlu0 %9038, %v7592
        %v9040 = vpop.permute.xlu0 %9039
        %9043 = vset.pattern.permute.xlu0 0
        %9044 = vperm.xlu0 %9043, %v7593
        %v9045 = vpop.permute.xlu0 %9044
        %9048 = vset.pattern.permute.xlu0 0
        %9049 = vperm.xlu0 %9048, %v7594
        %v9050 = vpop.permute.xlu0 %9049
        %9053 = vset.pattern.permute.xlu0 0
        %9054 = vperm.xlu0 %9053, %v7595
        %v9055 = vpop.permute.xlu0 %9054
        %9058 = vset.pattern.permute.xlu0 0
        %9059 = vperm.xlu0 %9058, %v7596
        %v9060 = vpop.permute.xlu0 %9059
        %9063 = vset.pattern.permute.xlu0 0
        %9064 = vperm.xlu0 %9063, %v7597
        %v9065 = vpop.permute.xlu0 %9064
        %9068 = vset.pattern.permute.xlu0 0
        %9069 = vperm.xlu0 %9068, %v7598
        %v9070 = vpop.permute.xlu0 %9069
        %9073 = vset.pattern.permute.xlu0 0
        %9074 = vperm.xlu0 %9073, %v7599
        %v9075 = vpop.permute.xlu0 %9074
        %9078 = vset.pattern.permute.xlu0 0
        %9079 = vperm.xlu0 %9078, %v7600
        %v9080 = vpop.permute.xlu0 %9079
        %9083 = vset.pattern.permute.xlu0 0
        %9084 = vperm.xlu0 %9083, %v7601
        %v9085 = vpop.permute.xlu0 %9084
        %9088 = vset.pattern.permute.xlu0 0
        %9089 = vperm.xlu0 %9088, %v7602
        %v9090 = vpop.permute.xlu0 %9089
        %9093 = vset.pattern.permute.xlu0 0
        %9094 = vperm.xlu0 %9093, %v7603
        %v9095 = vpop.permute.xlu0 %9094
        %9098 = vset.pattern.permute.xlu0 0
        %9099 = vperm.xlu0 %9098, %v7604
        %v9100 = vpop.permute.xlu0 %9099
        %9103 = vset.pattern.permute.xlu0 0
        %9104 = vperm.xlu0 %9103, %v7605
        %v9105 = vpop.permute.xlu0 %9104
        %9108 = vset.pattern.permute.xlu0 0
        %9109 = vperm.xlu0 %9108, %v7606
        %v9110 = vpop.permute.xlu0 %9109
        %9113 = vset.pattern.permute.xlu0 0
        %9114 = vperm.xlu0 %9113, %v7607
        %v9115 = vpop.permute.xlu0 %9114
        %9118 = vset.pattern.permute.xlu0 0
        %9119 = vperm.xlu0 %9118, %v7608
        %v9120 = vpop.permute.xlu0 %9119
        %9123 = vset.pattern.permute.xlu0 0
        %9124 = vperm.xlu0 %9123, %v7609
        %v9125 = vpop.permute.xlu0 %9124
        %9128 = vset.pattern.permute.xlu0 0
        %9129 = vperm.xlu0 %9128, %v7610
        %v9130 = vpop.permute.xlu0 %9129
        %9133 = vset.pattern.permute.xlu0 0
        %9134 = vperm.xlu0 %9133, %v7611
        %v9135 = vpop.permute.xlu0 %9134
        %9138 = vset.pattern.permute.xlu0 0
        %9139 = vperm.xlu0 %9138, %v7612
        %v9140 = vpop.permute.xlu0 %9139
        %9143 = vset.pattern.permute.xlu0 0
        %9144 = vperm.xlu0 %9143, %v7613
        %v9145 = vpop.permute.xlu0 %9144
        %9148 = vset.pattern.permute.xlu0 0
        %9149 = vperm.xlu0 %9148, %v7614
        %v9150 = vpop.permute.xlu0 %9149
        %9153 = vset.pattern.permute.xlu0 0
        %9154 = vperm.xlu0 %9153, %v7615
        %v9155 = vpop.permute.xlu0 %9154
        %9158 = vset.pattern.permute.xlu0 0
        %9159 = vperm.xlu0 %9158, %v7616
        %v9160 = vpop.permute.xlu0 %9159
        %9163 = vset.pattern.permute.xlu0 0
        %9164 = vperm.xlu0 %9163, %v7617
        %v9165 = vpop.permute.xlu0 %9164
        %9168 = vset.pattern.permute.xlu0 0
        %9169 = vperm.xlu0 %9168, %v7618
        %v9170 = vpop.permute.xlu0 %9169
        %9173 = vset.pattern.permute.xlu0 0
        %9174 = vperm.xlu0 %9173, %v7619
        %v9175 = vpop.permute.xlu0 %9174
        %9178 = vset.pattern.permute.xlu0 0
        %9179 = vperm.xlu0 %9178, %v7620
        %v9180 = vpop.permute.xlu0 %9179
        %9183 = vset.pattern.permute.xlu0 0
        %9184 = vperm.xlu0 %9183, %v7621
        %v9185 = vpop.permute.xlu0 %9184
        %9188 = vset.pattern.permute.xlu0 0
        %9189 = vperm.xlu0 %9188, %v7622
        %v9190 = vpop.permute.xlu0 %9189
        %9193 = vset.pattern.permute.xlu0 0
        %9194 = vperm.xlu0 %9193, %v7623
        %v9195 = vpop.permute.xlu0 %9194
        %9198 = vset.pattern.permute.xlu0 0
        %9199 = vperm.xlu0 %9198, %v7624
        %v9200 = vpop.permute.xlu0 %9199
        %9203 = vset.pattern.permute.xlu0 0
        %9204 = vperm.xlu0 %9203, %v7625
        %v9205 = vpop.permute.xlu0 %9204
        %9208 = vset.pattern.permute.xlu0 0
        %9209 = vperm.xlu0 %9208, %v7626
        %v9210 = vpop.permute.xlu0 %9209
        %9213 = vset.pattern.permute.xlu0 0
        %9214 = vperm.xlu0 %9213, %v7627
        %v9215 = vpop.permute.xlu0 %9214
        %9218 = vset.pattern.permute.xlu0 0
        %9219 = vperm.xlu0 %9218, %v7628
        %v9220 = vpop.permute.xlu0 %9219
        %9223 = vset.pattern.permute.xlu0 0
        %9224 = vperm.xlu0 %9223, %v7629
        %v9225 = vpop.permute.xlu0 %9224
        %9228 = vset.pattern.permute.xlu0 0
        %9229 = vperm.xlu0 %9228, %v7630
        %v9230 = vpop.permute.xlu0 %9229
        %9233 = vset.pattern.permute.xlu0 0
        %9234 = vperm.xlu0 %9233, %v7631
        %v9235 = vpop.permute.xlu0 %9234
        %9238 = vset.pattern.permute.xlu0 0
        %9239 = vperm.xlu0 %9238, %v7632
        %v9240 = vpop.permute.xlu0 %9239
        %9243 = vset.pattern.permute.xlu0 0
        %9244 = vperm.xlu0 %9243, %v7633
        %v9245 = vpop.permute.xlu0 %9244
        %9248 = vset.pattern.permute.xlu0 0
        %9249 = vperm.xlu0 %9248, %v7634
        %v9250 = vpop.permute.xlu0 %9249
        %9253 = vset.pattern.permute.xlu0 0
        %9254 = vperm.xlu0 %9253, %v7635
        %v9255 = vpop.permute.xlu0 %9254
        %9258 = vset.pattern.permute.xlu0 0
        %9259 = vperm.xlu0 %9258, %v7636
        %v9260 = vpop.permute.xlu0 %9259
        %9263 = vset.pattern.permute.xlu0 0
        %9264 = vperm.xlu0 %9263, %v7637
        %v9265 = vpop.permute.xlu0 %9264
        %9268 = vset.pattern.permute.xlu0 0
        %9269 = vperm.xlu0 %9268, %v7638
        %v9270 = vpop.permute.xlu0 %9269
        %9273 = vset.pattern.permute.xlu0 0
        %9274 = vperm.xlu0 %9273, %v7639
        %v9275 = vpop.permute.xlu0 %9274
        %9278 = vset.pattern.permute.xlu0 0
        %9279 = vperm.xlu0 %9278, %v7640
        %v9280 = vpop.permute.xlu0 %9279
        %v9282 = vmul.f32 %v8965, %v1509
        %v9283 = vmul.f32 %v8970, %v1510
        %v9284 = vmul.f32 %v8975, %v1511
        %v9285 = vmul.f32 %v8980, %v1512
        %v9286 = vmul.f32 %v8985, %v1513
        %v9287 = vmul.f32 %v8990, %v1514
        %v9288 = vmul.f32 %v8995, %v1515
        %v9289 = vmul.f32 %v9000, %v1516
        %v9290 = vmul.f32 %v9005, %v1517
        %v9291 = vmul.f32 %v9010, %v1518
        %v9292 = vmul.f32 %v9015, %v1519
        %v9293 = vmul.f32 %v9020, %v1520
        %v9294 = vmul.f32 %v9025, %v1521
        %v9295 = vmul.f32 %v9030, %v1522
        %v9296 = vmul.f32 %v9035, %v1523
        %v9297 = vmul.f32 %v9040, %v1524
        %v9298 = vmul.f32 %v9045, %v1525
        %v9299 = vmul.f32 %v9050, %v1526
        %v9300 = vmul.f32 %v9055, %v1527
        %v9301 = vmul.f32 %v9060, %v1528
        %v9302 = vmul.f32 %v9065, %v1529
        %v9303 = vmul.f32 %v9070, %v1530
        %v9304 = vmul.f32 %v9075, %v1531
        %v9305 = vmul.f32 %v9080, %v1532
        %v9306 = vmul.f32 %v9085, %v1533
        %v9307 = vmul.f32 %v9090, %v1534
        %v9308 = vmul.f32 %v9095, %v1535
        %v9309 = vmul.f32 %v9100, %v1536
        %v9310 = vmul.f32 %v9105, %v1537
        %v9311 = vmul.f32 %v9110, %v1538
        %v9312 = vmul.f32 %v9115, %v1539
        %v9313 = vmul.f32 %v9120, %v1540
        %v9314 = vmul.f32 %v9125, %v1541
        %v9315 = vmul.f32 %v9130, %v1542
        %v9316 = vmul.f32 %v9135, %v1543
        %v9317 = vmul.f32 %v9140, %v1544
        %v9318 = vmul.f32 %v9145, %v1545
        %v9319 = vmul.f32 %v9150, %v1546
        %v9320 = vmul.f32 %v9155, %v1547
        %v9321 = vmul.f32 %v9160, %v1548
        %v9322 = vmul.f32 %v9165, %v1549
        %v9323 = vmul.f32 %v9170, %v1550
        %v9324 = vmul.f32 %v9175, %v1551
        %v9325 = vmul.f32 %v9180, %v1552
        %v9326 = vmul.f32 %v9185, %v1553
        %v9327 = vmul.f32 %v9190, %v1554
        %v9328 = vmul.f32 %v9195, %v1555
        %v9329 = vmul.f32 %v9200, %v1556
        %v9330 = vmul.f32 %v9205, %v1557
        %v9331 = vmul.f32 %v9210, %v1558
        %v9332 = vmul.f32 %v9215, %v1559
        %v9333 = vmul.f32 %v9220, %v1560
        %v9334 = vmul.f32 %v9225, %v1561
        %v9335 = vmul.f32 %v9230, %v1562
        %v9336 = vmul.f32 %v9235, %v1563
        %v9337 = vmul.f32 %v9240, %v1564
        %v9338 = vmul.f32 %v9245, %v1565
        %v9339 = vmul.f32 %v9250, %v1566
        %v9340 = vmul.f32 %v9255, %v1567
        %v9341 = vmul.f32 %v9260, %v1568
        %v9342 = vmul.f32 %v9265, %v1569
        %v9343 = vmul.f32 %v9270, %v1570
        %v9344 = vmul.f32 %v9275, %v1571
        %v9345 = vmul.f32 %v9280, %v1572
        %vm9346 = vcmask 523520
        %v9347 = vsel %vm9346, %v9282, 0.0
        %v9348 = vrot.slane %v9347, 4
        %v9349 = vadd.f32 %v9347, %v9348
        %v9350 = vrot.slane %v9349, 2
        %v9351 = vadd.f32 %v9349, %v9350
        %v9352 = vrot.slane %v9351, 1
        %v9353 = vadd.f32 %v9351, %v9352
        %v9354 = vsel %vm9346, %v9283, 0.0
        %v9355 = vrot.slane %v9354, 4
        %v9356 = vadd.f32 %v9354, %v9355
        %v9357 = vrot.slane %v9356, 2
        %v9358 = vadd.f32 %v9356, %v9357
        %v9359 = vrot.slane %v9358, 1
        %v9360 = vadd.f32 %v9358, %v9359
        %v9361 = vsel %vm9346, %v9284, 0.0
        %v9362 = vrot.slane %v9361, 4
        %v9363 = vadd.f32 %v9361, %v9362
        %v9364 = vrot.slane %v9363, 2
        %v9365 = vadd.f32 %v9363, %v9364
        %v9366 = vrot.slane %v9365, 1
        %v9367 = vadd.f32 %v9365, %v9366
        %v9368 = vsel %vm9346, %v9285, 0.0
        %v9369 = vrot.slane %v9368, 4
        %v9370 = vadd.f32 %v9368, %v9369
        %v9371 = vrot.slane %v9370, 2
        %v9372 = vadd.f32 %v9370, %v9371
        %v9373 = vrot.slane %v9372, 1
        %v9374 = vadd.f32 %v9372, %v9373
        %v9375 = vsel %vm9346, %v9286, 0.0
        %v9376 = vrot.slane %v9375, 4
        %v9377 = vadd.f32 %v9375, %v9376
        %v9378 = vrot.slane %v9377, 2
        %v9379 = vadd.f32 %v9377, %v9378
        %v9380 = vrot.slane %v9379, 1
        %v9381 = vadd.f32 %v9379, %v9380
        %v9382 = vsel %vm9346, %v9287, 0.0
        %v9383 = vrot.slane %v9382, 4
        %v9384 = vadd.f32 %v9382, %v9383
        %v9385 = vrot.slane %v9384, 2
        %v9386 = vadd.f32 %v9384, %v9385
        %v9387 = vrot.slane %v9386, 1
        %v9388 = vadd.f32 %v9386, %v9387
        %v9389 = vsel %vm9346, %v9288, 0.0
        %v9390 = vrot.slane %v9389, 4
        %v9391 = vadd.f32 %v9389, %v9390
        %v9392 = vrot.slane %v9391, 2
        %v9393 = vadd.f32 %v9391, %v9392
        %v9394 = vrot.slane %v9393, 1
        %v9395 = vadd.f32 %v9393, %v9394
        %v9396 = vsel %vm9346, %v9289, 0.0
        %v9397 = vrot.slane %v9396, 4
        %v9398 = vadd.f32 %v9396, %v9397
        %v9399 = vrot.slane %v9398, 2
        %v9400 = vadd.f32 %v9398, %v9399
        %v9401 = vrot.slane %v9400, 1
        %v9402 = vadd.f32 %v9400, %v9401
        %v9403 = vsel %vm9346, %v9290, 0.0
        %v9404 = vrot.slane %v9403, 4
        %v9405 = vadd.f32 %v9403, %v9404
        %v9406 = vrot.slane %v9405, 2
        %v9407 = vadd.f32 %v9405, %v9406
        %v9408 = vrot.slane %v9407, 1
        %v9409 = vadd.f32 %v9407, %v9408
        %v9410 = vsel %vm9346, %v9291, 0.0
        %v9411 = vrot.slane %v9410, 4
        %v9412 = vadd.f32 %v9410, %v9411
        %v9413 = vrot.slane %v9412, 2
        %v9414 = vadd.f32 %v9412, %v9413
        %v9415 = vrot.slane %v9414, 1
        %v9416 = vadd.f32 %v9414, %v9415
        %v9417 = vsel %vm9346, %v9292, 0.0
        %v9418 = vrot.slane %v9417, 4
        %v9419 = vadd.f32 %v9417, %v9418
        %v9420 = vrot.slane %v9419, 2
        %v9421 = vadd.f32 %v9419, %v9420
        %v9422 = vrot.slane %v9421, 1
        %v9423 = vadd.f32 %v9421, %v9422
        %v9424 = vsel %vm9346, %v9293, 0.0
        %v9425 = vrot.slane %v9424, 4
        %v9426 = vadd.f32 %v9424, %v9425
        %v9427 = vrot.slane %v9426, 2
        %v9428 = vadd.f32 %v9426, %v9427
        %v9429 = vrot.slane %v9428, 1
        %v9430 = vadd.f32 %v9428, %v9429
        %v9431 = vsel %vm9346, %v9294, 0.0
        %v9432 = vrot.slane %v9431, 4
        %v9433 = vadd.f32 %v9431, %v9432
        %v9434 = vrot.slane %v9433, 2
        %v9435 = vadd.f32 %v9433, %v9434
        %v9436 = vrot.slane %v9435, 1
        %v9437 = vadd.f32 %v9435, %v9436
        %v9438 = vsel %vm9346, %v9295, 0.0
        %v9439 = vrot.slane %v9438, 4
        %v9440 = vadd.f32 %v9438, %v9439
        %v9441 = vrot.slane %v9440, 2
        %v9442 = vadd.f32 %v9440, %v9441
        %v9443 = vrot.slane %v9442, 1
        %v9444 = vadd.f32 %v9442, %v9443
        %v9445 = vsel %vm9346, %v9296, 0.0
        %v9446 = vrot.slane %v9445, 4
        %v9447 = vadd.f32 %v9445, %v9446
        %v9448 = vrot.slane %v9447, 2
        %v9449 = vadd.f32 %v9447, %v9448
        %v9450 = vrot.slane %v9449, 1
        %v9451 = vadd.f32 %v9449, %v9450
        %v9452 = vsel %vm9346, %v9297, 0.0
        %v9453 = vrot.slane %v9452, 4
        %v9454 = vadd.f32 %v9452, %v9453
        %v9455 = vrot.slane %v9454, 2
        %v9456 = vadd.f32 %v9454, %v9455
        %v9457 = vrot.slane %v9456, 1
        %v9458 = vadd.f32 %v9456, %v9457
        %v9459 = vsel %vm9346, %v9298, 0.0
        %v9460 = vrot.slane %v9459, 4
        %v9461 = vadd.f32 %v9459, %v9460
        %v9462 = vrot.slane %v9461, 2
        %v9463 = vadd.f32 %v9461, %v9462
        %v9464 = vrot.slane %v9463, 1
        %v9465 = vadd.f32 %v9463, %v9464
        %v9466 = vsel %vm9346, %v9299, 0.0
        %v9467 = vrot.slane %v9466, 4
        %v9468 = vadd.f32 %v9466, %v9467
        %v9469 = vrot.slane %v9468, 2
        %v9470 = vadd.f32 %v9468, %v9469
        %v9471 = vrot.slane %v9470, 1
        %v9472 = vadd.f32 %v9470, %v9471
        %v9473 = vsel %vm9346, %v9300, 0.0
        %v9474 = vrot.slane %v9473, 4
        %v9475 = vadd.f32 %v9473, %v9474
        %v9476 = vrot.slane %v9475, 2
        %v9477 = vadd.f32 %v9475, %v9476
        %v9478 = vrot.slane %v9477, 1
        %v9479 = vadd.f32 %v9477, %v9478
        %v9480 = vsel %vm9346, %v9301, 0.0
        %v9481 = vrot.slane %v9480, 4
        %v9482 = vadd.f32 %v9480, %v9481
        %v9483 = vrot.slane %v9482, 2
        %v9484 = vadd.f32 %v9482, %v9483
        %v9485 = vrot.slane %v9484, 1
        %v9486 = vadd.f32 %v9484, %v9485
        %v9487 = vsel %vm9346, %v9302, 0.0
        %v9488 = vrot.slane %v9487, 4
        %v9489 = vadd.f32 %v9487, %v9488
        %v9490 = vrot.slane %v9489, 2
        %v9491 = vadd.f32 %v9489, %v9490
        %v9492 = vrot.slane %v9491, 1
        %v9493 = vadd.f32 %v9491, %v9492
        %v9494 = vsel %vm9346, %v9303, 0.0
        %v9495 = vrot.slane %v9494, 4
        %v9496 = vadd.f32 %v9494, %v9495
        %v9497 = vrot.slane %v9496, 2
        %v9498 = vadd.f32 %v9496, %v9497
        %v9499 = vrot.slane %v9498, 1
        %v9500 = vadd.f32 %v9498, %v9499
        %v9501 = vsel %vm9346, %v9304, 0.0
        %v9502 = vrot.slane %v9501, 4
        %v9503 = vadd.f32 %v9501, %v9502
        %v9504 = vrot.slane %v9503, 2
        %v9505 = vadd.f32 %v9503, %v9504
        %v9506 = vrot.slane %v9505, 1
        %v9507 = vadd.f32 %v9505, %v9506
        %v9508 = vsel %vm9346, %v9305, 0.0
        %v9509 = vrot.slane %v9508, 4
        %v9510 = vadd.f32 %v9508, %v9509
        %v9511 = vrot.slane %v9510, 2
        %v9512 = vadd.f32 %v9510, %v9511
        %v9513 = vrot.slane %v9512, 1
        %v9514 = vadd.f32 %v9512, %v9513
        %v9515 = vsel %vm9346, %v9306, 0.0
        %v9516 = vrot.slane %v9515, 4
        %v9517 = vadd.f32 %v9515, %v9516
        %v9518 = vrot.slane %v9517, 2
        %v9519 = vadd.f32 %v9517, %v9518
        %v9520 = vrot.slane %v9519, 1
        %v9521 = vadd.f32 %v9519, %v9520
        %v9522 = vsel %vm9346, %v9307, 0.0
        %v9523 = vrot.slane %v9522, 4
        %v9524 = vadd.f32 %v9522, %v9523
        %v9525 = vrot.slane %v9524, 2
        %v9526 = vadd.f32 %v9524, %v9525
        %v9527 = vrot.slane %v9526, 1
        %v9528 = vadd.f32 %v9526, %v9527
        %v9529 = vsel %vm9346, %v9308, 0.0
        %v9530 = vrot.slane %v9529, 4
        %v9531 = vadd.f32 %v9529, %v9530
        %v9532 = vrot.slane %v9531, 2
        %v9533 = vadd.f32 %v9531, %v9532
        %v9534 = vrot.slane %v9533, 1
        %v9535 = vadd.f32 %v9533, %v9534
        %v9536 = vsel %vm9346, %v9309, 0.0
        %v9537 = vrot.slane %v9536, 4
        %v9538 = vadd.f32 %v9536, %v9537
        %v9539 = vrot.slane %v9538, 2
        %v9540 = vadd.f32 %v9538, %v9539
        %v9541 = vrot.slane %v9540, 1
        %v9542 = vadd.f32 %v9540, %v9541
        %v9543 = vsel %vm9346, %v9310, 0.0
        %v9544 = vrot.slane %v9543, 4
        %v9545 = vadd.f32 %v9543, %v9544
        %v9546 = vrot.slane %v9545, 2
        %v9547 = vadd.f32 %v9545, %v9546
        %v9548 = vrot.slane %v9547, 1
        %v9549 = vadd.f32 %v9547, %v9548
        %v9550 = vsel %vm9346, %v9311, 0.0
        %v9551 = vrot.slane %v9550, 4
        %v9552 = vadd.f32 %v9550, %v9551
        %v9553 = vrot.slane %v9552, 2
        %v9554 = vadd.f32 %v9552, %v9553
        %v9555 = vrot.slane %v9554, 1
        %v9556 = vadd.f32 %v9554, %v9555
        %v9557 = vsel %vm9346, %v9312, 0.0
        %v9558 = vrot.slane %v9557, 4
        %v9559 = vadd.f32 %v9557, %v9558
        %v9560 = vrot.slane %v9559, 2
        %v9561 = vadd.f32 %v9559, %v9560
        %v9562 = vrot.slane %v9561, 1
        %v9563 = vadd.f32 %v9561, %v9562
        %v9564 = vsel %vm9346, %v9313, 0.0
        %v9565 = vrot.slane %v9564, 4
        %v9566 = vadd.f32 %v9564, %v9565
        %v9567 = vrot.slane %v9566, 2
        %v9568 = vadd.f32 %v9566, %v9567
        %v9569 = vrot.slane %v9568, 1
        %v9570 = vadd.f32 %v9568, %v9569
        %v9571 = vsel %vm9346, %v9314, 0.0
        %v9572 = vrot.slane %v9571, 4
        %v9573 = vadd.f32 %v9571, %v9572
        %v9574 = vrot.slane %v9573, 2
        %v9575 = vadd.f32 %v9573, %v9574
        %v9576 = vrot.slane %v9575, 1
        %v9577 = vadd.f32 %v9575, %v9576
        %v9578 = vsel %vm9346, %v9315, 0.0
        %v9579 = vrot.slane %v9578, 4
        %v9580 = vadd.f32 %v9578, %v9579
        %v9581 = vrot.slane %v9580, 2
        %v9582 = vadd.f32 %v9580, %v9581
        %v9583 = vrot.slane %v9582, 1
        %v9584 = vadd.f32 %v9582, %v9583
        %v9585 = vsel %vm9346, %v9316, 0.0
        %v9586 = vrot.slane %v9585, 4
        %v9587 = vadd.f32 %v9585, %v9586
        %v9588 = vrot.slane %v9587, 2
        %v9589 = vadd.f32 %v9587, %v9588
        %v9590 = vrot.slane %v9589, 1
        %v9591 = vadd.f32 %v9589, %v9590
        %v9592 = vsel %vm9346, %v9317, 0.0
        %v9593 = vrot.slane %v9592, 4
        %v9594 = vadd.f32 %v9592, %v9593
        %v9595 = vrot.slane %v9594, 2
        %v9596 = vadd.f32 %v9594, %v9595
        %v9597 = vrot.slane %v9596, 1
        %v9598 = vadd.f32 %v9596, %v9597
        %v9599 = vsel %vm9346, %v9318, 0.0
        %v9600 = vrot.slane %v9599, 4
        %v9601 = vadd.f32 %v9599, %v9600
        %v9602 = vrot.slane %v9601, 2
        %v9603 = vadd.f32 %v9601, %v9602
        %v9604 = vrot.slane %v9603, 1
        %v9605 = vadd.f32 %v9603, %v9604
        %v9606 = vsel %vm9346, %v9319, 0.0
        %v9607 = vrot.slane %v9606, 4
        %v9608 = vadd.f32 %v9606, %v9607
        %v9609 = vrot.slane %v9608, 2
        %v9610 = vadd.f32 %v9608, %v9609
        %v9611 = vrot.slane %v9610, 1
        %v9612 = vadd.f32 %v9610, %v9611
        %v9613 = vsel %vm9346, %v9320, 0.0
        %v9614 = vrot.slane %v9613, 4
        %v9615 = vadd.f32 %v9613, %v9614
        %v9616 = vrot.slane %v9615, 2
        %v9617 = vadd.f32 %v9615, %v9616
        %v9618 = vrot.slane %v9617, 1
        %v9619 = vadd.f32 %v9617, %v9618
        %v9620 = vsel %vm9346, %v9321, 0.0
        %v9621 = vrot.slane %v9620, 4
        %v9622 = vadd.f32 %v9620, %v9621
        %v9623 = vrot.slane %v9622, 2
        %v9624 = vadd.f32 %v9622, %v9623
        %v9625 = vrot.slane %v9624, 1
        %v9626 = vadd.f32 %v9624, %v9625
        %v9627 = vsel %vm9346, %v9322, 0.0
        %v9628 = vrot.slane %v9627, 4
        %v9629 = vadd.f32 %v9627, %v9628
        %v9630 = vrot.slane %v9629, 2
        %v9631 = vadd.f32 %v9629, %v9630
        %v9632 = vrot.slane %v9631, 1
        %v9633 = vadd.f32 %v9631, %v9632
        %v9634 = vsel %vm9346, %v9323, 0.0
        %v9635 = vrot.slane %v9634, 4
        %v9636 = vadd.f32 %v9634, %v9635
        %v9637 = vrot.slane %v9636, 2
        %v9638 = vadd.f32 %v9636, %v9637
        %v9639 = vrot.slane %v9638, 1
        %v9640 = vadd.f32 %v9638, %v9639
        %v9641 = vsel %vm9346, %v9324, 0.0
        %v9642 = vrot.slane %v9641, 4
        %v9643 = vadd.f32 %v9641, %v9642
        %v9644 = vrot.slane %v9643, 2
        %v9645 = vadd.f32 %v9643, %v9644
        %v9646 = vrot.slane %v9645, 1
        %v9647 = vadd.f32 %v9645, %v9646
        %v9648 = vsel %vm9346, %v9325, 0.0
        %v9649 = vrot.slane %v9648, 4
        %v9650 = vadd.f32 %v9648, %v9649
        %v9651 = vrot.slane %v9650, 2
        %v9652 = vadd.f32 %v9650, %v9651
        %v9653 = vrot.slane %v9652, 1
        %v9654 = vadd.f32 %v9652, %v9653
        %v9655 = vsel %vm9346, %v9326, 0.0
        %v9656 = vrot.slane %v9655, 4
        %v9657 = vadd.f32 %v9655, %v9656
        %v9658 = vrot.slane %v9657, 2
        %v9659 = vadd.f32 %v9657, %v9658
        %v9660 = vrot.slane %v9659, 1
        %v9661 = vadd.f32 %v9659, %v9660
        %v9662 = vsel %vm9346, %v9327, 0.0
        %v9663 = vrot.slane %v9662, 4
        %v9664 = vadd.f32 %v9662, %v9663
        %v9665 = vrot.slane %v9664, 2
        %v9666 = vadd.f32 %v9664, %v9665
        %v9667 = vrot.slane %v9666, 1
        %v9668 = vadd.f32 %v9666, %v9667
        %v9669 = vsel %vm9346, %v9328, 0.0
        %v9670 = vrot.slane %v9669, 4
        %v9671 = vadd.f32 %v9669, %v9670
        %v9672 = vrot.slane %v9671, 2
        %v9673 = vadd.f32 %v9671, %v9672
        %v9674 = vrot.slane %v9673, 1
        %v9675 = vadd.f32 %v9673, %v9674
        %v9676 = vsel %vm9346, %v9329, 0.0
        %v9677 = vrot.slane %v9676, 4
        %v9678 = vadd.f32 %v9676, %v9677
        %v9679 = vrot.slane %v9678, 2
        %v9680 = vadd.f32 %v9678, %v9679
        %v9681 = vrot.slane %v9680, 1
        %v9682 = vadd.f32 %v9680, %v9681
        %v9683 = vsel %vm9346, %v9330, 0.0
        %v9684 = vrot.slane %v9683, 4
        %v9685 = vadd.f32 %v9683, %v9684
        %v9686 = vrot.slane %v9685, 2
        %v9687 = vadd.f32 %v9685, %v9686
        %v9688 = vrot.slane %v9687, 1
        %v9689 = vadd.f32 %v9687, %v9688
        %v9690 = vsel %vm9346, %v9331, 0.0
        %v9691 = vrot.slane %v9690, 4
        %v9692 = vadd.f32 %v9690, %v9691
        %v9693 = vrot.slane %v9692, 2
        %v9694 = vadd.f32 %v9692, %v9693
        %v9695 = vrot.slane %v9694, 1
        %v9696 = vadd.f32 %v9694, %v9695
        %v9697 = vsel %vm9346, %v9332, 0.0
        %v9698 = vrot.slane %v9697, 4
        %v9699 = vadd.f32 %v9697, %v9698
        %v9700 = vrot.slane %v9699, 2
        %v9701 = vadd.f32 %v9699, %v9700
        %v9702 = vrot.slane %v9701, 1
        %v9703 = vadd.f32 %v9701, %v9702
        %v9704 = vsel %vm9346, %v9333, 0.0
        %v9705 = vrot.slane %v9704, 4
        %v9706 = vadd.f32 %v9704, %v9705
        %v9707 = vrot.slane %v9706, 2
        %v9708 = vadd.f32 %v9706, %v9707
        %v9709 = vrot.slane %v9708, 1
        %v9710 = vadd.f32 %v9708, %v9709
        %v9711 = vsel %vm9346, %v9334, 0.0
        %v9712 = vrot.slane %v9711, 4
        %v9713 = vadd.f32 %v9711, %v9712
        %v9714 = vrot.slane %v9713, 2
        %v9715 = vadd.f32 %v9713, %v9714
        %v9716 = vrot.slane %v9715, 1
        %v9717 = vadd.f32 %v9715, %v9716
        %v9718 = vsel %vm9346, %v9335, 0.0
        %v9719 = vrot.slane %v9718, 4
        %v9720 = vadd.f32 %v9718, %v9719
        %v9721 = vrot.slane %v9720, 2
        %v9722 = vadd.f32 %v9720, %v9721
        %v9723 = vrot.slane %v9722, 1
        %v9724 = vadd.f32 %v9722, %v9723
        %v9725 = vsel %vm9346, %v9336, 0.0
        %v9726 = vrot.slane %v9725, 4
        %v9727 = vadd.f32 %v9725, %v9726
        %v9728 = vrot.slane %v9727, 2
        %v9729 = vadd.f32 %v9727, %v9728
        %v9730 = vrot.slane %v9729, 1
        %v9731 = vadd.f32 %v9729, %v9730
        %v9732 = vsel %vm9346, %v9337, 0.0
        %v9733 = vrot.slane %v9732, 4
        %v9734 = vadd.f32 %v9732, %v9733
        %v9735 = vrot.slane %v9734, 2
        %v9736 = vadd.f32 %v9734, %v9735
        %v9737 = vrot.slane %v9736, 1
        %v9738 = vadd.f32 %v9736, %v9737
        %v9739 = vsel %vm9346, %v9338, 0.0
        %v9740 = vrot.slane %v9739, 4
        %v9741 = vadd.f32 %v9739, %v9740
        %v9742 = vrot.slane %v9741, 2
        %v9743 = vadd.f32 %v9741, %v9742
        %v9744 = vrot.slane %v9743, 1
        %v9745 = vadd.f32 %v9743, %v9744
        %v9746 = vsel %vm9346, %v9339, 0.0
        %v9747 = vrot.slane %v9746, 4
        %v9748 = vadd.f32 %v9746, %v9747
        %v9749 = vrot.slane %v9748, 2
        %v9750 = vadd.f32 %v9748, %v9749
        %v9751 = vrot.slane %v9750, 1
        %v9752 = vadd.f32 %v9750, %v9751
        %v9753 = vsel %vm9346, %v9340, 0.0
        %v9754 = vrot.slane %v9753, 4
        %v9755 = vadd.f32 %v9753, %v9754
        %v9756 = vrot.slane %v9755, 2
        %v9757 = vadd.f32 %v9755, %v9756
        %v9758 = vrot.slane %v9757, 1
        %v9759 = vadd.f32 %v9757, %v9758
        %v9760 = vsel %vm9346, %v9341, 0.0
        %v9761 = vrot.slane %v9760, 4
        %v9762 = vadd.f32 %v9760, %v9761
        %v9763 = vrot.slane %v9762, 2
        %v9764 = vadd.f32 %v9762, %v9763
        %v9765 = vrot.slane %v9764, 1
        %v9766 = vadd.f32 %v9764, %v9765
        %v9767 = vsel %vm9346, %v9342, 0.0
        %v9768 = vrot.slane %v9767, 4
        %v9769 = vadd.f32 %v9767, %v9768
        %v9770 = vrot.slane %v9769, 2
        %v9771 = vadd.f32 %v9769, %v9770
        %v9772 = vrot.slane %v9771, 1
        %v9773 = vadd.f32 %v9771, %v9772
        %v9774 = vsel %vm9346, %v9343, 0.0
        %v9775 = vrot.slane %v9774, 4
        %v9776 = vadd.f32 %v9774, %v9775
        %v9777 = vrot.slane %v9776, 2
        %v9778 = vadd.f32 %v9776, %v9777
        %v9779 = vrot.slane %v9778, 1
        %v9780 = vadd.f32 %v9778, %v9779
        %v9781 = vsel %vm9346, %v9344, 0.0
        %v9782 = vrot.slane %v9781, 4
        %v9783 = vadd.f32 %v9781, %v9782
        %v9784 = vrot.slane %v9783, 2
        %v9785 = vadd.f32 %v9783, %v9784
        %v9786 = vrot.slane %v9785, 1
        %v9787 = vadd.f32 %v9785, %v9786
        %v9788 = vsel %vm9346, %v9345, 0.0
        %v9789 = vrot.slane %v9788, 4
        %v9790 = vadd.f32 %v9788, %v9789
        %v9791 = vrot.slane %v9790, 2
        %v9792 = vadd.f32 %v9790, %v9791
        %v9793 = vrot.slane %v9792, 1
        %v9794 = vadd.f32 %v9792, %v9793
        %v9795 = vld [vmem:[%s5 + $0x10] sm:$0xf]
        %v9796 = vld [vmem:[%s5 + $0x14] sm:$0xf]
        %v9797 = vld [vmem:[%s5 + $0x18] sm:$0xf]
        %v9798 = vld [vmem:[%s5 + $0x1c] sm:$0xf]
        %v9799 = vpack.c.bf16 %v9353, %v9353
        %v9800 = vpack.c.bf16 %v9360, %v9360
        %v9801 = vpack.c.bf16 %v9367, %v9367
        %v9802 = vpack.c.bf16 %v9374, %v9374
        %v9803 = vpack.c.bf16 %v9381, %v9381
        %v9804 = vpack.c.bf16 %v9388, %v9388
        %v9805 = vpack.c.bf16 %v9395, %v9395
        %v9806 = vpack.c.bf16 %v9402, %v9402
        %v9807 = vpack.c.bf16 %v9409, %v9409
        %v9808 = vpack.c.bf16 %v9416, %v9416
        %v9809 = vpack.c.bf16 %v9423, %v9423
        %v9810 = vpack.c.bf16 %v9430, %v9430
        %v9811 = vpack.c.bf16 %v9437, %v9437
        %v9812 = vpack.c.bf16 %v9444, %v9444
        %v9813 = vpack.c.bf16 %v9451, %v9451
        %v9814 = vpack.c.bf16 %v9458, %v9458
        %v9815 = vpack.c.bf16 %v9465, %v9465
        %v9816 = vpack.c.bf16 %v9472, %v9472
        %v9817 = vpack.c.bf16 %v9479, %v9479
        %v9818 = vpack.c.bf16 %v9486, %v9486
        %v9819 = vpack.c.bf16 %v9493, %v9493
        %v9820 = vpack.c.bf16 %v9500, %v9500
        %v9821 = vpack.c.bf16 %v9507, %v9507
        %v9822 = vpack.c.bf16 %v9514, %v9514
        %v9823 = vpack.c.bf16 %v9521, %v9521
        %v9824 = vpack.c.bf16 %v9528, %v9528
        %v9825 = vpack.c.bf16 %v9535, %v9535
        %v9826 = vpack.c.bf16 %v9542, %v9542
        %v9827 = vpack.c.bf16 %v9549, %v9549
        %v9828 = vpack.c.bf16 %v9556, %v9556
        %v9829 = vpack.c.bf16 %v9563, %v9563
        %v9830 = vpack.c.bf16 %v9570, %v9570
        %v9831 = vpack.c.bf16 %v9577, %v9577
        %v9832 = vpack.c.bf16 %v9584, %v9584
        %v9833 = vpack.c.bf16 %v9591, %v9591
        %v9834 = vpack.c.bf16 %v9598, %v9598
        %v9835 = vpack.c.bf16 %v9605, %v9605
        %v9836 = vpack.c.bf16 %v9612, %v9612
        %v9837 = vpack.c.bf16 %v9619, %v9619
        %v9838 = vpack.c.bf16 %v9626, %v9626
        %v9839 = vpack.c.bf16 %v9633, %v9633
        %v9840 = vpack.c.bf16 %v9640, %v9640
        %v9841 = vpack.c.bf16 %v9647, %v9647
        %v9842 = vpack.c.bf16 %v9654, %v9654
        %v9843 = vpack.c.bf16 %v9661, %v9661
        %v9844 = vpack.c.bf16 %v9668, %v9668
        %v9845 = vpack.c.bf16 %v9675, %v9675
        %v9846 = vpack.c.bf16 %v9682, %v9682
        %v9847 = vpack.c.bf16 %v9689, %v9689
        %v9848 = vpack.c.bf16 %v9696, %v9696
        %v9849 = vpack.c.bf16 %v9703, %v9703
        %v9850 = vpack.c.bf16 %v9710, %v9710
        %v9851 = vpack.c.bf16 %v9717, %v9717
        %v9852 = vpack.c.bf16 %v9724, %v9724
        %v9853 = vpack.c.bf16 %v9731, %v9731
        %v9854 = vpack.c.bf16 %v9738, %v9738
        %v9855 = vpack.c.bf16 %v9745, %v9745
        %v9856 = vpack.c.bf16 %v9752, %v9752
        %v9857 = vpack.c.bf16 %v9759, %v9759
        %v9858 = vpack.c.bf16 %v9766, %v9766
        %v9859 = vpack.c.bf16 %v9773, %v9773
        %v9860 = vpack.c.bf16 %v9780, %v9780
        %v9861 = vpack.c.bf16 %v9787, %v9787
        %v9862 = vpack.c.bf16 %v9794, %v9794
        %v9863 = vld [vmem:[%s7 + $0x6] sm:$0x1]
        %v9864 = vperm.slane %v9863, 0
        %v9929 = vunpack.c.l.b16 %v9799
        %v9930 = vunpack.c.l.b16 %v9800
        %v9931 = vunpack.c.l.b16 %v9801
        %v9932 = vunpack.c.l.b16 %v9802
        %v9933 = vunpack.c.l.b16 %v9803
        %v9934 = vunpack.c.l.b16 %v9804
        %v9935 = vunpack.c.l.b16 %v9805
        %v9936 = vunpack.c.l.b16 %v9806
        %v9937 = vunpack.c.l.b16 %v9807
        %v9938 = vunpack.c.l.b16 %v9808
        %v9939 = vunpack.c.l.b16 %v9809
        %v9940 = vunpack.c.l.b16 %v9810
        %v9941 = vunpack.c.l.b16 %v9811
        %v9942 = vunpack.c.l.b16 %v9812
        %v9943 = vunpack.c.l.b16 %v9813
        %v9944 = vunpack.c.l.b16 %v9814
        %v9945 = vunpack.c.l.b16 %v9815
        %v9946 = vunpack.c.l.b16 %v9816
        %v9947 = vunpack.c.l.b16 %v9817
        %v9948 = vunpack.c.l.b16 %v9818
        %v9949 = vunpack.c.l.b16 %v9819
        %v9950 = vunpack.c.l.b16 %v9820
        %v9951 = vunpack.c.l.b16 %v9821
        %v9952 = vunpack.c.l.b16 %v9822
        %v9953 = vunpack.c.l.b16 %v9823
        %v9954 = vunpack.c.l.b16 %v9824
        %v9955 = vunpack.c.l.b16 %v9825
        %v9956 = vunpack.c.l.b16 %v9826
        %v9957 = vunpack.c.l.b16 %v9827
        %v9958 = vunpack.c.l.b16 %v9828
        %v9959 = vunpack.c.l.b16 %v9829
        %v9960 = vunpack.c.l.b16 %v9830
        %v9961 = vunpack.c.l.b16 %v9831
        %v9962 = vunpack.c.l.b16 %v9832
        %v9963 = vunpack.c.l.b16 %v9833
        %v9964 = vunpack.c.l.b16 %v9834
        %v9965 = vunpack.c.l.b16 %v9835
        %v9966 = vunpack.c.l.b16 %v9836
        %v9967 = vunpack.c.l.b16 %v9837
        %v9968 = vunpack.c.l.b16 %v9838
        %v9969 = vunpack.c.l.b16 %v9839
        %v9970 = vunpack.c.l.b16 %v9840
        %v9971 = vunpack.c.l.b16 %v9841
        %v9972 = vunpack.c.l.b16 %v9842
        %v9973 = vunpack.c.l.b16 %v9843
        %v9974 = vunpack.c.l.b16 %v9844
        %v9975 = vunpack.c.l.b16 %v9845
        %v9976 = vunpack.c.l.b16 %v9846
        %v9977 = vunpack.c.l.b16 %v9847
        %v9978 = vunpack.c.l.b16 %v9848
        %v9979 = vunpack.c.l.b16 %v9849
        %v9980 = vunpack.c.l.b16 %v9850
        %v9981 = vunpack.c.l.b16 %v9851
        %v9982 = vunpack.c.l.b16 %v9852
        %v9983 = vunpack.c.l.b16 %v9853
        %v9984 = vunpack.c.l.b16 %v9854
        %v9985 = vunpack.c.l.b16 %v9855
        %v9986 = vunpack.c.l.b16 %v9856
        %v9987 = vunpack.c.l.b16 %v9857
        %v9988 = vunpack.c.l.b16 %v9858
        %v9989 = vunpack.c.l.b16 %v9859
        %v9990 = vunpack.c.l.b16 %v9860
        %v9991 = vunpack.c.l.b16 %v9861
        %v9992 = vunpack.c.l.b16 %v9862
        %v9993 = vsel %vm4515, %v9930, %v9929
        %v9994 = vsel %vm4517, %v9931, %v9993
        %v9995 = vsel %vm4519, %v9932, %v9994
        %v9996 = vsel %vm4521, %v9933, %v9995
        %v9997 = vsel %vm4523, %v9934, %v9996
        %v9998 = vsel %vm4525, %v9935, %v9997
        %v9999 = vsel %vm4527, %v9936, %v9998
        %v10000 = vsel %vm4515, %v9938, %v9937
        %v10001 = vsel %vm4517, %v9939, %v10000
        %v10002 = vsel %vm4519, %v9940, %v10001
        %v10003 = vsel %vm4521, %v9941, %v10002
        %v10004 = vsel %vm4523, %v9942, %v10003
        %v10005 = vsel %vm4525, %v9943, %v10004
        %v10006 = vsel %vm4527, %v9944, %v10005
        %v10007 = vsel %vm4515, %v9946, %v9945
        %v10008 = vsel %vm4517, %v9947, %v10007
        %v10009 = vsel %vm4519, %v9948, %v10008
        %v10010 = vsel %vm4521, %v9949, %v10009
        %v10011 = vsel %vm4523, %v9950, %v10010
        %v10012 = vsel %vm4525, %v9951, %v10011
        %v10013 = vsel %vm4527, %v9952, %v10012
        %v10014 = vsel %vm4515, %v9954, %v9953
        %v10015 = vsel %vm4517, %v9955, %v10014
        %v10016 = vsel %vm4519, %v9956, %v10015
        %v10017 = vsel %vm4521, %v9957, %v10016
        %v10018 = vsel %vm4523, %v9958, %v10017
        %v10019 = vsel %vm4525, %v9959, %v10018
        %v10020 = vsel %vm4527, %v9960, %v10019
        %v10021 = vsel %vm4515, %v9962, %v9961
        %v10022 = vsel %vm4517, %v9963, %v10021
        %v10023 = vsel %vm4519, %v9964, %v10022
        %v10024 = vsel %vm4521, %v9965, %v10023
        %v10025 = vsel %vm4523, %v9966, %v10024
        %v10026 = vsel %vm4525, %v9967, %v10025
        %v10027 = vsel %vm4527, %v9968, %v10026
        %v10028 = vsel %vm4515, %v9970, %v9969
        %v10029 = vsel %vm4517, %v9971, %v10028
        %v10030 = vsel %vm4519, %v9972, %v10029
        %v10031 = vsel %vm4521, %v9973, %v10030
        %v10032 = vsel %vm4523, %v9974, %v10031
        %v10033 = vsel %vm4525, %v9975, %v10032
        %v10034 = vsel %vm4527, %v9976, %v10033
        %v10035 = vsel %vm4515, %v9978, %v9977
        %v10036 = vsel %vm4517, %v9979, %v10035
        %v10037 = vsel %vm4519, %v9980, %v10036
        %v10038 = vsel %vm4521, %v9981, %v10037
        %v10039 = vsel %vm4523, %v9982, %v10038
        %v10040 = vsel %vm4525, %v9983, %v10039
        %v10041 = vsel %vm4527, %v9984, %v10040
        %v10042 = vsel %vm4515, %v9986, %v9985
        %v10043 = vsel %vm4517, %v9987, %v10042
        %v10044 = vsel %vm4519, %v9988, %v10043
        %v10045 = vsel %vm4521, %v9989, %v10044
        %v10046 = vsel %vm4523, %v9990, %v10045
        %v10047 = vsel %vm4525, %v9991, %v10046
        %v10048 = vsel %vm4527, %v9992, %v10047
        %v10049 = vpack.c.b16 %v10006, %v9999
        %v10050 = vpack.c.b16 %v10020, %v10013
        %v10051 = vpack.c.b16 %v10034, %v10027
        %v10052 = vpack.c.b16 %v10048, %v10041
        %10053 = vrot.lane.b32.xlu0 %v10049, 96
        %v10054 = vpop.permute.xlu0 %10053
        %10055 = vrot.lane.b32.xlu0 %v10050, 96
        %v10056 = vpop.permute.xlu0 %10055
        %10057 = vrot.lane.b32.xlu0 %v10051, 96
        %v10058 = vpop.permute.xlu0 %10057
        %10059 = vrot.lane.b32.xlu0 %v10052, 96
        %v10060 = vpop.permute.xlu0 %10059
        %v10065 = vunpack.c.l.b16 %v9795
        %v10066 = vunpack.c.l.b16 %v9796
        %v10067 = vunpack.c.l.b16 %v9797
        %v10068 = vunpack.c.l.b16 %v9798
        %v10069 = vpack.c.b16 %v10066, %v10065
        %v10070 = vpack.c.b16 %v10068, %v10067
        %v10074 = vsel %vm3223, %v10054, 0
        %v10077 = vsel %vm3223, %v10056, 0
        %v10080 = vsel %vm3223, %v10058, 0
        %v10083 = vsel %vm3223, %v10060, 0
        %10085 = vmatpush.bf16.msra.mxu0 0
        %10086 = vmatpush.bf16.msra.mxu0 0
        %10087 = vmatpush.bf16.msra.mxu0 0
        %10088 = vmatpush.bf16.msra.mxu0 0
        %10089 = vmatpush.bf16.msra.mxu0 0
        %10090 = vmatpush.bf16.msra.mxu0 0
        %10091 = vmatpush.bf16.msra.mxu0 %v10070
        %10092 = vmatpush.bf16.msra.mxu0 %v10069
        %10093 = vmatmul.bf16.gmra.mxu0 %v10074
        %v10094 = vpop.f32.mrf.mxu0
        %v10095 = vadd.f32 %v9864, %v10094
        %v10096 = vpop.f32.mrf.mxu0
        %v10097 = vadd.f32 %v9864, %v10096
        %10098 = vmatmul.bf16.gmra.mxu0 %v10077
        %v10099 = vpop.f32.mrf.mxu0
        %v10100 = vadd.f32 %v9864, %v10099
        %v10101 = vpop.f32.mrf.mxu0
        %v10102 = vadd.f32 %v9864, %v10101
        %10103 = vmatmul.bf16.gmra.mxu0 %v10080
        %v10104 = vpop.f32.mrf.mxu0
        %v10105 = vadd.f32 %v9864, %v10104
        %v10106 = vpop.f32.mrf.mxu0
        %v10107 = vadd.f32 %v9864, %v10106
        %10108 = vmatmul.bf16.gmra.mxu0 %v10083
        %v10109 = vpop.f32.mrf.mxu0
        %v10110 = vadd.f32 %v9864, %v10109
        %v10111 = vpop.f32.mrf.mxu0
        %v10112 = vadd.f32 %v9864, %v10111
        %10113 = vdwg.mxu0
        %v10114 = vmax.f32 %v10095, 0.0
        %v10115 = vmax.f32 %v10097, 0.0
        %v10116 = vmax.f32 %v10100, 0.0
        %v10117 = vmax.f32 %v10102, 0.0
        %v10118 = vmax.f32 %v10105, 0.0
        %v10119 = vmax.f32 %v10107, 0.0
        %v10120 = vmax.f32 %v10110, 0.0
        %v10121 = vmax.f32 %v10112, 0.0
        %v10122 = vmul.f32 %v8954, %v10114
        %v10123 = vmul.f32 %v8955, %v10115
        %v10124 = vmul.f32 %v8956, %v10116
        %v10125 = vmul.f32 %v8957, %v10117
        %v10126 = vmul.f32 %v8958, %v10118
        %v10127 = vmul.f32 %v8959, %v10119
        %v10128 = vmul.f32 %v8960, %v10120
        %v10129 = vmul.f32 %v8961, %v10121
        %v10130 = vld [vmem:[%s4 + $0x20] sm:$0xf]
        %v10131 = vld [vmem:[%s4 + $0x24] sm:$0xf]
        %v10132 = vld [vmem:[%s4 + $0x28] sm:$0xf]
        %v10133 = vld [vmem:[%s4 + $0x2c] sm:$0xf]
        %v10134 = vpack.c.bf16 %v10123, %v10122
        %v10135 = vpack.c.bf16 %v10125, %v10124
        %v10136 = vpack.c.bf16 %v10127, %v10126
        %v10137 = vpack.c.bf16 %v10129, %v10128
        %v10138 = vld [vmem:[%s4 + $0x30] sm:$0xf]
        %v10139 = vld [vmem:[%s4 + $0x34] sm:$0xf]
        %v10140 = vld [vmem:[%s4 + $0x38] sm:$0xf]
        %v10141 = vld [vmem:[%s4 + $0x3c] sm:$0xf]
        %v10142 = vpack.c.bf16 %v8955, %v8954
        %v10143 = vpack.c.bf16 %v8957, %v8956
        %v10144 = vpack.c.bf16 %v8959, %v8958
        %v10145 = vpack.c.bf16 %v8961, %v8960
        %v10150 = vunpack.c.l.b16 %v10138
        %v10151 = vunpack.c.l.b16 %v10139
        %v10152 = vunpack.c.l.b16 %v10140
        %v10153 = vunpack.c.l.b16 %v10141
        %v10154 = vpack.c.b16 %v10151, %v10150
        %v10155 = vpack.c.b16 %v10153, %v10152
        %v10159 = vsel %vm3223, %v10142, 0
        %v10162 = vsel %vm3223, %v10143, 0
        %v10165 = vsel %vm3223, %v10144, 0
        %v10168 = vsel %vm3223, %v10145, 0
        %10170 = vmatpush.bf16.msra.mxu0 0
        %10171 = vmatpush.bf16.msra.mxu0 0
        %10172 = vmatpush.bf16.msra.mxu0 0
        %10173 = vmatpush.bf16.msra.mxu0 0
        %10174 = vmatpush.bf16.msra.mxu0 0
        %10175 = vmatpush.bf16.msra.mxu0 0
        %10176 = vmatpush.bf16.msra.mxu0 %v10155
        %10177 = vmatpush.bf16.msra.mxu0 %v10154
        %10178 = vmatmul.bf16.gmra.mxu0 %v10159
        %v10179 = vpop.f32.mrf.mxu0
        %v10180 = vadd.f32 0.0, %v10179
        %v10181 = vpop.f32.mrf.mxu0
        %v10182 = vadd.f32 0.0, %v10181
        %10183 = vmatmul.bf16.gmra.mxu0 %v10162
        %v10184 = vpop.f32.mrf.mxu0
        %v10185 = vadd.f32 0.0, %v10184
        %v10186 = vpop.f32.mrf.mxu0
        %v10187 = vadd.f32 0.0, %v10186
        %10188 = vmatmul.bf16.gmra.mxu0 %v10165
        %v10189 = vpop.f32.mrf.mxu0
        %v10190 = vadd.f32 0.0, %v10189
        %v10191 = vpop.f32.mrf.mxu0
        %v10192 = vadd.f32 0.0, %v10191
        %10193 = vmatmul.bf16.gmra.mxu0 %v10168
        %v10194 = vpop.f32.mrf.mxu0
        %v10195 = vadd.f32 0.0, %v10194
        %v10196 = vpop.f32.mrf.mxu0
        %v10197 = vadd.f32 0.0, %v10196
        %10198 = vdwg.mxu0
        %v10203 = vunpack.c.l.b16 %v10130
        %v10204 = vunpack.c.l.b16 %v10131
        %v10205 = vunpack.c.l.b16 %v10132
        %v10206 = vunpack.c.l.b16 %v10133
        %v10207 = vpack.c.b16 %v10204, %v10203
        %v10208 = vpack.c.b16 %v10206, %v10205
        %v10212 = vsel %vm3223, %v10134, 0
        %v10215 = vsel %vm3223, %v10135, 0
        %v10218 = vsel %vm3223, %v10136, 0
        %v10221 = vsel %vm3223, %v10137, 0
        %10223 = vmatpush.bf16.msra.mxu0 0
        %10224 = vmatpush.bf16.msra.mxu0 0
        %10225 = vmatpush.bf16.msra.mxu0 0
        %10226 = vmatpush.bf16.msra.mxu0 0
        %10227 = vmatpush.bf16.msra.mxu0 0
        %10228 = vmatpush.bf16.msra.mxu0 0
        %10229 = vmatpush.bf16.msra.mxu0 %v10208
        %10230 = vmatpush.bf16.msra.mxu0 %v10207
        %10231 = vmatmul.bf16.gmra.mxu0 %v10212
        %v10232 = vpop.f32.mrf.mxu0
        %v10233 = vadd.f32 %v10180, %v10232
        %v10234 = vpop.f32.mrf.mxu0
        %v10235 = vadd.f32 %v10182, %v10234
        %10236 = vmatmul.bf16.gmra.mxu0 %v10215
        %v10237 = vpop.f32.mrf.mxu0
        %v10238 = vadd.f32 %v10185, %v10237
        %v10239 = vpop.f32.mrf.mxu0
        %v10240 = vadd.f32 %v10187, %v10239
        %10241 = vmatmul.bf16.gmra.mxu0 %v10218
        %v10242 = vpop.f32.mrf.mxu0
        %v10243 = vadd.f32 %v10190, %v10242
        %v10244 = vpop.f32.mrf.mxu0
        %v10245 = vadd.f32 %v10192, %v10244
        %10246 = vmatmul.bf16.gmra.mxu0 %v10221
        %v10247 = vpop.f32.mrf.mxu0
        %v10248 = vadd.f32 %v10195, %v10247
        %v10249 = vpop.f32.mrf.mxu0
        %v10250 = vadd.f32 %v10197, %v10249
        %10251 = vdwg.mxu0
        %v10252 = vld [vmem:[%s4 + $0x40] sm:$0xf]
        %v10253 = vld [vmem:[%s4 + $0x44] sm:$0xf]
        %v10254 = vld [vmem:[%s4 + $0x48] sm:$0xf]
        %v10255 = vld [vmem:[%s4 + $0x4c] sm:$0xf]
        %v10256 = vpack.c.bf16 %v10115, %v10114
        %v10257 = vpack.c.bf16 %v10117, %v10116
        %v10258 = vpack.c.bf16 %v10119, %v10118
        %v10259 = vpack.c.bf16 %v10121, %v10120
        %v10264 = vunpack.c.l.b16 %v10252
        %v10265 = vunpack.c.l.b16 %v10253
        %v10266 = vunpack.c.l.b16 %v10254
        %v10267 = vunpack.c.l.b16 %v10255
        %v10268 = vpack.c.b16 %v10265, %v10264
        %v10269 = vpack.c.b16 %v10267, %v10266
        %v10273 = vsel %vm3223, %v10256, 0
        %v10276 = vsel %vm3223, %v10257, 0
        %v10279 = vsel %vm3223, %v10258, 0
        %v10282 = vsel %vm3223, %v10259, 0
        %10284 = vmatpush.bf16.msra.mxu0 0
        %10285 = vmatpush.bf16.msra.mxu0 0
        %10286 = vmatpush.bf16.msra.mxu0 0
        %10287 = vmatpush.bf16.msra.mxu0 0
        %10288 = vmatpush.bf16.msra.mxu0 0
        %10289 = vmatpush.bf16.msra.mxu0 0
        %10290 = vmatpush.bf16.msra.mxu0 %v10269
        %10291 = vmatpush.bf16.msra.mxu0 %v10268
        %10292 = vmatmul.bf16.gmra.mxu0 %v10273
        %v10293 = vpop.f32.mrf.mxu0
        %v10294 = vadd.f32 0.0, %v10293
        %v10295 = vpop.f32.mrf.mxu0
        %v10296 = vadd.f32 0.0, %v10295
        %10297 = vmatmul.bf16.gmra.mxu0 %v10276
        %v10298 = vpop.f32.mrf.mxu0
        %v10299 = vadd.f32 0.0, %v10298
        %v10300 = vpop.f32.mrf.mxu0
        %v10301 = vadd.f32 0.0, %v10300
        %10302 = vmatmul.bf16.gmra.mxu0 %v10279
        %v10303 = vpop.f32.mrf.mxu0
        %v10304 = vadd.f32 0.0, %v10303
        %v10305 = vpop.f32.mrf.mxu0
        %v10306 = vadd.f32 0.0, %v10305
        %10307 = vmatmul.bf16.gmra.mxu0 %v10282
        %v10308 = vpop.f32.mrf.mxu0
        %v10309 = vadd.f32 0.0, %v10308
        %v10310 = vpop.f32.mrf.mxu0
        %v10311 = vadd.f32 0.0, %v10310
        %10312 = vdwg.mxu0
        %v10313 = vadd.f32 %v10233, %v10294
        %v10314 = vadd.f32 %v10235, %v10296
        %v10315 = vadd.f32 %v10238, %v10299
        %v10316 = vadd.f32 %v10240, %v10301
        %v10317 = vadd.f32 %v10243, %v10304
        %v10318 = vadd.f32 %v10245, %v10306
        %v10319 = vadd.f32 %v10248, %v10309
        %v10320 = vadd.f32 %v10250, %v10311
        %v10321 = vld [vmem:[%s6 + $0x1] sm:$0x1]
        %v10322 = vperm.slane %v10321, 0
        %v10323 = vadd.f32 %v10313, %v10322
        %v10324 = vadd.f32 %v10314, %v10322
        %v10325 = vadd.f32 %v10315, %v10322
        %v10326 = vadd.f32 %v10316, %v10322
        %v10327 = vadd.f32 %v10317, %v10322
        %v10328 = vadd.f32 %v10318, %v10322
        %v10329 = vadd.f32 %v10319, %v10322
        %v10330 = vadd.f32 %v10320, %v10322
        %v10331 = vmax.f32 %v10323, 0.0
        %v10332 = vmax.f32 %v10324, 0.0
        %v10333 = vmax.f32 %v10325, 0.0
        %v10334 = vmax.f32 %v10326, 0.0
        %v10335 = vmax.f32 %v10327, 0.0
        %v10336 = vmax.f32 %v10328, 0.0
        %v10337 = vmax.f32 %v10329, 0.0
        %v10338 = vmax.f32 %v10330, 0.0
        %v10339 = vld [vmem:[%s5 + $0x20] sm:$0xf]
        %v10340 = vld [vmem:[%s5 + $0x24] sm:$0xf]
        %v10341 = vld [vmem:[%s5 + $0x28] sm:$0xf]
        %v10342 = vld [vmem:[%s5 + $0x2c] sm:$0xf]
        %v10343 = vld [vmem:[%s5 + $0x30] sm:$0xf]
        %v10344 = vld [vmem:[%s5 + $0x34] sm:$0xf]
        %v10345 = vld [vmem:[%s5 + $0x38] sm:$0xf]
        %v10346 = vld [vmem:[%s5 + $0x3c] sm:$0xf]
        %v10347 = vpack.c.bf16 %v10332, %v10331
        %v10348 = vpack.c.bf16 %v10334, %v10333
        %v10349 = vpack.c.bf16 %v10336, %v10335
        %v10350 = vpack.c.bf16 %v10338, %v10337
        %v10351 = vld [vmem:[%s7 + $0x7] sm:$0x1]
        %v10352 = vperm.slane %v10351, 0
        %v10361 = vunpack.c.l.b16 %v10339
        %v10362 = vunpack.c.l.b16 %v10340
        %v10363 = vunpack.c.l.b16 %v10341
        %v10364 = vunpack.c.l.b16 %v10342
        %v10365 = vunpack.c.l.b16 %v10343
        %v10366 = vunpack.c.l.b16 %v10344
        %v10367 = vunpack.c.l.b16 %v10345
        %v10368 = vunpack.c.l.b16 %v10346
        %v10369 = vpack.c.b16 %v10362, %v10361
        %v10370 = vpack.c.b16 %v10364, %v10363
        %v10371 = vpack.c.b16 %v10366, %v10365
        %v10372 = vpack.c.b16 %v10368, %v10367
        %v10378 = vsel %vm1171, %v10347, 0
        %v10381 = vsel %vm1171, %v10348, 0
        %v10384 = vsel %vm1171, %v10349, 0
        %v10387 = vsel %vm1171, %v10350, 0
        %10389 = vmatpush.bf16.msra.mxu0 0
        %10390 = vmatpush.bf16.msra.mxu0 0
        %10391 = vmatpush.bf16.msra.mxu0 0
        %10392 = vmatpush.bf16.msra.mxu0 0
        %10393 = vmatpush.bf16.msra.mxu0 %v10372
        %10394 = vmatpush.bf16.msra.mxu0 %v10371
        %10395 = vmatpush.bf16.msra.mxu0 %v10370
        %10396 = vmatpush.bf16.msra.mxu0 %v10369
        %10397 = vmatmul.bf16.gmra.mxu0 %v10378
        %v10398 = vpop.f32.mrf.mxu0
        %v10399 = vadd.f32 %v10352, %v10398
        %v10400 = vpop.f32.mrf.mxu0
        %v10401 = vadd.f32 %v10352, %v10400
        %10402 = vmatmul.bf16.gmra.mxu0 %v10381
        %v10403 = vpop.f32.mrf.mxu0
        %v10404 = vadd.f32 %v10352, %v10403
        %v10405 = vpop.f32.mrf.mxu0
        %v10406 = vadd.f32 %v10352, %v10405
        %10407 = vmatmul.bf16.gmra.mxu0 %v10384
        %v10408 = vpop.f32.mrf.mxu0
        %v10409 = vadd.f32 %v10352, %v10408
        %v10410 = vpop.f32.mrf.mxu0
        %v10411 = vadd.f32 %v10352, %v10410
        %10412 = vmatmul.bf16.gmra.mxu0 %v10387
        %v10413 = vpop.f32.mrf.mxu0
        %v10414 = vadd.f32 %v10352, %v10413
        %v10415 = vpop.f32.mrf.mxu0
        %v10416 = vadd.f32 %v10352, %v10415
        %10417 = vdwg.mxu0
        %v10418 = vmax.f32 %v10399, 0.0
        %v10419 = vmax.f32 %v10401, 0.0
        %v10420 = vmax.f32 %v10404, 0.0
        %v10421 = vmax.f32 %v10406, 0.0
        %v10422 = vmax.f32 %v10409, 0.0
        %v10423 = vmax.f32 %v10411, 0.0
        %v10424 = vmax.f32 %v10414, 0.0
        %v10425 = vmax.f32 %v10416, 0.0
        %v10426 = vld [vmem:[%s5 + $0x40] sm:$0xf]
        %v10427 = vld [vmem:[%s5 + $0x44] sm:$0xf]
        %v10428 = vld [vmem:[%s5 + $0x48] sm:$0xf]
        %v10429 = vld [vmem:[%s5 + $0x4c] sm:$0xf]
        %v10430 = vpack.c.bf16 %v10419, %v10418
        %v10431 = vpack.c.bf16 %v10421, %v10420
        %v10432 = vpack.c.bf16 %v10423, %v10422
        %v10433 = vpack.c.bf16 %v10425, %v10424
        %v10434 = vld [vmem:[%s7 + $0x8] sm:$0x1]
        %v10435 = vperm.slane %v10434, 0
        %v10440 = vunpack.c.l.b16 %v10426
        %v10441 = vunpack.c.l.b16 %v10427
        %v10442 = vunpack.c.l.b16 %v10428
        %v10443 = vunpack.c.l.b16 %v10429
        %v10444 = vpack.c.b16 %v10441, %v10440
        %v10445 = vpack.c.b16 %v10443, %v10442
        %v10449 = vsel %vm3223, %v10430, 0
        %v10452 = vsel %vm3223, %v10431, 0
        %v10455 = vsel %vm3223, %v10432, 0
        %v10458 = vsel %vm3223, %v10433, 0
        %10460 = vmatpush.bf16.msra.mxu0 0
        %10461 = vmatpush.bf16.msra.mxu0 0
        %10462 = vmatpush.bf16.msra.mxu0 0
        %10463 = vmatpush.bf16.msra.mxu0 0
        %10464 = vmatpush.bf16.msra.mxu0 0
        %10465 = vmatpush.bf16.msra.mxu0 0
        %10466 = vmatpush.bf16.msra.mxu0 %v10445
        %10467 = vmatpush.bf16.msra.mxu0 %v10444
        %10468 = vmatmul.bf16.gmra.mxu0 %v10449
        %v10469 = vpop.f32.mrf.mxu0
        %v10470 = vadd.f32 %v10435, %v10469
        %v10471 = vpop.f32.mrf.mxu0
        %v10472 = vadd.f32 %v10435, %v10471
        %10473 = vmatmul.bf16.gmra.mxu0 %v10452
        %v10474 = vpop.f32.mrf.mxu0
        %v10475 = vadd.f32 %v10435, %v10474
        %v10476 = vpop.f32.mrf.mxu0
        %v10477 = vadd.f32 %v10435, %v10476
        %10478 = vmatmul.bf16.gmra.mxu0 %v10455
        %v10479 = vpop.f32.mrf.mxu0
        %v10480 = vadd.f32 %v10435, %v10479
        %v10481 = vpop.f32.mrf.mxu0
        %v10482 = vadd.f32 %v10435, %v10481
        %10483 = vmatmul.bf16.gmra.mxu0 %v10458
        %v10484 = vpop.f32.mrf.mxu0
        %v10485 = vadd.f32 %v10435, %v10484
        %v10486 = vpop.f32.mrf.mxu0
        %v10487 = vadd.f32 %v10435, %v10486
        %10488 = vdwg.mxu0
        %10489 = vst.msk [vmem:[%s413] sm:$0xff] %vm3223, %v10470
        %10490 = vst.msk [vmem:[%s413 + $0x8] sm:$0xff] %vm3223, %v10472
        %10491 = vst.msk [vmem:[%s413 + $0x10] sm:$0xff] %vm3223, %v10475
        %10492 = vst.msk [vmem:[%s413 + $0x18] sm:$0xff] %vm3223, %v10477
        %10493 = vst.msk [vmem:[%s413 + $0x20] sm:$0xff] %vm3223, %v10480
        %10494 = vst.msk [vmem:[%s413 + $0x28] sm:$0xff] %vm3223, %v10482
        %10495 = vst.msk [vmem:[%s413 + $0x30] sm:$0xff] %vm3223, %v10485
        %10496 = vst.msk [vmem:[%s413 + $0x38] sm:$0xff] %vm3223, %v10487
        %s10497 = smul.u32 8, %s24
        %p10498 = scmp.lt.s32.totalorder %s10497, 15
        %s10499 = scalar_select %p10498, %s10497, 15
        %s10500 = smul.addr %s10499, 8
        %s10501 = scalar_lea.vmem %s9, %s10500
        // Predicated region
        $region65: #{tpu_custom_call.1} parent=55 // pred_check
          %p10502 = pneg %p246
        $region66: #{tpu_custom_call.1} parent=55 // pred_check_branch
          %10504 = sbr.rel (%p10502) target = $region68
        $region67: #{tpu_custom_call.1} parent=55 // pred_region
          %s10505 = smul.u32 8, %s24
        $region68: #{tpu_custom_call.1} parent=55 // pred_fallthru
          _
      $region56: #{tpu_custom_call.1} parent=5 // pred_fallthru
        _
      %p10506 = scmp.le.s32.totalorder 2, %s19
      // Predicated region
      $region69: #{tpu_custom_call.1} parent=5 // pred_check
        %p10507 = pneg %p10506
      $region70: #{tpu_custom_call.1} parent=5 // pred_check_branch
        %10509 = sbr.rel (%p10507) target = $region72
      $region71: #{tpu_custom_call.1} parent=5 // pred_region
        %s10510 = ssub.s32 %s19, 2
        // Predicated region
        $region73: #{tpu_custom_call.1} parent=71 // pred_check
          %p10511 = pneg %p252
        $region74: #{tpu_custom_call.1} parent=71 // pred_check_branch
          %10513 = sbr.rel (%p10511) target = $region76
        $region75: #{tpu_custom_call.1} parent=71 // pred_region
          %s10514 = smul.u32 8, %s25
          %p10515 = scmp.lt.s32.totalorder %s10514, 15
          %s10516 = scalar_select %p10515, %s10514, 15
          %s10517 = smul.addr %s10516, 8
          %s10518 = scalar_lea.vmem %s9, %s10517
        $region76: #{tpu_custom_call.1} parent=71 // pred_fallthru
          _
      $region72: #{tpu_custom_call.1} parent=5 // pred_fallthru
        _
    $region6: #{tpu_custom_call.1} parent=1 // loop_footer
      %s23 = sadd.s32 1, %s19
    $region7: #{tpu_custom_call.1} parent=1 // loop_footer_branch
      %18 = sbr.rel target = $region3
    $region8: #{tpu_custom_call.1} parent=1 // loop_exit
      _
    %10519 = vsyncpa [#allocation3], 1
    %s10520 = scalar_lea.sflag [#allocation3], 1
    %10521 = vsyncpa %s10520, 1
    %10522 = vsyncpa [#allocation4], 1
    %s10523 = scalar_lea.sflag [#allocation4], 1
    %10524 = vsyncpa %s10523, 1

</llo_original>
